<compile_context>
chip_gen: v7x
topology: tpu7x:2x2x1
jax: 0.10.0
libtpu: 0.0.40
codegen_flags: <defaults>
</compile_context>

<pallas_src>
import jax
import jax.numpy as jnp
from jax import lax
from jax.experimental import pallas as pl
from jax.experimental.pallas import tpu as pltpu

KH = KW = 5
PAD = 2
EPS = 1e-5


def _fused_kernel(x_ref, w_ref, gamma_ref, beta_ref, o_ref, xp_ref):
    # x_ref:     (N, H, W, C)            unpadded NHWC input
    # w_ref:     (KH*KW, C)              depthwise filter, row k = tap (kh, kw), k = kh*KW + kw
    # gamma_ref: (1, C), beta_ref: (1, C)
    # o_ref:     (N, H, W, C)
    # xp_ref:    (N, H+2*PAD, W+2*PAD, C) VMEM scratch: relu(x) surrounded by a zero border
    N, H, W, C = o_ref.shape

    # ---- relu26 + fused zero padding (padding after ReLU; zeros are ReLU-invariant) ----
    xp_ref[...] = jnp.zeros_like(xp_ref)
    xp_ref[:, PAD:PAD + H, PAD:PAD + W, :] = jnp.maximum(x_ref[...], 0.0)
    xp = xp_ref[...]
    w = w_ref[...]

    # ---- depthwise 5x5 conv as 25 shifted multiply-accumulates (VPU work) ----
    # kw outer: only KW=5 misaligned slices along the sublane (W) axis are built;
    # the inner kh slices run along the cheap major (H) axis.
    acc = jnp.zeros((N, H, W, C), jnp.float32)
    for kw in range(KW):
        x_kw = xp[:, :, kw:kw + W, :]                       # (N, H+4, W, C)
        for kh in range(KH):
            acc = acc + x_kw[:, kh:kh + H, :, :] * w[kh * KW + kw, :]

    # ---- BatchNorm2d (training mode): one-pass per-channel batch statistics ----
    # TODO(synk): running_mean / running_var / num_batches_tracked updates are not
    # produced (forward output only).
    inv_cnt = 1.0 / float(N * H * W)
    s1 = jnp.sum(acc, axis=(0, 1, 2), keepdims=True)
    s2 = jnp.sum(acc * acc, axis=(0, 1, 2), keepdims=True)
    mean = s1 * inv_cnt
    var = jnp.maximum(s2 * inv_cnt - mean * mean, 0.0)      # biased variance
    inv = lax.rsqrt(var + EPS)
    gamma = gamma_ref[...].reshape(1, 1, 1, C)
    beta = beta_ref[...].reshape(1, 1, 1, C)
    y = (acc - mean) * (inv * gamma) + beta

    # ---- relu27 ----
    o_ref[...] = jnp.maximum(y, 0.0)


def fused_relu_dwconv_bn_relu_nhwc(x_nhwc, w_kc, gamma, beta):
    """Core call. x_nhwc: (N,H,W,C) f32; w_kc: (KH*KW, C); gamma/beta: (C,)."""
    N, H, W, C = x_nhwc.shape
    return pl.pallas_call(
        _fused_kernel,
        out_shape=jax.ShapeDtypeStruct((N, H, W, C), jnp.float32),
        in_specs=[
            pl.BlockSpec(memory_space=pltpu.MemorySpace.VMEM),
            pl.BlockSpec(memory_space=pltpu.MemorySpace.VMEM),
            pl.BlockSpec(memory_space=pltpu.MemorySpace.VMEM),
            pl.BlockSpec(memory_space=pltpu.MemorySpace.VMEM),
        ],
        out_specs=pl.BlockSpec(memory_space=pltpu.MemorySpace.VMEM),
        scratch_shapes=[pltpu.VMEM((N, H + 2 * PAD, W + 2 * PAD, C), jnp.float32)],
    )(x_nhwc, w_kc, gamma.reshape(1, C), beta.reshape(1, C))


@jax.jit
def fused_relu_dwconv_bn_relu(x_nchw, w_oihw, gamma, beta):
    """NCHW wrapper matching the PyTorch module.

    x_nchw: (N, C, H, W) f32; w_oihw: (C, 1, KH, KW); gamma/beta: (C,).
    """
    N, C, H, W = x_nchw.shape
    x_nhwc = jnp.transpose(x_nchw, (0, 2, 3, 1))
    w_kc = jnp.transpose(w_oihw[:, 0, :, :].reshape(C, KH * KW), (1, 0))  # (KH*KW, C)
    out_nhwc = fused_relu_dwconv_bn_relu_nhwc(x_nhwc, w_kc, gamma, beta)
    return jnp.transpose(out_nhwc, (0, 3, 1, 2))


def _reference(x_nchw, w_oihw, gamma, beta):
    """Pure-JAX reference (NCHW) mirroring the PyTorch training-mode forward."""
    x = jnp.maximum(x_nchw, 0.0)
    y = lax.conv_general_dilated(
        x, w_oihw,
        window_strides=(1, 1), padding=((PAD, PAD), (PAD, PAD)),
        dimension_numbers=("NCHW", "OIHW", "NCHW"),
        feature_group_count=x.shape[1])
    mean = jnp.mean(y, axis=(0, 2, 3), keepdims=True)
    var = jnp.mean((y - mean) ** 2, axis=(0, 2, 3), keepdims=True)
    y = (y - mean) / jnp.sqrt(var + EPS)
    y = y * gamma.reshape(1, -1, 1, 1) + beta.reshape(1, -1, 1, 1)
    return jnp.maximum(y, 0.0)


if __name__ == "__main__":
    # Shapes implied by the module: N=1, C=288, 14x14 spatial, 5x5 depthwise conv.
    N, C, H, W = 1, 288, 14, 14
    key = jax.random.PRNGKey(0)
    kx, kw = jax.random.split(key)

    x = jax.random.normal(kx, (N, C, H, W), dtype=jnp.float32)
    # Depthwise conv weight, PyTorch shape (out=C, in/groups=1, KH, KW)
    w = jax.random.normal(kw, (C, 1, KH, KW), dtype=jnp.float32) * 0.1
    # BatchNorm2d default affine init: weight=1, bias=0
    gamma = jnp.ones((C,), dtype=jnp.float32)
    beta = jnp.zeros((C,), dtype=jnp.float32)

    out = jax.block_until_ready(fused_relu_dwconv_bn_relu(x, w, gamma, beta))
    ref = jax.block_until_ready(_reference(x, w, gamma, beta))

    assert out.shape == (N, C, H, W)
    assert jnp.allclose(out, ref, atol=1e-3, rtol=1e-3)

    print("KERNEL_OK")
</pallas_src>

<mosaic_0001>
module attributes {stable_mosaic.version = 11 : i64} {
  func.func @_fused_kernel(%arg0: memref<1x14x14x288xf32, #tpu.memory_space<vmem>>, %arg1: memref<25x288xf32, #tpu.memory_space<vmem>>, %arg2: memref<1x288xf32, #tpu.memory_space<vmem>>, %arg3: memref<1x288xf32, #tpu.memory_space<vmem>>, %arg4: memref<1x14x14x288xf32, #tpu.memory_space<vmem>>, %arg5: memref<1x18x18x288xf32, #tpu.memory_space<vmem>>) attributes {dimension_semantics = [], scalar_prefetch = 0 : i64, scratch_operands = 1 : i64, tpu.core_type = #tpu.core_type<tc>} {
    %cst = arith.constant 0.000000e+00 : f32
    %0 = vector.broadcast %cst : f32 to vector<1x18x18x288xf32>
    %c0 = arith.constant 0 : index
    %c0_0 = arith.constant 0 : index
    %c0_1 = arith.constant 0 : index
    %c0_2 = arith.constant 0 : index
    %1 = vector.load %arg5[%c0, %c0_0, %c0_1, %c0_2] : memref<1x18x18x288xf32, #tpu.memory_space<vmem>>, vector<1x18x18x288xf32>
    tpu.vector_store %arg5[%c0, %c0_0, %c0_1, %c0_2], %0 {strides = array<i32>} : memref<1x18x18x288xf32, #tpu.memory_space<vmem>>, vector<1x18x18x288xf32>,
    %c0_3 = arith.constant 0 : index
    %c0_4 = arith.constant 0 : index
    %c0_5 = arith.constant 0 : index
    %c0_6 = arith.constant 0 : index
    %2 = vector.load %arg0[%c0_3, %c0_4, %c0_5, %c0_6] : memref<1x14x14x288xf32, #tpu.memory_space<vmem>>, vector<1x14x14x288xf32>
    %cst_7 = arith.constant 0.000000e+00 : f32
    %3 = vector.broadcast %cst_7 : f32 to vector<1x14x14x288xf32>
    %4 = arith.maximumf %2, %3 : vector<1x14x14x288xf32>
    %c0_8 = arith.constant 0 : index
    %c2 = arith.constant 2 : index
    %c2_9 = arith.constant 2 : index
    %c0_10 = arith.constant 0 : index
    %5 = vector.load %arg5[%c0_8, %c2, %c2_9, %c0_10] : memref<1x18x18x288xf32, #tpu.memory_space<vmem>>, vector<1x14x14x288xf32>
    tpu.vector_store %arg5[%c0_8, %c2, %c2_9, %c0_10], %4 {strides = array<i32>} : memref<1x18x18x288xf32, #tpu.memory_space<vmem>>, vector<1x14x14x288xf32>,
    %c0_11 = arith.constant 0 : index
    %c0_12 = arith.constant 0 : index
    %c0_13 = arith.constant 0 : index
    %c0_14 = arith.constant 0 : index
    %6 = vector.load %arg5[%c0_11, %c0_12, %c0_13, %c0_14] : memref<1x18x18x288xf32, #tpu.memory_space<vmem>>, vector<1x18x18x288xf32>
    %c0_15 = arith.constant 0 : index
    %c0_16 = arith.constant 0 : index
    %7 = vector.load %arg1[%c0_15, %c0_16] : memref<25x288xf32, #tpu.memory_space<vmem>>, vector<25x288xf32>
    %cst_17 = arith.constant 0.000000e+00 : f32
    %8 = vector.broadcast %cst_17 : f32 to vector<1x14x14x288xf32>
    %9 = vector.extract_strided_slice %6 {offsets = [0, 0, 0, 0], sizes = [1, 18, 14, 288], strides = [1, 1, 1, 1]} : vector<1x18x18x288xf32> to vector<1x18x14x288xf32>
    %10 = vector.extract_strided_slice %9 {offsets = [0, 0, 0, 0], sizes = [1, 14, 14, 288], strides = [1, 1, 1, 1]} : vector<1x18x14x288xf32> to vector<1x14x14x288xf32>
    %11 = vector.extract_strided_slice %7 {offsets = [0, 0], sizes = [1, 288], strides = [1, 1]} : vector<25x288xf32> to vector<1x288xf32>
    %12 = vector.shape_cast %11 : vector<1x288xf32> to vector<288xf32>
    %13 = vector.shape_cast %12 : vector<288xf32> to vector<1x1x1x288xf32>
    %14 = vector.broadcast %13 : vector<1x1x1x288xf32> to vector<1x14x14x288xf32>
    %15 = arith.mulf %10, %14 : vector<1x14x14x288xf32>
    %16 = arith.addf %8, %15 : vector<1x14x14x288xf32>
    %17 = vector.extract_strided_slice %9 {offsets = [0, 1, 0, 0], sizes = [1, 14, 14, 288], strides = [1, 1, 1, 1]} : vector<1x18x14x288xf32> to vector<1x14x14x288xf32>
    %18 = vector.extract_strided_slice %7 {offsets = [5, 0], sizes = [1, 288], strides = [1, 1]} : vector<25x288xf32> to vector<1x288xf32>
    %19 = vector.shape_cast %18 : vector<1x288xf32> to vector<288xf32>
    %20 = vector.shape_cast %19 : vector<288xf32> to vector<1x1x1x288xf32>
    %21 = vector.broadcast %20 : vector<1x1x1x288xf32> to vector<1x14x14x288xf32>
    %22 = arith.mulf %17, %21 : vector<1x14x14x288xf32>
    %23 = arith.addf %16, %22 : vector<1x14x14x288xf32>
    %24 = vector.extract_strided_slice %9 {offsets = [0, 2, 0, 0], sizes = [1, 14, 14, 288], strides = [1, 1, 1, 1]} : vector<1x18x14x288xf32> to vector<1x14x14x288xf32>
    %25 = vector.extract_strided_slice %7 {offsets = [10, 0], sizes = [1, 288], strides = [1, 1]} : vector<25x288xf32> to vector<1x288xf32>
    %26 = vector.shape_cast %25 : vector<1x288xf32> to vector<288xf32>
    %27 = vector.shape_cast %26 : vector<288xf32> to vector<1x1x1x288xf32>
    %28 = vector.broadcast %27 : vector<1x1x1x288xf32> to vector<1x14x14x288xf32>
    %29 = arith.mulf %24, %28 : vector<1x14x14x288xf32>
    %30 = arith.addf %23, %29 : vector<1x14x14x288xf32>
    %31 = vector.extract_strided_slice %9 {offsets = [0, 3, 0, 0], sizes = [1, 14, 14, 288], strides = [1, 1, 1, 1]} : vector<1x18x14x288xf32> to vector<1x14x14x288xf32>
    %32 = vector.extract_strided_slice %7 {offsets = [15, 0], sizes = [1, 288], strides = [1, 1]} : vector<25x288xf32> to vector<1x288xf32>
    %33 = vector.shape_cast %32 : vector<1x288xf32> to vector<288xf32>
    %34 = vector.shape_cast %33 : vector<288xf32> to vector<1x1x1x288xf32>
    %35 = vector.broadcast %34 : vector<1x1x1x288xf32> to vector<1x14x14x288xf32>
    %36 = arith.mulf %31, %35 : vector<1x14x14x288xf32>
    %37 = arith.addf %30, %36 : vector<1x14x14x288xf32>
    %38 = vector.extract_strided_slice %9 {offsets = [0, 4, 0, 0], sizes = [1, 14, 14, 288], strides = [1, 1, 1, 1]} : vector<1x18x14x288xf32> to vector<1x14x14x288xf32>
    %39 = vector.extract_strided_slice %7 {offsets = [20, 0], sizes = [1, 288], strides = [1, 1]} : vector<25x288xf32> to vector<1x288xf32>
    %40 = vector.shape_cast %39 : vector<1x288xf32> to vector<288xf32>
    %41 = vector.shape_cast %40 : vector<288xf32> to vector<1x1x1x288xf32>
    %42 = vector.broadcast %41 : vector<1x1x1x288xf32> to vector<1x14x14x288xf32>
    %43 = arith.mulf %38, %42 : vector<1x14x14x288xf32>
    %44 = arith.addf %37, %43 : vector<1x14x14x288xf32>
    %45 = vector.extract_strided_slice %6 {offsets = [0, 0, 1, 0], sizes = [1, 18, 14, 288], strides = [1, 1, 1, 1]} : vector<1x18x18x288xf32> to vector<1x18x14x288xf32>
    %46 = vector.extract_strided_slice %45 {offsets = [0, 0, 0, 0], sizes = [1, 14, 14, 288], strides = [1, 1, 1, 1]} : vector<1x18x14x288xf32> to vector<1x14x14x288xf32>
    %47 = vector.extract_strided_slice %7 {offsets = [1, 0], sizes = [1, 288], strides = [1, 1]} : vector<25x288xf32> to vector<1x288xf32>
    %48 = vector.shape_cast %47 : vector<1x288xf32> to vector<288xf32>
    %49 = vector.shape_cast %48 : vector<288xf32> to vector<1x1x1x288xf32>
    %50 = vector.broadcast %49 : vector<1x1x1x288xf32> to vector<1x14x14x288xf32>
    %51 = arith.mulf %46, %50 : vector<1x14x14x288xf32>
    %52 = arith.addf %44, %51 : vector<1x14x14x288xf32>
    %53 = vector.extract_strided_slice %45 {offsets = [0, 1, 0, 0], sizes = [1, 14, 14, 288], strides = [1, 1, 1, 1]} : vector<1x18x14x288xf32> to vector<1x14x14x288xf32>
    %54 = vector.extract_strided_slice %7 {offsets = [6, 0], sizes = [1, 288], strides = [1, 1]} : vector<25x288xf32> to vector<1x288xf32>
    %55 = vector.shape_cast %54 : vector<1x288xf32> to vector<288xf32>
    %56 = vector.shape_cast %55 : vector<288xf32> to vector<1x1x1x288xf32>
    %57 = vector.broadcast %56 : vector<1x1x1x288xf32> to vector<1x14x14x288xf32>
    %58 = arith.mulf %53, %57 : vector<1x14x14x288xf32>
    %59 = arith.addf %52, %58 : vector<1x14x14x288xf32>
    %60 = vector.extract_strided_slice %45 {offsets = [0, 2, 0, 0], sizes = [1, 14, 14, 288], strides = [1, 1, 1, 1]} : vector<1x18x14x288xf32> to vector<1x14x14x288xf32>
    %61 = vector.extract_strided_slice %7 {offsets = [11, 0], sizes = [1, 288], strides = [1, 1]} : vector<25x288xf32> to vector<1x288xf32>
    %62 = vector.shape_cast %61 : vector<1x288xf32> to vector<288xf32>
    %63 = vector.shape_cast %62 : vector<288xf32> to vector<1x1x1x288xf32>
    %64 = vector.broadcast %63 : vector<1x1x1x288xf32> to vector<1x14x14x288xf32>
    %65 = arith.mulf %60, %64 : vector<1x14x14x288xf32>
    %66 = arith.addf %59, %65 : vector<1x14x14x288xf32>
    %67 = vector.extract_strided_slice %45 {offsets = [0, 3, 0, 0], sizes = [1, 14, 14, 288], strides = [1, 1, 1, 1]} : vector<1x18x14x288xf32> to vector<1x14x14x288xf32>
    %68 = vector.extract_strided_slice %7 {offsets = [16, 0], sizes = [1, 288], strides = [1, 1]} : vector<25x288xf32> to vector<1x288xf32>
    %69 = vector.shape_cast %68 : vector<1x288xf32> to vector<288xf32>
    %70 = vector.shape_cast %69 : vector<288xf32> to vector<1x1x1x288xf32>
    %71 = vector.broadcast %70 : vector<1x1x1x288xf32> to vector<1x14x14x288xf32>
    %72 = arith.mulf %67, %71 : vector<1x14x14x288xf32>
    %73 = arith.addf %66, %72 : vector<1x14x14x288xf32>
    %74 = vector.extract_strided_slice %45 {offsets = [0, 4, 0, 0], sizes = [1, 14, 14, 288], strides = [1, 1, 1, 1]} : vector<1x18x14x288xf32> to vector<1x14x14x288xf32>
    %75 = vector.extract_strided_slice %7 {offsets = [21, 0], sizes = [1, 288], strides = [1, 1]} : vector<25x288xf32> to vector<1x288xf32>
    %76 = vector.shape_cast %75 : vector<1x288xf32> to vector<288xf32>
    %77 = vector.shape_cast %76 : vector<288xf32> to vector<1x1x1x288xf32>
    %78 = vector.broadcast %77 : vector<1x1x1x288xf32> to vector<1x14x14x288xf32>
    %79 = arith.mulf %74, %78 : vector<1x14x14x288xf32>
    %80 = arith.addf %73, %79 : vector<1x14x14x288xf32>
    %81 = vector.extract_strided_slice %6 {offsets = [0, 0, 2, 0], sizes = [1, 18, 14, 288], strides = [1, 1, 1, 1]} : vector<1x18x18x288xf32> to vector<1x18x14x288xf32>
    %82 = vector.extract_strided_slice %81 {offsets = [0, 0, 0, 0], sizes = [1, 14, 14, 288], strides = [1, 1, 1, 1]} : vector<1x18x14x288xf32> to vector<1x14x14x288xf32>
    %83 = vector.extract_strided_slice %7 {offsets = [2, 0], sizes = [1, 288], strides = [1, 1]} : vector<25x288xf32> to vector<1x288xf32>
    %84 = vector.shape_cast %83 : vector<1x288xf32> to vector<288xf32>
    %85 = vector.shape_cast %84 : vector<288xf32> to vector<1x1x1x288xf32>
    %86 = vector.broadcast %85 : vector<1x1x1x288xf32> to vector<1x14x14x288xf32>
    %87 = arith.mulf %82, %86 : vector<1x14x14x288xf32>
    %88 = arith.addf %80, %87 : vector<1x14x14x288xf32>
    %89 = vector.extract_strided_slice %81 {offsets = [0, 1, 0, 0], sizes = [1, 14, 14, 288], strides = [1, 1, 1, 1]} : vector<1x18x14x288xf32> to vector<1x14x14x288xf32>
    %90 = vector.extract_strided_slice %7 {offsets = [7, 0], sizes = [1, 288], strides = [1, 1]} : vector<25x288xf32> to vector<1x288xf32>
    %91 = vector.shape_cast %90 : vector<1x288xf32> to vector<288xf32>
    %92 = vector.shape_cast %91 : vector<288xf32> to vector<1x1x1x288xf32>
    %93 = vector.broadcast %92 : vector<1x1x1x288xf32> to vector<1x14x14x288xf32>
    %94 = arith.mulf %89, %93 : vector<1x14x14x288xf32>
    %95 = arith.addf %88, %94 : vector<1x14x14x288xf32>
    %96 = vector.extract_strided_slice %81 {offsets = [0, 2, 0, 0], sizes = [1, 14, 14, 288], strides = [1, 1, 1, 1]} : vector<1x18x14x288xf32> to vector<1x14x14x288xf32>
    %97 = vector.extract_strided_slice %7 {offsets = [12, 0], sizes = [1, 288], strides = [1, 1]} : vector<25x288xf32> to vector<1x288xf32>
    %98 = vector.shape_cast %97 : vector<1x288xf32> to vector<288xf32>
    %99 = vector.shape_cast %98 : vector<288xf32> to vector<1x1x1x288xf32>
    %100 = vector.broadcast %99 : vector<1x1x1x288xf32> to vector<1x14x14x288xf32>
    %101 = arith.mulf %96, %100 : vector<1x14x14x288xf32>
    %102 = arith.addf %95, %101 : vector<1x14x14x288xf32>
    %103 = vector.extract_strided_slice %81 {offsets = [0, 3, 0, 0], sizes = [1, 14, 14, 288], strides = [1, 1, 1, 1]} : vector<1x18x14x288xf32> to vector<1x14x14x288xf32>
    %104 = vector.extract_strided_slice %7 {offsets = [17, 0], sizes = [1, 288], strides = [1, 1]} : vector<25x288xf32> to vector<1x288xf32>
    %105 = vector.shape_cast %104 : vector<1x288xf32> to vector<288xf32>
    %106 = vector.shape_cast %105 : vector<288xf32> to vector<1x1x1x288xf32>
    %107 = vector.broadcast %106 : vector<1x1x1x288xf32> to vector<1x14x14x288xf32>
    %108 = arith.mulf %103, %107 : vector<1x14x14x288xf32>
    %109 = arith.addf %102, %108 : vector<1x14x14x288xf32>
    %110 = vector.extract_strided_slice %81 {offsets = [0, 4, 0, 0], sizes = [1, 14, 14, 288], strides = [1, 1, 1, 1]} : vector<1x18x14x288xf32> to vector<1x14x14x288xf32>
    %111 = vector.extract_strided_slice %7 {offsets = [22, 0], sizes = [1, 288], strides = [1, 1]} : vector<25x288xf32> to vector<1x288xf32>
    %112 = vector.shape_cast %111 : vector<1x288xf32> to vector<288xf32>
    %113 = vector.shape_cast %112 : vector<288xf32> to vector<1x1x1x288xf32>
    %114 = vector.broadcast %113 : vector<1x1x1x288xf32> to vector<1x14x14x288xf32>
    %115 = arith.mulf %110, %114 : vector<1x14x14x288xf32>
    %116 = arith.addf %109, %115 : vector<1x14x14x288xf32>
    %117 = vector.extract_strided_slice %6 {offsets = [0, 0, 3, 0], sizes = [1, 18, 14, 288], strides = [1, 1, 1, 1]} : vector<1x18x18x288xf32> to vector<1x18x14x288xf32>
    %118 = vector.extract_strided_slice %117 {offsets = [0, 0, 0, 0], sizes = [1, 14, 14, 288], strides = [1, 1, 1, 1]} : vector<1x18x14x288xf32> to vector<1x14x14x288xf32>
    %119 = vector.extract_strided_slice %7 {offsets = [3, 0], sizes = [1, 288], strides = [1, 1]} : vector<25x288xf32> to vector<1x288xf32>
    %120 = vector.shape_cast %119 : vector<1x288xf32> to vector<288xf32>
    %121 = vector.shape_cast %120 : vector<288xf32> to vector<1x1x1x288xf32>
    %122 = vector.broadcast %121 : vector<1x1x1x288xf32> to vector<1x14x14x288xf32>
    %123 = arith.mulf %118, %122 : vector<1x14x14x288xf32>
    %124 = arith.addf %116, %123 : vector<1x14x14x288xf32>
    %125 = vector.extract_strided_slice %117 {offsets = [0, 1, 0, 0], sizes = [1, 14, 14, 288], strides = [1, 1, 1, 1]} : vector<1x18x14x288xf32> to vector<1x14x14x288xf32>
    %126 = vector.extract_strided_slice %7 {offsets = [8, 0], sizes = [1, 288], strides = [1, 1]} : vector<25x288xf32> to vector<1x288xf32>
    %127 = vector.shape_cast %126 : vector<1x288xf32> to vector<288xf32>
    %128 = vector.shape_cast %127 : vector<288xf32> to vector<1x1x1x288xf32>
    %129 = vector.broadcast %128 : vector<1x1x1x288xf32> to vector<1x14x14x288xf32>
    %130 = arith.mulf %125, %129 : vector<1x14x14x288xf32>
    %131 = arith.addf %124, %130 : vector<1x14x14x288xf32>
    %132 = vector.extract_strided_slice %117 {offsets = [0, 2, 0, 0], sizes = [1, 14, 14, 288], strides = [1, 1, 1, 1]} : vector<1x18x14x288xf32> to vector<1x14x14x288xf32>
    %133 = vector.extract_strided_slice %7 {offsets = [13, 0], sizes = [1, 288], strides = [1, 1]} : vector<25x288xf32> to vector<1x288xf32>
    %134 = vector.shape_cast %133 : vector<1x288xf32> to vector<288xf32>
    %135 = vector.shape_cast %134 : vector<288xf32> to vector<1x1x1x288xf32>
    %136 = vector.broadcast %135 : vector<1x1x1x288xf32> to vector<1x14x14x288xf32>
    %137 = arith.mulf %132, %136 : vector<1x14x14x288xf32>
    %138 = arith.addf %131, %137 : vector<1x14x14x288xf32>
    %139 = vector.extract_strided_slice %117 {offsets = [0, 3, 0, 0], sizes = [1, 14, 14, 288], strides = [1, 1, 1, 1]} : vector<1x18x14x288xf32> to vector<1x14x14x288xf32>
    %140 = vector.extract_strided_slice %7 {offsets = [18, 0], sizes = [1, 288], strides = [1, 1]} : vector<25x288xf32> to vector<1x288xf32>
    %141 = vector.shape_cast %140 : vector<1x288xf32> to vector<288xf32>
    %142 = vector.shape_cast %141 : vector<288xf32> to vector<1x1x1x288xf32>
    %143 = vector.broadcast %142 : vector<1x1x1x288xf32> to vector<1x14x14x288xf32>
    %144 = arith.mulf %139, %143 : vector<1x14x14x288xf32>
    %145 = arith.addf %138, %144 : vector<1x14x14x288xf32>
    %146 = vector.extract_strided_slice %117 {offsets = [0, 4, 0, 0], sizes = [1, 14, 14, 288], strides = [1, 1, 1, 1]} : vector<1x18x14x288xf32> to vector<1x14x14x288xf32>
    %147 = vector.extract_strided_slice %7 {offsets = [23, 0], sizes = [1, 288], strides = [1, 1]} : vector<25x288xf32> to vector<1x288xf32>
    %148 = vector.shape_cast %147 : vector<1x288xf32> to vector<288xf32>
    %149 = vector.shape_cast %148 : vector<288xf32> to vector<1x1x1x288xf32>
    %150 = vector.broadcast %149 : vector<1x1x1x288xf32> to vector<1x14x14x288xf32>
    %151 = arith.mulf %146, %150 : vector<1x14x14x288xf32>
    %152 = arith.addf %145, %151 : vector<1x14x14x288xf32>
    %153 = vector.extract_strided_slice %6 {offsets = [0, 0, 4, 0], sizes = [1, 18, 14, 288], strides = [1, 1, 1, 1]} : vector<1x18x18x288xf32> to vector<1x18x14x288xf32>
    %154 = vector.extract_strided_slice %153 {offsets = [0, 0, 0, 0], sizes = [1, 14, 14, 288], strides = [1, 1, 1, 1]} : vector<1x18x14x288xf32> to vector<1x14x14x288xf32>
    %155 = vector.extract_strided_slice %7 {offsets = [4, 0], sizes = [1, 288], strides = [1, 1]} : vector<25x288xf32> to vector<1x288xf32>
    %156 = vector.shape_cast %155 : vector<1x288xf32> to vector<288xf32>
    %157 = vector.shape_cast %156 : vector<288xf32> to vector<1x1x1x288xf32>
    %158 = vector.broadcast %157 : vector<1x1x1x288xf32> to vector<1x14x14x288xf32>
    %159 = arith.mulf %154, %158 : vector<1x14x14x288xf32>
    %160 = arith.addf %152, %159 : vector<1x14x14x288xf32>
    %161 = vector.extract_strided_slice %153 {offsets = [0, 1, 0, 0], sizes = [1, 14, 14, 288], strides = [1, 1, 1, 1]} : vector<1x18x14x288xf32> to vector<1x14x14x288xf32>
    %162 = vector.extract_strided_slice %7 {offsets = [9, 0], sizes = [1, 288], strides = [1, 1]} : vector<25x288xf32> to vector<1x288xf32>
    %163 = vector.shape_cast %162 : vector<1x288xf32> to vector<288xf32>
    %164 = vector.shape_cast %163 : vector<288xf32> to vector<1x1x1x288xf32>
    %165 = vector.broadcast %164 : vector<1x1x1x288xf32> to vector<1x14x14x288xf32>
    %166 = arith.mulf %161, %165 : vector<1x14x14x288xf32>
    %167 = arith.addf %160, %166 : vector<1x14x14x288xf32>
    %168 = vector.extract_strided_slice %153 {offsets = [0, 2, 0, 0], sizes = [1, 14, 14, 288], strides = [1, 1, 1, 1]} : vector<1x18x14x288xf32> to vector<1x14x14x288xf32>
    %169 = vector.extract_strided_slice %7 {offsets = [14, 0], sizes = [1, 288], strides = [1, 1]} : vector<25x288xf32> to vector<1x288xf32>
    %170 = vector.shape_cast %169 : vector<1x288xf32> to vector<288xf32>
    %171 = vector.shape_cast %170 : vector<288xf32> to vector<1x1x1x288xf32>
    %172 = vector.broadcast %171 : vector<1x1x1x288xf32> to vector<1x14x14x288xf32>
    %173 = arith.mulf %168, %172 : vector<1x14x14x288xf32>
    %174 = arith.addf %167, %173 : vector<1x14x14x288xf32>
    %175 = vector.extract_strided_slice %153 {offsets = [0, 3, 0, 0], sizes = [1, 14, 14, 288], strides = [1, 1, 1, 1]} : vector<1x18x14x288xf32> to vector<1x14x14x288xf32>
    %176 = vector.extract_strided_slice %7 {offsets = [19, 0], sizes = [1, 288], strides = [1, 1]} : vector<25x288xf32> to vector<1x288xf32>
    %177 = vector.shape_cast %176 : vector<1x288xf32> to vector<288xf32>
    %178 = vector.shape_cast %177 : vector<288xf32> to vector<1x1x1x288xf32>
    %179 = vector.broadcast %178 : vector<1x1x1x288xf32> to vector<1x14x14x288xf32>
    %180 = arith.mulf %175, %179 : vector<1x14x14x288xf32>
    %181 = arith.addf %174, %180 : vector<1x14x14x288xf32>
    %182 = vector.extract_strided_slice %153 {offsets = [0, 4, 0, 0], sizes = [1, 14, 14, 288], strides = [1, 1, 1, 1]} : vector<1x18x14x288xf32> to vector<1x14x14x288xf32>
    %183 = vector.extract_strided_slice %7 {offsets = [24, 0], sizes = [1, 288], strides = [1, 1]} : vector<25x288xf32> to vector<1x288xf32>
    %184 = vector.shape_cast %183 : vector<1x288xf32> to vector<288xf32>
    %185 = vector.shape_cast %184 : vector<288xf32> to vector<1x1x1x288xf32>
    %186 = vector.broadcast %185 : vector<1x1x1x288xf32> to vector<1x14x14x288xf32>
    %187 = arith.mulf %182, %186 : vector<1x14x14x288xf32>
    %188 = arith.addf %181, %187 : vector<1x14x14x288xf32>
    %cst_18 = arith.constant dense<0.000000e+00> : vector<288xf32>
    %189 = vector.multi_reduction <add>, %188, %cst_18 [0, 1, 2] : vector<1x14x14x288xf32> to vector<288xf32>
    %190 = vector.shape_cast %189 : vector<288xf32> to vector<1x1x1x288xf32>
    %191 = arith.mulf %188, %188 : vector<1x14x14x288xf32>
    %cst_19 = arith.constant dense<0.000000e+00> : vector<288xf32>
    %192 = vector.multi_reduction <add>, %191, %cst_19 [0, 1, 2] : vector<1x14x14x288xf32> to vector<288xf32>
    %193 = vector.shape_cast %192 : vector<288xf32> to vector<1x1x1x288xf32>
    %cst_20 = arith.constant 0.00510204071 : f32
    %194 = vector.broadcast %cst_20 : f32 to vector<1x1x1x288xf32>
    %195 = arith.mulf %190, %194 : vector<1x1x1x288xf32>
    %cst_21 = arith.constant 0.00510204071 : f32
    %196 = vector.broadcast %cst_21 : f32 to vector<1x1x1x288xf32>
    %197 = arith.mulf %193, %196 : vector<1x1x1x288xf32>
    %198 = arith.mulf %195, %195 : vector<1x1x1x288xf32>
    %199 = arith.subf %197, %198 : vector<1x1x1x288xf32>
    %cst_22 = arith.constant 0.000000e+00 : f32
    %200 = vector.broadcast %cst_22 : f32 to vector<1x1x1x288xf32>
    %201 = arith.maximumf %199, %200 : vector<1x1x1x288xf32>
    %cst_23 = arith.constant 9.99999974E-6 : f32
    %202 = vector.broadcast %cst_23 : f32 to vector<1x1x1x288xf32>
    %203 = arith.addf %201, %202 : vector<1x1x1x288xf32>
    %204 = math.rsqrt %203 : vector<1x1x1x288xf32>
    %c0_24 = arith.constant 0 : index
    %c0_25 = arith.constant 0 : index
    %205 = vector.load %arg2[%c0_24, %c0_25] : memref<1x288xf32, #tpu.memory_space<vmem>>, vector<1x288xf32>
    %206 = vector.shape_cast %205 : vector<1x288xf32> to vector<1x1x1x288xf32>
    %c0_26 = arith.constant 0 : index
    %c0_27 = arith.constant 0 : index
    %207 = vector.load %arg3[%c0_26, %c0_27] : memref<1x288xf32, #tpu.memory_space<vmem>>, vector<1x288xf32>
    %208 = vector.shape_cast %207 : vector<1x288xf32> to vector<1x1x1x288xf32>
    %209 = vector.broadcast %195 : vector<1x1x1x288xf32> to vector<1x14x14x288xf32>
    %210 = arith.subf %188, %209 : vector<1x14x14x288xf32>
    %211 = arith.mulf %204, %206 : vector<1x1x1x288xf32>
    %212 = vector.broadcast %211 : vector<1x1x1x288xf32> to vector<1x14x14x288xf32>
    %213 = arith.mulf %210, %212 : vector<1x14x14x288xf32>
    %214 = vector.broadcast %208 : vector<1x1x1x288xf32> to vector<1x14x14x288xf32>
    %215 = arith.addf %213, %214 : vector<1x14x14x288xf32>
    %cst_28 = arith.constant 0.000000e+00 : f32
    %216 = vector.broadcast %cst_28 : f32 to vector<1x14x14x288xf32>
    %217 = arith.maximumf %215, %216 : vector<1x14x14x288xf32>
    %c0_29 = arith.constant 0 : index
    %c0_30 = arith.constant 0 : index
    %c0_31 = arith.constant 0 : index
    %c0_32 = arith.constant 0 : index
    %218 = vector.load %arg4[%c0_29, %c0_30, %c0_31, %c0_32] : memref<1x14x14x288xf32, #tpu.memory_space<vmem>>, vector<1x14x14x288xf32>
    tpu.vector_store %arg4[%c0_29, %c0_30, %c0_31, %c0_32], %217 {strides = array<i32>} : memref<1x14x14x288xf32, #tpu.memory_space<vmem>>, vector<1x14x14x288xf32>,
    return
  }
}

</mosaic_0001>

<llo_original>
// kernel: squeeze.1
$region0: #{squeeze.1}
  %s0 = inlined_call_operand.vmem [shape: f32[288,5,5], index: 0, kind: input, shape index: {}]
  %s1 = inlined_call_operand.vmem [shape: f32[288,25], index: 1, kind: output, shape index: {}]
  %s2 = scalar_lea.vmem %s0, 16
  %v3 = vld [vmem:[%s2] sm:$0x1f]
  %vm4 = vcmask 261120
  %s5 = scalar_lea.vmem %s1, 16
  %6 = vst.msk [vmem:[%s5] sm:$0x1f] %vm4, %v3
  %s7 = scalar_lea.vmem %s0, 40
  %v8 = vld [vmem:[%s7] sm:$0x1f]
  %vm9 = vcmask 261120
  %s10 = scalar_lea.vmem %s1, 21
  %11 = vst.msk [vmem:[%s10] sm:$0x7] %vm9, %v8
  %s12 = scalar_lea.vmem %s1, 37
  %13 = vst.msk [vmem:[%s12] sm:$0x18] %vm9, %v8
  %s14 = scalar_lea.vmem %s0, 64
  %v15 = vld [vmem:[%s14] sm:$0x1f]
  %vm16 = vcmask 261120
  %s17 = scalar_lea.vmem %s1, 42
  %18 = vst.msk [vmem:[%s17] sm:$0x1f] %vm16, %v15
  %s19 = scalar_lea.vmem %s0, 88
  %v20 = vld [vmem:[%s19] sm:$0x1f]
  %vm21 = vcmask 261120
  %s22 = scalar_lea.vmem %s1, 47
  %23 = vst.msk [vmem:[%s22] ss:$17 sm:$0x3] %vm21, %v20
  %s24 = scalar_lea.vmem %s1, 63
  %25 = vst.msk [vmem:[%s24] sm:$0x1c] %vm21, %v20
  %s26 = scalar_lea.vmem %s0, 112
  %v27 = vld [vmem:[%s26] sm:$0x1f]
  %vm28 = vcmask 261120
  %s29 = scalar_lea.vmem %s1, 68
  %30 = vst.msk [vmem:[%s29] sm:$0xf] %vm28, %v27
  %s31 = scalar_lea.vmem %s1, 84
  %32 = vst.msk [vmem:[%s31] sm:$0x10] %vm28, %v27
  %v33 = vld [vmem:[%s0] sm:$0x1f]
  %34 = vst [vmem:[%s1] sm:$0x1f] %v33
  %s35 = scalar_lea.vmem %s0, 8
  %v36 = vld [vmem:[%s35] sm:$0x1f]
  %s37 = scalar_lea.vmem %s1, 8
  %38 = vst [vmem:[%s37] sm:$0x1f] %v36
  %s39 = scalar_lea.vmem %s0, 24
  %v40 = vld [vmem:[%s39] sm:$0x1f]
  %s41 = scalar_lea.vmem %s1, 5
  %42 = vst [vmem:[%s41] sm:$0x7] %v40
  %s43 = scalar_lea.vmem %s1, 21
  %44 = vst [vmem:[%s43] sm:$0x18] %v40
  %s45 = scalar_lea.vmem %s0, 32
  %v46 = vld [vmem:[%s45] sm:$0x1f]
  %s47 = scalar_lea.vmem %s1, 13
  %48 = vst [vmem:[%s47] sm:$0x7] %v46
  %s49 = scalar_lea.vmem %s1, 29
  %50 = vst [vmem:[%s49] sm:$0x18] %v46
  %s51 = scalar_lea.vmem %s0, 48
  %v52 = vld [vmem:[%s51] sm:$0x1f]
  %s53 = scalar_lea.vmem %s1, 26
  %54 = vst [vmem:[%s53] sm:$0x1f] %v52
  %s55 = scalar_lea.vmem %s0, 56
  %v56 = vld [vmem:[%s55] sm:$0x1f]
  %s57 = scalar_lea.vmem %s1, 34
  %58 = vst [vmem:[%s57] sm:$0x1f] %v56
  %s59 = scalar_lea.vmem %s0, 72
  %v60 = vld [vmem:[%s59] sm:$0x1f]
  %s61 = scalar_lea.vmem %s1, 31
  %62 = vst [vmem:[%s61] ss:$17 sm:$0x3] %v60
  %s63 = scalar_lea.vmem %s1, 47
  %64 = vst [vmem:[%s63] sm:$0x1c] %v60
  %s65 = scalar_lea.vmem %s0, 80
  %v66 = vld [vmem:[%s65] sm:$0x1f]
  %s67 = scalar_lea.vmem %s1, 39
  %68 = vst [vmem:[%s67] ss:$17 sm:$0x3] %v66
  %s69 = scalar_lea.vmem %s1, 55
  %70 = vst [vmem:[%s69] sm:$0x1c] %v66
  %s71 = scalar_lea.vmem %s0, 96
  %v72 = vld [vmem:[%s71] sm:$0x1f]
  %s73 = scalar_lea.vmem %s1, 52
  %74 = vst [vmem:[%s73] sm:$0xf] %v72
  %s75 = scalar_lea.vmem %s1, 68
  %76 = vst [vmem:[%s75] sm:$0x10] %v72
  %s77 = scalar_lea.vmem %s0, 104
  %v78 = vld [vmem:[%s77] sm:$0x1f]
  %s79 = scalar_lea.vmem %s1, 60
  %80 = vst [vmem:[%s79] sm:$0xf] %v78
  %s81 = scalar_lea.vmem %s1, 76
  %82 = vst [vmem:[%s81] sm:$0x10] %v78

// kernel: fused_relu_dwconv_bn_relu.1
$region0: #{fused_relu_dwconv_bn_relu.1}
  #allocation0 [shape = 'u32[]', space=smem, size = 0x4, offset = 0x4, fixed_abs, tag = 'smem constant byte address 0x4 - core index']
  #allocation1 [shape = 'u32[144,128]{1,0:T(1,128)}', space=vmem, size = 0x12000, scoped, tag = 'internal scratch']
  #allocation2 [shape = 'f32[1,18,18,288]{3,2,1,0:T(8,128)}', space=vmem, size = 0xa2000, scoped, tag = 'scratch operand']
  %s0 = inlined_call_operand.vmem [shape: f32[1,14,14,288], index: 0, kind: input, shape index: {}]
  %s1 = inlined_call_operand.vmem [shape: f32[25,288], index: 1, kind: input, shape index: {}]
  %s2 = inlined_call_operand.vmem [shape: f32[1,288], index: 2, kind: input, shape index: {}]
  %s3 = inlined_call_operand.vmem [shape: f32[1,288], index: 3, kind: input, shape index: {}]
  %s4 = inlined_call_operand.vmem [shape: f32[1,14,14,288], index: 4, kind: output, shape index: {}]
  %s5 = sld [smem:[#allocation0]]
  $region26: #{fused_relu_dwconv_bn_relu.1} parent=0
    _
  %s7 = ssub.s32 1, %s5
  %s8 = scalar_select 0, %s7, %s5
  // Predicated region
  $region2: #{fused_relu_dwconv_bn_relu.1} parent=0 // pred_check
    _
  $region3: #{fused_relu_dwconv_bn_relu.1} parent=0 // pred_check_branch
    %10 = sbr.rel (0) target = $region5
  $region4: #{fused_relu_dwconv_bn_relu.1} parent=0 // pred_region
    _
  $region5: #{fused_relu_dwconv_bn_relu.1} parent=0 // pred_fallthru
    _
  // Predicated region
  $region6: #{fused_relu_dwconv_bn_relu.1} parent=0 // pred_check
    _
  $region7: #{fused_relu_dwconv_bn_relu.1} parent=0 // pred_check_branch
    %12 = sbr.rel (0) target = $region9
  $region8: #{fused_relu_dwconv_bn_relu.1} parent=0 // pred_region
    _
  $region9: #{fused_relu_dwconv_bn_relu.1} parent=0 // pred_fallthru
    _
  // Predicated region
  $region10: #{fused_relu_dwconv_bn_relu.1} parent=0 // pred_check
    _
  $region11: #{fused_relu_dwconv_bn_relu.1} parent=0 // pred_check_branch
    %14 = sbr.rel (0) target = $region13
  $region12: #{fused_relu_dwconv_bn_relu.1} parent=0 // pred_region
    _
  $region13: #{fused_relu_dwconv_bn_relu.1} parent=0 // pred_fallthru
    _
  // Predicated region
  $region14: #{fused_relu_dwconv_bn_relu.1} parent=0 // pred_check
    _
  $region15: #{fused_relu_dwconv_bn_relu.1} parent=0 // pred_check_branch
    %16 = sbr.rel (0) target = $region17
  $region16: #{fused_relu_dwconv_bn_relu.1} parent=0 // pred_region
    _
  $region17: #{fused_relu_dwconv_bn_relu.1} parent=0 // pred_fallthru
    _
  %17 = vst [vmem:[#allocation2] sm:$0xff] 0.0
  %18 = vst [vmem:[#allocation2 + $0x8] sm:$0xff] 0.0
  %vm19 = vcmask 261120
  %20 = vst.msk [vmem:[#allocation2 + $0x10] sm:$0xff] %vm19, 0.0
  %21 = vst [vmem:[#allocation2 + $0x18] sm:$0xff] 0.0
  %22 = vst [vmem:[#allocation2 + $0x20] sm:$0xff] 0.0
  %23 = vst.msk [vmem:[#allocation2 + $0x28] sm:$0xff] %vm19, 0.0
  %24 = vst [vmem:[#allocation2 + $0x30] sm:$0x3] 0.0
  %25 = vst [vmem:[#allocation2 + $0x38] sm:$0x3] 0.0
  %vm26 = vcmask 254976
  %27 = vst.msk [vmem:[#allocation2 + $0x40] sm:$0x3] %vm26, 0.0
  %28 = vst [vmem:[#allocation2 + $0x48] sm:$0xff] 0.0
  %29 = vst [vmem:[#allocation2 + $0x50] sm:$0xff] 0.0
  %30 = vst.msk [vmem:[#allocation2 + $0x58] sm:$0xff] %vm19, 0.0
  %31 = vst [vmem:[#allocation2 + $0x60] sm:$0xff] 0.0
  %32 = vst [vmem:[#allocation2 + $0x68] sm:$0xff] 0.0
  %33 = vst.msk [vmem:[#allocation2 + $0x70] sm:$0xff] %vm19, 0.0
  %34 = vst [vmem:[#allocation2 + $0x78] sm:$0x3] 0.0
  %35 = vst [vmem:[#allocation2 + $0x80] sm:$0x3] 0.0
  %36 = vst.msk [vmem:[#allocation2 + $0x88] sm:$0x3] %vm26, 0.0
  %37 = vst [vmem:[#allocation2 + $0x90] sm:$0xff] 0.0
  %38 = vst [vmem:[#allocation2 + $0x98] sm:$0xff] 0.0
  %39 = vst.msk [vmem:[#allocation2 + $0xa0] sm:$0xff] %vm19, 0.0
  %40 = vst [vmem:[#allocation2 + $0xa8] sm:$0xff] 0.0
  %41 = vst [vmem:[#allocation2 + $0xb0] sm:$0xff] 0.0
  %42 = vst.msk [vmem:[#allocation2 + $0xb8] sm:$0xff] %vm19, 0.0
  %43 = vst [vmem:[#allocation2 + $0xc0] sm:$0x3] 0.0
  %44 = vst [vmem:[#allocation2 + $0xc8] sm:$0x3] 0.0
  %45 = vst.msk [vmem:[#allocation2 + $0xd0] sm:$0x3] %vm26, 0.0
  %46 = vst [vmem:[#allocation2 + $0xd8] sm:$0xff] 0.0
  %47 = vst [vmem:[#allocation2 + $0xe0] sm:$0xff] 0.0
  %48 = vst.msk [vmem:[#allocation2 + $0xe8] sm:$0xff] %vm19, 0.0
  %49 = vst [vmem:[#allocation2 + $0xf0] sm:$0xff] 0.0
  %50 = vst [vmem:[#allocation2 + $0xf8] sm:$0xff] 0.0
  %51 = vst.msk [vmem:[#allocation2 + $0x100] sm:$0xff] %vm19, 0.0
  %52 = vst [vmem:[#allocation2 + $0x108] sm:$0x3] 0.0
  %53 = vst [vmem:[#allocation2 + $0x110] sm:$0x3] 0.0
  %54 = vst.msk [vmem:[#allocation2 + $0x118] sm:$0x3] %vm26, 0.0
  %55 = vst [vmem:[#allocation2 + $0x120] sm:$0xff] 0.0
  %56 = vst [vmem:[#allocation2 + $0x128] sm:$0xff] 0.0
  %57 = vst.msk [vmem:[#allocation2 + $0x130] sm:$0xff] %vm19, 0.0
  %58 = vst [vmem:[#allocation2 + $0x138] sm:$0xff] 0.0
  %59 = vst [vmem:[#allocation2 + $0x140] sm:$0xff] 0.0
  %60 = vst.msk [vmem:[#allocation2 + $0x148] sm:$0xff] %vm19, 0.0
  %61 = vst [vmem:[#allocation2 + $0x150] sm:$0x3] 0.0
  %62 = vst [vmem:[#allocation2 + $0x158] sm:$0x3] 0.0
  %63 = vst.msk [vmem:[#allocation2 + $0x160] sm:$0x3] %vm26, 0.0
  %64 = vst [vmem:[#allocation2 + $0x168] sm:$0xff] 0.0
  %65 = vst [vmem:[#allocation2 + $0x170] sm:$0xff] 0.0
  %66 = vst.msk [vmem:[#allocation2 + $0x178] sm:$0xff] %vm19, 0.0
  %67 = vst [vmem:[#allocation2 + $0x180] sm:$0xff] 0.0
  %68 = vst [vmem:[#allocation2 + $0x188] sm:$0xff] 0.0
  %69 = vst.msk [vmem:[#allocation2 + $0x190] sm:$0xff] %vm19, 0.0
  %70 = vst [vmem:[#allocation2 + $0x198] sm:$0x3] 0.0
  %71 = vst [vmem:[#allocation2 + $0x1a0] sm:$0x3] 0.0
  %72 = vst.msk [vmem:[#allocation2 + $0x1a8] sm:$0x3] %vm26, 0.0
  %73 = vst [vmem:[#allocation2 + $0x1b0] sm:$0xff] 0.0
  %74 = vst [vmem:[#allocation2 + $0x1b8] sm:$0xff] 0.0
  %75 = vst.msk [vmem:[#allocation2 + $0x1c0] sm:$0xff] %vm19, 0.0
  %76 = vst [vmem:[#allocation2 + $0x1c8] sm:$0xff] 0.0
  %77 = vst [vmem:[#allocation2 + $0x1d0] sm:$0xff] 0.0
  %78 = vst.msk [vmem:[#allocation2 + $0x1d8] sm:$0xff] %vm19, 0.0
  %79 = vst [vmem:[#allocation2 + $0x1e0] sm:$0x3] 0.0
  %80 = vst [vmem:[#allocation2 + $0x1e8] sm:$0x3] 0.0
  %81 = vst.msk [vmem:[#allocation2 + $0x1f0] sm:$0x3] %vm26, 0.0
  %82 = vst [vmem:[#allocation2 + $0x1f8] sm:$0xff] 0.0
  %83 = vst [vmem:[#allocation2 + $0x200] sm:$0xff] 0.0
  %84 = vst.msk [vmem:[#allocation2 + $0x208] sm:$0xff] %vm19, 0.0
  %85 = vst [vmem:[#allocation2 + $0x210] sm:$0xff] 0.0
  %86 = vst [vmem:[#allocation2 + $0x218] sm:$0xff] 0.0
  %87 = vst.msk [vmem:[#allocation2 + $0x220] sm:$0xff] %vm19, 0.0
  %88 = vst [vmem:[#allocation2 + $0x228] sm:$0x3] 0.0
  %89 = vst [vmem:[#allocation2 + $0x230] sm:$0x3] 0.0
  %90 = vst.msk [vmem:[#allocation2 + $0x238] sm:$0x3] %vm26, 0.0
  %91 = vst [vmem:[#allocation2 + $0x240] sm:$0xff] 0.0
  %92 = vst [vmem:[#allocation2 + $0x248] sm:$0xff] 0.0
  %93 = vst.msk [vmem:[#allocation2 + $0x250] sm:$0xff] %vm19, 0.0
  %94 = vst [vmem:[#allocation2 + $0x258] sm:$0xff] 0.0
  %95 = vst [vmem:[#allocation2 + $0x260] sm:$0xff] 0.0
  %96 = vst.msk [vmem:[#allocation2 + $0x268] sm:$0xff] %vm19, 0.0
  %97 = vst [vmem:[#allocation2 + $0x270] sm:$0x3] 0.0
  %98 = vst [vmem:[#allocation2 + $0x278] sm:$0x3] 0.0
  %99 = vst.msk [vmem:[#allocation2 + $0x280] sm:$0x3] %vm26, 0.0
  %100 = vst [vmem:[#allocation2 + $0x288] sm:$0xff] 0.0
  %101 = vst [vmem:[#allocation2 + $0x290] sm:$0xff] 0.0
  %102 = vst.msk [vmem:[#allocation2 + $0x298] sm:$0xff] %vm19, 0.0
  %103 = vst [vmem:[#allocation2 + $0x2a0] sm:$0xff] 0.0
  %104 = vst [vmem:[#allocation2 + $0x2a8] sm:$0xff] 0.0
  %105 = vst.msk [vmem:[#allocation2 + $0x2b0] sm:$0xff] %vm19, 0.0
  %106 = vst [vmem:[#allocation2 + $0x2b8] sm:$0x3] 0.0
  %107 = vst [vmem:[#allocation2 + $0x2c0] sm:$0x3] 0.0
  %108 = vst.msk [vmem:[#allocation2 + $0x2c8] sm:$0x3] %vm26, 0.0
  %109 = vst [vmem:[#allocation2 + $0x2d0] sm:$0xff] 0.0
  %110 = vst [vmem:[#allocation2 + $0x2d8] sm:$0xff] 0.0
  %111 = vst.msk [vmem:[#allocation2 + $0x2e0] sm:$0xff] %vm19, 0.0
  %112 = vst [vmem:[#allocation2 + $0x2e8] sm:$0xff] 0.0
  %113 = vst [vmem:[#allocation2 + $0x2f0] sm:$0xff] 0.0
  %114 = vst.msk [vmem:[#allocation2 + $0x2f8] sm:$0xff] %vm19, 0.0
  %115 = vst [vmem:[#allocation2 + $0x300] sm:$0x3] 0.0
  %116 = vst [vmem:[#allocation2 + $0x308] sm:$0x3] 0.0
  %117 = vst.msk [vmem:[#allocation2 + $0x310] sm:$0x3] %vm26, 0.0
  %118 = vst [vmem:[#allocation2 + $0x318] sm:$0xff] 0.0
  %119 = vst [vmem:[#allocation2 + $0x320] sm:$0xff] 0.0
  %120 = vst.msk [vmem:[#allocation2 + $0x328] sm:$0xff] %vm19, 0.0
  %121 = vst [vmem:[#allocation2 + $0x330] sm:$0xff] 0.0
  %122 = vst [vmem:[#allocation2 + $0x338] sm:$0xff] 0.0
  %123 = vst.msk [vmem:[#allocation2 + $0x340] sm:$0xff] %vm19, 0.0
  %124 = vst [vmem:[#allocation2 + $0x348] sm:$0x3] 0.0
  %125 = vst [vmem:[#allocation2 + $0x350] sm:$0x3] 0.0
  %126 = vst.msk [vmem:[#allocation2 + $0x358] sm:$0x3] %vm26, 0.0
  %127 = vst [vmem:[#allocation2 + $0x360] sm:$0xff] 0.0
  %128 = vst [vmem:[#allocation2 + $0x368] sm:$0xff] 0.0
  %129 = vst.msk [vmem:[#allocation2 + $0x370] sm:$0xff] %vm19, 0.0
  %130 = vst [vmem:[#allocation2 + $0x378] sm:$0xff] 0.0
  %131 = vst [vmem:[#allocation2 + $0x380] sm:$0xff] 0.0
  %132 = vst.msk [vmem:[#allocation2 + $0x388] sm:$0xff] %vm19, 0.0
  %133 = vst [vmem:[#allocation2 + $0x390] sm:$0x3] 0.0
  %134 = vst [vmem:[#allocation2 + $0x398] sm:$0x3] 0.0
  %135 = vst.msk [vmem:[#allocation2 + $0x3a0] sm:$0x3] %vm26, 0.0
  %136 = vst [vmem:[#allocation2 + $0x3a8] sm:$0xff] 0.0
  %137 = vst [vmem:[#allocation2 + $0x3b0] sm:$0xff] 0.0
  %138 = vst.msk [vmem:[#allocation2 + $0x3b8] sm:$0xff] %vm19, 0.0
  %139 = vst [vmem:[#allocation2 + $0x3c0] sm:$0xff] 0.0
  %140 = vst [vmem:[#allocation2 + $0x3c8] sm:$0xff] 0.0
  %141 = vst.msk [vmem:[#allocation2 + $0x3d0] sm:$0xff] %vm19, 0.0
  %142 = vst [vmem:[#allocation2 + $0x3d8] sm:$0x3] 0.0
  %143 = vst [vmem:[#allocation2 + $0x3e0] sm:$0x3] 0.0
  %144 = vst.msk [vmem:[#allocation2 + $0x3e8] sm:$0x3] %vm26, 0.0
  %145 = vst [vmem:[#allocation2 + $0x3f0] sm:$0xff] 0.0
  %146 = vst [vmem:[#allocation2 + $0x3f8] sm:$0xff] 0.0
  %147 = vst.msk [vmem:[#allocation2 + $0x400] sm:$0xff] %vm19, 0.0
  %148 = vst [vmem:[#allocation2 + $0x408] sm:$0xff] 0.0
  %149 = vst [vmem:[#allocation2 + $0x410] sm:$0xff] 0.0
  %150 = vst.msk [vmem:[#allocation2 + $0x418] sm:$0xff] %vm19, 0.0
  %151 = vst [vmem:[#allocation2 + $0x420] sm:$0x3] 0.0
  %152 = vst [vmem:[#allocation2 + $0x428] sm:$0x3] 0.0
  %153 = vst.msk [vmem:[#allocation2 + $0x430] sm:$0x3] %vm26, 0.0
  %154 = vst [vmem:[#allocation2 + $0x438] sm:$0xff] 0.0
  %155 = vst [vmem:[#allocation2 + $0x440] sm:$0xff] 0.0
  %156 = vst.msk [vmem:[#allocation2 + $0x448] sm:$0xff] %vm19, 0.0
  %157 = vst [vmem:[#allocation2 + $0x450] sm:$0xff] 0.0
  %158 = vst [vmem:[#allocation2 + $0x458] sm:$0xff] 0.0
  %159 = vst.msk [vmem:[#allocation2 + $0x460] sm:$0xff] %vm19, 0.0
  %160 = vst [vmem:[#allocation2 + $0x468] sm:$0x3] 0.0
  %161 = vst [vmem:[#allocation2 + $0x470] sm:$0x3] 0.0
  %162 = vst.msk [vmem:[#allocation2 + $0x478] sm:$0x3] %vm26, 0.0
  %163 = vst [vmem:[#allocation2 + $0x480] sm:$0xff] 0.0
  %164 = vst [vmem:[#allocation2 + $0x488] sm:$0xff] 0.0
  %165 = vst.msk [vmem:[#allocation2 + $0x490] sm:$0xff] %vm19, 0.0
  %166 = vst [vmem:[#allocation2 + $0x498] sm:$0xff] 0.0
  %167 = vst [vmem:[#allocation2 + $0x4a0] sm:$0xff] 0.0
  %168 = vst.msk [vmem:[#allocation2 + $0x4a8] sm:$0xff] %vm19, 0.0
  %169 = vst [vmem:[#allocation2 + $0x4b0] sm:$0x3] 0.0
  %170 = vst [vmem:[#allocation2 + $0x4b8] sm:$0x3] 0.0
  %171 = vst.msk [vmem:[#allocation2 + $0x4c0] sm:$0x3] %vm26, 0.0
  %172 = vst [vmem:[#allocation2 + $0x4c8] sm:$0xff] 0.0
  %173 = vst [vmem:[#allocation2 + $0x4d0] sm:$0xff] 0.0
  %174 = vst.msk [vmem:[#allocation2 + $0x4d8] sm:$0xff] %vm19, 0.0
  %175 = vst [vmem:[#allocation2 + $0x4e0] sm:$0xff] 0.0
  %176 = vst [vmem:[#allocation2 + $0x4e8] sm:$0xff] 0.0
  %177 = vst.msk [vmem:[#allocation2 + $0x4f0] sm:$0xff] %vm19, 0.0
  %178 = vst [vmem:[#allocation2 + $0x4f8] sm:$0x3] 0.0
  %179 = vst [vmem:[#allocation2 + $0x500] sm:$0x3] 0.0
  %180 = vst.msk [vmem:[#allocation2 + $0x508] sm:$0x3] %vm26, 0.0
  %v181 = vld [vmem:[%s0] sm:$0xff]
  %v182 = vld [vmem:[%s0 + $0x8] sm:$0xff]
  %v183 = vld [vmem:[%s0 + $0x10] sm:$0xff]
  %v184 = vld [vmem:[%s0 + $0x18] sm:$0x3f]
  %v185 = vld [vmem:[%s0 + $0x20] sm:$0x3f]
  %v186 = vld [vmem:[%s0 + $0x28] sm:$0x3f]
  %v187 = vld [vmem:[%s0 + $0x30] sm:$0xff]
  %v188 = vld [vmem:[%s0 + $0x38] sm:$0xff]
  %v189 = vld [vmem:[%s0 + $0x40] sm:$0xff]
  %v190 = vld [vmem:[%s0 + $0x48] sm:$0x3f]
  %v191 = vld [vmem:[%s0 + $0x50] sm:$0x3f]
  %v192 = vld [vmem:[%s0 + $0x58] sm:$0x3f]
  %v193 = vld [vmem:[%s0 + $0x60] sm:$0xff]
  %v194 = vld [vmem:[%s0 + $0x68] sm:$0xff]
  %v195 = vld [vmem:[%s0 + $0x70] sm:$0xff]
  %v196 = vld [vmem:[%s0 + $0x78] sm:$0x3f]
  %v197 = vld [vmem:[%s0 + $0x80] sm:$0x3f]
  %v198 = vld [vmem:[%s0 + $0x88] sm:$0x3f]
  %v199 = vld [vmem:[%s0 + $0x90] sm:$0xff]
  %v200 = vld [vmem:[%s0 + $0x98] sm:$0xff]
  %v201 = vld [vmem:[%s0 + $0xa0] sm:$0xff]
  %v202 = vld [vmem:[%s0 + $0xa8] sm:$0x3f]
  %v203 = vld [vmem:[%s0 + $0xb0] sm:$0x3f]
  %v204 = vld [vmem:[%s0 + $0xb8] sm:$0x3f]
  %v205 = vld [vmem:[%s0 + $0xc0] sm:$0xff]
  %v206 = vld [vmem:[%s0 + $0xc8] sm:$0xff]
  %v207 = vld [vmem:[%s0 + $0xd0] sm:$0xff]
  %v208 = vld [vmem:[%s0 + $0xd8] sm:$0x3f]
  %v209 = vld [vmem:[%s0 + $0xe0] sm:$0x3f]
  %v210 = vld [vmem:[%s0 + $0xe8] sm:$0x3f]
  %v211 = vld [vmem:[%s0 + $0xf0] sm:$0xff]
  %v212 = vld [vmem:[%s0 + $0xf8] sm:$0xff]
  %v213 = vld [vmem:[%s0 + $0x100] sm:$0xff]
  %v214 = vld [vmem:[%s0 + $0x108] sm:$0x3f]
  %v215 = vld [vmem:[%s0 + $0x110] sm:$0x3f]
  %v216 = vld [vmem:[%s0 + $0x118] sm:$0x3f]
  %v217 = vld [vmem:[%s0 + $0x120] sm:$0xff]
  %v218 = vld [vmem:[%s0 + $0x128] sm:$0xff]
  %v219 = vld [vmem:[%s0 + $0x130] sm:$0xff]
  %v220 = vld [vmem:[%s0 + $0x138] sm:$0x3f]
  %v221 = vld [vmem:[%s0 + $0x140] sm:$0x3f]
  %v222 = vld [vmem:[%s0 + $0x148] sm:$0x3f]
  %v223 = vld [vmem:[%s0 + $0x150] sm:$0xff]
  %v224 = vld [vmem:[%s0 + $0x158] sm:$0xff]
  %v225 = vld [vmem:[%s0 + $0x160] sm:$0xff]
  %v226 = vld [vmem:[%s0 + $0x168] sm:$0x3f]
  %v227 = vld [vmem:[%s0 + $0x170] sm:$0x3f]
  %v228 = vld [vmem:[%s0 + $0x178] sm:$0x3f]
  %v229 = vld [vmem:[%s0 + $0x180] sm:$0xff]
  %v230 = vld [vmem:[%s0 + $0x188] sm:$0xff]
  %v231 = vld [vmem:[%s0 + $0x190] sm:$0xff]
  %v232 = vld [vmem:[%s0 + $0x198] sm:$0x3f]
  %v233 = vld [vmem:[%s0 + $0x1a0] sm:$0x3f]
  %v234 = vld [vmem:[%s0 + $0x1a8] sm:$0x3f]
  %v235 = vld [vmem:[%s0 + $0x1b0] sm:$0xff]
  %v236 = vld [vmem:[%s0 + $0x1b8] sm:$0xff]
  %v237 = vld [vmem:[%s0 + $0x1c0] sm:$0xff]
  %v238 = vld [vmem:[%s0 + $0x1c8] sm:$0x3f]
  %v239 = vld [vmem:[%s0 + $0x1d0] sm:$0x3f]
  %v240 = vld [vmem:[%s0 + $0x1d8] sm:$0x3f]
  %v241 = vld [vmem:[%s0 + $0x1e0] sm:$0xff]
  %v242 = vld [vmem:[%s0 + $0x1e8] sm:$0xff]
  %v243 = vld [vmem:[%s0 + $0x1f0] sm:$0xff]
  %v244 = vld [vmem:[%s0 + $0x1f8] sm:$0x3f]
  %v245 = vld [vmem:[%s0 + $0x200] sm:$0x3f]
  %v246 = vld [vmem:[%s0 + $0x208] sm:$0x3f]
  %v247 = vld [vmem:[%s0 + $0x210] sm:$0xff]
  %v248 = vld [vmem:[%s0 + $0x218] sm:$0xff]
  %v249 = vld [vmem:[%s0 + $0x220] sm:$0xff]
  %v250 = vld [vmem:[%s0 + $0x228] sm:$0x3f]
  %v251 = vld [vmem:[%s0 + $0x230] sm:$0x3f]
  %v252 = vld [vmem:[%s0 + $0x238] sm:$0x3f]
  %v253 = vld [vmem:[%s0 + $0x240] sm:$0xff]
  %v254 = vld [vmem:[%s0 + $0x248] sm:$0xff]
  %v255 = vld [vmem:[%s0 + $0x250] sm:$0xff]
  %v256 = vld [vmem:[%s0 + $0x258] sm:$0x3f]
  %v257 = vld [vmem:[%s0 + $0x260] sm:$0x3f]
  %v258 = vld [vmem:[%s0 + $0x268] sm:$0x3f]
  %v259 = vld [vmem:[%s0 + $0x270] sm:$0xff]
  %v260 = vld [vmem:[%s0 + $0x278] sm:$0xff]
  %v261 = vld [vmem:[%s0 + $0x280] sm:$0xff]
  %v262 = vld [vmem:[%s0 + $0x288] sm:$0x3f]
  %v263 = vld [vmem:[%s0 + $0x290] sm:$0x3f]
  %v264 = vld [vmem:[%s0 + $0x298] sm:$0x3f]
  %v265 = vmax.f32 %v181, 0.0
  %v266 = vmax.f32 %v182, 0.0
  %v267 = vmax.f32 %v183, 0.0
  %v268 = vmax.f32 %v184, 0.0
  %v269 = vmax.f32 %v185, 0.0
  %v270 = vmax.f32 %v186, 0.0
  %v271 = vmax.f32 %v187, 0.0
  %v272 = vmax.f32 %v188, 0.0
  %v273 = vmax.f32 %v189, 0.0
  %v274 = vmax.f32 %v190, 0.0
  %v275 = vmax.f32 %v191, 0.0
  %v276 = vmax.f32 %v192, 0.0
  %v277 = vmax.f32 %v193, 0.0
  %v278 = vmax.f32 %v194, 0.0
  %v279 = vmax.f32 %v195, 0.0
  %v280 = vmax.f32 %v196, 0.0
  %v281 = vmax.f32 %v197, 0.0
  %v282 = vmax.f32 %v198, 0.0
  %v283 = vmax.f32 %v199, 0.0
  %v284 = vmax.f32 %v200, 0.0
  %v285 = vmax.f32 %v201, 0.0
  %v286 = vmax.f32 %v202, 0.0
  %v287 = vmax.f32 %v203, 0.0
  %v288 = vmax.f32 %v204, 0.0
  %v289 = vmax.f32 %v205, 0.0
  %v290 = vmax.f32 %v206, 0.0
  %v291 = vmax.f32 %v207, 0.0
  %v292 = vmax.f32 %v208, 0.0
  %v293 = vmax.f32 %v209, 0.0
  %v294 = vmax.f32 %v210, 0.0
  %v295 = vmax.f32 %v211, 0.0
  %v296 = vmax.f32 %v212, 0.0
  %v297 = vmax.f32 %v213, 0.0
  %v298 = vmax.f32 %v214, 0.0
  %v299 = vmax.f32 %v215, 0.0
  %v300 = vmax.f32 %v216, 0.0
  %v301 = vmax.f32 %v217, 0.0
  %v302 = vmax.f32 %v218, 0.0
  %v303 = vmax.f32 %v219, 0.0
  %v304 = vmax.f32 %v220, 0.0
  %v305 = vmax.f32 %v221, 0.0
  %v306 = vmax.f32 %v222, 0.0
  %v307 = vmax.f32 %v223, 0.0
  %v308 = vmax.f32 %v224, 0.0
  %v309 = vmax.f32 %v225, 0.0
  %v310 = vmax.f32 %v226, 0.0
  %v311 = vmax.f32 %v227, 0.0
  %v312 = vmax.f32 %v228, 0.0
  %v313 = vmax.f32 %v229, 0.0
  %v314 = vmax.f32 %v230, 0.0
  %v315 = vmax.f32 %v231, 0.0
  %v316 = vmax.f32 %v232, 0.0
  %v317 = vmax.f32 %v233, 0.0
  %v318 = vmax.f32 %v234, 0.0
  %v319 = vmax.f32 %v235, 0.0
  %v320 = vmax.f32 %v236, 0.0
  %v321 = vmax.f32 %v237, 0.0
  %v322 = vmax.f32 %v238, 0.0
  %v323 = vmax.f32 %v239, 0.0
  %v324 = vmax.f32 %v240, 0.0
  %v325 = vmax.f32 %v241, 0.0
  %v326 = vmax.f32 %v242, 0.0
  %v327 = vmax.f32 %v243, 0.0
  %v328 = vmax.f32 %v244, 0.0
  %v329 = vmax.f32 %v245, 0.0
  %v330 = vmax.f32 %v246, 0.0
  %v331 = vmax.f32 %v247, 0.0
  %v332 = vmax.f32 %v248, 0.0
  %v333 = vmax.f32 %v249, 0.0
  %v334 = vmax.f32 %v250, 0.0
  %v335 = vmax.f32 %v251, 0.0
  %v336 = vmax.f32 %v252, 0.0
  %v337 = vmax.f32 %v253, 0.0
  %v338 = vmax.f32 %v254, 0.0
  %v339 = vmax.f32 %v255, 0.0
  %v340 = vmax.f32 %v256, 0.0
  %v341 = vmax.f32 %v257, 0.0
  %v342 = vmax.f32 %v258, 0.0
  %v343 = vmax.f32 %v259, 0.0
  %v344 = vmax.f32 %v260, 0.0
  %v345 = vmax.f32 %v261, 0.0
  %v346 = vmax.f32 %v262, 0.0
  %v347 = vmax.f32 %v263, 0.0
  %v348 = vmax.f32 %v264, 0.0
  %vm433 = vcmask 1041408
  %v434 = vrot.slane %v265, 6
  %v435 = vrot.slane %v266, 6
  %v436 = vrot.slane %v267, 6
  %v437 = vrot.slane %v268, 6
  %v438 = vsel %vm433, %v434, %v437
  %v439 = vrot.slane %v269, 6
  %v440 = vsel %vm433, %v435, %v439
  %v441 = vrot.slane %v270, 6
  %v442 = vsel %vm433, %v436, %v441
  %v443 = vrot.slane %v271, 6
  %v444 = vrot.slane %v272, 6
  %v445 = vrot.slane %v273, 6
  %v446 = vrot.slane %v274, 6
  %v447 = vsel %vm433, %v443, %v446
  %v448 = vrot.slane %v275, 6
  %v449 = vsel %vm433, %v444, %v448
  %v450 = vrot.slane %v276, 6
  %v451 = vsel %vm433, %v445, %v450
  %v452 = vrot.slane %v277, 6
  %v453 = vrot.slane %v278, 6
  %v454 = vrot.slane %v279, 6
  %v455 = vrot.slane %v280, 6
  %v456 = vsel %vm433, %v452, %v455
  %v457 = vrot.slane %v281, 6
  %v458 = vsel %vm433, %v453, %v457
  %v459 = vrot.slane %v282, 6
  %v460 = vsel %vm433, %v454, %v459
  %v461 = vrot.slane %v283, 6
  %v462 = vrot.slane %v284, 6
  %v463 = vrot.slane %v285, 6
  %v464 = vrot.slane %v286, 6
  %v465 = vsel %vm433, %v461, %v464
  %v466 = vrot.slane %v287, 6
  %v467 = vsel %vm433, %v462, %v466
  %v468 = vrot.slane %v288, 6
  %v469 = vsel %vm433, %v463, %v468
  %v470 = vrot.slane %v289, 6
  %v471 = vrot.slane %v290, 6
  %v472 = vrot.slane %v291, 6
  %v473 = vrot.slane %v292, 6
  %v474 = vsel %vm433, %v470, %v473
  %v475 = vrot.slane %v293, 6
  %v476 = vsel %vm433, %v471, %v475
  %v477 = vrot.slane %v294, 6
  %v478 = vsel %vm433, %v472, %v477
  %v479 = vrot.slane %v295, 6
  %v480 = vrot.slane %v296, 6
  %v481 = vrot.slane %v297, 6
  %v482 = vrot.slane %v298, 6
  %v483 = vsel %vm433, %v479, %v482
  %v484 = vrot.slane %v299, 6
  %v485 = vsel %vm433, %v480, %v484
  %v486 = vrot.slane %v300, 6
  %v487 = vsel %vm433, %v481, %v486
  %v488 = vrot.slane %v301, 6
  %v489 = vrot.slane %v302, 6
  %v490 = vrot.slane %v303, 6
  %v491 = vrot.slane %v304, 6
  %v492 = vsel %vm433, %v488, %v491
  %v493 = vrot.slane %v305, 6
  %v494 = vsel %vm433, %v489, %v493
  %v495 = vrot.slane %v306, 6
  %v496 = vsel %vm433, %v490, %v495
  %v497 = vrot.slane %v307, 6
  %v498 = vrot.slane %v308, 6
  %v499 = vrot.slane %v309, 6
  %v500 = vrot.slane %v310, 6
  %v501 = vsel %vm433, %v497, %v500
  %v502 = vrot.slane %v311, 6
  %v503 = vsel %vm433, %v498, %v502
  %v504 = vrot.slane %v312, 6
  %v505 = vsel %vm433, %v499, %v504
  %v506 = vrot.slane %v313, 6
  %v507 = vrot.slane %v314, 6
  %v508 = vrot.slane %v315, 6
  %v509 = vrot.slane %v316, 6
  %v510 = vsel %vm433, %v506, %v509
  %v511 = vrot.slane %v317, 6
  %v512 = vsel %vm433, %v507, %v511
  %v513 = vrot.slane %v318, 6
  %v514 = vsel %vm433, %v508, %v513
  %v515 = vrot.slane %v319, 6
  %v516 = vrot.slane %v320, 6
  %v517 = vrot.slane %v321, 6
  %v518 = vrot.slane %v322, 6
  %v519 = vsel %vm433, %v515, %v518
  %v520 = vrot.slane %v323, 6
  %v521 = vsel %vm433, %v516, %v520
  %v522 = vrot.slane %v324, 6
  %v523 = vsel %vm433, %v517, %v522
  %v524 = vrot.slane %v325, 6
  %v525 = vrot.slane %v326, 6
  %v526 = vrot.slane %v327, 6
  %v527 = vrot.slane %v328, 6
  %v528 = vsel %vm433, %v524, %v527
  %v529 = vrot.slane %v329, 6
  %v530 = vsel %vm433, %v525, %v529
  %v531 = vrot.slane %v330, 6
  %v532 = vsel %vm433, %v526, %v531
  %v533 = vrot.slane %v331, 6
  %v534 = vrot.slane %v332, 6
  %v535 = vrot.slane %v333, 6
  %v536 = vrot.slane %v334, 6
  %v537 = vsel %vm433, %v533, %v536
  %v538 = vrot.slane %v335, 6
  %v539 = vsel %vm433, %v534, %v538
  %v540 = vrot.slane %v336, 6
  %v541 = vsel %vm433, %v535, %v540
  %v542 = vrot.slane %v337, 6
  %v543 = vrot.slane %v338, 6
  %v544 = vrot.slane %v339, 6
  %v545 = vrot.slane %v340, 6
  %v546 = vsel %vm433, %v542, %v545
  %v547 = vrot.slane %v341, 6
  %v548 = vsel %vm433, %v543, %v547
  %v549 = vrot.slane %v342, 6
  %v550 = vsel %vm433, %v544, %v549
  %v551 = vrot.slane %v343, 6
  %v552 = vrot.slane %v344, 6
  %v553 = vrot.slane %v345, 6
  %v554 = vrot.slane %v346, 6
  %v555 = vsel %vm433, %v551, %v554
  %v556 = vrot.slane %v347, 6
  %v557 = vsel %vm433, %v552, %v556
  %v558 = vrot.slane %v348, 6
  %v559 = vsel %vm433, %v553, %v558
  %s644 = scalar_lea.vmem [#allocation2], 144
  %645 = vst [vmem:[%s644] sm:$0xfc] %v434
  %646 = vst [vmem:[%s644 + $0x8] sm:$0xfc] %v435
  %vm647 = vcmask 261122
  %648 = vst.msk [vmem:[%s644 + $0x10] sm:$0xfc] %vm647, %v436
  %649 = vst [vmem:[%s644 + $0x18] sm:$0xff] %v438
  %650 = vst [vmem:[%s644 + $0x20] sm:$0xff] %v440
  %651 = vst.msk [vmem:[%s644 + $0x28] sm:$0xff] %vm19, %v442
  %652 = vst [vmem:[%s644 + $0x48] sm:$0xfc] %v443
  %653 = vst [vmem:[%s644 + $0x50] sm:$0xfc] %v444
  %654 = vst.msk [vmem:[%s644 + $0x58] sm:$0xfc] %vm647, %v445
  %655 = vst [vmem:[%s644 + $0x60] sm:$0xff] %v447
  %656 = vst [vmem:[%s644 + $0x68] sm:$0xff] %v449
  %657 = vst.msk [vmem:[%s644 + $0x70] sm:$0xff] %vm19, %v451
  %658 = vst [vmem:[%s644 + $0x90] sm:$0xfc] %v452
  %659 = vst [vmem:[%s644 + $0x98] sm:$0xfc] %v453
  %660 = vst.msk [vmem:[%s644 + $0xa0] sm:$0xfc] %vm647, %v454
  %661 = vst [vmem:[%s644 + $0xa8] sm:$0xff] %v456
  %662 = vst [vmem:[%s644 + $0xb0] sm:$0xff] %v458
  %663 = vst.msk [vmem:[%s644 + $0xb8] sm:$0xff] %vm19, %v460
  %664 = vst [vmem:[%s644 + $0xd8] sm:$0xfc] %v461
  %665 = vst [vmem:[%s644 + $0xe0] sm:$0xfc] %v462
  %666 = vst.msk [vmem:[%s644 + $0xe8] sm:$0xfc] %vm647, %v463
  %667 = vst [vmem:[%s644 + $0xf0] sm:$0xff] %v465
  %668 = vst [vmem:[%s644 + $0xf8] sm:$0xff] %v467
  %669 = vst.msk [vmem:[%s644 + $0x100] sm:$0xff] %vm19, %v469
  %670 = vst [vmem:[%s644 + $0x120] sm:$0xfc] %v470
  %671 = vst [vmem:[%s644 + $0x128] sm:$0xfc] %v471
  %672 = vst.msk [vmem:[%s644 + $0x130] sm:$0xfc] %vm647, %v472
  %673 = vst [vmem:[%s644 + $0x138] sm:$0xff] %v474
  %674 = vst [vmem:[%s644 + $0x140] sm:$0xff] %v476
  %675 = vst.msk [vmem:[%s644 + $0x148] sm:$0xff] %vm19, %v478
  %676 = vst [vmem:[%s644 + $0x168] sm:$0xfc] %v479
  %677 = vst [vmem:[%s644 + $0x170] sm:$0xfc] %v480
  %678 = vst.msk [vmem:[%s644 + $0x178] sm:$0xfc] %vm647, %v481
  %679 = vst [vmem:[%s644 + $0x180] sm:$0xff] %v483
  %680 = vst [vmem:[%s644 + $0x188] sm:$0xff] %v485
  %681 = vst.msk [vmem:[%s644 + $0x190] sm:$0xff] %vm19, %v487
  %682 = vst [vmem:[%s644 + $0x1b0] sm:$0xfc] %v488
  %683 = vst [vmem:[%s644 + $0x1b8] sm:$0xfc] %v489
  %684 = vst.msk [vmem:[%s644 + $0x1c0] sm:$0xfc] %vm647, %v490
  %685 = vst [vmem:[%s644 + $0x1c8] sm:$0xff] %v492
  %686 = vst [vmem:[%s644 + $0x1d0] sm:$0xff] %v494
  %687 = vst.msk [vmem:[%s644 + $0x1d8] sm:$0xff] %vm19, %v496
  %688 = vst [vmem:[%s644 + $0x1f8] sm:$0xfc] %v497
  %689 = vst [vmem:[%s644 + $0x200] sm:$0xfc] %v498
  %690 = vst.msk [vmem:[%s644 + $0x208] sm:$0xfc] %vm647, %v499
  %691 = vst [vmem:[%s644 + $0x210] sm:$0xff] %v501
  %692 = vst [vmem:[%s644 + $0x218] sm:$0xff] %v503
  %693 = vst.msk [vmem:[%s644 + $0x220] sm:$0xff] %vm19, %v505
  %694 = vst [vmem:[%s644 + $0x240] sm:$0xfc] %v506
  %695 = vst [vmem:[%s644 + $0x248] sm:$0xfc] %v507
  %696 = vst.msk [vmem:[%s644 + $0x250] sm:$0xfc] %vm647, %v508
  %697 = vst [vmem:[%s644 + $0x258] sm:$0xff] %v510
  %698 = vst [vmem:[%s644 + $0x260] sm:$0xff] %v512
  %699 = vst.msk [vmem:[%s644 + $0x268] sm:$0xff] %vm19, %v514
  %700 = vst [vmem:[%s644 + $0x288] sm:$0xfc] %v515
  %701 = vst [vmem:[%s644 + $0x290] sm:$0xfc] %v516
  %702 = vst.msk [vmem:[%s644 + $0x298] sm:$0xfc] %vm647, %v517
  %703 = vst [vmem:[%s644 + $0x2a0] sm:$0xff] %v519
  %704 = vst [vmem:[%s644 + $0x2a8] sm:$0xff] %v521
  %705 = vst.msk [vmem:[%s644 + $0x2b0] sm:$0xff] %vm19, %v523
  %706 = vst [vmem:[%s644 + $0x2d0] sm:$0xfc] %v524
  %707 = vst [vmem:[%s644 + $0x2d8] sm:$0xfc] %v525
  %708 = vst.msk [vmem:[%s644 + $0x2e0] sm:$0xfc] %vm647, %v526
  %709 = vst [vmem:[%s644 + $0x2e8] sm:$0xff] %v528
  %710 = vst [vmem:[%s644 + $0x2f0] sm:$0xff] %v530
  %711 = vst.msk [vmem:[%s644 + $0x2f8] sm:$0xff] %vm19, %v532
  %712 = vst [vmem:[%s644 + $0x318] sm:$0xfc] %v533
  %713 = vst [vmem:[%s644 + $0x320] sm:$0xfc] %v534
  %714 = vst.msk [vmem:[%s644 + $0x328] sm:$0xfc] %vm647, %v535
  %715 = vst [vmem:[%s644 + $0x330] sm:$0xff] %v537
  %716 = vst [vmem:[%s644 + $0x338] sm:$0xff] %v539
  %717 = vst.msk [vmem:[%s644 + $0x340] sm:$0xff] %vm19, %v541
  %718 = vst [vmem:[%s644 + $0x360] sm:$0xfc] %v542
  %719 = vst [vmem:[%s644 + $0x368] sm:$0xfc] %v543
  %720 = vst.msk [vmem:[%s644 + $0x370] sm:$0xfc] %vm647, %v544
  %721 = vst [vmem:[%s644 + $0x378] sm:$0xff] %v546
  %722 = vst [vmem:[%s644 + $0x380] sm:$0xff] %v548
  %723 = vst.msk [vmem:[%s644 + $0x388] sm:$0xff] %vm19, %v550
  %724 = vst [vmem:[%s644 + $0x3a8] sm:$0xfc] %v551
  %725 = vst [vmem:[%s644 + $0x3b0] sm:$0xfc] %v552
  %726 = vst.msk [vmem:[%s644 + $0x3b8] sm:$0xfc] %vm647, %v553
  %727 = vst [vmem:[%s644 + $0x3c0] sm:$0xff] %v555
  %728 = vst [vmem:[%s644 + $0x3c8] sm:$0xff] %v557
  %729 = vst.msk [vmem:[%s644 + $0x3d0] sm:$0xff] %vm19, %v559
  %v730 = vld [vmem:[#allocation2] sm:$0xff]
  %v731 = vld [vmem:[#allocation2 + $0x8] sm:$0xff]
  %v732 = vld [vmem:[#allocation2 + $0x10] sm:$0xff]
  %v733 = vld [vmem:[#allocation2 + $0x18] sm:$0xff]
  %v734 = vld [vmem:[#allocation2 + $0x20] sm:$0xff]
  %v735 = vld [vmem:[#allocation2 + $0x28] sm:$0xff]
  %v736 = vld [vmem:[#allocation2 + $0x30] sm:$0x3]
  %v737 = vld [vmem:[#allocation2 + $0x38] sm:$0x3]
  %v738 = vld [vmem:[#allocation2 + $0x40] sm:$0x3]
  %v739 = vld [vmem:[#allocation2 + $0x48] sm:$0xff]
  %v740 = vld [vmem:[#allocation2 + $0x50] sm:$0xff]
  %v741 = vld [vmem:[#allocation2 + $0x58] sm:$0xff]
  %v742 = vld [vmem:[#allocation2 + $0x60] sm:$0xff]
  %v743 = vld [vmem:[#allocation2 + $0x68] sm:$0xff]
  %v744 = vld [vmem:[#allocation2 + $0x70] sm:$0xff]
  %v745 = vld [vmem:[#allocation2 + $0x78] sm:$0x3]
  %v746 = vld [vmem:[#allocation2 + $0x80] sm:$0x3]
  %v747 = vld [vmem:[#allocation2 + $0x88] sm:$0x3]
  %v748 = vld [vmem:[#allocation2 + $0x90] sm:$0xff]
  %v749 = vld [vmem:[#allocation2 + $0x98] sm:$0xff]
  %v750 = vld [vmem:[#allocation2 + $0xa0] sm:$0xff]
  %v751 = vld [vmem:[#allocation2 + $0xa8] sm:$0xff]
  %v752 = vld [vmem:[#allocation2 + $0xb0] sm:$0xff]
  %v753 = vld [vmem:[#allocation2 + $0xb8] sm:$0xff]
  %v754 = vld [vmem:[#allocation2 + $0xc0] sm:$0x3]
  %v755 = vld [vmem:[#allocation2 + $0xc8] sm:$0x3]
  %v756 = vld [vmem:[#allocation2 + $0xd0] sm:$0x3]
  %v757 = vld [vmem:[#allocation2 + $0xd8] sm:$0xff]
  %v758 = vld [vmem:[#allocation2 + $0xe0] sm:$0xff]
  %v759 = vld [vmem:[#allocation2 + $0xe8] sm:$0xff]
  %v760 = vld [vmem:[#allocation2 + $0xf0] sm:$0xff]
  %v761 = vld [vmem:[#allocation2 + $0xf8] sm:$0xff]
  %v762 = vld [vmem:[#allocation2 + $0x100] sm:$0xff]
  %v763 = vld [vmem:[#allocation2 + $0x108] sm:$0x3]
  %v764 = vld [vmem:[#allocation2 + $0x110] sm:$0x3]
  %v765 = vld [vmem:[#allocation2 + $0x118] sm:$0x3]
  %v766 = vld [vmem:[#allocation2 + $0x120] sm:$0xff]
  %v767 = vld [vmem:[#allocation2 + $0x128] sm:$0xff]
  %v768 = vld [vmem:[#allocation2 + $0x130] sm:$0xff]
  %v769 = vld [vmem:[#allocation2 + $0x138] sm:$0xff]
  %v770 = vld [vmem:[#allocation2 + $0x140] sm:$0xff]
  %v771 = vld [vmem:[#allocation2 + $0x148] sm:$0xff]
  %v772 = vld [vmem:[#allocation2 + $0x150] sm:$0x3]
  %v773 = vld [vmem:[#allocation2 + $0x158] sm:$0x3]
  %v774 = vld [vmem:[#allocation2 + $0x160] sm:$0x3]
  %v775 = vld [vmem:[#allocation2 + $0x168] sm:$0xff]
  %v776 = vld [vmem:[#allocation2 + $0x170] sm:$0xff]
  %v777 = vld [vmem:[#allocation2 + $0x178] sm:$0xff]
  %v778 = vld [vmem:[#allocation2 + $0x180] sm:$0xff]
  %v779 = vld [vmem:[#allocation2 + $0x188] sm:$0xff]
  %v780 = vld [vmem:[#allocation2 + $0x190] sm:$0xff]
  %v781 = vld [vmem:[#allocation2 + $0x198] sm:$0x3]
  %v782 = vld [vmem:[#allocation2 + $0x1a0] sm:$0x3]
  %v783 = vld [vmem:[#allocation2 + $0x1a8] sm:$0x3]
  %v784 = vld [vmem:[#allocation2 + $0x1b0] sm:$0xff]
  %v785 = vld [vmem:[#allocation2 + $0x1b8] sm:$0xff]
  %v786 = vld [vmem:[#allocation2 + $0x1c0] sm:$0xff]
  %v787 = vld [vmem:[#allocation2 + $0x1c8] sm:$0xff]
  %v788 = vld [vmem:[#allocation2 + $0x1d0] sm:$0xff]
  %v789 = vld [vmem:[#allocation2 + $0x1d8] sm:$0xff]
  %v790 = vld [vmem:[#allocation2 + $0x1e0] sm:$0x3]
  %v791 = vld [vmem:[#allocation2 + $0x1e8] sm:$0x3]
  %v792 = vld [vmem:[#allocation2 + $0x1f0] sm:$0x3]
  %v793 = vld [vmem:[#allocation2 + $0x1f8] sm:$0xff]
  %v794 = vld [vmem:[#allocation2 + $0x200] sm:$0xff]
  %v795 = vld [vmem:[#allocation2 + $0x208] sm:$0xff]
  %v796 = vld [vmem:[#allocation2 + $0x210] sm:$0xff]
  %v797 = vld [vmem:[#allocation2 + $0x218] sm:$0xff]
  %v798 = vld [vmem:[#allocation2 + $0x220] sm:$0xff]
  %v799 = vld [vmem:[#allocation2 + $0x228] sm:$0x3]
  %v800 = vld [vmem:[#allocation2 + $0x230] sm:$0x3]
  %v801 = vld [vmem:[#allocation2 + $0x238] sm:$0x3]
  %v802 = vld [vmem:[#allocation2 + $0x240] sm:$0xff]
  %v803 = vld [vmem:[#allocation2 + $0x248] sm:$0xff]
  %v804 = vld [vmem:[#allocation2 + $0x250] sm:$0xff]
  %v805 = vld [vmem:[#allocation2 + $0x258] sm:$0xff]
  %v806 = vld [vmem:[#allocation2 + $0x260] sm:$0xff]
  %v807 = vld [vmem:[#allocation2 + $0x268] sm:$0xff]
  %v808 = vld [vmem:[#allocation2 + $0x270] sm:$0x3]
  %v809 = vld [vmem:[#allocation2 + $0x278] sm:$0x3]
  %v810 = vld [vmem:[#allocation2 + $0x280] sm:$0x3]
  %v811 = vld [vmem:[#allocation2 + $0x288] sm:$0xff]
  %v812 = vld [vmem:[#allocation2 + $0x290] sm:$0xff]
  %v813 = vld [vmem:[#allocation2 + $0x298] sm:$0xff]
  %v814 = vld [vmem:[#allocation2 + $0x2a0] sm:$0xff]
  %v815 = vld [vmem:[#allocation2 + $0x2a8] sm:$0xff]
  %v816 = vld [vmem:[#allocation2 + $0x2b0] sm:$0xff]
  %v817 = vld [vmem:[#allocation2 + $0x2b8] sm:$0x3]
  %v818 = vld [vmem:[#allocation2 + $0x2c0] sm:$0x3]
  %v819 = vld [vmem:[#allocation2 + $0x2c8] sm:$0x3]
  %v820 = vld [vmem:[#allocation2 + $0x2d0] sm:$0xff]
  %v821 = vld [vmem:[#allocation2 + $0x2d8] sm:$0xff]
  %v822 = vld [vmem:[#allocation2 + $0x2e0] sm:$0xff]
  %v823 = vld [vmem:[#allocation2 + $0x2e8] sm:$0xff]
  %v824 = vld [vmem:[#allocation2 + $0x2f0] sm:$0xff]
  %v825 = vld [vmem:[#allocation2 + $0x2f8] sm:$0xff]
  %v826 = vld [vmem:[#allocation2 + $0x300] sm:$0x3]
  %v827 = vld [vmem:[#allocation2 + $0x308] sm:$0x3]
  %v828 = vld [vmem:[#allocation2 + $0x310] sm:$0x3]
  %v829 = vld [vmem:[#allocation2 + $0x318] sm:$0xff]
  %v830 = vld [vmem:[#allocation2 + $0x320] sm:$0xff]
  %v831 = vld [vmem:[#allocation2 + $0x328] sm:$0xff]
  %v832 = vld [vmem:[#allocation2 + $0x330] sm:$0xff]
  %v833 = vld [vmem:[#allocation2 + $0x338] sm:$0xff]
  %v834 = vld [vmem:[#allocation2 + $0x340] sm:$0xff]
  %v835 = vld [vmem:[#allocation2 + $0x348] sm:$0x3]
  %v836 = vld [vmem:[#allocation2 + $0x350] sm:$0x3]
  %v837 = vld [vmem:[#allocation2 + $0x358] sm:$0x3]
  %v838 = vld [vmem:[#allocation2 + $0x360] sm:$0xff]
  %v839 = vld [vmem:[#allocation2 + $0x368] sm:$0xff]
  %v840 = vld [vmem:[#allocation2 + $0x370] sm:$0xff]
  %v841 = vld [vmem:[#allocation2 + $0x378] sm:$0xff]
  %v842 = vld [vmem:[#allocation2 + $0x380] sm:$0xff]
  %v843 = vld [vmem:[#allocation2 + $0x388] sm:$0xff]
  %v844 = vld [vmem:[#allocation2 + $0x390] sm:$0x3]
  %v845 = vld [vmem:[#allocation2 + $0x398] sm:$0x3]
  %v846 = vld [vmem:[#allocation2 + $0x3a0] sm:$0x3]
  %v847 = vld [vmem:[#allocation2 + $0x3a8] sm:$0xff]
  %v848 = vld [vmem:[#allocation2 + $0x3b0] sm:$0xff]
  %v849 = vld [vmem:[#allocation2 + $0x3b8] sm:$0xff]
  %v850 = vld [vmem:[#allocation2 + $0x3c0] sm:$0xff]
  %v851 = vld [vmem:[#allocation2 + $0x3c8] sm:$0xff]
  %v852 = vld [vmem:[#allocation2 + $0x3d0] sm:$0xff]
  %v853 = vld [vmem:[#allocation2 + $0x3d8] sm:$0x3]
  %v854 = vld [vmem:[#allocation2 + $0x3e0] sm:$0x3]
  %v855 = vld [vmem:[#allocation2 + $0x3e8] sm:$0x3]
  %v856 = vld [vmem:[#allocation2 + $0x3f0] sm:$0xff]
  %v857 = vld [vmem:[#allocation2 + $0x3f8] sm:$0xff]
  %v858 = vld [vmem:[#allocation2 + $0x400] sm:$0xff]
  %v859 = vld [vmem:[#allocation2 + $0x408] sm:$0xff]
  %v860 = vld [vmem:[#allocation2 + $0x410] sm:$0xff]
  %v861 = vld [vmem:[#allocation2 + $0x418] sm:$0xff]
  %v862 = vld [vmem:[#allocation2 + $0x420] sm:$0x3]
  %v863 = vld [vmem:[#allocation2 + $0x428] sm:$0x3]
  %v864 = vld [vmem:[#allocation2 + $0x430] sm:$0x3]
  %v865 = vld [vmem:[#allocation2 + $0x438] sm:$0xff]
  %v866 = vld [vmem:[#allocation2 + $0x440] sm:$0xff]
  %v867 = vld [vmem:[#allocation2 + $0x448] sm:$0xff]
  %v868 = vld [vmem:[#allocation2 + $0x450] sm:$0xff]
  %v869 = vld [vmem:[#allocation2 + $0x458] sm:$0xff]
  %v870 = vld [vmem:[#allocation2 + $0x460] sm:$0xff]
  %v871 = vld [vmem:[#allocation2 + $0x468] sm:$0x3]
  %v872 = vld [vmem:[#allocation2 + $0x470] sm:$0x3]
  %v873 = vld [vmem:[#allocation2 + $0x478] sm:$0x3]
  %v874 = vld [vmem:[#allocation2 + $0x480] sm:$0xff]
  %v875 = vld [vmem:[#allocation2 + $0x488] sm:$0xff]
  %v876 = vld [vmem:[#allocation2 + $0x490] sm:$0xff]
  %v877 = vld [vmem:[#allocation2 + $0x498] sm:$0xff]
  %v878 = vld [vmem:[#allocation2 + $0x4a0] sm:$0xff]
  %v879 = vld [vmem:[#allocation2 + $0x4a8] sm:$0xff]
  %v880 = vld [vmem:[#allocation2 + $0x4b0] sm:$0x3]
  %v881 = vld [vmem:[#allocation2 + $0x4b8] sm:$0x3]
  %v882 = vld [vmem:[#allocation2 + $0x4c0] sm:$0x3]
  %v883 = vld [vmem:[#allocation2 + $0x4c8] sm:$0xff]
  %v884 = vld [vmem:[#allocation2 + $0x4d0] sm:$0xff]
  %v885 = vld [vmem:[#allocation2 + $0x4d8] sm:$0xff]
  %v886 = vld [vmem:[#allocation2 + $0x4e0] sm:$0xff]
  %v887 = vld [vmem:[#allocation2 + $0x4e8] sm:$0xff]
  %v888 = vld [vmem:[#allocation2 + $0x4f0] sm:$0xff]
  %v889 = vld [vmem:[#allocation2 + $0x4f8] sm:$0x3]
  %v890 = vld [vmem:[#allocation2 + $0x500] sm:$0x3]
  %v891 = vld [vmem:[#allocation2 + $0x508] sm:$0x3]
  %v892 = vld [vmem:[%s1] sm:$0xff]
  %v893 = vld [vmem:[%s1 + $0x8] sm:$0xff]
  %v894 = vld [vmem:[%s1 + $0x10] sm:$0xff]
  %v895 = vld [vmem:[%s1 + $0x18] sm:$0xff]
  %v896 = vld [vmem:[%s1 + $0x20] sm:$0xff]
  %v897 = vld [vmem:[%s1 + $0x28] sm:$0xff]
  %v898 = vld [vmem:[%s1 + $0x30] sm:$0xff]
  %v899 = vld [vmem:[%s1 + $0x38] sm:$0xff]
  %v900 = vld [vmem:[%s1 + $0x40] sm:$0xff]
  %v901 = vld [vmem:[%s1 + $0x48] sm:$0x1]
  %v902 = vld [vmem:[%s1 + $0x50] sm:$0x1]
  %v903 = vld [vmem:[%s1 + $0x58] sm:$0x1]
  %v904 = vlaneseq
  %v905 = vshrl.u32 %v904, 7
  %v906 = vsub.s32 0, %v905
  %v907 = vrot.slane %v892, %v906
  %v908 = vlaneseq
  %v909 = vshrl.u32 %v908, 7
  %v910 = vsub.s32 0, %v909
  %v911 = vrot.slane %v893, %v910
  %v912 = vlaneseq
  %v913 = vshrl.u32 %v912, 7
  %v914 = vsub.s32 0, %v913
  %v915 = vrot.slane %v894, %v914
  %v916 = vmul.f32 %v730, %v907
  %v917 = vmul.f32 %v731, %v911
  %v918 = vmul.f32 %v732, %v915
  %v919 = vmul.f32 %v733, %v907
  %v920 = vmul.f32 %v734, %v911
  %v921 = vmul.f32 %v735, %v915
  %v922 = vmul.f32 %v739, %v907
  %v923 = vmul.f32 %v740, %v911
  %v924 = vmul.f32 %v741, %v915
  %v925 = vmul.f32 %v742, %v907
  %v926 = vmul.f32 %v743, %v911
  %v927 = vmul.f32 %v744, %v915
  %v928 = vmul.f32 %v748, %v907
  %v929 = vmul.f32 %v749, %v911
  %v930 = vmul.f32 %v750, %v915
  %v931 = vmul.f32 %v751, %v907
  %v932 = vmul.f32 %v752, %v911
  %v933 = vmul.f32 %v753, %v915
  %v934 = vmul.f32 %v757, %v907
  %v935 = vmul.f32 %v758, %v911
  %v936 = vmul.f32 %v759, %v915
  %v937 = vmul.f32 %v760, %v907
  %v938 = vmul.f32 %v761, %v911
  %v939 = vmul.f32 %v762, %v915
  %v940 = vmul.f32 %v766, %v907
  %v941 = vmul.f32 %v767, %v911
  %v942 = vmul.f32 %v768, %v915
  %v943 = vmul.f32 %v769, %v907
  %v944 = vmul.f32 %v770, %v911
  %v945 = vmul.f32 %v771, %v915
  %v946 = vmul.f32 %v775, %v907
  %v947 = vmul.f32 %v776, %v911
  %v948 = vmul.f32 %v777, %v915
  %v949 = vmul.f32 %v778, %v907
  %v950 = vmul.f32 %v779, %v911
  %v951 = vmul.f32 %v780, %v915
  %v952 = vmul.f32 %v784, %v907
  %v953 = vmul.f32 %v785, %v911
  %v954 = vmul.f32 %v786, %v915
  %v955 = vmul.f32 %v787, %v907
  %v956 = vmul.f32 %v788, %v911
  %v957 = vmul.f32 %v789, %v915
  %v958 = vmul.f32 %v793, %v907
  %v959 = vmul.f32 %v794, %v911
  %v960 = vmul.f32 %v795, %v915
  %v961 = vmul.f32 %v796, %v907
  %v962 = vmul.f32 %v797, %v911
  %v963 = vmul.f32 %v798, %v915
  %v964 = vmul.f32 %v802, %v907
  %v965 = vmul.f32 %v803, %v911
  %v966 = vmul.f32 %v804, %v915
  %v967 = vmul.f32 %v805, %v907
  %v968 = vmul.f32 %v806, %v911
  %v969 = vmul.f32 %v807, %v915
  %v970 = vmul.f32 %v811, %v907
  %v971 = vmul.f32 %v812, %v911
  %v972 = vmul.f32 %v813, %v915
  %v973 = vmul.f32 %v814, %v907
  %v974 = vmul.f32 %v815, %v911
  %v975 = vmul.f32 %v816, %v915
  %v976 = vmul.f32 %v820, %v907
  %v977 = vmul.f32 %v821, %v911
  %v978 = vmul.f32 %v822, %v915
  %v979 = vmul.f32 %v823, %v907
  %v980 = vmul.f32 %v824, %v911
  %v981 = vmul.f32 %v825, %v915
  %v982 = vmul.f32 %v829, %v907
  %v983 = vmul.f32 %v830, %v911
  %v984 = vmul.f32 %v831, %v915
  %v985 = vmul.f32 %v832, %v907
  %v986 = vmul.f32 %v833, %v911
  %v987 = vmul.f32 %v834, %v915
  %v988 = vmul.f32 %v838, %v907
  %v989 = vmul.f32 %v839, %v911
  %v990 = vmul.f32 %v840, %v915
  %v991 = vmul.f32 %v841, %v907
  %v992 = vmul.f32 %v842, %v911
  %v993 = vmul.f32 %v843, %v915
  %v994 = vmul.f32 %v847, %v907
  %v995 = vmul.f32 %v848, %v911
  %v996 = vmul.f32 %v849, %v915
  %v997 = vmul.f32 %v850, %v907
  %v998 = vmul.f32 %v851, %v911
  %v999 = vmul.f32 %v852, %v915
  %v1000 = vadd.f32 %v916, 0.0
  %v1001 = vadd.f32 %v917, 0.0
  %v1002 = vadd.f32 %v918, 0.0
  %v1003 = vadd.f32 %v919, 0.0
  %v1004 = vadd.f32 %v920, 0.0
  %v1005 = vadd.f32 %v921, 0.0
  %v1006 = vadd.f32 %v922, 0.0
  %v1007 = vadd.f32 %v923, 0.0
  %v1008 = vadd.f32 %v924, 0.0
  %v1009 = vadd.f32 %v925, 0.0
  %v1010 = vadd.f32 %v926, 0.0
  %v1011 = vadd.f32 %v927, 0.0
  %v1012 = vadd.f32 %v928, 0.0
  %v1013 = vadd.f32 %v929, 0.0
  %v1014 = vadd.f32 %v930, 0.0
  %v1015 = vadd.f32 %v931, 0.0
  %v1016 = vadd.f32 %v932, 0.0
  %v1017 = vadd.f32 %v933, 0.0
  %v1018 = vadd.f32 %v934, 0.0
  %v1019 = vadd.f32 %v935, 0.0
  %v1020 = vadd.f32 %v936, 0.0
  %v1021 = vadd.f32 %v937, 0.0
  %v1022 = vadd.f32 %v938, 0.0
  %v1023 = vadd.f32 %v939, 0.0
  %v1024 = vadd.f32 %v940, 0.0
  %v1025 = vadd.f32 %v941, 0.0
  %v1026 = vadd.f32 %v942, 0.0
  %v1027 = vadd.f32 %v943, 0.0
  %v1028 = vadd.f32 %v944, 0.0
  %v1029 = vadd.f32 %v945, 0.0
  %v1030 = vadd.f32 %v946, 0.0
  %v1031 = vadd.f32 %v947, 0.0
  %v1032 = vadd.f32 %v948, 0.0
  %v1033 = vadd.f32 %v949, 0.0
  %v1034 = vadd.f32 %v950, 0.0
  %v1035 = vadd.f32 %v951, 0.0
  %v1036 = vadd.f32 %v952, 0.0
  %v1037 = vadd.f32 %v953, 0.0
  %v1038 = vadd.f32 %v954, 0.0
  %v1039 = vadd.f32 %v955, 0.0
  %v1040 = vadd.f32 %v956, 0.0
  %v1041 = vadd.f32 %v957, 0.0
  %v1042 = vadd.f32 %v958, 0.0
  %v1043 = vadd.f32 %v959, 0.0
  %v1044 = vadd.f32 %v960, 0.0
  %v1045 = vadd.f32 %v961, 0.0
  %v1046 = vadd.f32 %v962, 0.0
  %v1047 = vadd.f32 %v963, 0.0
  %v1048 = vadd.f32 %v964, 0.0
  %v1049 = vadd.f32 %v965, 0.0
  %v1050 = vadd.f32 %v966, 0.0
  %v1051 = vadd.f32 %v967, 0.0
  %v1052 = vadd.f32 %v968, 0.0
  %v1053 = vadd.f32 %v969, 0.0
  %v1054 = vadd.f32 %v970, 0.0
  %v1055 = vadd.f32 %v971, 0.0
  %v1056 = vadd.f32 %v972, 0.0
  %v1057 = vadd.f32 %v973, 0.0
  %v1058 = vadd.f32 %v974, 0.0
  %v1059 = vadd.f32 %v975, 0.0
  %v1060 = vadd.f32 %v976, 0.0
  %v1061 = vadd.f32 %v977, 0.0
  %v1062 = vadd.f32 %v978, 0.0
  %v1063 = vadd.f32 %v979, 0.0
  %v1064 = vadd.f32 %v980, 0.0
  %v1065 = vadd.f32 %v981, 0.0
  %v1066 = vadd.f32 %v982, 0.0
  %v1067 = vadd.f32 %v983, 0.0
  %v1068 = vadd.f32 %v984, 0.0
  %v1069 = vadd.f32 %v985, 0.0
  %v1070 = vadd.f32 %v986, 0.0
  %v1071 = vadd.f32 %v987, 0.0
  %v1072 = vadd.f32 %v988, 0.0
  %v1073 = vadd.f32 %v989, 0.0
  %v1074 = vadd.f32 %v990, 0.0
  %v1075 = vadd.f32 %v991, 0.0
  %v1076 = vadd.f32 %v992, 0.0
  %v1077 = vadd.f32 %v993, 0.0
  %v1078 = vadd.f32 %v994, 0.0
  %v1079 = vadd.f32 %v995, 0.0
  %v1080 = vadd.f32 %v996, 0.0
  %v1081 = vadd.f32 %v997, 0.0
  %v1082 = vadd.f32 %v998, 0.0
  %v1083 = vadd.f32 %v999, 0.0
  %v1084 = vlaneseq
  %v1085 = vshrl.u32 %v1084, 7
  %v1086 = vsub.s32 5, %v1085
  %v1087 = vrot.slane %v892, %v1086
  %v1088 = vlaneseq
  %v1089 = vshrl.u32 %v1088, 7
  %v1090 = vsub.s32 5, %v1089
  %v1091 = vrot.slane %v893, %v1090
  %v1092 = vlaneseq
  %v1093 = vshrl.u32 %v1092, 7
  %v1094 = vsub.s32 5, %v1093
  %v1095 = vrot.slane %v894, %v1094
  %v1096 = vmul.f32 %v739, %v1087
  %v1097 = vmul.f32 %v740, %v1091
  %v1098 = vmul.f32 %v741, %v1095
  %v1099 = vmul.f32 %v742, %v1087
  %v1100 = vmul.f32 %v743, %v1091
  %v1101 = vmul.f32 %v744, %v1095
  %v1102 = vmul.f32 %v748, %v1087
  %v1103 = vmul.f32 %v749, %v1091
  %v1104 = vmul.f32 %v750, %v1095
  %v1105 = vmul.f32 %v751, %v1087
  %v1106 = vmul.f32 %v752, %v1091
  %v1107 = vmul.f32 %v753, %v1095
  %v1108 = vmul.f32 %v757, %v1087
  %v1109 = vmul.f32 %v758, %v1091
  %v1110 = vmul.f32 %v759, %v1095
  %v1111 = vmul.f32 %v760, %v1087
  %v1112 = vmul.f32 %v761, %v1091
  %v1113 = vmul.f32 %v762, %v1095
  %v1114 = vmul.f32 %v766, %v1087
  %v1115 = vmul.f32 %v767, %v1091
  %v1116 = vmul.f32 %v768, %v1095
  %v1117 = vmul.f32 %v769, %v1087
  %v1118 = vmul.f32 %v770, %v1091
  %v1119 = vmul.f32 %v771, %v1095
  %v1120 = vmul.f32 %v775, %v1087
  %v1121 = vmul.f32 %v776, %v1091
  %v1122 = vmul.f32 %v777, %v1095
  %v1123 = vmul.f32 %v778, %v1087
  %v1124 = vmul.f32 %v779, %v1091
  %v1125 = vmul.f32 %v780, %v1095
  %v1126 = vmul.f32 %v784, %v1087
  %v1127 = vmul.f32 %v785, %v1091
  %v1128 = vmul.f32 %v786, %v1095
  %v1129 = vmul.f32 %v787, %v1087
  %v1130 = vmul.f32 %v788, %v1091
  %v1131 = vmul.f32 %v789, %v1095
  %v1132 = vmul.f32 %v793, %v1087
  %v1133 = vmul.f32 %v794, %v1091
  %v1134 = vmul.f32 %v795, %v1095
  %v1135 = vmul.f32 %v796, %v1087
  %v1136 = vmul.f32 %v797, %v1091
  %v1137 = vmul.f32 %v798, %v1095
  %v1138 = vmul.f32 %v802, %v1087
  %v1139 = vmul.f32 %v803, %v1091
  %v1140 = vmul.f32 %v804, %v1095
  %v1141 = vmul.f32 %v805, %v1087
  %v1142 = vmul.f32 %v806, %v1091
  %v1143 = vmul.f32 %v807, %v1095
  %v1144 = vmul.f32 %v811, %v1087
  %v1145 = vmul.f32 %v812, %v1091
  %v1146 = vmul.f32 %v813, %v1095
  %v1147 = vmul.f32 %v814, %v1087
  %v1148 = vmul.f32 %v815, %v1091
  %v1149 = vmul.f32 %v816, %v1095
  %v1150 = vmul.f32 %v820, %v1087
  %v1151 = vmul.f32 %v821, %v1091
  %v1152 = vmul.f32 %v822, %v1095
  %v1153 = vmul.f32 %v823, %v1087
  %v1154 = vmul.f32 %v824, %v1091
  %v1155 = vmul.f32 %v825, %v1095
  %v1156 = vmul.f32 %v829, %v1087
  %v1157 = vmul.f32 %v830, %v1091
  %v1158 = vmul.f32 %v831, %v1095
  %v1159 = vmul.f32 %v832, %v1087
  %v1160 = vmul.f32 %v833, %v1091
  %v1161 = vmul.f32 %v834, %v1095
  %v1162 = vmul.f32 %v838, %v1087
  %v1163 = vmul.f32 %v839, %v1091
  %v1164 = vmul.f32 %v840, %v1095
  %v1165 = vmul.f32 %v841, %v1087
  %v1166 = vmul.f32 %v842, %v1091
  %v1167 = vmul.f32 %v843, %v1095
  %v1168 = vmul.f32 %v847, %v1087
  %v1169 = vmul.f32 %v848, %v1091
  %v1170 = vmul.f32 %v849, %v1095
  %v1171 = vmul.f32 %v850, %v1087
  %v1172 = vmul.f32 %v851, %v1091
  %v1173 = vmul.f32 %v852, %v1095
  %v1174 = vmul.f32 %v856, %v1087
  %v1175 = vmul.f32 %v857, %v1091
  %v1176 = vmul.f32 %v858, %v1095
  %v1177 = vmul.f32 %v859, %v1087
  %v1178 = vmul.f32 %v860, %v1091
  %v1179 = vmul.f32 %v861, %v1095
  %v1180 = vadd.f32 %v1000, %v1096
  %v1181 = vadd.f32 %v1001, %v1097
  %v1182 = vadd.f32 %v1002, %v1098
  %v1183 = vadd.f32 %v1003, %v1099
  %v1184 = vadd.f32 %v1004, %v1100
  %v1185 = vadd.f32 %v1005, %v1101
  %v1186 = vadd.f32 %v1006, %v1102
  %v1187 = vadd.f32 %v1007, %v1103
  %v1188 = vadd.f32 %v1008, %v1104
  %v1189 = vadd.f32 %v1009, %v1105
  %v1190 = vadd.f32 %v1010, %v1106
  %v1191 = vadd.f32 %v1011, %v1107
  %v1192 = vadd.f32 %v1012, %v1108
  %v1193 = vadd.f32 %v1013, %v1109
  %v1194 = vadd.f32 %v1014, %v1110
  %v1195 = vadd.f32 %v1015, %v1111
  %v1196 = vadd.f32 %v1016, %v1112
  %v1197 = vadd.f32 %v1017, %v1113
  %v1198 = vadd.f32 %v1018, %v1114
  %v1199 = vadd.f32 %v1019, %v1115
  %v1200 = vadd.f32 %v1020, %v1116
  %v1201 = vadd.f32 %v1021, %v1117
  %v1202 = vadd.f32 %v1022, %v1118
  %v1203 = vadd.f32 %v1023, %v1119
  %v1204 = vadd.f32 %v1024, %v1120
  %v1205 = vadd.f32 %v1025, %v1121
  %v1206 = vadd.f32 %v1026, %v1122
  %v1207 = vadd.f32 %v1027, %v1123
  %v1208 = vadd.f32 %v1028, %v1124
  %v1209 = vadd.f32 %v1029, %v1125
  %v1210 = vadd.f32 %v1030, %v1126
  %v1211 = vadd.f32 %v1031, %v1127
  %v1212 = vadd.f32 %v1032, %v1128
  %v1213 = vadd.f32 %v1033, %v1129
  %v1214 = vadd.f32 %v1034, %v1130
  %v1215 = vadd.f32 %v1035, %v1131
  %v1216 = vadd.f32 %v1036, %v1132
  %v1217 = vadd.f32 %v1037, %v1133
  %v1218 = vadd.f32 %v1038, %v1134
  %v1219 = vadd.f32 %v1039, %v1135
  %v1220 = vadd.f32 %v1040, %v1136
  %v1221 = vadd.f32 %v1041, %v1137
  %v1222 = vadd.f32 %v1042, %v1138
  %v1223 = vadd.f32 %v1043, %v1139
  %v1224 = vadd.f32 %v1044, %v1140
  %v1225 = vadd.f32 %v1045, %v1141
  %v1226 = vadd.f32 %v1046, %v1142
  %v1227 = vadd.f32 %v1047, %v1143
  %v1228 = vadd.f32 %v1048, %v1144
  %v1229 = vadd.f32 %v1049, %v1145
  %v1230 = vadd.f32 %v1050, %v1146
  %v1231 = vadd.f32 %v1051, %v1147
  %v1232 = vadd.f32 %v1052, %v1148
  %v1233 = vadd.f32 %v1053, %v1149
  %v1234 = vadd.f32 %v1054, %v1150
  %v1235 = vadd.f32 %v1055, %v1151
  %v1236 = vadd.f32 %v1056, %v1152
  %v1237 = vadd.f32 %v1057, %v1153
  %v1238 = vadd.f32 %v1058, %v1154
  %v1239 = vadd.f32 %v1059, %v1155
  %v1240 = vadd.f32 %v1060, %v1156
  %v1241 = vadd.f32 %v1061, %v1157
  %v1242 = vadd.f32 %v1062, %v1158
  %v1243 = vadd.f32 %v1063, %v1159
  %v1244 = vadd.f32 %v1064, %v1160
  %v1245 = vadd.f32 %v1065, %v1161
  %v1246 = vadd.f32 %v1066, %v1162
  %v1247 = vadd.f32 %v1067, %v1163
  %v1248 = vadd.f32 %v1068, %v1164
  %v1249 = vadd.f32 %v1069, %v1165
  %v1250 = vadd.f32 %v1070, %v1166
  %v1251 = vadd.f32 %v1071, %v1167
  %v1252 = vadd.f32 %v1072, %v1168
  %v1253 = vadd.f32 %v1073, %v1169
  %v1254 = vadd.f32 %v1074, %v1170
  %v1255 = vadd.f32 %v1075, %v1171
  %v1256 = vadd.f32 %v1076, %v1172
  %v1257 = vadd.f32 %v1077, %v1173
  %v1258 = vadd.f32 %v1078, %v1174
  %v1259 = vadd.f32 %v1079, %v1175
  %v1260 = vadd.f32 %v1080, %v1176
  %v1261 = vadd.f32 %v1081, %v1177
  %v1262 = vadd.f32 %v1082, %v1178
  %v1263 = vadd.f32 %v1083, %v1179
  %v1264 = vlaneseq
  %v1265 = vshrl.u32 %v1264, 7
  %v1266 = vsub.s32 2, %v1265
  %v1267 = vrot.slane %v895, %v1266
  %v1268 = vlaneseq
  %v1269 = vshrl.u32 %v1268, 7
  %v1270 = vsub.s32 2, %v1269
  %v1271 = vrot.slane %v896, %v1270
  %v1272 = vlaneseq
  %v1273 = vshrl.u32 %v1272, 7
  %v1274 = vsub.s32 2, %v1273
  %v1275 = vrot.slane %v897, %v1274
  %v1276 = vmul.f32 %v748, %v1267
  %v1277 = vmul.f32 %v749, %v1271
  %v1278 = vmul.f32 %v750, %v1275
  %v1279 = vmul.f32 %v751, %v1267
  %v1280 = vmul.f32 %v752, %v1271
  %v1281 = vmul.f32 %v753, %v1275
  %v1282 = vmul.f32 %v757, %v1267
  %v1283 = vmul.f32 %v758, %v1271
  %v1284 = vmul.f32 %v759, %v1275
  %v1285 = vmul.f32 %v760, %v1267
  %v1286 = vmul.f32 %v761, %v1271
  %v1287 = vmul.f32 %v762, %v1275
  %v1288 = vmul.f32 %v766, %v1267
  %v1289 = vmul.f32 %v767, %v1271
  %v1290 = vmul.f32 %v768, %v1275
  %v1291 = vmul.f32 %v769, %v1267
  %v1292 = vmul.f32 %v770, %v1271
  %v1293 = vmul.f32 %v771, %v1275
  %v1294 = vmul.f32 %v775, %v1267
  %v1295 = vmul.f32 %v776, %v1271
  %v1296 = vmul.f32 %v777, %v1275
  %v1297 = vmul.f32 %v778, %v1267
  %v1298 = vmul.f32 %v779, %v1271
  %v1299 = vmul.f32 %v780, %v1275
  %v1300 = vmul.f32 %v784, %v1267
  %v1301 = vmul.f32 %v785, %v1271
  %v1302 = vmul.f32 %v786, %v1275
  %v1303 = vmul.f32 %v787, %v1267
  %v1304 = vmul.f32 %v788, %v1271
  %v1305 = vmul.f32 %v789, %v1275
  %v1306 = vmul.f32 %v793, %v1267
  %v1307 = vmul.f32 %v794, %v1271
  %v1308 = vmul.f32 %v795, %v1275
  %v1309 = vmul.f32 %v796, %v1267
  %v1310 = vmul.f32 %v797, %v1271
  %v1311 = vmul.f32 %v798, %v1275
  %v1312 = vmul.f32 %v802, %v1267
  %v1313 = vmul.f32 %v803, %v1271
  %v1314 = vmul.f32 %v804, %v1275
  %v1315 = vmul.f32 %v805, %v1267
  %v1316 = vmul.f32 %v806, %v1271
  %v1317 = vmul.f32 %v807, %v1275
  %v1318 = vmul.f32 %v811, %v1267
  %v1319 = vmul.f32 %v812, %v1271
  %v1320 = vmul.f32 %v813, %v1275
  %v1321 = vmul.f32 %v814, %v1267
  %v1322 = vmul.f32 %v815, %v1271
  %v1323 = vmul.f32 %v816, %v1275
  %v1324 = vmul.f32 %v820, %v1267
  %v1325 = vmul.f32 %v821, %v1271
  %v1326 = vmul.f32 %v822, %v1275
  %v1327 = vmul.f32 %v823, %v1267
  %v1328 = vmul.f32 %v824, %v1271
  %v1329 = vmul.f32 %v825, %v1275
  %v1330 = vmul.f32 %v829, %v1267
  %v1331 = vmul.f32 %v830, %v1271
  %v1332 = vmul.f32 %v831, %v1275
  %v1333 = vmul.f32 %v832, %v1267
  %v1334 = vmul.f32 %v833, %v1271
  %v1335 = vmul.f32 %v834, %v1275
  %v1336 = vmul.f32 %v838, %v1267
  %v1337 = vmul.f32 %v839, %v1271
  %v1338 = vmul.f32 %v840, %v1275
  %v1339 = vmul.f32 %v841, %v1267
  %v1340 = vmul.f32 %v842, %v1271
  %v1341 = vmul.f32 %v843, %v1275
  %v1342 = vmul.f32 %v847, %v1267
  %v1343 = vmul.f32 %v848, %v1271
  %v1344 = vmul.f32 %v849, %v1275
  %v1345 = vmul.f32 %v850, %v1267
  %v1346 = vmul.f32 %v851, %v1271
  %v1347 = vmul.f32 %v852, %v1275
  %v1348 = vmul.f32 %v856, %v1267
  %v1349 = vmul.f32 %v857, %v1271
  %v1350 = vmul.f32 %v858, %v1275
  %v1351 = vmul.f32 %v859, %v1267
  %v1352 = vmul.f32 %v860, %v1271
  %v1353 = vmul.f32 %v861, %v1275
  %v1354 = vmul.f32 %v865, %v1267
  %v1355 = vmul.f32 %v866, %v1271
  %v1356 = vmul.f32 %v867, %v1275
  %v1357 = vmul.f32 %v868, %v1267
  %v1358 = vmul.f32 %v869, %v1271
  %v1359 = vmul.f32 %v870, %v1275
  %v1360 = vadd.f32 %v1180, %v1276
  %v1361 = vadd.f32 %v1181, %v1277
  %v1362 = vadd.f32 %v1182, %v1278
  %v1363 = vadd.f32 %v1183, %v1279
  %v1364 = vadd.f32 %v1184, %v1280
  %v1365 = vadd.f32 %v1185, %v1281
  %v1366 = vadd.f32 %v1186, %v1282
  %v1367 = vadd.f32 %v1187, %v1283
  %v1368 = vadd.f32 %v1188, %v1284
  %v1369 = vadd.f32 %v1189, %v1285
  %v1370 = vadd.f32 %v1190, %v1286
  %v1371 = vadd.f32 %v1191, %v1287
  %v1372 = vadd.f32 %v1192, %v1288
  %v1373 = vadd.f32 %v1193, %v1289
  %v1374 = vadd.f32 %v1194, %v1290
  %v1375 = vadd.f32 %v1195, %v1291
  %v1376 = vadd.f32 %v1196, %v1292
  %v1377 = vadd.f32 %v1197, %v1293
  %v1378 = vadd.f32 %v1198, %v1294
  %v1379 = vadd.f32 %v1199, %v1295
  %v1380 = vadd.f32 %v1200, %v1296
  %v1381 = vadd.f32 %v1201, %v1297
  %v1382 = vadd.f32 %v1202, %v1298
  %v1383 = vadd.f32 %v1203, %v1299
  %v1384 = vadd.f32 %v1204, %v1300
  %v1385 = vadd.f32 %v1205, %v1301
  %v1386 = vadd.f32 %v1206, %v1302
  %v1387 = vadd.f32 %v1207, %v1303
  %v1388 = vadd.f32 %v1208, %v1304
  %v1389 = vadd.f32 %v1209, %v1305
  %v1390 = vadd.f32 %v1210, %v1306
  %v1391 = vadd.f32 %v1211, %v1307
  %v1392 = vadd.f32 %v1212, %v1308
  %v1393 = vadd.f32 %v1213, %v1309
  %v1394 = vadd.f32 %v1214, %v1310
  %v1395 = vadd.f32 %v1215, %v1311
  %v1396 = vadd.f32 %v1216, %v1312
  %v1397 = vadd.f32 %v1217, %v1313
  %v1398 = vadd.f32 %v1218, %v1314
  %v1399 = vadd.f32 %v1219, %v1315
  %v1400 = vadd.f32 %v1220, %v1316
  %v1401 = vadd.f32 %v1221, %v1317
  %v1402 = vadd.f32 %v1222, %v1318
  %v1403 = vadd.f32 %v1223, %v1319
  %v1404 = vadd.f32 %v1224, %v1320
  %v1405 = vadd.f32 %v1225, %v1321
  %v1406 = vadd.f32 %v1226, %v1322
  %v1407 = vadd.f32 %v1227, %v1323
  %v1408 = vadd.f32 %v1228, %v1324
  %v1409 = vadd.f32 %v1229, %v1325
  %v1410 = vadd.f32 %v1230, %v1326
  %v1411 = vadd.f32 %v1231, %v1327
  %v1412 = vadd.f32 %v1232, %v1328
  %v1413 = vadd.f32 %v1233, %v1329
  %v1414 = vadd.f32 %v1234, %v1330
  %v1415 = vadd.f32 %v1235, %v1331
  %v1416 = vadd.f32 %v1236, %v1332
  %v1417 = vadd.f32 %v1237, %v1333
  %v1418 = vadd.f32 %v1238, %v1334
  %v1419 = vadd.f32 %v1239, %v1335
  %v1420 = vadd.f32 %v1240, %v1336
  %v1421 = vadd.f32 %v1241, %v1337
  %v1422 = vadd.f32 %v1242, %v1338
  %v1423 = vadd.f32 %v1243, %v1339
  %v1424 = vadd.f32 %v1244, %v1340
  %v1425 = vadd.f32 %v1245, %v1341
  %v1426 = vadd.f32 %v1246, %v1342
  %v1427 = vadd.f32 %v1247, %v1343
  %v1428 = vadd.f32 %v1248, %v1344
  %v1429 = vadd.f32 %v1249, %v1345
  %v1430 = vadd.f32 %v1250, %v1346
  %v1431 = vadd.f32 %v1251, %v1347
  %v1432 = vadd.f32 %v1252, %v1348
  %v1433 = vadd.f32 %v1253, %v1349
  %v1434 = vadd.f32 %v1254, %v1350
  %v1435 = vadd.f32 %v1255, %v1351
  %v1436 = vadd.f32 %v1256, %v1352
  %v1437 = vadd.f32 %v1257, %v1353
  %v1438 = vadd.f32 %v1258, %v1354
  %v1439 = vadd.f32 %v1259, %v1355
  %v1440 = vadd.f32 %v1260, %v1356
  %v1441 = vadd.f32 %v1261, %v1357
  %v1442 = vadd.f32 %v1262, %v1358
  %v1443 = vadd.f32 %v1263, %v1359
  %v1444 = vlaneseq
  %v1445 = vshrl.u32 %v1444, 7
  %v1446 = vsub.s32 7, %v1445
  %v1447 = vrot.slane %v895, %v1446
  %v1448 = vlaneseq
  %v1449 = vshrl.u32 %v1448, 7
  %v1450 = vsub.s32 7, %v1449
  %v1451 = vrot.slane %v896, %v1450
  %v1452 = vlaneseq
  %v1453 = vshrl.u32 %v1452, 7
  %v1454 = vsub.s32 7, %v1453
  %v1455 = vrot.slane %v897, %v1454
  %v1456 = vmul.f32 %v757, %v1447
  %v1457 = vmul.f32 %v758, %v1451
  %v1458 = vmul.f32 %v759, %v1455
  %v1459 = vmul.f32 %v760, %v1447
  %v1460 = vmul.f32 %v761, %v1451
  %v1461 = vmul.f32 %v762, %v1455
  %v1462 = vmul.f32 %v766, %v1447
  %v1463 = vmul.f32 %v767, %v1451
  %v1464 = vmul.f32 %v768, %v1455
  %v1465 = vmul.f32 %v769, %v1447
  %v1466 = vmul.f32 %v770, %v1451
  %v1467 = vmul.f32 %v771, %v1455
  %v1468 = vmul.f32 %v775, %v1447
  %v1469 = vmul.f32 %v776, %v1451
  %v1470 = vmul.f32 %v777, %v1455
  %v1471 = vmul.f32 %v778, %v1447
  %v1472 = vmul.f32 %v779, %v1451
  %v1473 = vmul.f32 %v780, %v1455
  %v1474 = vmul.f32 %v784, %v1447
  %v1475 = vmul.f32 %v785, %v1451
  %v1476 = vmul.f32 %v786, %v1455
  %v1477 = vmul.f32 %v787, %v1447
  %v1478 = vmul.f32 %v788, %v1451
  %v1479 = vmul.f32 %v789, %v1455
  %v1480 = vmul.f32 %v793, %v1447
  %v1481 = vmul.f32 %v794, %v1451
  %v1482 = vmul.f32 %v795, %v1455
  %v1483 = vmul.f32 %v796, %v1447
  %v1484 = vmul.f32 %v797, %v1451
  %v1485 = vmul.f32 %v798, %v1455
  %v1486 = vmul.f32 %v802, %v1447
  %v1487 = vmul.f32 %v803, %v1451
  %v1488 = vmul.f32 %v804, %v1455
  %v1489 = vmul.f32 %v805, %v1447
  %v1490 = vmul.f32 %v806, %v1451
  %v1491 = vmul.f32 %v807, %v1455
  %v1492 = vmul.f32 %v811, %v1447
  %v1493 = vmul.f32 %v812, %v1451
  %v1494 = vmul.f32 %v813, %v1455
  %v1495 = vmul.f32 %v814, %v1447
  %v1496 = vmul.f32 %v815, %v1451
  %v1497 = vmul.f32 %v816, %v1455
  %v1498 = vmul.f32 %v820, %v1447
  %v1499 = vmul.f32 %v821, %v1451
  %v1500 = vmul.f32 %v822, %v1455
  %v1501 = vmul.f32 %v823, %v1447
  %v1502 = vmul.f32 %v824, %v1451
  %v1503 = vmul.f32 %v825, %v1455
  %v1504 = vmul.f32 %v829, %v1447
  %v1505 = vmul.f32 %v830, %v1451
  %v1506 = vmul.f32 %v831, %v1455
  %v1507 = vmul.f32 %v832, %v1447
  %v1508 = vmul.f32 %v833, %v1451
  %v1509 = vmul.f32 %v834, %v1455
  %v1510 = vmul.f32 %v838, %v1447
  %v1511 = vmul.f32 %v839, %v1451
  %v1512 = vmul.f32 %v840, %v1455
  %v1513 = vmul.f32 %v841, %v1447
  %v1514 = vmul.f32 %v842, %v1451
  %v1515 = vmul.f32 %v843, %v1455
  %v1516 = vmul.f32 %v847, %v1447
  %v1517 = vmul.f32 %v848, %v1451
  %v1518 = vmul.f32 %v849, %v1455
  %v1519 = vmul.f32 %v850, %v1447
  %v1520 = vmul.f32 %v851, %v1451
  %v1521 = vmul.f32 %v852, %v1455
  %v1522 = vmul.f32 %v856, %v1447
  %v1523 = vmul.f32 %v857, %v1451
  %v1524 = vmul.f32 %v858, %v1455
  %v1525 = vmul.f32 %v859, %v1447
  %v1526 = vmul.f32 %v860, %v1451
  %v1527 = vmul.f32 %v861, %v1455
  %v1528 = vmul.f32 %v865, %v1447
  %v1529 = vmul.f32 %v866, %v1451
  %v1530 = vmul.f32 %v867, %v1455
  %v1531 = vmul.f32 %v868, %v1447
  %v1532 = vmul.f32 %v869, %v1451
  %v1533 = vmul.f32 %v870, %v1455
  %v1534 = vmul.f32 %v874, %v1447
  %v1535 = vmul.f32 %v875, %v1451
  %v1536 = vmul.f32 %v876, %v1455
  %v1537 = vmul.f32 %v877, %v1447
  %v1538 = vmul.f32 %v878, %v1451
  %v1539 = vmul.f32 %v879, %v1455
  %v1540 = vadd.f32 %v1360, %v1456
  %v1541 = vadd.f32 %v1361, %v1457
  %v1542 = vadd.f32 %v1362, %v1458
  %v1543 = vadd.f32 %v1363, %v1459
  %v1544 = vadd.f32 %v1364, %v1460
  %v1545 = vadd.f32 %v1365, %v1461
  %v1546 = vadd.f32 %v1366, %v1462
  %v1547 = vadd.f32 %v1367, %v1463
  %v1548 = vadd.f32 %v1368, %v1464
  %v1549 = vadd.f32 %v1369, %v1465
  %v1550 = vadd.f32 %v1370, %v1466
  %v1551 = vadd.f32 %v1371, %v1467
  %v1552 = vadd.f32 %v1372, %v1468
  %v1553 = vadd.f32 %v1373, %v1469
  %v1554 = vadd.f32 %v1374, %v1470
  %v1555 = vadd.f32 %v1375, %v1471
  %v1556 = vadd.f32 %v1376, %v1472
  %v1557 = vadd.f32 %v1377, %v1473
  %v1558 = vadd.f32 %v1378, %v1474
  %v1559 = vadd.f32 %v1379, %v1475
  %v1560 = vadd.f32 %v1380, %v1476
  %v1561 = vadd.f32 %v1381, %v1477
  %v1562 = vadd.f32 %v1382, %v1478
  %v1563 = vadd.f32 %v1383, %v1479
  %v1564 = vadd.f32 %v1384, %v1480
  %v1565 = vadd.f32 %v1385, %v1481
  %v1566 = vadd.f32 %v1386, %v1482
  %v1567 = vadd.f32 %v1387, %v1483
  %v1568 = vadd.f32 %v1388, %v1484
  %v1569 = vadd.f32 %v1389, %v1485
  %v1570 = vadd.f32 %v1390, %v1486
  %v1571 = vadd.f32 %v1391, %v1487
  %v1572 = vadd.f32 %v1392, %v1488
  %v1573 = vadd.f32 %v1393, %v1489
  %v1574 = vadd.f32 %v1394, %v1490
  %v1575 = vadd.f32 %v1395, %v1491
  %v1576 = vadd.f32 %v1396, %v1492
  %v1577 = vadd.f32 %v1397, %v1493
  %v1578 = vadd.f32 %v1398, %v1494
  %v1579 = vadd.f32 %v1399, %v1495
  %v1580 = vadd.f32 %v1400, %v1496
  %v1581 = vadd.f32 %v1401, %v1497
  %v1582 = vadd.f32 %v1402, %v1498
  %v1583 = vadd.f32 %v1403, %v1499
  %v1584 = vadd.f32 %v1404, %v1500
  %v1585 = vadd.f32 %v1405, %v1501
  %v1586 = vadd.f32 %v1406, %v1502
  %v1587 = vadd.f32 %v1407, %v1503
  %v1588 = vadd.f32 %v1408, %v1504
  %v1589 = vadd.f32 %v1409, %v1505
  %v1590 = vadd.f32 %v1410, %v1506
  %v1591 = vadd.f32 %v1411, %v1507
  %v1592 = vadd.f32 %v1412, %v1508
  %v1593 = vadd.f32 %v1413, %v1509
  %v1594 = vadd.f32 %v1414, %v1510
  %v1595 = vadd.f32 %v1415, %v1511
  %v1596 = vadd.f32 %v1416, %v1512
  %v1597 = vadd.f32 %v1417, %v1513
  %v1598 = vadd.f32 %v1418, %v1514
  %v1599 = vadd.f32 %v1419, %v1515
  %v1600 = vadd.f32 %v1420, %v1516
  %v1601 = vadd.f32 %v1421, %v1517
  %v1602 = vadd.f32 %v1422, %v1518
  %v1603 = vadd.f32 %v1423, %v1519
  %v1604 = vadd.f32 %v1424, %v1520
  %v1605 = vadd.f32 %v1425, %v1521
  %v1606 = vadd.f32 %v1426, %v1522
  %v1607 = vadd.f32 %v1427, %v1523
  %v1608 = vadd.f32 %v1428, %v1524
  %v1609 = vadd.f32 %v1429, %v1525
  %v1610 = vadd.f32 %v1430, %v1526
  %v1611 = vadd.f32 %v1431, %v1527
  %v1612 = vadd.f32 %v1432, %v1528
  %v1613 = vadd.f32 %v1433, %v1529
  %v1614 = vadd.f32 %v1434, %v1530
  %v1615 = vadd.f32 %v1435, %v1531
  %v1616 = vadd.f32 %v1436, %v1532
  %v1617 = vadd.f32 %v1437, %v1533
  %v1618 = vadd.f32 %v1438, %v1534
  %v1619 = vadd.f32 %v1439, %v1535
  %v1620 = vadd.f32 %v1440, %v1536
  %v1621 = vadd.f32 %v1441, %v1537
  %v1622 = vadd.f32 %v1442, %v1538
  %v1623 = vadd.f32 %v1443, %v1539
  %v1624 = vlaneseq
  %v1625 = vshrl.u32 %v1624, 7
  %v1626 = vsub.s32 4, %v1625
  %v1627 = vrot.slane %v898, %v1626
  %v1628 = vlaneseq
  %v1629 = vshrl.u32 %v1628, 7
  %v1630 = vsub.s32 4, %v1629
  %v1631 = vrot.slane %v899, %v1630
  %v1632 = vlaneseq
  %v1633 = vshrl.u32 %v1632, 7
  %v1634 = vsub.s32 4, %v1633
  %v1635 = vrot.slane %v900, %v1634
  %v1636 = vmul.f32 %v766, %v1627
  %v1637 = vmul.f32 %v767, %v1631
  %v1638 = vmul.f32 %v768, %v1635
  %v1639 = vmul.f32 %v769, %v1627
  %v1640 = vmul.f32 %v770, %v1631
  %v1641 = vmul.f32 %v771, %v1635
  %v1642 = vmul.f32 %v775, %v1627
  %v1643 = vmul.f32 %v776, %v1631
  %v1644 = vmul.f32 %v777, %v1635
  %v1645 = vmul.f32 %v778, %v1627
  %v1646 = vmul.f32 %v779, %v1631
  %v1647 = vmul.f32 %v780, %v1635
  %v1648 = vmul.f32 %v784, %v1627
  %v1649 = vmul.f32 %v785, %v1631
  %v1650 = vmul.f32 %v786, %v1635
  %v1651 = vmul.f32 %v787, %v1627
  %v1652 = vmul.f32 %v788, %v1631
  %v1653 = vmul.f32 %v789, %v1635
  %v1654 = vmul.f32 %v793, %v1627
  %v1655 = vmul.f32 %v794, %v1631
  %v1656 = vmul.f32 %v795, %v1635
  %v1657 = vmul.f32 %v796, %v1627
  %v1658 = vmul.f32 %v797, %v1631
  %v1659 = vmul.f32 %v798, %v1635
  %v1660 = vmul.f32 %v802, %v1627
  %v1661 = vmul.f32 %v803, %v1631
  %v1662 = vmul.f32 %v804, %v1635
  %v1663 = vmul.f32 %v805, %v1627
  %v1664 = vmul.f32 %v806, %v1631
  %v1665 = vmul.f32 %v807, %v1635
  %v1666 = vmul.f32 %v811, %v1627
  %v1667 = vmul.f32 %v812, %v1631
  %v1668 = vmul.f32 %v813, %v1635
  %v1669 = vmul.f32 %v814, %v1627
  %v1670 = vmul.f32 %v815, %v1631
  %v1671 = vmul.f32 %v816, %v1635
  %v1672 = vmul.f32 %v820, %v1627
  %v1673 = vmul.f32 %v821, %v1631
  %v1674 = vmul.f32 %v822, %v1635
  %v1675 = vmul.f32 %v823, %v1627
  %v1676 = vmul.f32 %v824, %v1631
  %v1677 = vmul.f32 %v825, %v1635
  %v1678 = vmul.f32 %v829, %v1627
  %v1679 = vmul.f32 %v830, %v1631
  %v1680 = vmul.f32 %v831, %v1635
  %v1681 = vmul.f32 %v832, %v1627
  %v1682 = vmul.f32 %v833, %v1631
  %v1683 = vmul.f32 %v834, %v1635
  %v1684 = vmul.f32 %v838, %v1627
  %v1685 = vmul.f32 %v839, %v1631
  %v1686 = vmul.f32 %v840, %v1635
  %v1687 = vmul.f32 %v841, %v1627
  %v1688 = vmul.f32 %v842, %v1631
  %v1689 = vmul.f32 %v843, %v1635
  %v1690 = vmul.f32 %v847, %v1627
  %v1691 = vmul.f32 %v848, %v1631
  %v1692 = vmul.f32 %v849, %v1635
  %v1693 = vmul.f32 %v850, %v1627
  %v1694 = vmul.f32 %v851, %v1631
  %v1695 = vmul.f32 %v852, %v1635
  %v1696 = vmul.f32 %v856, %v1627
  %v1697 = vmul.f32 %v857, %v1631
  %v1698 = vmul.f32 %v858, %v1635
  %v1699 = vmul.f32 %v859, %v1627
  %v1700 = vmul.f32 %v860, %v1631
  %v1701 = vmul.f32 %v861, %v1635
  %v1702 = vmul.f32 %v865, %v1627
  %v1703 = vmul.f32 %v866, %v1631
  %v1704 = vmul.f32 %v867, %v1635
  %v1705 = vmul.f32 %v868, %v1627
  %v1706 = vmul.f32 %v869, %v1631
  %v1707 = vmul.f32 %v870, %v1635
  %v1708 = vmul.f32 %v874, %v1627
  %v1709 = vmul.f32 %v875, %v1631
  %v1710 = vmul.f32 %v876, %v1635
  %v1711 = vmul.f32 %v877, %v1627
  %v1712 = vmul.f32 %v878, %v1631
  %v1713 = vmul.f32 %v879, %v1635
  %v1714 = vmul.f32 %v883, %v1627
  %v1715 = vmul.f32 %v884, %v1631
  %v1716 = vmul.f32 %v885, %v1635
  %v1717 = vmul.f32 %v886, %v1627
  %v1718 = vmul.f32 %v887, %v1631
  %v1719 = vmul.f32 %v888, %v1635
  %v1720 = vadd.f32 %v1540, %v1636
  %v1721 = vadd.f32 %v1541, %v1637
  %v1722 = vadd.f32 %v1542, %v1638
  %v1723 = vadd.f32 %v1543, %v1639
  %v1724 = vadd.f32 %v1544, %v1640
  %v1725 = vadd.f32 %v1545, %v1641
  %v1726 = vadd.f32 %v1546, %v1642
  %v1727 = vadd.f32 %v1547, %v1643
  %v1728 = vadd.f32 %v1548, %v1644
  %v1729 = vadd.f32 %v1549, %v1645
  %v1730 = vadd.f32 %v1550, %v1646
  %v1731 = vadd.f32 %v1551, %v1647
  %v1732 = vadd.f32 %v1552, %v1648
  %v1733 = vadd.f32 %v1553, %v1649
  %v1734 = vadd.f32 %v1554, %v1650
  %v1735 = vadd.f32 %v1555, %v1651
  %v1736 = vadd.f32 %v1556, %v1652
  %v1737 = vadd.f32 %v1557, %v1653
  %v1738 = vadd.f32 %v1558, %v1654
  %v1739 = vadd.f32 %v1559, %v1655
  %v1740 = vadd.f32 %v1560, %v1656
  %v1741 = vadd.f32 %v1561, %v1657
  %v1742 = vadd.f32 %v1562, %v1658
  %v1743 = vadd.f32 %v1563, %v1659
  %v1744 = vadd.f32 %v1564, %v1660
  %v1745 = vadd.f32 %v1565, %v1661
  %v1746 = vadd.f32 %v1566, %v1662
  %v1747 = vadd.f32 %v1567, %v1663
  %v1748 = vadd.f32 %v1568, %v1664
  %v1749 = vadd.f32 %v1569, %v1665
  %v1750 = vadd.f32 %v1570, %v1666
  %v1751 = vadd.f32 %v1571, %v1667
  %v1752 = vadd.f32 %v1572, %v1668
  %v1753 = vadd.f32 %v1573, %v1669
  %v1754 = vadd.f32 %v1574, %v1670
  %v1755 = vadd.f32 %v1575, %v1671
  %v1756 = vadd.f32 %v1576, %v1672
  %v1757 = vadd.f32 %v1577, %v1673
  %v1758 = vadd.f32 %v1578, %v1674
  %v1759 = vadd.f32 %v1579, %v1675
  %v1760 = vadd.f32 %v1580, %v1676
  %v1761 = vadd.f32 %v1581, %v1677
  %v1762 = vadd.f32 %v1582, %v1678
  %v1763 = vadd.f32 %v1583, %v1679
  %v1764 = vadd.f32 %v1584, %v1680
  %v1765 = vadd.f32 %v1585, %v1681
  %v1766 = vadd.f32 %v1586, %v1682
  %v1767 = vadd.f32 %v1587, %v1683
  %v1768 = vadd.f32 %v1588, %v1684
  %v1769 = vadd.f32 %v1589, %v1685
  %v1770 = vadd.f32 %v1590, %v1686
  %v1771 = vadd.f32 %v1591, %v1687
  %v1772 = vadd.f32 %v1592, %v1688
  %v1773 = vadd.f32 %v1593, %v1689
  %v1774 = vadd.f32 %v1594, %v1690
  %v1775 = vadd.f32 %v1595, %v1691
  %v1776 = vadd.f32 %v1596, %v1692
  %v1777 = vadd.f32 %v1597, %v1693
  %v1778 = vadd.f32 %v1598, %v1694
  %v1779 = vadd.f32 %v1599, %v1695
  %v1780 = vadd.f32 %v1600, %v1696
  %v1781 = vadd.f32 %v1601, %v1697
  %v1782 = vadd.f32 %v1602, %v1698
  %v1783 = vadd.f32 %v1603, %v1699
  %v1784 = vadd.f32 %v1604, %v1700
  %v1785 = vadd.f32 %v1605, %v1701
  %v1786 = vadd.f32 %v1606, %v1702
  %v1787 = vadd.f32 %v1607, %v1703
  %v1788 = vadd.f32 %v1608, %v1704
  %v1789 = vadd.f32 %v1609, %v1705
  %v1790 = vadd.f32 %v1610, %v1706
  %v1791 = vadd.f32 %v1611, %v1707
  %v1792 = vadd.f32 %v1612, %v1708
  %v1793 = vadd.f32 %v1613, %v1709
  %v1794 = vadd.f32 %v1614, %v1710
  %v1795 = vadd.f32 %v1615, %v1711
  %v1796 = vadd.f32 %v1616, %v1712
  %v1797 = vadd.f32 %v1617, %v1713
  %v1798 = vadd.f32 %v1618, %v1714
  %v1799 = vadd.f32 %v1619, %v1715
  %v1800 = vadd.f32 %v1620, %v1716
  %v1801 = vadd.f32 %v1621, %v1717
  %v1802 = vadd.f32 %v1622, %v1718
  %v1803 = vadd.f32 %v1623, %v1719
  %v1804 = vlaneseq
  %v1805 = vshrl.u32 %v1804, 7
  %v1806 = vsub.s32 1, %v1805
  %v1807 = vrot.slane %v892, %v1806
  %v1808 = vlaneseq
  %v1809 = vshrl.u32 %v1808, 7
  %v1810 = vsub.s32 1, %v1809
  %v1811 = vrot.slane %v893, %v1810
  %v1812 = vlaneseq
  %v1813 = vshrl.u32 %v1812, 7
  %v1814 = vsub.s32 1, %v1813
  %v1815 = vrot.slane %v894, %v1814
  %v1816 = vmul.f32 %v730, %v1807
  %v1817 = vmul.f32 %v731, %v1811
  %v1818 = vmul.f32 %v732, %v1815
  %v1819 = vmul.f32 %v733, %v1807
  %v1820 = vmul.f32 %v734, %v1811
  %v1821 = vmul.f32 %v735, %v1815
  %v1822 = vmul.f32 %v739, %v1807
  %v1823 = vmul.f32 %v740, %v1811
  %v1824 = vmul.f32 %v741, %v1815
  %v1825 = vmul.f32 %v742, %v1807
  %v1826 = vmul.f32 %v743, %v1811
  %v1827 = vmul.f32 %v744, %v1815
  %v1828 = vmul.f32 %v748, %v1807
  %v1829 = vmul.f32 %v749, %v1811
  %v1830 = vmul.f32 %v750, %v1815
  %v1831 = vmul.f32 %v751, %v1807
  %v1832 = vmul.f32 %v752, %v1811
  %v1833 = vmul.f32 %v753, %v1815
  %v1834 = vmul.f32 %v757, %v1807
  %v1835 = vmul.f32 %v758, %v1811
  %v1836 = vmul.f32 %v759, %v1815
  %v1837 = vmul.f32 %v760, %v1807
  %v1838 = vmul.f32 %v761, %v1811
  %v1839 = vmul.f32 %v762, %v1815
  %v1840 = vmul.f32 %v766, %v1807
  %v1841 = vmul.f32 %v767, %v1811
  %v1842 = vmul.f32 %v768, %v1815
  %v1843 = vmul.f32 %v769, %v1807
  %v1844 = vmul.f32 %v770, %v1811
  %v1845 = vmul.f32 %v771, %v1815
  %v1846 = vmul.f32 %v775, %v1807
  %v1847 = vmul.f32 %v776, %v1811
  %v1848 = vmul.f32 %v777, %v1815
  %v1849 = vmul.f32 %v778, %v1807
  %v1850 = vmul.f32 %v779, %v1811
  %v1851 = vmul.f32 %v780, %v1815
  %v1852 = vmul.f32 %v784, %v1807
  %v1853 = vmul.f32 %v785, %v1811
  %v1854 = vmul.f32 %v786, %v1815
  %v1855 = vmul.f32 %v787, %v1807
  %v1856 = vmul.f32 %v788, %v1811
  %v1857 = vmul.f32 %v789, %v1815
  %v1858 = vmul.f32 %v793, %v1807
  %v1859 = vmul.f32 %v794, %v1811
  %v1860 = vmul.f32 %v795, %v1815
  %v1861 = vmul.f32 %v796, %v1807
  %v1862 = vmul.f32 %v797, %v1811
  %v1863 = vmul.f32 %v798, %v1815
  %v1864 = vmul.f32 %v802, %v1807
  %v1865 = vmul.f32 %v803, %v1811
  %v1866 = vmul.f32 %v804, %v1815
  %v1867 = vmul.f32 %v805, %v1807
  %v1868 = vmul.f32 %v806, %v1811
  %v1869 = vmul.f32 %v807, %v1815
  %v1870 = vmul.f32 %v811, %v1807
  %v1871 = vmul.f32 %v812, %v1811
  %v1872 = vmul.f32 %v813, %v1815
  %v1873 = vmul.f32 %v814, %v1807
  %v1874 = vmul.f32 %v815, %v1811
  %v1875 = vmul.f32 %v816, %v1815
  %v1876 = vmul.f32 %v820, %v1807
  %v1877 = vmul.f32 %v821, %v1811
  %v1878 = vmul.f32 %v822, %v1815
  %v1879 = vmul.f32 %v823, %v1807
  %v1880 = vmul.f32 %v824, %v1811
  %v1881 = vmul.f32 %v825, %v1815
  %v1882 = vmul.f32 %v829, %v1807
  %v1883 = vmul.f32 %v830, %v1811
  %v1884 = vmul.f32 %v831, %v1815
  %v1885 = vmul.f32 %v832, %v1807
  %v1886 = vmul.f32 %v833, %v1811
  %v1887 = vmul.f32 %v834, %v1815
  %v1888 = vmul.f32 %v838, %v1807
  %v1889 = vmul.f32 %v839, %v1811
  %v1890 = vmul.f32 %v840, %v1815
  %v1891 = vmul.f32 %v841, %v1807
  %v1892 = vmul.f32 %v842, %v1811
  %v1893 = vmul.f32 %v843, %v1815
  %v1894 = vmul.f32 %v847, %v1807
  %v1895 = vmul.f32 %v848, %v1811
  %v1896 = vmul.f32 %v849, %v1815
  %v1897 = vmul.f32 %v850, %v1807
  %v1898 = vmul.f32 %v851, %v1811
  %v1899 = vmul.f32 %v852, %v1815
  %vm1984 = vcmask 1046528
  %v1985 = vrot.slane %v1816, 1
  %v1986 = vrot.slane %v1819, 1
  %v1987 = vsel %vm1984, %v1985, %v1986
  %v1988 = vrot.slane %v1817, 1
  %v1989 = vrot.slane %v1820, 1
  %v1990 = vsel %vm1984, %v1988, %v1989
  %v1991 = vrot.slane %v1818, 1
  %v1992 = vrot.slane %v1821, 1
  %v1993 = vsel %vm1984, %v1991, %v1992
  %v1994 = vrot.slane %v1822, 1
  %v1995 = vrot.slane %v1825, 1
  %v1996 = vsel %vm1984, %v1994, %v1995
  %v1997 = vrot.slane %v1823, 1
  %v1998 = vrot.slane %v1826, 1
  %v1999 = vsel %vm1984, %v1997, %v1998
  %v2000 = vrot.slane %v1824, 1
  %v2001 = vrot.slane %v1827, 1
  %v2002 = vsel %vm1984, %v2000, %v2001
  %v2003 = vrot.slane %v1828, 1
  %v2004 = vrot.slane %v1831, 1
  %v2005 = vsel %vm1984, %v2003, %v2004
  %v2006 = vrot.slane %v1829, 1
  %v2007 = vrot.slane %v1832, 1
  %v2008 = vsel %vm1984, %v2006, %v2007
  %v2009 = vrot.slane %v1830, 1
  %v2010 = vrot.slane %v1833, 1
  %v2011 = vsel %vm1984, %v2009, %v2010
  %v2012 = vrot.slane %v1834, 1
  %v2013 = vrot.slane %v1837, 1
  %v2014 = vsel %vm1984, %v2012, %v2013
  %v2015 = vrot.slane %v1835, 1
  %v2016 = vrot.slane %v1838, 1
  %v2017 = vsel %vm1984, %v2015, %v2016
  %v2018 = vrot.slane %v1836, 1
  %v2019 = vrot.slane %v1839, 1
  %v2020 = vsel %vm1984, %v2018, %v2019
  %v2021 = vrot.slane %v1840, 1
  %v2022 = vrot.slane %v1843, 1
  %v2023 = vsel %vm1984, %v2021, %v2022
  %v2024 = vrot.slane %v1841, 1
  %v2025 = vrot.slane %v1844, 1
  %v2026 = vsel %vm1984, %v2024, %v2025
  %v2027 = vrot.slane %v1842, 1
  %v2028 = vrot.slane %v1845, 1
  %v2029 = vsel %vm1984, %v2027, %v2028
  %v2030 = vrot.slane %v1846, 1
  %v2031 = vrot.slane %v1849, 1
  %v2032 = vsel %vm1984, %v2030, %v2031
  %v2033 = vrot.slane %v1847, 1
  %v2034 = vrot.slane %v1850, 1
  %v2035 = vsel %vm1984, %v2033, %v2034
  %v2036 = vrot.slane %v1848, 1
  %v2037 = vrot.slane %v1851, 1
  %v2038 = vsel %vm1984, %v2036, %v2037
  %v2039 = vrot.slane %v1852, 1
  %v2040 = vrot.slane %v1855, 1
  %v2041 = vsel %vm1984, %v2039, %v2040
  %v2042 = vrot.slane %v1853, 1
  %v2043 = vrot.slane %v1856, 1
  %v2044 = vsel %vm1984, %v2042, %v2043
  %v2045 = vrot.slane %v1854, 1
  %v2046 = vrot.slane %v1857, 1
  %v2047 = vsel %vm1984, %v2045, %v2046
  %v2048 = vrot.slane %v1858, 1
  %v2049 = vrot.slane %v1861, 1
  %v2050 = vsel %vm1984, %v2048, %v2049
  %v2051 = vrot.slane %v1859, 1
  %v2052 = vrot.slane %v1862, 1
  %v2053 = vsel %vm1984, %v2051, %v2052
  %v2054 = vrot.slane %v1860, 1
  %v2055 = vrot.slane %v1863, 1
  %v2056 = vsel %vm1984, %v2054, %v2055
  %v2057 = vrot.slane %v1864, 1
  %v2058 = vrot.slane %v1867, 1
  %v2059 = vsel %vm1984, %v2057, %v2058
  %v2060 = vrot.slane %v1865, 1
  %v2061 = vrot.slane %v1868, 1
  %v2062 = vsel %vm1984, %v2060, %v2061
  %v2063 = vrot.slane %v1866, 1
  %v2064 = vrot.slane %v1869, 1
  %v2065 = vsel %vm1984, %v2063, %v2064
  %v2066 = vrot.slane %v1870, 1
  %v2067 = vrot.slane %v1873, 1
  %v2068 = vsel %vm1984, %v2066, %v2067
  %v2069 = vrot.slane %v1871, 1
  %v2070 = vrot.slane %v1874, 1
  %v2071 = vsel %vm1984, %v2069, %v2070
  %v2072 = vrot.slane %v1872, 1
  %v2073 = vrot.slane %v1875, 1
  %v2074 = vsel %vm1984, %v2072, %v2073
  %v2075 = vrot.slane %v1876, 1
  %v2076 = vrot.slane %v1879, 1
  %v2077 = vsel %vm1984, %v2075, %v2076
  %v2078 = vrot.slane %v1877, 1
  %v2079 = vrot.slane %v1880, 1
  %v2080 = vsel %vm1984, %v2078, %v2079
  %v2081 = vrot.slane %v1878, 1
  %v2082 = vrot.slane %v1881, 1
  %v2083 = vsel %vm1984, %v2081, %v2082
  %v2084 = vrot.slane %v1882, 1
  %v2085 = vrot.slane %v1885, 1
  %v2086 = vsel %vm1984, %v2084, %v2085
  %v2087 = vrot.slane %v1883, 1
  %v2088 = vrot.slane %v1886, 1
  %v2089 = vsel %vm1984, %v2087, %v2088
  %v2090 = vrot.slane %v1884, 1
  %v2091 = vrot.slane %v1887, 1
  %v2092 = vsel %vm1984, %v2090, %v2091
  %v2093 = vrot.slane %v1888, 1
  %v2094 = vrot.slane %v1891, 1
  %v2095 = vsel %vm1984, %v2093, %v2094
  %v2096 = vrot.slane %v1889, 1
  %v2097 = vrot.slane %v1892, 1
  %v2098 = vsel %vm1984, %v2096, %v2097
  %v2099 = vrot.slane %v1890, 1
  %v2100 = vrot.slane %v1893, 1
  %v2101 = vsel %vm1984, %v2099, %v2100
  %v2102 = vrot.slane %v1894, 1
  %v2103 = vrot.slane %v1897, 1
  %v2104 = vsel %vm1984, %v2102, %v2103
  %v2105 = vrot.slane %v1895, 1
  %v2106 = vrot.slane %v1898, 1
  %v2107 = vsel %vm1984, %v2105, %v2106
  %v2108 = vrot.slane %v1896, 1
  %v2109 = vrot.slane %v1899, 1
  %v2110 = vsel %vm1984, %v2108, %v2109
  %v2195 = vadd.f32 %v1720, %v1987
  %v2196 = vadd.f32 %v1721, %v1990
  %v2197 = vadd.f32 %v1722, %v1993
  %v2198 = vadd.f32 %v1723, %v1986
  %v2199 = vadd.f32 %v1724, %v1989
  %v2200 = vadd.f32 %v1725, %v1992
  %v2201 = vadd.f32 %v1726, %v1996
  %v2202 = vadd.f32 %v1727, %v1999
  %v2203 = vadd.f32 %v1728, %v2002
  %v2204 = vadd.f32 %v1729, %v1995
  %v2205 = vadd.f32 %v1730, %v1998
  %v2206 = vadd.f32 %v1731, %v2001
  %v2207 = vadd.f32 %v1732, %v2005
  %v2208 = vadd.f32 %v1733, %v2008
  %v2209 = vadd.f32 %v1734, %v2011
  %v2210 = vadd.f32 %v1735, %v2004
  %v2211 = vadd.f32 %v1736, %v2007
  %v2212 = vadd.f32 %v1737, %v2010
  %v2213 = vadd.f32 %v1738, %v2014
  %v2214 = vadd.f32 %v1739, %v2017
  %v2215 = vadd.f32 %v1740, %v2020
  %v2216 = vadd.f32 %v1741, %v2013
  %v2217 = vadd.f32 %v1742, %v2016
  %v2218 = vadd.f32 %v1743, %v2019
  %v2219 = vadd.f32 %v1744, %v2023
  %v2220 = vadd.f32 %v1745, %v2026
  %v2221 = vadd.f32 %v1746, %v2029
  %v2222 = vadd.f32 %v1747, %v2022
  %v2223 = vadd.f32 %v1748, %v2025
  %v2224 = vadd.f32 %v1749, %v2028
  %v2225 = vadd.f32 %v1750, %v2032
  %v2226 = vadd.f32 %v1751, %v2035
  %v2227 = vadd.f32 %v1752, %v2038
  %v2228 = vadd.f32 %v1753, %v2031
  %v2229 = vadd.f32 %v1754, %v2034
  %v2230 = vadd.f32 %v1755, %v2037
  %v2231 = vadd.f32 %v1756, %v2041
  %v2232 = vadd.f32 %v1757, %v2044
  %v2233 = vadd.f32 %v1758, %v2047
  %v2234 = vadd.f32 %v1759, %v2040
  %v2235 = vadd.f32 %v1760, %v2043
  %v2236 = vadd.f32 %v1761, %v2046
  %v2237 = vadd.f32 %v1762, %v2050
  %v2238 = vadd.f32 %v1763, %v2053
  %v2239 = vadd.f32 %v1764, %v2056
  %v2240 = vadd.f32 %v1765, %v2049
  %v2241 = vadd.f32 %v1766, %v2052
  %v2242 = vadd.f32 %v1767, %v2055
  %v2243 = vadd.f32 %v1768, %v2059
  %v2244 = vadd.f32 %v1769, %v2062
  %v2245 = vadd.f32 %v1770, %v2065
  %v2246 = vadd.f32 %v1771, %v2058
  %v2247 = vadd.f32 %v1772, %v2061
  %v2248 = vadd.f32 %v1773, %v2064
  %v2249 = vadd.f32 %v1774, %v2068
  %v2250 = vadd.f32 %v1775, %v2071
  %v2251 = vadd.f32 %v1776, %v2074
  %v2252 = vadd.f32 %v1777, %v2067
  %v2253 = vadd.f32 %v1778, %v2070
  %v2254 = vadd.f32 %v1779, %v2073
  %v2255 = vadd.f32 %v1780, %v2077
  %v2256 = vadd.f32 %v1781, %v2080
  %v2257 = vadd.f32 %v1782, %v2083
  %v2258 = vadd.f32 %v1783, %v2076
  %v2259 = vadd.f32 %v1784, %v2079
  %v2260 = vadd.f32 %v1785, %v2082
  %v2261 = vadd.f32 %v1786, %v2086
  %v2262 = vadd.f32 %v1787, %v2089
  %v2263 = vadd.f32 %v1788, %v2092
  %v2264 = vadd.f32 %v1789, %v2085
  %v2265 = vadd.f32 %v1790, %v2088
  %v2266 = vadd.f32 %v1791, %v2091
  %v2267 = vadd.f32 %v1792, %v2095
  %v2268 = vadd.f32 %v1793, %v2098
  %v2269 = vadd.f32 %v1794, %v2101
  %v2270 = vadd.f32 %v1795, %v2094
  %v2271 = vadd.f32 %v1796, %v2097
  %v2272 = vadd.f32 %v1797, %v2100
  %v2273 = vadd.f32 %v1798, %v2104
  %v2274 = vadd.f32 %v1799, %v2107
  %v2275 = vadd.f32 %v1800, %v2110
  %v2276 = vadd.f32 %v1801, %v2103
  %v2277 = vadd.f32 %v1802, %v2106
  %v2278 = vadd.f32 %v1803, %v2109
  %v2279 = vlaneseq
  %v2280 = vshrl.u32 %v2279, 7
  %v2281 = vsub.s32 6, %v2280
  %v2282 = vrot.slane %v892, %v2281
  %v2283 = vlaneseq
  %v2284 = vshrl.u32 %v2283, 7
  %v2285 = vsub.s32 6, %v2284
  %v2286 = vrot.slane %v893, %v2285
  %v2287 = vlaneseq
  %v2288 = vshrl.u32 %v2287, 7
  %v2289 = vsub.s32 6, %v2288
  %v2290 = vrot.slane %v894, %v2289
  %v2291 = vmul.f32 %v739, %v2282
  %v2292 = vmul.f32 %v740, %v2286
  %v2293 = vmul.f32 %v741, %v2290
  %v2294 = vmul.f32 %v742, %v2282
  %v2295 = vmul.f32 %v743, %v2286
  %v2296 = vmul.f32 %v744, %v2290
  %v2297 = vmul.f32 %v748, %v2282
  %v2298 = vmul.f32 %v749, %v2286
  %v2299 = vmul.f32 %v750, %v2290
  %v2300 = vmul.f32 %v751, %v2282
  %v2301 = vmul.f32 %v752, %v2286
  %v2302 = vmul.f32 %v753, %v2290
  %v2303 = vmul.f32 %v757, %v2282
  %v2304 = vmul.f32 %v758, %v2286
  %v2305 = vmul.f32 %v759, %v2290
  %v2306 = vmul.f32 %v760, %v2282
  %v2307 = vmul.f32 %v761, %v2286
  %v2308 = vmul.f32 %v762, %v2290
  %v2309 = vmul.f32 %v766, %v2282
  %v2310 = vmul.f32 %v767, %v2286
  %v2311 = vmul.f32 %v768, %v2290
  %v2312 = vmul.f32 %v769, %v2282
  %v2313 = vmul.f32 %v770, %v2286
  %v2314 = vmul.f32 %v771, %v2290
  %v2315 = vmul.f32 %v775, %v2282
  %v2316 = vmul.f32 %v776, %v2286
  %v2317 = vmul.f32 %v777, %v2290
  %v2318 = vmul.f32 %v778, %v2282
  %v2319 = vmul.f32 %v779, %v2286
  %v2320 = vmul.f32 %v780, %v2290
  %v2321 = vmul.f32 %v784, %v2282
  %v2322 = vmul.f32 %v785, %v2286
  %v2323 = vmul.f32 %v786, %v2290
  %v2324 = vmul.f32 %v787, %v2282
  %v2325 = vmul.f32 %v788, %v2286
  %v2326 = vmul.f32 %v789, %v2290
  %v2327 = vmul.f32 %v793, %v2282
  %v2328 = vmul.f32 %v794, %v2286
  %v2329 = vmul.f32 %v795, %v2290
  %v2330 = vmul.f32 %v796, %v2282
  %v2331 = vmul.f32 %v797, %v2286
  %v2332 = vmul.f32 %v798, %v2290
  %v2333 = vmul.f32 %v802, %v2282
  %v2334 = vmul.f32 %v803, %v2286
  %v2335 = vmul.f32 %v804, %v2290
  %v2336 = vmul.f32 %v805, %v2282
  %v2337 = vmul.f32 %v806, %v2286
  %v2338 = vmul.f32 %v807, %v2290
  %v2339 = vmul.f32 %v811, %v2282
  %v2340 = vmul.f32 %v812, %v2286
  %v2341 = vmul.f32 %v813, %v2290
  %v2342 = vmul.f32 %v814, %v2282
  %v2343 = vmul.f32 %v815, %v2286
  %v2344 = vmul.f32 %v816, %v2290
  %v2345 = vmul.f32 %v820, %v2282
  %v2346 = vmul.f32 %v821, %v2286
  %v2347 = vmul.f32 %v822, %v2290
  %v2348 = vmul.f32 %v823, %v2282
  %v2349 = vmul.f32 %v824, %v2286
  %v2350 = vmul.f32 %v825, %v2290
  %v2351 = vmul.f32 %v829, %v2282
  %v2352 = vmul.f32 %v830, %v2286
  %v2353 = vmul.f32 %v831, %v2290
  %v2354 = vmul.f32 %v832, %v2282
  %v2355 = vmul.f32 %v833, %v2286
  %v2356 = vmul.f32 %v834, %v2290
  %v2357 = vmul.f32 %v838, %v2282
  %v2358 = vmul.f32 %v839, %v2286
  %v2359 = vmul.f32 %v840, %v2290
  %v2360 = vmul.f32 %v841, %v2282
  %v2361 = vmul.f32 %v842, %v2286
  %v2362 = vmul.f32 %v843, %v2290
  %v2363 = vmul.f32 %v847, %v2282
  %v2364 = vmul.f32 %v848, %v2286
  %v2365 = vmul.f32 %v849, %v2290
  %v2366 = vmul.f32 %v850, %v2282
  %v2367 = vmul.f32 %v851, %v2286
  %v2368 = vmul.f32 %v852, %v2290
  %v2369 = vmul.f32 %v856, %v2282
  %v2370 = vmul.f32 %v857, %v2286
  %v2371 = vmul.f32 %v858, %v2290
  %v2372 = vmul.f32 %v859, %v2282
  %v2373 = vmul.f32 %v860, %v2286
  %v2374 = vmul.f32 %v861, %v2290
  %v2459 = vrot.slane %v2291, 1
  %v2460 = vrot.slane %v2294, 1
  %v2461 = vsel %vm1984, %v2459, %v2460
  %v2462 = vrot.slane %v2292, 1
  %v2463 = vrot.slane %v2295, 1
  %v2464 = vsel %vm1984, %v2462, %v2463
  %v2465 = vrot.slane %v2293, 1
  %v2466 = vrot.slane %v2296, 1
  %v2467 = vsel %vm1984, %v2465, %v2466
  %v2468 = vrot.slane %v2297, 1
  %v2469 = vrot.slane %v2300, 1
  %v2470 = vsel %vm1984, %v2468, %v2469
  %v2471 = vrot.slane %v2298, 1
  %v2472 = vrot.slane %v2301, 1
  %v2473 = vsel %vm1984, %v2471, %v2472
  %v2474 = vrot.slane %v2299, 1
  %v2475 = vrot.slane %v2302, 1
  %v2476 = vsel %vm1984, %v2474, %v2475
  %v2477 = vrot.slane %v2303, 1
  %v2478 = vrot.slane %v2306, 1
  %v2479 = vsel %vm1984, %v2477, %v2478
  %v2480 = vrot.slane %v2304, 1
  %v2481 = vrot.slane %v2307, 1
  %v2482 = vsel %vm1984, %v2480, %v2481
  %v2483 = vrot.slane %v2305, 1
  %v2484 = vrot.slane %v2308, 1
  %v2485 = vsel %vm1984, %v2483, %v2484
  %v2486 = vrot.slane %v2309, 1
  %v2487 = vrot.slane %v2312, 1
  %v2488 = vsel %vm1984, %v2486, %v2487
  %v2489 = vrot.slane %v2310, 1
  %v2490 = vrot.slane %v2313, 1
  %v2491 = vsel %vm1984, %v2489, %v2490
  %v2492 = vrot.slane %v2311, 1
  %v2493 = vrot.slane %v2314, 1
  %v2494 = vsel %vm1984, %v2492, %v2493
  %v2495 = vrot.slane %v2315, 1
  %v2496 = vrot.slane %v2318, 1
  %v2497 = vsel %vm1984, %v2495, %v2496
  %v2498 = vrot.slane %v2316, 1
  %v2499 = vrot.slane %v2319, 1
  %v2500 = vsel %vm1984, %v2498, %v2499
  %v2501 = vrot.slane %v2317, 1
  %v2502 = vrot.slane %v2320, 1
  %v2503 = vsel %vm1984, %v2501, %v2502
  %v2504 = vrot.slane %v2321, 1
  %v2505 = vrot.slane %v2324, 1
  %v2506 = vsel %vm1984, %v2504, %v2505
  %v2507 = vrot.slane %v2322, 1
  %v2508 = vrot.slane %v2325, 1
  %v2509 = vsel %vm1984, %v2507, %v2508
  %v2510 = vrot.slane %v2323, 1
  %v2511 = vrot.slane %v2326, 1
  %v2512 = vsel %vm1984, %v2510, %v2511
  %v2513 = vrot.slane %v2327, 1
  %v2514 = vrot.slane %v2330, 1
  %v2515 = vsel %vm1984, %v2513, %v2514
  %v2516 = vrot.slane %v2328, 1
  %v2517 = vrot.slane %v2331, 1
  %v2518 = vsel %vm1984, %v2516, %v2517
  %v2519 = vrot.slane %v2329, 1
  %v2520 = vrot.slane %v2332, 1
  %v2521 = vsel %vm1984, %v2519, %v2520
  %v2522 = vrot.slane %v2333, 1
  %v2523 = vrot.slane %v2336, 1
  %v2524 = vsel %vm1984, %v2522, %v2523
  %v2525 = vrot.slane %v2334, 1
  %v2526 = vrot.slane %v2337, 1
  %v2527 = vsel %vm1984, %v2525, %v2526
  %v2528 = vrot.slane %v2335, 1
  %v2529 = vrot.slane %v2338, 1
  %v2530 = vsel %vm1984, %v2528, %v2529
  %v2531 = vrot.slane %v2339, 1
  %v2532 = vrot.slane %v2342, 1
  %v2533 = vsel %vm1984, %v2531, %v2532
  %v2534 = vrot.slane %v2340, 1
  %v2535 = vrot.slane %v2343, 1
  %v2536 = vsel %vm1984, %v2534, %v2535
  %v2537 = vrot.slane %v2341, 1
  %v2538 = vrot.slane %v2344, 1
  %v2539 = vsel %vm1984, %v2537, %v2538
  %v2540 = vrot.slane %v2345, 1
  %v2541 = vrot.slane %v2348, 1
  %v2542 = vsel %vm1984, %v2540, %v2541
  %v2543 = vrot.slane %v2346, 1
  %v2544 = vrot.slane %v2349, 1
  %v2545 = vsel %vm1984, %v2543, %v2544
  %v2546 = vrot.slane %v2347, 1
  %v2547 = vrot.slane %v2350, 1
  %v2548 = vsel %vm1984, %v2546, %v2547
  %v2549 = vrot.slane %v2351, 1
  %v2550 = vrot.slane %v2354, 1
  %v2551 = vsel %vm1984, %v2549, %v2550
  %v2552 = vrot.slane %v2352, 1
  %v2553 = vrot.slane %v2355, 1
  %v2554 = vsel %vm1984, %v2552, %v2553
  %v2555 = vrot.slane %v2353, 1
  %v2556 = vrot.slane %v2356, 1
  %v2557 = vsel %vm1984, %v2555, %v2556
  %v2558 = vrot.slane %v2357, 1
  %v2559 = vrot.slane %v2360, 1
  %v2560 = vsel %vm1984, %v2558, %v2559
  %v2561 = vrot.slane %v2358, 1
  %v2562 = vrot.slane %v2361, 1
  %v2563 = vsel %vm1984, %v2561, %v2562
  %v2564 = vrot.slane %v2359, 1
  %v2565 = vrot.slane %v2362, 1
  %v2566 = vsel %vm1984, %v2564, %v2565
  %v2567 = vrot.slane %v2363, 1
  %v2568 = vrot.slane %v2366, 1
  %v2569 = vsel %vm1984, %v2567, %v2568
  %v2570 = vrot.slane %v2364, 1
  %v2571 = vrot.slane %v2367, 1
  %v2572 = vsel %vm1984, %v2570, %v2571
  %v2573 = vrot.slane %v2365, 1
  %v2574 = vrot.slane %v2368, 1
  %v2575 = vsel %vm1984, %v2573, %v2574
  %v2576 = vrot.slane %v2369, 1
  %v2577 = vrot.slane %v2372, 1
  %v2578 = vsel %vm1984, %v2576, %v2577
  %v2579 = vrot.slane %v2370, 1
  %v2580 = vrot.slane %v2373, 1
  %v2581 = vsel %vm1984, %v2579, %v2580
  %v2582 = vrot.slane %v2371, 1
  %v2583 = vrot.slane %v2374, 1
  %v2584 = vsel %vm1984, %v2582, %v2583
  %v2669 = vadd.f32 %v2195, %v2461
  %v2670 = vadd.f32 %v2196, %v2464
  %v2671 = vadd.f32 %v2197, %v2467
  %v2672 = vadd.f32 %v2198, %v2460
  %v2673 = vadd.f32 %v2199, %v2463
  %v2674 = vadd.f32 %v2200, %v2466
  %v2675 = vadd.f32 %v2201, %v2470
  %v2676 = vadd.f32 %v2202, %v2473
  %v2677 = vadd.f32 %v2203, %v2476
  %v2678 = vadd.f32 %v2204, %v2469
  %v2679 = vadd.f32 %v2205, %v2472
  %v2680 = vadd.f32 %v2206, %v2475
  %v2681 = vadd.f32 %v2207, %v2479
  %v2682 = vadd.f32 %v2208, %v2482
  %v2683 = vadd.f32 %v2209, %v2485
  %v2684 = vadd.f32 %v2210, %v2478
  %v2685 = vadd.f32 %v2211, %v2481
  %v2686 = vadd.f32 %v2212, %v2484
  %v2687 = vadd.f32 %v2213, %v2488
  %v2688 = vadd.f32 %v2214, %v2491
  %v2689 = vadd.f32 %v2215, %v2494
  %v2690 = vadd.f32 %v2216, %v2487
  %v2691 = vadd.f32 %v2217, %v2490
  %v2692 = vadd.f32 %v2218, %v2493
  %v2693 = vadd.f32 %v2219, %v2497
  %v2694 = vadd.f32 %v2220, %v2500
  %v2695 = vadd.f32 %v2221, %v2503
  %v2696 = vadd.f32 %v2222, %v2496
  %v2697 = vadd.f32 %v2223, %v2499
  %v2698 = vadd.f32 %v2224, %v2502
  %v2699 = vadd.f32 %v2225, %v2506
  %v2700 = vadd.f32 %v2226, %v2509
  %v2701 = vadd.f32 %v2227, %v2512
  %v2702 = vadd.f32 %v2228, %v2505
  %v2703 = vadd.f32 %v2229, %v2508
  %v2704 = vadd.f32 %v2230, %v2511
  %v2705 = vadd.f32 %v2231, %v2515
  %v2706 = vadd.f32 %v2232, %v2518
  %v2707 = vadd.f32 %v2233, %v2521
  %v2708 = vadd.f32 %v2234, %v2514
  %v2709 = vadd.f32 %v2235, %v2517
  %v2710 = vadd.f32 %v2236, %v2520
  %v2711 = vadd.f32 %v2237, %v2524
  %v2712 = vadd.f32 %v2238, %v2527
  %v2713 = vadd.f32 %v2239, %v2530
  %v2714 = vadd.f32 %v2240, %v2523
  %v2715 = vadd.f32 %v2241, %v2526
  %v2716 = vadd.f32 %v2242, %v2529
  %v2717 = vadd.f32 %v2243, %v2533
  %v2718 = vadd.f32 %v2244, %v2536
  %v2719 = vadd.f32 %v2245, %v2539
  %v2720 = vadd.f32 %v2246, %v2532
  %v2721 = vadd.f32 %v2247, %v2535
  %v2722 = vadd.f32 %v2248, %v2538
  %v2723 = vadd.f32 %v2249, %v2542
  %v2724 = vadd.f32 %v2250, %v2545
  %v2725 = vadd.f32 %v2251, %v2548
  %v2726 = vadd.f32 %v2252, %v2541
  %v2727 = vadd.f32 %v2253, %v2544
  %v2728 = vadd.f32 %v2254, %v2547
  %v2729 = vadd.f32 %v2255, %v2551
  %v2730 = vadd.f32 %v2256, %v2554
  %v2731 = vadd.f32 %v2257, %v2557
  %v2732 = vadd.f32 %v2258, %v2550
  %v2733 = vadd.f32 %v2259, %v2553
  %v2734 = vadd.f32 %v2260, %v2556
  %v2735 = vadd.f32 %v2261, %v2560
  %v2736 = vadd.f32 %v2262, %v2563
  %v2737 = vadd.f32 %v2263, %v2566
  %v2738 = vadd.f32 %v2264, %v2559
  %v2739 = vadd.f32 %v2265, %v2562
  %v2740 = vadd.f32 %v2266, %v2565
  %v2741 = vadd.f32 %v2267, %v2569
  %v2742 = vadd.f32 %v2268, %v2572
  %v2743 = vadd.f32 %v2269, %v2575
  %v2744 = vadd.f32 %v2270, %v2568
  %v2745 = vadd.f32 %v2271, %v2571
  %v2746 = vadd.f32 %v2272, %v2574
  %v2747 = vadd.f32 %v2273, %v2578
  %v2748 = vadd.f32 %v2274, %v2581
  %v2749 = vadd.f32 %v2275, %v2584
  %v2750 = vadd.f32 %v2276, %v2577
  %v2751 = vadd.f32 %v2277, %v2580
  %v2752 = vadd.f32 %v2278, %v2583
  %v2753 = vlaneseq
  %v2754 = vshrl.u32 %v2753, 7
  %v2755 = vsub.s32 3, %v2754
  %v2756 = vrot.slane %v895, %v2755
  %v2757 = vlaneseq
  %v2758 = vshrl.u32 %v2757, 7
  %v2759 = vsub.s32 3, %v2758
  %v2760 = vrot.slane %v896, %v2759
  %v2761 = vlaneseq
  %v2762 = vshrl.u32 %v2761, 7
  %v2763 = vsub.s32 3, %v2762
  %v2764 = vrot.slane %v897, %v2763
  %v2765 = vmul.f32 %v748, %v2756
  %v2766 = vmul.f32 %v749, %v2760
  %v2767 = vmul.f32 %v750, %v2764
  %v2768 = vmul.f32 %v751, %v2756
  %v2769 = vmul.f32 %v752, %v2760
  %v2770 = vmul.f32 %v753, %v2764
  %v2771 = vmul.f32 %v757, %v2756
  %v2772 = vmul.f32 %v758, %v2760
  %v2773 = vmul.f32 %v759, %v2764
  %v2774 = vmul.f32 %v760, %v2756
  %v2775 = vmul.f32 %v761, %v2760
  %v2776 = vmul.f32 %v762, %v2764
  %v2777 = vmul.f32 %v766, %v2756
  %v2778 = vmul.f32 %v767, %v2760
  %v2779 = vmul.f32 %v768, %v2764
  %v2780 = vmul.f32 %v769, %v2756
  %v2781 = vmul.f32 %v770, %v2760
  %v2782 = vmul.f32 %v771, %v2764
  %v2783 = vmul.f32 %v775, %v2756
  %v2784 = vmul.f32 %v776, %v2760
  %v2785 = vmul.f32 %v777, %v2764
  %v2786 = vmul.f32 %v778, %v2756
  %v2787 = vmul.f32 %v779, %v2760
  %v2788 = vmul.f32 %v780, %v2764
  %v2789 = vmul.f32 %v784, %v2756
  %v2790 = vmul.f32 %v785, %v2760
  %v2791 = vmul.f32 %v786, %v2764
  %v2792 = vmul.f32 %v787, %v2756
  %v2793 = vmul.f32 %v788, %v2760
  %v2794 = vmul.f32 %v789, %v2764
  %v2795 = vmul.f32 %v793, %v2756
  %v2796 = vmul.f32 %v794, %v2760
  %v2797 = vmul.f32 %v795, %v2764
  %v2798 = vmul.f32 %v796, %v2756
  %v2799 = vmul.f32 %v797, %v2760
  %v2800 = vmul.f32 %v798, %v2764
  %v2801 = vmul.f32 %v802, %v2756
  %v2802 = vmul.f32 %v803, %v2760
  %v2803 = vmul.f32 %v804, %v2764
  %v2804 = vmul.f32 %v805, %v2756
  %v2805 = vmul.f32 %v806, %v2760
  %v2806 = vmul.f32 %v807, %v2764
  %v2807 = vmul.f32 %v811, %v2756
  %v2808 = vmul.f32 %v812, %v2760
  %v2809 = vmul.f32 %v813, %v2764
  %v2810 = vmul.f32 %v814, %v2756
  %v2811 = vmul.f32 %v815, %v2760
  %v2812 = vmul.f32 %v816, %v2764
  %v2813 = vmul.f32 %v820, %v2756
  %v2814 = vmul.f32 %v821, %v2760
  %v2815 = vmul.f32 %v822, %v2764
  %v2816 = vmul.f32 %v823, %v2756
  %v2817 = vmul.f32 %v824, %v2760
  %v2818 = vmul.f32 %v825, %v2764
  %v2819 = vmul.f32 %v829, %v2756
  %v2820 = vmul.f32 %v830, %v2760
  %v2821 = vmul.f32 %v831, %v2764
  %v2822 = vmul.f32 %v832, %v2756
  %v2823 = vmul.f32 %v833, %v2760
  %v2824 = vmul.f32 %v834, %v2764
  %v2825 = vmul.f32 %v838, %v2756
  %v2826 = vmul.f32 %v839, %v2760
  %v2827 = vmul.f32 %v840, %v2764
  %v2828 = vmul.f32 %v841, %v2756
  %v2829 = vmul.f32 %v842, %v2760
  %v2830 = vmul.f32 %v843, %v2764
  %v2831 = vmul.f32 %v847, %v2756
  %v2832 = vmul.f32 %v848, %v2760
  %v2833 = vmul.f32 %v849, %v2764
  %v2834 = vmul.f32 %v850, %v2756
  %v2835 = vmul.f32 %v851, %v2760
  %v2836 = vmul.f32 %v852, %v2764
  %v2837 = vmul.f32 %v856, %v2756
  %v2838 = vmul.f32 %v857, %v2760
  %v2839 = vmul.f32 %v858, %v2764
  %v2840 = vmul.f32 %v859, %v2756
  %v2841 = vmul.f32 %v860, %v2760
  %v2842 = vmul.f32 %v861, %v2764
  %v2843 = vmul.f32 %v865, %v2756
  %v2844 = vmul.f32 %v866, %v2760
  %v2845 = vmul.f32 %v867, %v2764
  %v2846 = vmul.f32 %v868, %v2756
  %v2847 = vmul.f32 %v869, %v2760
  %v2848 = vmul.f32 %v870, %v2764
  %v2933 = vrot.slane %v2765, 1
  %v2934 = vrot.slane %v2768, 1
  %v2935 = vsel %vm1984, %v2933, %v2934
  %v2936 = vrot.slane %v2766, 1
  %v2937 = vrot.slane %v2769, 1
  %v2938 = vsel %vm1984, %v2936, %v2937
  %v2939 = vrot.slane %v2767, 1
  %v2940 = vrot.slane %v2770, 1
  %v2941 = vsel %vm1984, %v2939, %v2940
  %v2942 = vrot.slane %v2771, 1
  %v2943 = vrot.slane %v2774, 1
  %v2944 = vsel %vm1984, %v2942, %v2943
  %v2945 = vrot.slane %v2772, 1
  %v2946 = vrot.slane %v2775, 1
  %v2947 = vsel %vm1984, %v2945, %v2946
  %v2948 = vrot.slane %v2773, 1
  %v2949 = vrot.slane %v2776, 1
  %v2950 = vsel %vm1984, %v2948, %v2949
  %v2951 = vrot.slane %v2777, 1
  %v2952 = vrot.slane %v2780, 1
  %v2953 = vsel %vm1984, %v2951, %v2952
  %v2954 = vrot.slane %v2778, 1
  %v2955 = vrot.slane %v2781, 1
  %v2956 = vsel %vm1984, %v2954, %v2955
  %v2957 = vrot.slane %v2779, 1
  %v2958 = vrot.slane %v2782, 1
  %v2959 = vsel %vm1984, %v2957, %v2958
  %v2960 = vrot.slane %v2783, 1
  %v2961 = vrot.slane %v2786, 1
  %v2962 = vsel %vm1984, %v2960, %v2961
  %v2963 = vrot.slane %v2784, 1
  %v2964 = vrot.slane %v2787, 1
  %v2965 = vsel %vm1984, %v2963, %v2964
  %v2966 = vrot.slane %v2785, 1
  %v2967 = vrot.slane %v2788, 1
  %v2968 = vsel %vm1984, %v2966, %v2967
  %v2969 = vrot.slane %v2789, 1
  %v2970 = vrot.slane %v2792, 1
  %v2971 = vsel %vm1984, %v2969, %v2970
  %v2972 = vrot.slane %v2790, 1
  %v2973 = vrot.slane %v2793, 1
  %v2974 = vsel %vm1984, %v2972, %v2973
  %v2975 = vrot.slane %v2791, 1
  %v2976 = vrot.slane %v2794, 1
  %v2977 = vsel %vm1984, %v2975, %v2976
  %v2978 = vrot.slane %v2795, 1
  %v2979 = vrot.slane %v2798, 1
  %v2980 = vsel %vm1984, %v2978, %v2979
  %v2981 = vrot.slane %v2796, 1
  %v2982 = vrot.slane %v2799, 1
  %v2983 = vsel %vm1984, %v2981, %v2982
  %v2984 = vrot.slane %v2797, 1
  %v2985 = vrot.slane %v2800, 1
  %v2986 = vsel %vm1984, %v2984, %v2985
  %v2987 = vrot.slane %v2801, 1
  %v2988 = vrot.slane %v2804, 1
  %v2989 = vsel %vm1984, %v2987, %v2988
  %v2990 = vrot.slane %v2802, 1
  %v2991 = vrot.slane %v2805, 1
  %v2992 = vsel %vm1984, %v2990, %v2991
  %v2993 = vrot.slane %v2803, 1
  %v2994 = vrot.slane %v2806, 1
  %v2995 = vsel %vm1984, %v2993, %v2994
  %v2996 = vrot.slane %v2807, 1
  %v2997 = vrot.slane %v2810, 1
  %v2998 = vsel %vm1984, %v2996, %v2997
  %v2999 = vrot.slane %v2808, 1
  %v3000 = vrot.slane %v2811, 1
  %v3001 = vsel %vm1984, %v2999, %v3000
  %v3002 = vrot.slane %v2809, 1
  %v3003 = vrot.slane %v2812, 1
  %v3004 = vsel %vm1984, %v3002, %v3003
  %v3005 = vrot.slane %v2813, 1
  %v3006 = vrot.slane %v2816, 1
  %v3007 = vsel %vm1984, %v3005, %v3006
  %v3008 = vrot.slane %v2814, 1
  %v3009 = vrot.slane %v2817, 1
  %v3010 = vsel %vm1984, %v3008, %v3009
  %v3011 = vrot.slane %v2815, 1
  %v3012 = vrot.slane %v2818, 1
  %v3013 = vsel %vm1984, %v3011, %v3012
  %v3014 = vrot.slane %v2819, 1
  %v3015 = vrot.slane %v2822, 1
  %v3016 = vsel %vm1984, %v3014, %v3015
  %v3017 = vrot.slane %v2820, 1
  %v3018 = vrot.slane %v2823, 1
  %v3019 = vsel %vm1984, %v3017, %v3018
  %v3020 = vrot.slane %v2821, 1
  %v3021 = vrot.slane %v2824, 1
  %v3022 = vsel %vm1984, %v3020, %v3021
  %v3023 = vrot.slane %v2825, 1
  %v3024 = vrot.slane %v2828, 1
  %v3025 = vsel %vm1984, %v3023, %v3024
  %v3026 = vrot.slane %v2826, 1
  %v3027 = vrot.slane %v2829, 1
  %v3028 = vsel %vm1984, %v3026, %v3027
  %v3029 = vrot.slane %v2827, 1
  %v3030 = vrot.slane %v2830, 1
  %v3031 = vsel %vm1984, %v3029, %v3030
  %v3032 = vrot.slane %v2831, 1
  %v3033 = vrot.slane %v2834, 1
  %v3034 = vsel %vm1984, %v3032, %v3033
  %v3035 = vrot.slane %v2832, 1
  %v3036 = vrot.slane %v2835, 1
  %v3037 = vsel %vm1984, %v3035, %v3036
  %v3038 = vrot.slane %v2833, 1
  %v3039 = vrot.slane %v2836, 1
  %v3040 = vsel %vm1984, %v3038, %v3039
  %v3041 = vrot.slane %v2837, 1
  %v3042 = vrot.slane %v2840, 1
  %v3043 = vsel %vm1984, %v3041, %v3042
  %v3044 = vrot.slane %v2838, 1
  %v3045 = vrot.slane %v2841, 1
  %v3046 = vsel %vm1984, %v3044, %v3045
  %v3047 = vrot.slane %v2839, 1
  %v3048 = vrot.slane %v2842, 1
  %v3049 = vsel %vm1984, %v3047, %v3048
  %v3050 = vrot.slane %v2843, 1
  %v3051 = vrot.slane %v2846, 1
  %v3052 = vsel %vm1984, %v3050, %v3051
  %v3053 = vrot.slane %v2844, 1
  %v3054 = vrot.slane %v2847, 1
  %v3055 = vsel %vm1984, %v3053, %v3054
  %v3056 = vrot.slane %v2845, 1
  %v3057 = vrot.slane %v2848, 1
  %v3058 = vsel %vm1984, %v3056, %v3057
  %v3143 = vadd.f32 %v2669, %v2935
  %v3144 = vadd.f32 %v2670, %v2938
  %v3145 = vadd.f32 %v2671, %v2941
  %v3146 = vadd.f32 %v2672, %v2934
  %v3147 = vadd.f32 %v2673, %v2937
  %v3148 = vadd.f32 %v2674, %v2940
  %v3149 = vadd.f32 %v2675, %v2944
  %v3150 = vadd.f32 %v2676, %v2947
  %v3151 = vadd.f32 %v2677, %v2950
  %v3152 = vadd.f32 %v2678, %v2943
  %v3153 = vadd.f32 %v2679, %v2946
  %v3154 = vadd.f32 %v2680, %v2949
  %v3155 = vadd.f32 %v2681, %v2953
  %v3156 = vadd.f32 %v2682, %v2956
  %v3157 = vadd.f32 %v2683, %v2959
  %v3158 = vadd.f32 %v2684, %v2952
  %v3159 = vadd.f32 %v2685, %v2955
  %v3160 = vadd.f32 %v2686, %v2958
  %v3161 = vadd.f32 %v2687, %v2962
  %v3162 = vadd.f32 %v2688, %v2965
  %v3163 = vadd.f32 %v2689, %v2968
  %v3164 = vadd.f32 %v2690, %v2961
  %v3165 = vadd.f32 %v2691, %v2964
  %v3166 = vadd.f32 %v2692, %v2967
  %v3167 = vadd.f32 %v2693, %v2971
  %v3168 = vadd.f32 %v2694, %v2974
  %v3169 = vadd.f32 %v2695, %v2977
  %v3170 = vadd.f32 %v2696, %v2970
  %v3171 = vadd.f32 %v2697, %v2973
  %v3172 = vadd.f32 %v2698, %v2976
  %v3173 = vadd.f32 %v2699, %v2980
  %v3174 = vadd.f32 %v2700, %v2983
  %v3175 = vadd.f32 %v2701, %v2986
  %v3176 = vadd.f32 %v2702, %v2979
  %v3177 = vadd.f32 %v2703, %v2982
  %v3178 = vadd.f32 %v2704, %v2985
  %v3179 = vadd.f32 %v2705, %v2989
  %v3180 = vadd.f32 %v2706, %v2992
  %v3181 = vadd.f32 %v2707, %v2995
  %v3182 = vadd.f32 %v2708, %v2988
  %v3183 = vadd.f32 %v2709, %v2991
  %v3184 = vadd.f32 %v2710, %v2994
  %v3185 = vadd.f32 %v2711, %v2998
  %v3186 = vadd.f32 %v2712, %v3001
  %v3187 = vadd.f32 %v2713, %v3004
  %v3188 = vadd.f32 %v2714, %v2997
  %v3189 = vadd.f32 %v2715, %v3000
  %v3190 = vadd.f32 %v2716, %v3003
  %v3191 = vadd.f32 %v2717, %v3007
  %v3192 = vadd.f32 %v2718, %v3010
  %v3193 = vadd.f32 %v2719, %v3013
  %v3194 = vadd.f32 %v2720, %v3006
  %v3195 = vadd.f32 %v2721, %v3009
  %v3196 = vadd.f32 %v2722, %v3012
  %v3197 = vadd.f32 %v2723, %v3016
  %v3198 = vadd.f32 %v2724, %v3019
  %v3199 = vadd.f32 %v2725, %v3022
  %v3200 = vadd.f32 %v2726, %v3015
  %v3201 = vadd.f32 %v2727, %v3018
  %v3202 = vadd.f32 %v2728, %v3021
  %v3203 = vadd.f32 %v2729, %v3025
  %v3204 = vadd.f32 %v2730, %v3028
  %v3205 = vadd.f32 %v2731, %v3031
  %v3206 = vadd.f32 %v2732, %v3024
  %v3207 = vadd.f32 %v2733, %v3027
  %v3208 = vadd.f32 %v2734, %v3030
  %v3209 = vadd.f32 %v2735, %v3034
  %v3210 = vadd.f32 %v2736, %v3037
  %v3211 = vadd.f32 %v2737, %v3040
  %v3212 = vadd.f32 %v2738, %v3033
  %v3213 = vadd.f32 %v2739, %v3036
  %v3214 = vadd.f32 %v2740, %v3039
  %v3215 = vadd.f32 %v2741, %v3043
  %v3216 = vadd.f32 %v2742, %v3046
  %v3217 = vadd.f32 %v2743, %v3049
  %v3218 = vadd.f32 %v2744, %v3042
  %v3219 = vadd.f32 %v2745, %v3045
  %v3220 = vadd.f32 %v2746, %v3048
  %v3221 = vadd.f32 %v2747, %v3052
  %v3222 = vadd.f32 %v2748, %v3055
  %v3223 = vadd.f32 %v2749, %v3058
  %v3224 = vadd.f32 %v2750, %v3051
  %v3225 = vadd.f32 %v2751, %v3054
  %v3226 = vadd.f32 %v2752, %v3057
  %v3227 = vlaneseq
  %v3228 = vshrl.u32 %v3227, 7
  %v3229 = vsub.s32 0, %v3228
  %v3230 = vrot.slane %v898, %v3229
  %v3231 = vlaneseq
  %v3232 = vshrl.u32 %v3231, 7
  %v3233 = vsub.s32 0, %v3232
  %v3234 = vrot.slane %v899, %v3233
  %v3235 = vlaneseq
  %v3236 = vshrl.u32 %v3235, 7
  %v3237 = vsub.s32 0, %v3236
  %v3238 = vrot.slane %v900, %v3237
  %v3239 = vmul.f32 %v757, %v3230
  %v3240 = vmul.f32 %v758, %v3234
  %v3241 = vmul.f32 %v759, %v3238
  %v3242 = vmul.f32 %v760, %v3230
  %v3243 = vmul.f32 %v761, %v3234
  %v3244 = vmul.f32 %v762, %v3238
  %v3245 = vmul.f32 %v766, %v3230
  %v3246 = vmul.f32 %v767, %v3234
  %v3247 = vmul.f32 %v768, %v3238
  %v3248 = vmul.f32 %v769, %v3230
  %v3249 = vmul.f32 %v770, %v3234
  %v3250 = vmul.f32 %v771, %v3238
  %v3251 = vmul.f32 %v775, %v3230
  %v3252 = vmul.f32 %v776, %v3234
  %v3253 = vmul.f32 %v777, %v3238
  %v3254 = vmul.f32 %v778, %v3230
  %v3255 = vmul.f32 %v779, %v3234
  %v3256 = vmul.f32 %v780, %v3238
  %v3257 = vmul.f32 %v784, %v3230
  %v3258 = vmul.f32 %v785, %v3234
  %v3259 = vmul.f32 %v786, %v3238
  %v3260 = vmul.f32 %v787, %v3230
  %v3261 = vmul.f32 %v788, %v3234
  %v3262 = vmul.f32 %v789, %v3238
  %v3263 = vmul.f32 %v793, %v3230
  %v3264 = vmul.f32 %v794, %v3234
  %v3265 = vmul.f32 %v795, %v3238
  %v3266 = vmul.f32 %v796, %v3230
  %v3267 = vmul.f32 %v797, %v3234
  %v3268 = vmul.f32 %v798, %v3238
  %v3269 = vmul.f32 %v802, %v3230
  %v3270 = vmul.f32 %v803, %v3234
  %v3271 = vmul.f32 %v804, %v3238
  %v3272 = vmul.f32 %v805, %v3230
  %v3273 = vmul.f32 %v806, %v3234
  %v3274 = vmul.f32 %v807, %v3238
  %v3275 = vmul.f32 %v811, %v3230
  %v3276 = vmul.f32 %v812, %v3234
  %v3277 = vmul.f32 %v813, %v3238
  %v3278 = vmul.f32 %v814, %v3230
  %v3279 = vmul.f32 %v815, %v3234
  %v3280 = vmul.f32 %v816, %v3238
  %v3281 = vmul.f32 %v820, %v3230
  %v3282 = vmul.f32 %v821, %v3234
  %v3283 = vmul.f32 %v822, %v3238
  %v3284 = vmul.f32 %v823, %v3230
  %v3285 = vmul.f32 %v824, %v3234
  %v3286 = vmul.f32 %v825, %v3238
  %v3287 = vmul.f32 %v829, %v3230
  %v3288 = vmul.f32 %v830, %v3234
  %v3289 = vmul.f32 %v831, %v3238
  %v3290 = vmul.f32 %v832, %v3230
  %v3291 = vmul.f32 %v833, %v3234
  %v3292 = vmul.f32 %v834, %v3238
  %v3293 = vmul.f32 %v838, %v3230
  %v3294 = vmul.f32 %v839, %v3234
  %v3295 = vmul.f32 %v840, %v3238
  %v3296 = vmul.f32 %v841, %v3230
  %v3297 = vmul.f32 %v842, %v3234
  %v3298 = vmul.f32 %v843, %v3238
  %v3299 = vmul.f32 %v847, %v3230
  %v3300 = vmul.f32 %v848, %v3234
  %v3301 = vmul.f32 %v849, %v3238
  %v3302 = vmul.f32 %v850, %v3230
  %v3303 = vmul.f32 %v851, %v3234
  %v3304 = vmul.f32 %v852, %v3238
  %v3305 = vmul.f32 %v856, %v3230
  %v3306 = vmul.f32 %v857, %v3234
  %v3307 = vmul.f32 %v858, %v3238
  %v3308 = vmul.f32 %v859, %v3230
  %v3309 = vmul.f32 %v860, %v3234
  %v3310 = vmul.f32 %v861, %v3238
  %v3311 = vmul.f32 %v865, %v3230
  %v3312 = vmul.f32 %v866, %v3234
  %v3313 = vmul.f32 %v867, %v3238
  %v3314 = vmul.f32 %v868, %v3230
  %v3315 = vmul.f32 %v869, %v3234
  %v3316 = vmul.f32 %v870, %v3238
  %v3317 = vmul.f32 %v874, %v3230
  %v3318 = vmul.f32 %v875, %v3234
  %v3319 = vmul.f32 %v876, %v3238
  %v3320 = vmul.f32 %v877, %v3230
  %v3321 = vmul.f32 %v878, %v3234
  %v3322 = vmul.f32 %v879, %v3238
  %v3407 = vrot.slane %v3239, 1
  %v3408 = vrot.slane %v3242, 1
  %v3409 = vsel %vm1984, %v3407, %v3408
  %v3410 = vrot.slane %v3240, 1
  %v3411 = vrot.slane %v3243, 1
  %v3412 = vsel %vm1984, %v3410, %v3411
  %v3413 = vrot.slane %v3241, 1
  %v3414 = vrot.slane %v3244, 1
  %v3415 = vsel %vm1984, %v3413, %v3414
  %v3416 = vrot.slane %v3245, 1
  %v3417 = vrot.slane %v3248, 1
  %v3418 = vsel %vm1984, %v3416, %v3417
  %v3419 = vrot.slane %v3246, 1
  %v3420 = vrot.slane %v3249, 1
  %v3421 = vsel %vm1984, %v3419, %v3420
  %v3422 = vrot.slane %v3247, 1
  %v3423 = vrot.slane %v3250, 1
  %v3424 = vsel %vm1984, %v3422, %v3423
  %v3425 = vrot.slane %v3251, 1
  %v3426 = vrot.slane %v3254, 1
  %v3427 = vsel %vm1984, %v3425, %v3426
  %v3428 = vrot.slane %v3252, 1
  %v3429 = vrot.slane %v3255, 1
  %v3430 = vsel %vm1984, %v3428, %v3429
  %v3431 = vrot.slane %v3253, 1
  %v3432 = vrot.slane %v3256, 1
  %v3433 = vsel %vm1984, %v3431, %v3432
  %v3434 = vrot.slane %v3257, 1
  %v3435 = vrot.slane %v3260, 1
  %v3436 = vsel %vm1984, %v3434, %v3435
  %v3437 = vrot.slane %v3258, 1
  %v3438 = vrot.slane %v3261, 1
  %v3439 = vsel %vm1984, %v3437, %v3438
  %v3440 = vrot.slane %v3259, 1
  %v3441 = vrot.slane %v3262, 1
  %v3442 = vsel %vm1984, %v3440, %v3441
  %v3443 = vrot.slane %v3263, 1
  %v3444 = vrot.slane %v3266, 1
  %v3445 = vsel %vm1984, %v3443, %v3444
  %v3446 = vrot.slane %v3264, 1
  %v3447 = vrot.slane %v3267, 1
  %v3448 = vsel %vm1984, %v3446, %v3447
  %v3449 = vrot.slane %v3265, 1
  %v3450 = vrot.slane %v3268, 1
  %v3451 = vsel %vm1984, %v3449, %v3450
  %v3452 = vrot.slane %v3269, 1
  %v3453 = vrot.slane %v3272, 1
  %v3454 = vsel %vm1984, %v3452, %v3453
  %v3455 = vrot.slane %v3270, 1
  %v3456 = vrot.slane %v3273, 1
  %v3457 = vsel %vm1984, %v3455, %v3456
  %v3458 = vrot.slane %v3271, 1
  %v3459 = vrot.slane %v3274, 1
  %v3460 = vsel %vm1984, %v3458, %v3459
  %v3461 = vrot.slane %v3275, 1
  %v3462 = vrot.slane %v3278, 1
  %v3463 = vsel %vm1984, %v3461, %v3462
  %v3464 = vrot.slane %v3276, 1
  %v3465 = vrot.slane %v3279, 1
  %v3466 = vsel %vm1984, %v3464, %v3465
  %v3467 = vrot.slane %v3277, 1
  %v3468 = vrot.slane %v3280, 1
  %v3469 = vsel %vm1984, %v3467, %v3468
  %v3470 = vrot.slane %v3281, 1
  %v3471 = vrot.slane %v3284, 1
  %v3472 = vsel %vm1984, %v3470, %v3471
  %v3473 = vrot.slane %v3282, 1
  %v3474 = vrot.slane %v3285, 1
  %v3475 = vsel %vm1984, %v3473, %v3474
  %v3476 = vrot.slane %v3283, 1
  %v3477 = vrot.slane %v3286, 1
  %v3478 = vsel %vm1984, %v3476, %v3477
  %v3479 = vrot.slane %v3287, 1
  %v3480 = vrot.slane %v3290, 1
  %v3481 = vsel %vm1984, %v3479, %v3480
  %v3482 = vrot.slane %v3288, 1
  %v3483 = vrot.slane %v3291, 1
  %v3484 = vsel %vm1984, %v3482, %v3483
  %v3485 = vrot.slane %v3289, 1
  %v3486 = vrot.slane %v3292, 1
  %v3487 = vsel %vm1984, %v3485, %v3486
  %v3488 = vrot.slane %v3293, 1
  %v3489 = vrot.slane %v3296, 1
  %v3490 = vsel %vm1984, %v3488, %v3489
  %v3491 = vrot.slane %v3294, 1
  %v3492 = vrot.slane %v3297, 1
  %v3493 = vsel %vm1984, %v3491, %v3492
  %v3494 = vrot.slane %v3295, 1
  %v3495 = vrot.slane %v3298, 1
  %v3496 = vsel %vm1984, %v3494, %v3495
  %v3497 = vrot.slane %v3299, 1
  %v3498 = vrot.slane %v3302, 1
  %v3499 = vsel %vm1984, %v3497, %v3498
  %v3500 = vrot.slane %v3300, 1
  %v3501 = vrot.slane %v3303, 1
  %v3502 = vsel %vm1984, %v3500, %v3501
  %v3503 = vrot.slane %v3301, 1
  %v3504 = vrot.slane %v3304, 1
  %v3505 = vsel %vm1984, %v3503, %v3504
  %v3506 = vrot.slane %v3305, 1
  %v3507 = vrot.slane %v3308, 1
  %v3508 = vsel %vm1984, %v3506, %v3507
  %v3509 = vrot.slane %v3306, 1
  %v3510 = vrot.slane %v3309, 1
  %v3511 = vsel %vm1984, %v3509, %v3510
  %v3512 = vrot.slane %v3307, 1
  %v3513 = vrot.slane %v3310, 1
  %v3514 = vsel %vm1984, %v3512, %v3513
  %v3515 = vrot.slane %v3311, 1
  %v3516 = vrot.slane %v3314, 1
  %v3517 = vsel %vm1984, %v3515, %v3516
  %v3518 = vrot.slane %v3312, 1
  %v3519 = vrot.slane %v3315, 1
  %v3520 = vsel %vm1984, %v3518, %v3519
  %v3521 = vrot.slane %v3313, 1
  %v3522 = vrot.slane %v3316, 1
  %v3523 = vsel %vm1984, %v3521, %v3522
  %v3524 = vrot.slane %v3317, 1
  %v3525 = vrot.slane %v3320, 1
  %v3526 = vsel %vm1984, %v3524, %v3525
  %v3527 = vrot.slane %v3318, 1
  %v3528 = vrot.slane %v3321, 1
  %v3529 = vsel %vm1984, %v3527, %v3528
  %v3530 = vrot.slane %v3319, 1
  %v3531 = vrot.slane %v3322, 1
  %v3532 = vsel %vm1984, %v3530, %v3531
  %v3617 = vadd.f32 %v3143, %v3409
  %v3618 = vadd.f32 %v3144, %v3412
  %v3619 = vadd.f32 %v3145, %v3415
  %v3620 = vadd.f32 %v3146, %v3408
  %v3621 = vadd.f32 %v3147, %v3411
  %v3622 = vadd.f32 %v3148, %v3414
  %v3623 = vadd.f32 %v3149, %v3418
  %v3624 = vadd.f32 %v3150, %v3421
  %v3625 = vadd.f32 %v3151, %v3424
  %v3626 = vadd.f32 %v3152, %v3417
  %v3627 = vadd.f32 %v3153, %v3420
  %v3628 = vadd.f32 %v3154, %v3423
  %v3629 = vadd.f32 %v3155, %v3427
  %v3630 = vadd.f32 %v3156, %v3430
  %v3631 = vadd.f32 %v3157, %v3433
  %v3632 = vadd.f32 %v3158, %v3426
  %v3633 = vadd.f32 %v3159, %v3429
  %v3634 = vadd.f32 %v3160, %v3432
  %v3635 = vadd.f32 %v3161, %v3436
  %v3636 = vadd.f32 %v3162, %v3439
  %v3637 = vadd.f32 %v3163, %v3442
  %v3638 = vadd.f32 %v3164, %v3435
  %v3639 = vadd.f32 %v3165, %v3438
  %v3640 = vadd.f32 %v3166, %v3441
  %v3641 = vadd.f32 %v3167, %v3445
  %v3642 = vadd.f32 %v3168, %v3448
  %v3643 = vadd.f32 %v3169, %v3451
  %v3644 = vadd.f32 %v3170, %v3444
  %v3645 = vadd.f32 %v3171, %v3447
  %v3646 = vadd.f32 %v3172, %v3450
  %v3647 = vadd.f32 %v3173, %v3454
  %v3648 = vadd.f32 %v3174, %v3457
  %v3649 = vadd.f32 %v3175, %v3460
  %v3650 = vadd.f32 %v3176, %v3453
  %v3651 = vadd.f32 %v3177, %v3456
  %v3652 = vadd.f32 %v3178, %v3459
  %v3653 = vadd.f32 %v3179, %v3463
  %v3654 = vadd.f32 %v3180, %v3466
  %v3655 = vadd.f32 %v3181, %v3469
  %v3656 = vadd.f32 %v3182, %v3462
  %v3657 = vadd.f32 %v3183, %v3465
  %v3658 = vadd.f32 %v3184, %v3468
  %v3659 = vadd.f32 %v3185, %v3472
  %v3660 = vadd.f32 %v3186, %v3475
  %v3661 = vadd.f32 %v3187, %v3478
  %v3662 = vadd.f32 %v3188, %v3471
  %v3663 = vadd.f32 %v3189, %v3474
  %v3664 = vadd.f32 %v3190, %v3477
  %v3665 = vadd.f32 %v3191, %v3481
  %v3666 = vadd.f32 %v3192, %v3484
  %v3667 = vadd.f32 %v3193, %v3487
  %v3668 = vadd.f32 %v3194, %v3480
  %v3669 = vadd.f32 %v3195, %v3483
  %v3670 = vadd.f32 %v3196, %v3486
  %v3671 = vadd.f32 %v3197, %v3490
  %v3672 = vadd.f32 %v3198, %v3493
  %v3673 = vadd.f32 %v3199, %v3496
  %v3674 = vadd.f32 %v3200, %v3489
  %v3675 = vadd.f32 %v3201, %v3492
  %v3676 = vadd.f32 %v3202, %v3495
  %v3677 = vadd.f32 %v3203, %v3499
  %v3678 = vadd.f32 %v3204, %v3502
  %v3679 = vadd.f32 %v3205, %v3505
  %v3680 = vadd.f32 %v3206, %v3498
  %v3681 = vadd.f32 %v3207, %v3501
  %v3682 = vadd.f32 %v3208, %v3504
  %v3683 = vadd.f32 %v3209, %v3508
  %v3684 = vadd.f32 %v3210, %v3511
  %v3685 = vadd.f32 %v3211, %v3514
  %v3686 = vadd.f32 %v3212, %v3507
  %v3687 = vadd.f32 %v3213, %v3510
  %v3688 = vadd.f32 %v3214, %v3513
  %v3689 = vadd.f32 %v3215, %v3517
  %v3690 = vadd.f32 %v3216, %v3520
  %v3691 = vadd.f32 %v3217, %v3523
  %v3692 = vadd.f32 %v3218, %v3516
  %v3693 = vadd.f32 %v3219, %v3519
  %v3694 = vadd.f32 %v3220, %v3522
  %v3695 = vadd.f32 %v3221, %v3526
  %v3696 = vadd.f32 %v3222, %v3529
  %v3697 = vadd.f32 %v3223, %v3532
  %v3698 = vadd.f32 %v3224, %v3525
  %v3699 = vadd.f32 %v3225, %v3528
  %v3700 = vadd.f32 %v3226, %v3531
  %v3701 = vlaneseq
  %v3702 = vshrl.u32 %v3701, 7
  %v3703 = vsub.s32 5, %v3702
  %v3704 = vrot.slane %v898, %v3703
  %v3705 = vlaneseq
  %v3706 = vshrl.u32 %v3705, 7
  %v3707 = vsub.s32 5, %v3706
  %v3708 = vrot.slane %v899, %v3707
  %v3709 = vlaneseq
  %v3710 = vshrl.u32 %v3709, 7
  %v3711 = vsub.s32 5, %v3710
  %v3712 = vrot.slane %v900, %v3711
  %v3713 = vmul.f32 %v766, %v3704
  %v3714 = vmul.f32 %v767, %v3708
  %v3715 = vmul.f32 %v768, %v3712
  %v3716 = vmul.f32 %v769, %v3704
  %v3717 = vmul.f32 %v770, %v3708
  %v3718 = vmul.f32 %v771, %v3712
  %v3719 = vmul.f32 %v775, %v3704
  %v3720 = vmul.f32 %v776, %v3708
  %v3721 = vmul.f32 %v777, %v3712
  %v3722 = vmul.f32 %v778, %v3704
  %v3723 = vmul.f32 %v779, %v3708
  %v3724 = vmul.f32 %v780, %v3712
  %v3725 = vmul.f32 %v784, %v3704
  %v3726 = vmul.f32 %v785, %v3708
  %v3727 = vmul.f32 %v786, %v3712
  %v3728 = vmul.f32 %v787, %v3704
  %v3729 = vmul.f32 %v788, %v3708
  %v3730 = vmul.f32 %v789, %v3712
  %v3731 = vmul.f32 %v793, %v3704
  %v3732 = vmul.f32 %v794, %v3708
  %v3733 = vmul.f32 %v795, %v3712
  %v3734 = vmul.f32 %v796, %v3704
  %v3735 = vmul.f32 %v797, %v3708
  %v3736 = vmul.f32 %v798, %v3712
  %v3737 = vmul.f32 %v802, %v3704
  %v3738 = vmul.f32 %v803, %v3708
  %v3739 = vmul.f32 %v804, %v3712
  %v3740 = vmul.f32 %v805, %v3704
  %v3741 = vmul.f32 %v806, %v3708
  %v3742 = vmul.f32 %v807, %v3712
  %v3743 = vmul.f32 %v811, %v3704
  %v3744 = vmul.f32 %v812, %v3708
  %v3745 = vmul.f32 %v813, %v3712
  %v3746 = vmul.f32 %v814, %v3704
  %v3747 = vmul.f32 %v815, %v3708
  %v3748 = vmul.f32 %v816, %v3712
  %v3749 = vmul.f32 %v820, %v3704
  %v3750 = vmul.f32 %v821, %v3708
  %v3751 = vmul.f32 %v822, %v3712
  %v3752 = vmul.f32 %v823, %v3704
  %v3753 = vmul.f32 %v824, %v3708
  %v3754 = vmul.f32 %v825, %v3712
  %v3755 = vmul.f32 %v829, %v3704
  %v3756 = vmul.f32 %v830, %v3708
  %v3757 = vmul.f32 %v831, %v3712
  %v3758 = vmul.f32 %v832, %v3704
  %v3759 = vmul.f32 %v833, %v3708
  %v3760 = vmul.f32 %v834, %v3712
  %v3761 = vmul.f32 %v838, %v3704
  %v3762 = vmul.f32 %v839, %v3708
  %v3763 = vmul.f32 %v840, %v3712
  %v3764 = vmul.f32 %v841, %v3704
  %v3765 = vmul.f32 %v842, %v3708
  %v3766 = vmul.f32 %v843, %v3712
  %v3767 = vmul.f32 %v847, %v3704
  %v3768 = vmul.f32 %v848, %v3708
  %v3769 = vmul.f32 %v849, %v3712
  %v3770 = vmul.f32 %v850, %v3704
  %v3771 = vmul.f32 %v851, %v3708
  %v3772 = vmul.f32 %v852, %v3712
  %v3773 = vmul.f32 %v856, %v3704
  %v3774 = vmul.f32 %v857, %v3708
  %v3775 = vmul.f32 %v858, %v3712
  %v3776 = vmul.f32 %v859, %v3704
  %v3777 = vmul.f32 %v860, %v3708
  %v3778 = vmul.f32 %v861, %v3712
  %v3779 = vmul.f32 %v865, %v3704
  %v3780 = vmul.f32 %v866, %v3708
  %v3781 = vmul.f32 %v867, %v3712
  %v3782 = vmul.f32 %v868, %v3704
  %v3783 = vmul.f32 %v869, %v3708
  %v3784 = vmul.f32 %v870, %v3712
  %v3785 = vmul.f32 %v874, %v3704
  %v3786 = vmul.f32 %v875, %v3708
  %v3787 = vmul.f32 %v876, %v3712
  %v3788 = vmul.f32 %v877, %v3704
  %v3789 = vmul.f32 %v878, %v3708
  %v3790 = vmul.f32 %v879, %v3712
  %v3791 = vmul.f32 %v883, %v3704
  %v3792 = vmul.f32 %v884, %v3708
  %v3793 = vmul.f32 %v885, %v3712
  %v3794 = vmul.f32 %v886, %v3704
  %v3795 = vmul.f32 %v887, %v3708
  %v3796 = vmul.f32 %v888, %v3712
  %v3881 = vrot.slane %v3713, 1
  %v3882 = vrot.slane %v3716, 1
  %v3883 = vsel %vm1984, %v3881, %v3882
  %v3884 = vrot.slane %v3714, 1
  %v3885 = vrot.slane %v3717, 1
  %v3886 = vsel %vm1984, %v3884, %v3885
  %v3887 = vrot.slane %v3715, 1
  %v3888 = vrot.slane %v3718, 1
  %v3889 = vsel %vm1984, %v3887, %v3888
  %v3890 = vrot.slane %v3719, 1
  %v3891 = vrot.slane %v3722, 1
  %v3892 = vsel %vm1984, %v3890, %v3891
  %v3893 = vrot.slane %v3720, 1
  %v3894 = vrot.slane %v3723, 1
  %v3895 = vsel %vm1984, %v3893, %v3894
  %v3896 = vrot.slane %v3721, 1
  %v3897 = vrot.slane %v3724, 1
  %v3898 = vsel %vm1984, %v3896, %v3897
  %v3899 = vrot.slane %v3725, 1
  %v3900 = vrot.slane %v3728, 1
  %v3901 = vsel %vm1984, %v3899, %v3900
  %v3902 = vrot.slane %v3726, 1
  %v3903 = vrot.slane %v3729, 1
  %v3904 = vsel %vm1984, %v3902, %v3903
  %v3905 = vrot.slane %v3727, 1
  %v3906 = vrot.slane %v3730, 1
  %v3907 = vsel %vm1984, %v3905, %v3906
  %v3908 = vrot.slane %v3731, 1
  %v3909 = vrot.slane %v3734, 1
  %v3910 = vsel %vm1984, %v3908, %v3909
  %v3911 = vrot.slane %v3732, 1
  %v3912 = vrot.slane %v3735, 1
  %v3913 = vsel %vm1984, %v3911, %v3912
  %v3914 = vrot.slane %v3733, 1
  %v3915 = vrot.slane %v3736, 1
  %v3916 = vsel %vm1984, %v3914, %v3915
  %v3917 = vrot.slane %v3737, 1
  %v3918 = vrot.slane %v3740, 1
  %v3919 = vsel %vm1984, %v3917, %v3918
  %v3920 = vrot.slane %v3738, 1
  %v3921 = vrot.slane %v3741, 1
  %v3922 = vsel %vm1984, %v3920, %v3921
  %v3923 = vrot.slane %v3739, 1
  %v3924 = vrot.slane %v3742, 1
  %v3925 = vsel %vm1984, %v3923, %v3924
  %v3926 = vrot.slane %v3743, 1
  %v3927 = vrot.slane %v3746, 1
  %v3928 = vsel %vm1984, %v3926, %v3927
  %v3929 = vrot.slane %v3744, 1
  %v3930 = vrot.slane %v3747, 1
  %v3931 = vsel %vm1984, %v3929, %v3930
  %v3932 = vrot.slane %v3745, 1
  %v3933 = vrot.slane %v3748, 1
  %v3934 = vsel %vm1984, %v3932, %v3933
  %v3935 = vrot.slane %v3749, 1
  %v3936 = vrot.slane %v3752, 1
  %v3937 = vsel %vm1984, %v3935, %v3936
  %v3938 = vrot.slane %v3750, 1
  %v3939 = vrot.slane %v3753, 1
  %v3940 = vsel %vm1984, %v3938, %v3939
  %v3941 = vrot.slane %v3751, 1
  %v3942 = vrot.slane %v3754, 1
  %v3943 = vsel %vm1984, %v3941, %v3942
  %v3944 = vrot.slane %v3755, 1
  %v3945 = vrot.slane %v3758, 1
  %v3946 = vsel %vm1984, %v3944, %v3945
  %v3947 = vrot.slane %v3756, 1
  %v3948 = vrot.slane %v3759, 1
  %v3949 = vsel %vm1984, %v3947, %v3948
  %v3950 = vrot.slane %v3757, 1
  %v3951 = vrot.slane %v3760, 1
  %v3952 = vsel %vm1984, %v3950, %v3951
  %v3953 = vrot.slane %v3761, 1
  %v3954 = vrot.slane %v3764, 1
  %v3955 = vsel %vm1984, %v3953, %v3954
  %v3956 = vrot.slane %v3762, 1
  %v3957 = vrot.slane %v3765, 1
  %v3958 = vsel %vm1984, %v3956, %v3957
  %v3959 = vrot.slane %v3763, 1
  %v3960 = vrot.slane %v3766, 1
  %v3961 = vsel %vm1984, %v3959, %v3960
  %v3962 = vrot.slane %v3767, 1
  %v3963 = vrot.slane %v3770, 1
  %v3964 = vsel %vm1984, %v3962, %v3963
  %v3965 = vrot.slane %v3768, 1
  %v3966 = vrot.slane %v3771, 1
  %v3967 = vsel %vm1984, %v3965, %v3966
  %v3968 = vrot.slane %v3769, 1
  %v3969 = vrot.slane %v3772, 1
  %v3970 = vsel %vm1984, %v3968, %v3969
  %v3971 = vrot.slane %v3773, 1
  %v3972 = vrot.slane %v3776, 1
  %v3973 = vsel %vm1984, %v3971, %v3972
  %v3974 = vrot.slane %v3774, 1
  %v3975 = vrot.slane %v3777, 1
  %v3976 = vsel %vm1984, %v3974, %v3975
  %v3977 = vrot.slane %v3775, 1
  %v3978 = vrot.slane %v3778, 1
  %v3979 = vsel %vm1984, %v3977, %v3978
  %v3980 = vrot.slane %v3779, 1
  %v3981 = vrot.slane %v3782, 1
  %v3982 = vsel %vm1984, %v3980, %v3981
  %v3983 = vrot.slane %v3780, 1
  %v3984 = vrot.slane %v3783, 1
  %v3985 = vsel %vm1984, %v3983, %v3984
  %v3986 = vrot.slane %v3781, 1
  %v3987 = vrot.slane %v3784, 1
  %v3988 = vsel %vm1984, %v3986, %v3987
  %v3989 = vrot.slane %v3785, 1
  %v3990 = vrot.slane %v3788, 1
  %v3991 = vsel %vm1984, %v3989, %v3990
  %v3992 = vrot.slane %v3786, 1
  %v3993 = vrot.slane %v3789, 1
  %v3994 = vsel %vm1984, %v3992, %v3993
  %v3995 = vrot.slane %v3787, 1
  %v3996 = vrot.slane %v3790, 1
  %v3997 = vsel %vm1984, %v3995, %v3996
  %v3998 = vrot.slane %v3791, 1
  %v3999 = vrot.slane %v3794, 1
  %v4000 = vsel %vm1984, %v3998, %v3999
  %v4001 = vrot.slane %v3792, 1
  %v4002 = vrot.slane %v3795, 1
  %v4003 = vsel %vm1984, %v4001, %v4002
  %v4004 = vrot.slane %v3793, 1
  %v4005 = vrot.slane %v3796, 1
  %v4006 = vsel %vm1984, %v4004, %v4005
  %v4091 = vadd.f32 %v3617, %v3883
  %v4092 = vadd.f32 %v3618, %v3886
  %v4093 = vadd.f32 %v3619, %v3889
  %v4094 = vadd.f32 %v3620, %v3882
  %v4095 = vadd.f32 %v3621, %v3885
  %v4096 = vadd.f32 %v3622, %v3888
  %v4097 = vadd.f32 %v3623, %v3892
  %v4098 = vadd.f32 %v3624, %v3895
  %v4099 = vadd.f32 %v3625, %v3898
  %v4100 = vadd.f32 %v3626, %v3891
  %v4101 = vadd.f32 %v3627, %v3894
  %v4102 = vadd.f32 %v3628, %v3897
  %v4103 = vadd.f32 %v3629, %v3901
  %v4104 = vadd.f32 %v3630, %v3904
  %v4105 = vadd.f32 %v3631, %v3907
  %v4106 = vadd.f32 %v3632, %v3900
  %v4107 = vadd.f32 %v3633, %v3903
  %v4108 = vadd.f32 %v3634, %v3906
  %v4109 = vadd.f32 %v3635, %v3910
  %v4110 = vadd.f32 %v3636, %v3913
  %v4111 = vadd.f32 %v3637, %v3916
  %v4112 = vadd.f32 %v3638, %v3909
  %v4113 = vadd.f32 %v3639, %v3912
  %v4114 = vadd.f32 %v3640, %v3915
  %v4115 = vadd.f32 %v3641, %v3919
  %v4116 = vadd.f32 %v3642, %v3922
  %v4117 = vadd.f32 %v3643, %v3925
  %v4118 = vadd.f32 %v3644, %v3918
  %v4119 = vadd.f32 %v3645, %v3921
  %v4120 = vadd.f32 %v3646, %v3924
  %v4121 = vadd.f32 %v3647, %v3928
  %v4122 = vadd.f32 %v3648, %v3931
  %v4123 = vadd.f32 %v3649, %v3934
  %v4124 = vadd.f32 %v3650, %v3927
  %v4125 = vadd.f32 %v3651, %v3930
  %v4126 = vadd.f32 %v3652, %v3933
  %v4127 = vadd.f32 %v3653, %v3937
  %v4128 = vadd.f32 %v3654, %v3940
  %v4129 = vadd.f32 %v3655, %v3943
  %v4130 = vadd.f32 %v3656, %v3936
  %v4131 = vadd.f32 %v3657, %v3939
  %v4132 = vadd.f32 %v3658, %v3942
  %v4133 = vadd.f32 %v3659, %v3946
  %v4134 = vadd.f32 %v3660, %v3949
  %v4135 = vadd.f32 %v3661, %v3952
  %v4136 = vadd.f32 %v3662, %v3945
  %v4137 = vadd.f32 %v3663, %v3948
  %v4138 = vadd.f32 %v3664, %v3951
  %v4139 = vadd.f32 %v3665, %v3955
  %v4140 = vadd.f32 %v3666, %v3958
  %v4141 = vadd.f32 %v3667, %v3961
  %v4142 = vadd.f32 %v3668, %v3954
  %v4143 = vadd.f32 %v3669, %v3957
  %v4144 = vadd.f32 %v3670, %v3960
  %v4145 = vadd.f32 %v3671, %v3964
  %v4146 = vadd.f32 %v3672, %v3967
  %v4147 = vadd.f32 %v3673, %v3970
  %v4148 = vadd.f32 %v3674, %v3963
  %v4149 = vadd.f32 %v3675, %v3966
  %v4150 = vadd.f32 %v3676, %v3969
  %v4151 = vadd.f32 %v3677, %v3973
  %v4152 = vadd.f32 %v3678, %v3976
  %v4153 = vadd.f32 %v3679, %v3979
  %v4154 = vadd.f32 %v3680, %v3972
  %v4155 = vadd.f32 %v3681, %v3975
  %v4156 = vadd.f32 %v3682, %v3978
  %v4157 = vadd.f32 %v3683, %v3982
  %v4158 = vadd.f32 %v3684, %v3985
  %v4159 = vadd.f32 %v3685, %v3988
  %v4160 = vadd.f32 %v3686, %v3981
  %v4161 = vadd.f32 %v3687, %v3984
  %v4162 = vadd.f32 %v3688, %v3987
  %v4163 = vadd.f32 %v3689, %v3991
  %v4164 = vadd.f32 %v3690, %v3994
  %v4165 = vadd.f32 %v3691, %v3997
  %v4166 = vadd.f32 %v3692, %v3990
  %v4167 = vadd.f32 %v3693, %v3993
  %v4168 = vadd.f32 %v3694, %v3996
  %v4169 = vadd.f32 %v3695, %v4000
  %v4170 = vadd.f32 %v3696, %v4003
  %v4171 = vadd.f32 %v3697, %v4006
  %v4172 = vadd.f32 %v3698, %v3999
  %v4173 = vadd.f32 %v3699, %v4002
  %v4174 = vadd.f32 %v3700, %v4005
  %v4175 = vlaneseq
  %v4176 = vshrl.u32 %v4175, 7
  %v4177 = vsub.s32 2, %v4176
  %v4178 = vrot.slane %v892, %v4177
  %v4179 = vlaneseq
  %v4180 = vshrl.u32 %v4179, 7
  %v4181 = vsub.s32 2, %v4180
  %v4182 = vrot.slane %v893, %v4181
  %v4183 = vlaneseq
  %v4184 = vshrl.u32 %v4183, 7
  %v4185 = vsub.s32 2, %v4184
  %v4186 = vrot.slane %v894, %v4185
  %v4187 = vmul.f32 %v730, %v4178
  %v4188 = vmul.f32 %v731, %v4182
  %v4189 = vmul.f32 %v732, %v4186
  %v4190 = vmul.f32 %v733, %v4178
  %v4191 = vmul.f32 %v734, %v4182
  %v4192 = vmul.f32 %v735, %v4186
  %v4193 = vmul.f32 %v739, %v4178
  %v4194 = vmul.f32 %v740, %v4182
  %v4195 = vmul.f32 %v741, %v4186
  %v4196 = vmul.f32 %v742, %v4178
  %v4197 = vmul.f32 %v743, %v4182
  %v4198 = vmul.f32 %v744, %v4186
  %v4199 = vmul.f32 %v748, %v4178
  %v4200 = vmul.f32 %v749, %v4182
  %v4201 = vmul.f32 %v750, %v4186
  %v4202 = vmul.f32 %v751, %v4178
  %v4203 = vmul.f32 %v752, %v4182
  %v4204 = vmul.f32 %v753, %v4186
  %v4205 = vmul.f32 %v757, %v4178
  %v4206 = vmul.f32 %v758, %v4182
  %v4207 = vmul.f32 %v759, %v4186
  %v4208 = vmul.f32 %v760, %v4178
  %v4209 = vmul.f32 %v761, %v4182
  %v4210 = vmul.f32 %v762, %v4186
  %v4211 = vmul.f32 %v766, %v4178
  %v4212 = vmul.f32 %v767, %v4182
  %v4213 = vmul.f32 %v768, %v4186
  %v4214 = vmul.f32 %v769, %v4178
  %v4215 = vmul.f32 %v770, %v4182
  %v4216 = vmul.f32 %v771, %v4186
  %v4217 = vmul.f32 %v775, %v4178
  %v4218 = vmul.f32 %v776, %v4182
  %v4219 = vmul.f32 %v777, %v4186
  %v4220 = vmul.f32 %v778, %v4178
  %v4221 = vmul.f32 %v779, %v4182
  %v4222 = vmul.f32 %v780, %v4186
  %v4223 = vmul.f32 %v784, %v4178
  %v4224 = vmul.f32 %v785, %v4182
  %v4225 = vmul.f32 %v786, %v4186
  %v4226 = vmul.f32 %v787, %v4178
  %v4227 = vmul.f32 %v788, %v4182
  %v4228 = vmul.f32 %v789, %v4186
  %v4229 = vmul.f32 %v793, %v4178
  %v4230 = vmul.f32 %v794, %v4182
  %v4231 = vmul.f32 %v795, %v4186
  %v4232 = vmul.f32 %v796, %v4178
  %v4233 = vmul.f32 %v797, %v4182
  %v4234 = vmul.f32 %v798, %v4186
  %v4235 = vmul.f32 %v802, %v4178
  %v4236 = vmul.f32 %v803, %v4182
  %v4237 = vmul.f32 %v804, %v4186
  %v4238 = vmul.f32 %v805, %v4178
  %v4239 = vmul.f32 %v806, %v4182
  %v4240 = vmul.f32 %v807, %v4186
  %v4241 = vmul.f32 %v811, %v4178
  %v4242 = vmul.f32 %v812, %v4182
  %v4243 = vmul.f32 %v813, %v4186
  %v4244 = vmul.f32 %v814, %v4178
  %v4245 = vmul.f32 %v815, %v4182
  %v4246 = vmul.f32 %v816, %v4186
  %v4247 = vmul.f32 %v820, %v4178
  %v4248 = vmul.f32 %v821, %v4182
  %v4249 = vmul.f32 %v822, %v4186
  %v4250 = vmul.f32 %v823, %v4178
  %v4251 = vmul.f32 %v824, %v4182
  %v4252 = vmul.f32 %v825, %v4186
  %v4253 = vmul.f32 %v829, %v4178
  %v4254 = vmul.f32 %v830, %v4182
  %v4255 = vmul.f32 %v831, %v4186
  %v4256 = vmul.f32 %v832, %v4178
  %v4257 = vmul.f32 %v833, %v4182
  %v4258 = vmul.f32 %v834, %v4186
  %v4259 = vmul.f32 %v838, %v4178
  %v4260 = vmul.f32 %v839, %v4182
  %v4261 = vmul.f32 %v840, %v4186
  %v4262 = vmul.f32 %v841, %v4178
  %v4263 = vmul.f32 %v842, %v4182
  %v4264 = vmul.f32 %v843, %v4186
  %v4265 = vmul.f32 %v847, %v4178
  %v4266 = vmul.f32 %v848, %v4182
  %v4267 = vmul.f32 %v849, %v4186
  %v4268 = vmul.f32 %v850, %v4178
  %v4269 = vmul.f32 %v851, %v4182
  %v4270 = vmul.f32 %v852, %v4186
  %vm4355 = vcmask 1045504
  %v4356 = vrot.slane %v4187, 2
  %v4357 = vrot.slane %v4190, 2
  %v4358 = vsel %vm4355, %v4356, %v4357
  %v4359 = vrot.slane %v4188, 2
  %v4360 = vrot.slane %v4191, 2
  %v4361 = vsel %vm4355, %v4359, %v4360
  %v4362 = vrot.slane %v4189, 2
  %v4363 = vrot.slane %v4192, 2
  %v4364 = vsel %vm4355, %v4362, %v4363
  %v4365 = vrot.slane %v4193, 2
  %v4366 = vrot.slane %v4196, 2
  %v4367 = vsel %vm4355, %v4365, %v4366
  %v4368 = vrot.slane %v4194, 2
  %v4369 = vrot.slane %v4197, 2
  %v4370 = vsel %vm4355, %v4368, %v4369
  %v4371 = vrot.slane %v4195, 2
  %v4372 = vrot.slane %v4198, 2
  %v4373 = vsel %vm4355, %v4371, %v4372
  %v4374 = vrot.slane %v4199, 2
  %v4375 = vrot.slane %v4202, 2
  %v4376 = vsel %vm4355, %v4374, %v4375
  %v4377 = vrot.slane %v4200, 2
  %v4378 = vrot.slane %v4203, 2
  %v4379 = vsel %vm4355, %v4377, %v4378
  %v4380 = vrot.slane %v4201, 2
  %v4381 = vrot.slane %v4204, 2
  %v4382 = vsel %vm4355, %v4380, %v4381
  %v4383 = vrot.slane %v4205, 2
  %v4384 = vrot.slane %v4208, 2
  %v4385 = vsel %vm4355, %v4383, %v4384
  %v4386 = vrot.slane %v4206, 2
  %v4387 = vrot.slane %v4209, 2
  %v4388 = vsel %vm4355, %v4386, %v4387
  %v4389 = vrot.slane %v4207, 2
  %v4390 = vrot.slane %v4210, 2
  %v4391 = vsel %vm4355, %v4389, %v4390
  %v4392 = vrot.slane %v4211, 2
  %v4393 = vrot.slane %v4214, 2
  %v4394 = vsel %vm4355, %v4392, %v4393
  %v4395 = vrot.slane %v4212, 2
  %v4396 = vrot.slane %v4215, 2
  %v4397 = vsel %vm4355, %v4395, %v4396
  %v4398 = vrot.slane %v4213, 2
  %v4399 = vrot.slane %v4216, 2
  %v4400 = vsel %vm4355, %v4398, %v4399
  %v4401 = vrot.slane %v4217, 2
  %v4402 = vrot.slane %v4220, 2
  %v4403 = vsel %vm4355, %v4401, %v4402
  %v4404 = vrot.slane %v4218, 2
  %v4405 = vrot.slane %v4221, 2
  %v4406 = vsel %vm4355, %v4404, %v4405
  %v4407 = vrot.slane %v4219, 2
  %v4408 = vrot.slane %v4222, 2
  %v4409 = vsel %vm4355, %v4407, %v4408
  %v4410 = vrot.slane %v4223, 2
  %v4411 = vrot.slane %v4226, 2
  %v4412 = vsel %vm4355, %v4410, %v4411
  %v4413 = vrot.slane %v4224, 2
  %v4414 = vrot.slane %v4227, 2
  %v4415 = vsel %vm4355, %v4413, %v4414
  %v4416 = vrot.slane %v4225, 2
  %v4417 = vrot.slane %v4228, 2
  %v4418 = vsel %vm4355, %v4416, %v4417
  %v4419 = vrot.slane %v4229, 2
  %v4420 = vrot.slane %v4232, 2
  %v4421 = vsel %vm4355, %v4419, %v4420
  %v4422 = vrot.slane %v4230, 2
  %v4423 = vrot.slane %v4233, 2
  %v4424 = vsel %vm4355, %v4422, %v4423
  %v4425 = vrot.slane %v4231, 2
  %v4426 = vrot.slane %v4234, 2
  %v4427 = vsel %vm4355, %v4425, %v4426
  %v4428 = vrot.slane %v4235, 2
  %v4429 = vrot.slane %v4238, 2
  %v4430 = vsel %vm4355, %v4428, %v4429
  %v4431 = vrot.slane %v4236, 2
  %v4432 = vrot.slane %v4239, 2
  %v4433 = vsel %vm4355, %v4431, %v4432
  %v4434 = vrot.slane %v4237, 2
  %v4435 = vrot.slane %v4240, 2
  %v4436 = vsel %vm4355, %v4434, %v4435
  %v4437 = vrot.slane %v4241, 2
  %v4438 = vrot.slane %v4244, 2
  %v4439 = vsel %vm4355, %v4437, %v4438
  %v4440 = vrot.slane %v4242, 2
  %v4441 = vrot.slane %v4245, 2
  %v4442 = vsel %vm4355, %v4440, %v4441
  %v4443 = vrot.slane %v4243, 2
  %v4444 = vrot.slane %v4246, 2
  %v4445 = vsel %vm4355, %v4443, %v4444
  %v4446 = vrot.slane %v4247, 2
  %v4447 = vrot.slane %v4250, 2
  %v4448 = vsel %vm4355, %v4446, %v4447
  %v4449 = vrot.slane %v4248, 2
  %v4450 = vrot.slane %v4251, 2
  %v4451 = vsel %vm4355, %v4449, %v4450
  %v4452 = vrot.slane %v4249, 2
  %v4453 = vrot.slane %v4252, 2
  %v4454 = vsel %vm4355, %v4452, %v4453
  %v4455 = vrot.slane %v4253, 2
  %v4456 = vrot.slane %v4256, 2
  %v4457 = vsel %vm4355, %v4455, %v4456
  %v4458 = vrot.slane %v4254, 2
  %v4459 = vrot.slane %v4257, 2
  %v4460 = vsel %vm4355, %v4458, %v4459
  %v4461 = vrot.slane %v4255, 2
  %v4462 = vrot.slane %v4258, 2
  %v4463 = vsel %vm4355, %v4461, %v4462
  %v4464 = vrot.slane %v4259, 2
  %v4465 = vrot.slane %v4262, 2
  %v4466 = vsel %vm4355, %v4464, %v4465
  %v4467 = vrot.slane %v4260, 2
  %v4468 = vrot.slane %v4263, 2
  %v4469 = vsel %vm4355, %v4467, %v4468
  %v4470 = vrot.slane %v4261, 2
  %v4471 = vrot.slane %v4264, 2
  %v4472 = vsel %vm4355, %v4470, %v4471
  %v4473 = vrot.slane %v4265, 2
  %v4474 = vrot.slane %v4268, 2
  %v4475 = vsel %vm4355, %v4473, %v4474
  %v4476 = vrot.slane %v4266, 2
  %v4477 = vrot.slane %v4269, 2
  %v4478 = vsel %vm4355, %v4476, %v4477
  %v4479 = vrot.slane %v4267, 2
  %v4480 = vrot.slane %v4270, 2
  %v4481 = vsel %vm4355, %v4479, %v4480
  %v4566 = vadd.f32 %v4091, %v4358
  %v4567 = vadd.f32 %v4092, %v4361
  %v4568 = vadd.f32 %v4093, %v4364
  %v4569 = vadd.f32 %v4094, %v4357
  %v4570 = vadd.f32 %v4095, %v4360
  %v4571 = vadd.f32 %v4096, %v4363
  %v4572 = vadd.f32 %v4097, %v4367
  %v4573 = vadd.f32 %v4098, %v4370
  %v4574 = vadd.f32 %v4099, %v4373
  %v4575 = vadd.f32 %v4100, %v4366
  %v4576 = vadd.f32 %v4101, %v4369
  %v4577 = vadd.f32 %v4102, %v4372
  %v4578 = vadd.f32 %v4103, %v4376
  %v4579 = vadd.f32 %v4104, %v4379
  %v4580 = vadd.f32 %v4105, %v4382
  %v4581 = vadd.f32 %v4106, %v4375
  %v4582 = vadd.f32 %v4107, %v4378
  %v4583 = vadd.f32 %v4108, %v4381
  %v4584 = vadd.f32 %v4109, %v4385
  %v4585 = vadd.f32 %v4110, %v4388
  %v4586 = vadd.f32 %v4111, %v4391
  %v4587 = vadd.f32 %v4112, %v4384
  %v4588 = vadd.f32 %v4113, %v4387
  %v4589 = vadd.f32 %v4114, %v4390
  %v4590 = vadd.f32 %v4115, %v4394
  %v4591 = vadd.f32 %v4116, %v4397
  %v4592 = vadd.f32 %v4117, %v4400
  %v4593 = vadd.f32 %v4118, %v4393
  %v4594 = vadd.f32 %v4119, %v4396
  %v4595 = vadd.f32 %v4120, %v4399
  %v4596 = vadd.f32 %v4121, %v4403
  %v4597 = vadd.f32 %v4122, %v4406
  %v4598 = vadd.f32 %v4123, %v4409
  %v4599 = vadd.f32 %v4124, %v4402
  %v4600 = vadd.f32 %v4125, %v4405
  %v4601 = vadd.f32 %v4126, %v4408
  %v4602 = vadd.f32 %v4127, %v4412
  %v4603 = vadd.f32 %v4128, %v4415
  %v4604 = vadd.f32 %v4129, %v4418
  %v4605 = vadd.f32 %v4130, %v4411
  %v4606 = vadd.f32 %v4131, %v4414
  %v4607 = vadd.f32 %v4132, %v4417
  %v4608 = vadd.f32 %v4133, %v4421
  %v4609 = vadd.f32 %v4134, %v4424
  %v4610 = vadd.f32 %v4135, %v4427
  %v4611 = vadd.f32 %v4136, %v4420
  %v4612 = vadd.f32 %v4137, %v4423
  %v4613 = vadd.f32 %v4138, %v4426
  %v4614 = vadd.f32 %v4139, %v4430
  %v4615 = vadd.f32 %v4140, %v4433
  %v4616 = vadd.f32 %v4141, %v4436
  %v4617 = vadd.f32 %v4142, %v4429
  %v4618 = vadd.f32 %v4143, %v4432
  %v4619 = vadd.f32 %v4144, %v4435
  %v4620 = vadd.f32 %v4145, %v4439
  %v4621 = vadd.f32 %v4146, %v4442
  %v4622 = vadd.f32 %v4147, %v4445
  %v4623 = vadd.f32 %v4148, %v4438
  %v4624 = vadd.f32 %v4149, %v4441
  %v4625 = vadd.f32 %v4150, %v4444
  %v4626 = vadd.f32 %v4151, %v4448
  %v4627 = vadd.f32 %v4152, %v4451
  %v4628 = vadd.f32 %v4153, %v4454
  %v4629 = vadd.f32 %v4154, %v4447
  %v4630 = vadd.f32 %v4155, %v4450
  %v4631 = vadd.f32 %v4156, %v4453
  %v4632 = vadd.f32 %v4157, %v4457
  %v4633 = vadd.f32 %v4158, %v4460
  %v4634 = vadd.f32 %v4159, %v4463
  %v4635 = vadd.f32 %v4160, %v4456
  %v4636 = vadd.f32 %v4161, %v4459
  %v4637 = vadd.f32 %v4162, %v4462
  %v4638 = vadd.f32 %v4163, %v4466
  %v4639 = vadd.f32 %v4164, %v4469
  %v4640 = vadd.f32 %v4165, %v4472
  %v4641 = vadd.f32 %v4166, %v4465
  %v4642 = vadd.f32 %v4167, %v4468
  %v4643 = vadd.f32 %v4168, %v4471
  %v4644 = vadd.f32 %v4169, %v4475
  %v4645 = vadd.f32 %v4170, %v4478
  %v4646 = vadd.f32 %v4171, %v4481
  %v4647 = vadd.f32 %v4172, %v4474
  %v4648 = vadd.f32 %v4173, %v4477
  %v4649 = vadd.f32 %v4174, %v4480
  %v4650 = vlaneseq
  %v4651 = vshrl.u32 %v4650, 7
  %v4652 = vsub.s32 7, %v4651
  %v4653 = vrot.slane %v892, %v4652
  %v4654 = vlaneseq
  %v4655 = vshrl.u32 %v4654, 7
  %v4656 = vsub.s32 7, %v4655
  %v4657 = vrot.slane %v893, %v4656
  %v4658 = vlaneseq
  %v4659 = vshrl.u32 %v4658, 7
  %v4660 = vsub.s32 7, %v4659
  %v4661 = vrot.slane %v894, %v4660
  %v4662 = vmul.f32 %v739, %v4653
  %v4663 = vmul.f32 %v740, %v4657
  %v4664 = vmul.f32 %v741, %v4661
  %v4665 = vmul.f32 %v742, %v4653
  %v4666 = vmul.f32 %v743, %v4657
  %v4667 = vmul.f32 %v744, %v4661
  %v4668 = vmul.f32 %v748, %v4653
  %v4669 = vmul.f32 %v749, %v4657
  %v4670 = vmul.f32 %v750, %v4661
  %v4671 = vmul.f32 %v751, %v4653
  %v4672 = vmul.f32 %v752, %v4657
  %v4673 = vmul.f32 %v753, %v4661
  %v4674 = vmul.f32 %v757, %v4653
  %v4675 = vmul.f32 %v758, %v4657
  %v4676 = vmul.f32 %v759, %v4661
  %v4677 = vmul.f32 %v760, %v4653
  %v4678 = vmul.f32 %v761, %v4657
  %v4679 = vmul.f32 %v762, %v4661
  %v4680 = vmul.f32 %v766, %v4653
  %v4681 = vmul.f32 %v767, %v4657
  %v4682 = vmul.f32 %v768, %v4661
  %v4683 = vmul.f32 %v769, %v4653
  %v4684 = vmul.f32 %v770, %v4657
  %v4685 = vmul.f32 %v771, %v4661
  %v4686 = vmul.f32 %v775, %v4653
  %v4687 = vmul.f32 %v776, %v4657
  %v4688 = vmul.f32 %v777, %v4661
  %v4689 = vmul.f32 %v778, %v4653
  %v4690 = vmul.f32 %v779, %v4657
  %v4691 = vmul.f32 %v780, %v4661
  %v4692 = vmul.f32 %v784, %v4653
  %v4693 = vmul.f32 %v785, %v4657
  %v4694 = vmul.f32 %v786, %v4661
  %v4695 = vmul.f32 %v787, %v4653
  %v4696 = vmul.f32 %v788, %v4657
  %v4697 = vmul.f32 %v789, %v4661
  %v4698 = vmul.f32 %v793, %v4653
  %v4699 = vmul.f32 %v794, %v4657
  %v4700 = vmul.f32 %v795, %v4661
  %v4701 = vmul.f32 %v796, %v4653
  %v4702 = vmul.f32 %v797, %v4657
  %v4703 = vmul.f32 %v798, %v4661
  %v4704 = vmul.f32 %v802, %v4653
  %v4705 = vmul.f32 %v803, %v4657
  %v4706 = vmul.f32 %v804, %v4661
  %v4707 = vmul.f32 %v805, %v4653
  %v4708 = vmul.f32 %v806, %v4657
  %v4709 = vmul.f32 %v807, %v4661
  %v4710 = vmul.f32 %v811, %v4653
  %v4711 = vmul.f32 %v812, %v4657
  %v4712 = vmul.f32 %v813, %v4661
  %v4713 = vmul.f32 %v814, %v4653
  %v4714 = vmul.f32 %v815, %v4657
  %v4715 = vmul.f32 %v816, %v4661
  %v4716 = vmul.f32 %v820, %v4653
  %v4717 = vmul.f32 %v821, %v4657
  %v4718 = vmul.f32 %v822, %v4661
  %v4719 = vmul.f32 %v823, %v4653
  %v4720 = vmul.f32 %v824, %v4657
  %v4721 = vmul.f32 %v825, %v4661
  %v4722 = vmul.f32 %v829, %v4653
  %v4723 = vmul.f32 %v830, %v4657
  %v4724 = vmul.f32 %v831, %v4661
  %v4725 = vmul.f32 %v832, %v4653
  %v4726 = vmul.f32 %v833, %v4657
  %v4727 = vmul.f32 %v834, %v4661
  %v4728 = vmul.f32 %v838, %v4653
  %v4729 = vmul.f32 %v839, %v4657
  %v4730 = vmul.f32 %v840, %v4661
  %v4731 = vmul.f32 %v841, %v4653
  %v4732 = vmul.f32 %v842, %v4657
  %v4733 = vmul.f32 %v843, %v4661
  %v4734 = vmul.f32 %v847, %v4653
  %v4735 = vmul.f32 %v848, %v4657
  %v4736 = vmul.f32 %v849, %v4661
  %v4737 = vmul.f32 %v850, %v4653
  %v4738 = vmul.f32 %v851, %v4657
  %v4739 = vmul.f32 %v852, %v4661
  %v4740 = vmul.f32 %v856, %v4653
  %v4741 = vmul.f32 %v857, %v4657
  %v4742 = vmul.f32 %v858, %v4661
  %v4743 = vmul.f32 %v859, %v4653
  %v4744 = vmul.f32 %v860, %v4657
  %v4745 = vmul.f32 %v861, %v4661
  %v4830 = vrot.slane %v4662, 2
  %v4831 = vrot.slane %v4665, 2
  %v4832 = vsel %vm4355, %v4830, %v4831
  %v4833 = vrot.slane %v4663, 2
  %v4834 = vrot.slane %v4666, 2
  %v4835 = vsel %vm4355, %v4833, %v4834
  %v4836 = vrot.slane %v4664, 2
  %v4837 = vrot.slane %v4667, 2
  %v4838 = vsel %vm4355, %v4836, %v4837
  %v4839 = vrot.slane %v4668, 2
  %v4840 = vrot.slane %v4671, 2
  %v4841 = vsel %vm4355, %v4839, %v4840
  %v4842 = vrot.slane %v4669, 2
  %v4843 = vrot.slane %v4672, 2
  %v4844 = vsel %vm4355, %v4842, %v4843
  %v4845 = vrot.slane %v4670, 2
  %v4846 = vrot.slane %v4673, 2
  %v4847 = vsel %vm4355, %v4845, %v4846
  %v4848 = vrot.slane %v4674, 2
  %v4849 = vrot.slane %v4677, 2
  %v4850 = vsel %vm4355, %v4848, %v4849
  %v4851 = vrot.slane %v4675, 2
  %v4852 = vrot.slane %v4678, 2
  %v4853 = vsel %vm4355, %v4851, %v4852
  %v4854 = vrot.slane %v4676, 2
  %v4855 = vrot.slane %v4679, 2
  %v4856 = vsel %vm4355, %v4854, %v4855
  %v4857 = vrot.slane %v4680, 2
  %v4858 = vrot.slane %v4683, 2
  %v4859 = vsel %vm4355, %v4857, %v4858
  %v4860 = vrot.slane %v4681, 2
  %v4861 = vrot.slane %v4684, 2
  %v4862 = vsel %vm4355, %v4860, %v4861
  %v4863 = vrot.slane %v4682, 2
  %v4864 = vrot.slane %v4685, 2
  %v4865 = vsel %vm4355, %v4863, %v4864
  %v4866 = vrot.slane %v4686, 2
  %v4867 = vrot.slane %v4689, 2
  %v4868 = vsel %vm4355, %v4866, %v4867
  %v4869 = vrot.slane %v4687, 2
  %v4870 = vrot.slane %v4690, 2
  %v4871 = vsel %vm4355, %v4869, %v4870
  %v4872 = vrot.slane %v4688, 2
  %v4873 = vrot.slane %v4691, 2
  %v4874 = vsel %vm4355, %v4872, %v4873
  %v4875 = vrot.slane %v4692, 2
  %v4876 = vrot.slane %v4695, 2
  %v4877 = vsel %vm4355, %v4875, %v4876
  %v4878 = vrot.slane %v4693, 2
  %v4879 = vrot.slane %v4696, 2
  %v4880 = vsel %vm4355, %v4878, %v4879
  %v4881 = vrot.slane %v4694, 2
  %v4882 = vrot.slane %v4697, 2
  %v4883 = vsel %vm4355, %v4881, %v4882
  %v4884 = vrot.slane %v4698, 2
  %v4885 = vrot.slane %v4701, 2
  %v4886 = vsel %vm4355, %v4884, %v4885
  %v4887 = vrot.slane %v4699, 2
  %v4888 = vrot.slane %v4702, 2
  %v4889 = vsel %vm4355, %v4887, %v4888
  %v4890 = vrot.slane %v4700, 2
  %v4891 = vrot.slane %v4703, 2
  %v4892 = vsel %vm4355, %v4890, %v4891
  %v4893 = vrot.slane %v4704, 2
  %v4894 = vrot.slane %v4707, 2
  %v4895 = vsel %vm4355, %v4893, %v4894
  %v4896 = vrot.slane %v4705, 2
  %v4897 = vrot.slane %v4708, 2
  %v4898 = vsel %vm4355, %v4896, %v4897
  %v4899 = vrot.slane %v4706, 2
  %v4900 = vrot.slane %v4709, 2
  %v4901 = vsel %vm4355, %v4899, %v4900
  %v4902 = vrot.slane %v4710, 2
  %v4903 = vrot.slane %v4713, 2
  %v4904 = vsel %vm4355, %v4902, %v4903
  %v4905 = vrot.slane %v4711, 2
  %v4906 = vrot.slane %v4714, 2
  %v4907 = vsel %vm4355, %v4905, %v4906
  %v4908 = vrot.slane %v4712, 2
  %v4909 = vrot.slane %v4715, 2
  %v4910 = vsel %vm4355, %v4908, %v4909
  %v4911 = vrot.slane %v4716, 2
  %v4912 = vrot.slane %v4719, 2
  %v4913 = vsel %vm4355, %v4911, %v4912
  %v4914 = vrot.slane %v4717, 2
  %v4915 = vrot.slane %v4720, 2
  %v4916 = vsel %vm4355, %v4914, %v4915
  %v4917 = vrot.slane %v4718, 2
  %v4918 = vrot.slane %v4721, 2
  %v4919 = vsel %vm4355, %v4917, %v4918
  %v4920 = vrot.slane %v4722, 2
  %v4921 = vrot.slane %v4725, 2
  %v4922 = vsel %vm4355, %v4920, %v4921
  %v4923 = vrot.slane %v4723, 2
  %v4924 = vrot.slane %v4726, 2
  %v4925 = vsel %vm4355, %v4923, %v4924
  %v4926 = vrot.slane %v4724, 2
  %v4927 = vrot.slane %v4727, 2
  %v4928 = vsel %vm4355, %v4926, %v4927
  %v4929 = vrot.slane %v4728, 2
  %v4930 = vrot.slane %v4731, 2
  %v4931 = vsel %vm4355, %v4929, %v4930
  %v4932 = vrot.slane %v4729, 2
  %v4933 = vrot.slane %v4732, 2
  %v4934 = vsel %vm4355, %v4932, %v4933
  %v4935 = vrot.slane %v4730, 2
  %v4936 = vrot.slane %v4733, 2
  %v4937 = vsel %vm4355, %v4935, %v4936
  %v4938 = vrot.slane %v4734, 2
  %v4939 = vrot.slane %v4737, 2
  %v4940 = vsel %vm4355, %v4938, %v4939
  %v4941 = vrot.slane %v4735, 2
  %v4942 = vrot.slane %v4738, 2
  %v4943 = vsel %vm4355, %v4941, %v4942
  %v4944 = vrot.slane %v4736, 2
  %v4945 = vrot.slane %v4739, 2
  %v4946 = vsel %vm4355, %v4944, %v4945
  %v4947 = vrot.slane %v4740, 2
  %v4948 = vrot.slane %v4743, 2
  %v4949 = vsel %vm4355, %v4947, %v4948
  %v4950 = vrot.slane %v4741, 2
  %v4951 = vrot.slane %v4744, 2
  %v4952 = vsel %vm4355, %v4950, %v4951
  %v4953 = vrot.slane %v4742, 2
  %v4954 = vrot.slane %v4745, 2
  %v4955 = vsel %vm4355, %v4953, %v4954
  %v5040 = vadd.f32 %v4566, %v4832
  %v5041 = vadd.f32 %v4567, %v4835
  %v5042 = vadd.f32 %v4568, %v4838
  %v5043 = vadd.f32 %v4569, %v4831
  %v5044 = vadd.f32 %v4570, %v4834
  %v5045 = vadd.f32 %v4571, %v4837
  %v5046 = vadd.f32 %v4572, %v4841
  %v5047 = vadd.f32 %v4573, %v4844
  %v5048 = vadd.f32 %v4574, %v4847
  %v5049 = vadd.f32 %v4575, %v4840
  %v5050 = vadd.f32 %v4576, %v4843
  %v5051 = vadd.f32 %v4577, %v4846
  %v5052 = vadd.f32 %v4578, %v4850
  %v5053 = vadd.f32 %v4579, %v4853
  %v5054 = vadd.f32 %v4580, %v4856
  %v5055 = vadd.f32 %v4581, %v4849
  %v5056 = vadd.f32 %v4582, %v4852
  %v5057 = vadd.f32 %v4583, %v4855
  %v5058 = vadd.f32 %v4584, %v4859
  %v5059 = vadd.f32 %v4585, %v4862
  %v5060 = vadd.f32 %v4586, %v4865
  %v5061 = vadd.f32 %v4587, %v4858
  %v5062 = vadd.f32 %v4588, %v4861
  %v5063 = vadd.f32 %v4589, %v4864
  %v5064 = vadd.f32 %v4590, %v4868
  %v5065 = vadd.f32 %v4591, %v4871
  %v5066 = vadd.f32 %v4592, %v4874
  %v5067 = vadd.f32 %v4593, %v4867
  %v5068 = vadd.f32 %v4594, %v4870
  %v5069 = vadd.f32 %v4595, %v4873
  %v5070 = vadd.f32 %v4596, %v4877
  %v5071 = vadd.f32 %v4597, %v4880
  %v5072 = vadd.f32 %v4598, %v4883
  %v5073 = vadd.f32 %v4599, %v4876
  %v5074 = vadd.f32 %v4600, %v4879
  %v5075 = vadd.f32 %v4601, %v4882
  %v5076 = vadd.f32 %v4602, %v4886
  %v5077 = vadd.f32 %v4603, %v4889
  %v5078 = vadd.f32 %v4604, %v4892
  %v5079 = vadd.f32 %v4605, %v4885
  %v5080 = vadd.f32 %v4606, %v4888
  %v5081 = vadd.f32 %v4607, %v4891
  %v5082 = vadd.f32 %v4608, %v4895
  %v5083 = vadd.f32 %v4609, %v4898
  %v5084 = vadd.f32 %v4610, %v4901
  %v5085 = vadd.f32 %v4611, %v4894
  %v5086 = vadd.f32 %v4612, %v4897
  %v5087 = vadd.f32 %v4613, %v4900
  %v5088 = vadd.f32 %v4614, %v4904
  %v5089 = vadd.f32 %v4615, %v4907
  %v5090 = vadd.f32 %v4616, %v4910
  %v5091 = vadd.f32 %v4617, %v4903
  %v5092 = vadd.f32 %v4618, %v4906
  %v5093 = vadd.f32 %v4619, %v4909
  %v5094 = vadd.f32 %v4620, %v4913
  %v5095 = vadd.f32 %v4621, %v4916
  %v5096 = vadd.f32 %v4622, %v4919
  %v5097 = vadd.f32 %v4623, %v4912
  %v5098 = vadd.f32 %v4624, %v4915
  %v5099 = vadd.f32 %v4625, %v4918
  %v5100 = vadd.f32 %v4626, %v4922
  %v5101 = vadd.f32 %v4627, %v4925
  %v5102 = vadd.f32 %v4628, %v4928
  %v5103 = vadd.f32 %v4629, %v4921
  %v5104 = vadd.f32 %v4630, %v4924
  %v5105 = vadd.f32 %v4631, %v4927
  %v5106 = vadd.f32 %v4632, %v4931
  %v5107 = vadd.f32 %v4633, %v4934
  %v5108 = vadd.f32 %v4634, %v4937
  %v5109 = vadd.f32 %v4635, %v4930
  %v5110 = vadd.f32 %v4636, %v4933
  %v5111 = vadd.f32 %v4637, %v4936
  %v5112 = vadd.f32 %v4638, %v4940
  %v5113 = vadd.f32 %v4639, %v4943
  %v5114 = vadd.f32 %v4640, %v4946
  %v5115 = vadd.f32 %v4641, %v4939
  %v5116 = vadd.f32 %v4642, %v4942
  %v5117 = vadd.f32 %v4643, %v4945
  %v5118 = vadd.f32 %v4644, %v4949
  %v5119 = vadd.f32 %v4645, %v4952
  %v5120 = vadd.f32 %v4646, %v4955
  %v5121 = vadd.f32 %v4647, %v4948
  %v5122 = vadd.f32 %v4648, %v4951
  %v5123 = vadd.f32 %v4649, %v4954
  %v5124 = vlaneseq
  %v5125 = vshrl.u32 %v5124, 7
  %v5126 = vsub.s32 4, %v5125
  %v5127 = vrot.slane %v895, %v5126
  %v5128 = vlaneseq
  %v5129 = vshrl.u32 %v5128, 7
  %v5130 = vsub.s32 4, %v5129
  %v5131 = vrot.slane %v896, %v5130
  %v5132 = vlaneseq
  %v5133 = vshrl.u32 %v5132, 7
  %v5134 = vsub.s32 4, %v5133
  %v5135 = vrot.slane %v897, %v5134
  %v5136 = vmul.f32 %v748, %v5127
  %v5137 = vmul.f32 %v749, %v5131
  %v5138 = vmul.f32 %v750, %v5135
  %v5139 = vmul.f32 %v751, %v5127
  %v5140 = vmul.f32 %v752, %v5131
  %v5141 = vmul.f32 %v753, %v5135
  %v5142 = vmul.f32 %v757, %v5127
  %v5143 = vmul.f32 %v758, %v5131
  %v5144 = vmul.f32 %v759, %v5135
  %v5145 = vmul.f32 %v760, %v5127
  %v5146 = vmul.f32 %v761, %v5131
  %v5147 = vmul.f32 %v762, %v5135
  %v5148 = vmul.f32 %v766, %v5127
  %v5149 = vmul.f32 %v767, %v5131
  %v5150 = vmul.f32 %v768, %v5135
  %v5151 = vmul.f32 %v769, %v5127
  %v5152 = vmul.f32 %v770, %v5131
  %v5153 = vmul.f32 %v771, %v5135
  %v5154 = vmul.f32 %v775, %v5127
  %v5155 = vmul.f32 %v776, %v5131
  %v5156 = vmul.f32 %v777, %v5135
  %v5157 = vmul.f32 %v778, %v5127
  %v5158 = vmul.f32 %v779, %v5131
  %v5159 = vmul.f32 %v780, %v5135
  %v5160 = vmul.f32 %v784, %v5127
  %v5161 = vmul.f32 %v785, %v5131
  %v5162 = vmul.f32 %v786, %v5135
  %v5163 = vmul.f32 %v787, %v5127
  %v5164 = vmul.f32 %v788, %v5131
  %v5165 = vmul.f32 %v789, %v5135
  %v5166 = vmul.f32 %v793, %v5127
  %v5167 = vmul.f32 %v794, %v5131
  %v5168 = vmul.f32 %v795, %v5135
  %v5169 = vmul.f32 %v796, %v5127
  %v5170 = vmul.f32 %v797, %v5131
  %v5171 = vmul.f32 %v798, %v5135
  %v5172 = vmul.f32 %v802, %v5127
  %v5173 = vmul.f32 %v803, %v5131
  %v5174 = vmul.f32 %v804, %v5135
  %v5175 = vmul.f32 %v805, %v5127
  %v5176 = vmul.f32 %v806, %v5131
  %v5177 = vmul.f32 %v807, %v5135
  %v5178 = vmul.f32 %v811, %v5127
  %v5179 = vmul.f32 %v812, %v5131
  %v5180 = vmul.f32 %v813, %v5135
  %v5181 = vmul.f32 %v814, %v5127
  %v5182 = vmul.f32 %v815, %v5131
  %v5183 = vmul.f32 %v816, %v5135
  %v5184 = vmul.f32 %v820, %v5127
  %v5185 = vmul.f32 %v821, %v5131
  %v5186 = vmul.f32 %v822, %v5135
  %v5187 = vmul.f32 %v823, %v5127
  %v5188 = vmul.f32 %v824, %v5131
  %v5189 = vmul.f32 %v825, %v5135
  %v5190 = vmul.f32 %v829, %v5127
  %v5191 = vmul.f32 %v830, %v5131
  %v5192 = vmul.f32 %v831, %v5135
  %v5193 = vmul.f32 %v832, %v5127
  %v5194 = vmul.f32 %v833, %v5131
  %v5195 = vmul.f32 %v834, %v5135
  %v5196 = vmul.f32 %v838, %v5127
  %v5197 = vmul.f32 %v839, %v5131
  %v5198 = vmul.f32 %v840, %v5135
  %v5199 = vmul.f32 %v841, %v5127
  %v5200 = vmul.f32 %v842, %v5131
  %v5201 = vmul.f32 %v843, %v5135
  %v5202 = vmul.f32 %v847, %v5127
  %v5203 = vmul.f32 %v848, %v5131
  %v5204 = vmul.f32 %v849, %v5135
  %v5205 = vmul.f32 %v850, %v5127
  %v5206 = vmul.f32 %v851, %v5131
  %v5207 = vmul.f32 %v852, %v5135
  %v5208 = vmul.f32 %v856, %v5127
  %v5209 = vmul.f32 %v857, %v5131
  %v5210 = vmul.f32 %v858, %v5135
  %v5211 = vmul.f32 %v859, %v5127
  %v5212 = vmul.f32 %v860, %v5131
  %v5213 = vmul.f32 %v861, %v5135
  %v5214 = vmul.f32 %v865, %v5127
  %v5215 = vmul.f32 %v866, %v5131
  %v5216 = vmul.f32 %v867, %v5135
  %v5217 = vmul.f32 %v868, %v5127
  %v5218 = vmul.f32 %v869, %v5131
  %v5219 = vmul.f32 %v870, %v5135
  %v5304 = vrot.slane %v5136, 2
  %v5305 = vrot.slane %v5139, 2
  %v5306 = vsel %vm4355, %v5304, %v5305
  %v5307 = vrot.slane %v5137, 2
  %v5308 = vrot.slane %v5140, 2
  %v5309 = vsel %vm4355, %v5307, %v5308
  %v5310 = vrot.slane %v5138, 2
  %v5311 = vrot.slane %v5141, 2
  %v5312 = vsel %vm4355, %v5310, %v5311
  %v5313 = vrot.slane %v5142, 2
  %v5314 = vrot.slane %v5145, 2
  %v5315 = vsel %vm4355, %v5313, %v5314
  %v5316 = vrot.slane %v5143, 2
  %v5317 = vrot.slane %v5146, 2
  %v5318 = vsel %vm4355, %v5316, %v5317
  %v5319 = vrot.slane %v5144, 2
  %v5320 = vrot.slane %v5147, 2
  %v5321 = vsel %vm4355, %v5319, %v5320
  %v5322 = vrot.slane %v5148, 2
  %v5323 = vrot.slane %v5151, 2
  %v5324 = vsel %vm4355, %v5322, %v5323
  %v5325 = vrot.slane %v5149, 2
  %v5326 = vrot.slane %v5152, 2
  %v5327 = vsel %vm4355, %v5325, %v5326
  %v5328 = vrot.slane %v5150, 2
  %v5329 = vrot.slane %v5153, 2
  %v5330 = vsel %vm4355, %v5328, %v5329
  %v5331 = vrot.slane %v5154, 2
  %v5332 = vrot.slane %v5157, 2
  %v5333 = vsel %vm4355, %v5331, %v5332
  %v5334 = vrot.slane %v5155, 2
  %v5335 = vrot.slane %v5158, 2
  %v5336 = vsel %vm4355, %v5334, %v5335
  %v5337 = vrot.slane %v5156, 2
  %v5338 = vrot.slane %v5159, 2
  %v5339 = vsel %vm4355, %v5337, %v5338
  %v5340 = vrot.slane %v5160, 2
  %v5341 = vrot.slane %v5163, 2
  %v5342 = vsel %vm4355, %v5340, %v5341
  %v5343 = vrot.slane %v5161, 2
  %v5344 = vrot.slane %v5164, 2
  %v5345 = vsel %vm4355, %v5343, %v5344
  %v5346 = vrot.slane %v5162, 2
  %v5347 = vrot.slane %v5165, 2
  %v5348 = vsel %vm4355, %v5346, %v5347
  %v5349 = vrot.slane %v5166, 2
  %v5350 = vrot.slane %v5169, 2
  %v5351 = vsel %vm4355, %v5349, %v5350
  %v5352 = vrot.slane %v5167, 2
  %v5353 = vrot.slane %v5170, 2
  %v5354 = vsel %vm4355, %v5352, %v5353
  %v5355 = vrot.slane %v5168, 2
  %v5356 = vrot.slane %v5171, 2
  %v5357 = vsel %vm4355, %v5355, %v5356
  %v5358 = vrot.slane %v5172, 2
  %v5359 = vrot.slane %v5175, 2
  %v5360 = vsel %vm4355, %v5358, %v5359
  %v5361 = vrot.slane %v5173, 2
  %v5362 = vrot.slane %v5176, 2
  %v5363 = vsel %vm4355, %v5361, %v5362
  %v5364 = vrot.slane %v5174, 2
  %v5365 = vrot.slane %v5177, 2
  %v5366 = vsel %vm4355, %v5364, %v5365
  %v5367 = vrot.slane %v5178, 2
  %v5368 = vrot.slane %v5181, 2
  %v5369 = vsel %vm4355, %v5367, %v5368
  %v5370 = vrot.slane %v5179, 2
  %v5371 = vrot.slane %v5182, 2
  %v5372 = vsel %vm4355, %v5370, %v5371
  %v5373 = vrot.slane %v5180, 2
  %v5374 = vrot.slane %v5183, 2
  %v5375 = vsel %vm4355, %v5373, %v5374
  %v5376 = vrot.slane %v5184, 2
  %v5377 = vrot.slane %v5187, 2
  %v5378 = vsel %vm4355, %v5376, %v5377
  %v5379 = vrot.slane %v5185, 2
  %v5380 = vrot.slane %v5188, 2
  %v5381 = vsel %vm4355, %v5379, %v5380
  %v5382 = vrot.slane %v5186, 2
  %v5383 = vrot.slane %v5189, 2
  %v5384 = vsel %vm4355, %v5382, %v5383
  %v5385 = vrot.slane %v5190, 2
  %v5386 = vrot.slane %v5193, 2
  %v5387 = vsel %vm4355, %v5385, %v5386
  %v5388 = vrot.slane %v5191, 2
  %v5389 = vrot.slane %v5194, 2
  %v5390 = vsel %vm4355, %v5388, %v5389
  %v5391 = vrot.slane %v5192, 2
  %v5392 = vrot.slane %v5195, 2
  %v5393 = vsel %vm4355, %v5391, %v5392
  %v5394 = vrot.slane %v5196, 2
  %v5395 = vrot.slane %v5199, 2
  %v5396 = vsel %vm4355, %v5394, %v5395
  %v5397 = vrot.slane %v5197, 2
  %v5398 = vrot.slane %v5200, 2
  %v5399 = vsel %vm4355, %v5397, %v5398
  %v5400 = vrot.slane %v5198, 2
  %v5401 = vrot.slane %v5201, 2
  %v5402 = vsel %vm4355, %v5400, %v5401
  %v5403 = vrot.slane %v5202, 2
  %v5404 = vrot.slane %v5205, 2
  %v5405 = vsel %vm4355, %v5403, %v5404
  %v5406 = vrot.slane %v5203, 2
  %v5407 = vrot.slane %v5206, 2
  %v5408 = vsel %vm4355, %v5406, %v5407
  %v5409 = vrot.slane %v5204, 2
  %v5410 = vrot.slane %v5207, 2
  %v5411 = vsel %vm4355, %v5409, %v5410
  %v5412 = vrot.slane %v5208, 2
  %v5413 = vrot.slane %v5211, 2
  %v5414 = vsel %vm4355, %v5412, %v5413
  %v5415 = vrot.slane %v5209, 2
  %v5416 = vrot.slane %v5212, 2
  %v5417 = vsel %vm4355, %v5415, %v5416
  %v5418 = vrot.slane %v5210, 2
  %v5419 = vrot.slane %v5213, 2
  %v5420 = vsel %vm4355, %v5418, %v5419
  %v5421 = vrot.slane %v5214, 2
  %v5422 = vrot.slane %v5217, 2
  %v5423 = vsel %vm4355, %v5421, %v5422
  %v5424 = vrot.slane %v5215, 2
  %v5425 = vrot.slane %v5218, 2
  %v5426 = vsel %vm4355, %v5424, %v5425
  %v5427 = vrot.slane %v5216, 2
  %v5428 = vrot.slane %v5219, 2
  %v5429 = vsel %vm4355, %v5427, %v5428
  %v5514 = vadd.f32 %v5040, %v5306
  %v5515 = vadd.f32 %v5041, %v5309
  %v5516 = vadd.f32 %v5042, %v5312
  %v5517 = vadd.f32 %v5043, %v5305
  %v5518 = vadd.f32 %v5044, %v5308
  %v5519 = vadd.f32 %v5045, %v5311
  %v5520 = vadd.f32 %v5046, %v5315
  %v5521 = vadd.f32 %v5047, %v5318
  %v5522 = vadd.f32 %v5048, %v5321
  %v5523 = vadd.f32 %v5049, %v5314
  %v5524 = vadd.f32 %v5050, %v5317
  %v5525 = vadd.f32 %v5051, %v5320
  %v5526 = vadd.f32 %v5052, %v5324
  %v5527 = vadd.f32 %v5053, %v5327
  %v5528 = vadd.f32 %v5054, %v5330
  %v5529 = vadd.f32 %v5055, %v5323
  %v5530 = vadd.f32 %v5056, %v5326
  %v5531 = vadd.f32 %v5057, %v5329
  %v5532 = vadd.f32 %v5058, %v5333
  %v5533 = vadd.f32 %v5059, %v5336
  %v5534 = vadd.f32 %v5060, %v5339
  %v5535 = vadd.f32 %v5061, %v5332
  %v5536 = vadd.f32 %v5062, %v5335
  %v5537 = vadd.f32 %v5063, %v5338
  %v5538 = vadd.f32 %v5064, %v5342
  %v5539 = vadd.f32 %v5065, %v5345
  %v5540 = vadd.f32 %v5066, %v5348
  %v5541 = vadd.f32 %v5067, %v5341
  %v5542 = vadd.f32 %v5068, %v5344
  %v5543 = vadd.f32 %v5069, %v5347
  %v5544 = vadd.f32 %v5070, %v5351
  %v5545 = vadd.f32 %v5071, %v5354
  %v5546 = vadd.f32 %v5072, %v5357
  %v5547 = vadd.f32 %v5073, %v5350
  %v5548 = vadd.f32 %v5074, %v5353
  %v5549 = vadd.f32 %v5075, %v5356
  %v5550 = vadd.f32 %v5076, %v5360
  %v5551 = vadd.f32 %v5077, %v5363
  %v5552 = vadd.f32 %v5078, %v5366
  %v5553 = vadd.f32 %v5079, %v5359
  %v5554 = vadd.f32 %v5080, %v5362
  %v5555 = vadd.f32 %v5081, %v5365
  %v5556 = vadd.f32 %v5082, %v5369
  %v5557 = vadd.f32 %v5083, %v5372
  %v5558 = vadd.f32 %v5084, %v5375
  %v5559 = vadd.f32 %v5085, %v5368
  %v5560 = vadd.f32 %v5086, %v5371
  %v5561 = vadd.f32 %v5087, %v5374
  %v5562 = vadd.f32 %v5088, %v5378
  %v5563 = vadd.f32 %v5089, %v5381
  %v5564 = vadd.f32 %v5090, %v5384
  %v5565 = vadd.f32 %v5091, %v5377
  %v5566 = vadd.f32 %v5092, %v5380
  %v5567 = vadd.f32 %v5093, %v5383
  %v5568 = vadd.f32 %v5094, %v5387
  %v5569 = vadd.f32 %v5095, %v5390
  %v5570 = vadd.f32 %v5096, %v5393
  %v5571 = vadd.f32 %v5097, %v5386
  %v5572 = vadd.f32 %v5098, %v5389
  %v5573 = vadd.f32 %v5099, %v5392
  %v5574 = vadd.f32 %v5100, %v5396
  %v5575 = vadd.f32 %v5101, %v5399
  %v5576 = vadd.f32 %v5102, %v5402
  %v5577 = vadd.f32 %v5103, %v5395
  %v5578 = vadd.f32 %v5104, %v5398
  %v5579 = vadd.f32 %v5105, %v5401
  %v5580 = vadd.f32 %v5106, %v5405
  %v5581 = vadd.f32 %v5107, %v5408
  %v5582 = vadd.f32 %v5108, %v5411
  %v5583 = vadd.f32 %v5109, %v5404
  %v5584 = vadd.f32 %v5110, %v5407
  %v5585 = vadd.f32 %v5111, %v5410
  %v5586 = vadd.f32 %v5112, %v5414
  %v5587 = vadd.f32 %v5113, %v5417
  %v5588 = vadd.f32 %v5114, %v5420
  %v5589 = vadd.f32 %v5115, %v5413
  %v5590 = vadd.f32 %v5116, %v5416
  %v5591 = vadd.f32 %v5117, %v5419
  %v5592 = vadd.f32 %v5118, %v5423
  %v5593 = vadd.f32 %v5119, %v5426
  %v5594 = vadd.f32 %v5120, %v5429
  %v5595 = vadd.f32 %v5121, %v5422
  %v5596 = vadd.f32 %v5122, %v5425
  %v5597 = vadd.f32 %v5123, %v5428
  %v5598 = vlaneseq
  %v5599 = vshrl.u32 %v5598, 7
  %v5600 = vsub.s32 1, %v5599
  %v5601 = vrot.slane %v898, %v5600
  %v5602 = vlaneseq
  %v5603 = vshrl.u32 %v5602, 7
  %v5604 = vsub.s32 1, %v5603
  %v5605 = vrot.slane %v899, %v5604
  %v5606 = vlaneseq
  %v5607 = vshrl.u32 %v5606, 7
  %v5608 = vsub.s32 1, %v5607
  %v5609 = vrot.slane %v900, %v5608
  %v5610 = vmul.f32 %v757, %v5601
  %v5611 = vmul.f32 %v758, %v5605
  %v5612 = vmul.f32 %v759, %v5609
  %v5613 = vmul.f32 %v760, %v5601
  %v5614 = vmul.f32 %v761, %v5605
  %v5615 = vmul.f32 %v762, %v5609
  %v5616 = vmul.f32 %v766, %v5601
  %v5617 = vmul.f32 %v767, %v5605
  %v5618 = vmul.f32 %v768, %v5609
  %v5619 = vmul.f32 %v769, %v5601
  %v5620 = vmul.f32 %v770, %v5605
  %v5621 = vmul.f32 %v771, %v5609
  %v5622 = vmul.f32 %v775, %v5601
  %v5623 = vmul.f32 %v776, %v5605
  %v5624 = vmul.f32 %v777, %v5609
  %v5625 = vmul.f32 %v778, %v5601
  %v5626 = vmul.f32 %v779, %v5605
  %v5627 = vmul.f32 %v780, %v5609
  %v5628 = vmul.f32 %v784, %v5601
  %v5629 = vmul.f32 %v785, %v5605
  %v5630 = vmul.f32 %v786, %v5609
  %v5631 = vmul.f32 %v787, %v5601
  %v5632 = vmul.f32 %v788, %v5605
  %v5633 = vmul.f32 %v789, %v5609
  %v5634 = vmul.f32 %v793, %v5601
  %v5635 = vmul.f32 %v794, %v5605
  %v5636 = vmul.f32 %v795, %v5609
  %v5637 = vmul.f32 %v796, %v5601
  %v5638 = vmul.f32 %v797, %v5605
  %v5639 = vmul.f32 %v798, %v5609
  %v5640 = vmul.f32 %v802, %v5601
  %v5641 = vmul.f32 %v803, %v5605
  %v5642 = vmul.f32 %v804, %v5609
  %v5643 = vmul.f32 %v805, %v5601
  %v5644 = vmul.f32 %v806, %v5605
  %v5645 = vmul.f32 %v807, %v5609
  %v5646 = vmul.f32 %v811, %v5601
  %v5647 = vmul.f32 %v812, %v5605
  %v5648 = vmul.f32 %v813, %v5609
  %v5649 = vmul.f32 %v814, %v5601
  %v5650 = vmul.f32 %v815, %v5605
  %v5651 = vmul.f32 %v816, %v5609
  %v5652 = vmul.f32 %v820, %v5601
  %v5653 = vmul.f32 %v821, %v5605
  %v5654 = vmul.f32 %v822, %v5609
  %v5655 = vmul.f32 %v823, %v5601
  %v5656 = vmul.f32 %v824, %v5605
  %v5657 = vmul.f32 %v825, %v5609
  %v5658 = vmul.f32 %v829, %v5601
  %v5659 = vmul.f32 %v830, %v5605
  %v5660 = vmul.f32 %v831, %v5609
  %v5661 = vmul.f32 %v832, %v5601
  %v5662 = vmul.f32 %v833, %v5605
  %v5663 = vmul.f32 %v834, %v5609
  %v5664 = vmul.f32 %v838, %v5601
  %v5665 = vmul.f32 %v839, %v5605
  %v5666 = vmul.f32 %v840, %v5609
  %v5667 = vmul.f32 %v841, %v5601
  %v5668 = vmul.f32 %v842, %v5605
  %v5669 = vmul.f32 %v843, %v5609
  %v5670 = vmul.f32 %v847, %v5601
  %v5671 = vmul.f32 %v848, %v5605
  %v5672 = vmul.f32 %v849, %v5609
  %v5673 = vmul.f32 %v850, %v5601
  %v5674 = vmul.f32 %v851, %v5605
  %v5675 = vmul.f32 %v852, %v5609
  %v5676 = vmul.f32 %v856, %v5601
  %v5677 = vmul.f32 %v857, %v5605
  %v5678 = vmul.f32 %v858, %v5609
  %v5679 = vmul.f32 %v859, %v5601
  %v5680 = vmul.f32 %v860, %v5605
  %v5681 = vmul.f32 %v861, %v5609
  %v5682 = vmul.f32 %v865, %v5601
  %v5683 = vmul.f32 %v866, %v5605
  %v5684 = vmul.f32 %v867, %v5609
  %v5685 = vmul.f32 %v868, %v5601
  %v5686 = vmul.f32 %v869, %v5605
  %v5687 = vmul.f32 %v870, %v5609
  %v5688 = vmul.f32 %v874, %v5601
  %v5689 = vmul.f32 %v875, %v5605
  %v5690 = vmul.f32 %v876, %v5609
  %v5691 = vmul.f32 %v877, %v5601
  %v5692 = vmul.f32 %v878, %v5605
  %v5693 = vmul.f32 %v879, %v5609
  %v5778 = vrot.slane %v5610, 2
  %v5779 = vrot.slane %v5613, 2
  %v5780 = vsel %vm4355, %v5778, %v5779
  %v5781 = vrot.slane %v5611, 2
  %v5782 = vrot.slane %v5614, 2
  %v5783 = vsel %vm4355, %v5781, %v5782
  %v5784 = vrot.slane %v5612, 2
  %v5785 = vrot.slane %v5615, 2
  %v5786 = vsel %vm4355, %v5784, %v5785
  %v5787 = vrot.slane %v5616, 2
  %v5788 = vrot.slane %v5619, 2
  %v5789 = vsel %vm4355, %v5787, %v5788
  %v5790 = vrot.slane %v5617, 2
  %v5791 = vrot.slane %v5620, 2
  %v5792 = vsel %vm4355, %v5790, %v5791
  %v5793 = vrot.slane %v5618, 2
  %v5794 = vrot.slane %v5621, 2
  %v5795 = vsel %vm4355, %v5793, %v5794
  %v5796 = vrot.slane %v5622, 2
  %v5797 = vrot.slane %v5625, 2
  %v5798 = vsel %vm4355, %v5796, %v5797
  %v5799 = vrot.slane %v5623, 2
  %v5800 = vrot.slane %v5626, 2
  %v5801 = vsel %vm4355, %v5799, %v5800
  %v5802 = vrot.slane %v5624, 2
  %v5803 = vrot.slane %v5627, 2
  %v5804 = vsel %vm4355, %v5802, %v5803
  %v5805 = vrot.slane %v5628, 2
  %v5806 = vrot.slane %v5631, 2
  %v5807 = vsel %vm4355, %v5805, %v5806
  %v5808 = vrot.slane %v5629, 2
  %v5809 = vrot.slane %v5632, 2
  %v5810 = vsel %vm4355, %v5808, %v5809
  %v5811 = vrot.slane %v5630, 2
  %v5812 = vrot.slane %v5633, 2
  %v5813 = vsel %vm4355, %v5811, %v5812
  %v5814 = vrot.slane %v5634, 2
  %v5815 = vrot.slane %v5637, 2
  %v5816 = vsel %vm4355, %v5814, %v5815
  %v5817 = vrot.slane %v5635, 2
  %v5818 = vrot.slane %v5638, 2
  %v5819 = vsel %vm4355, %v5817, %v5818
  %v5820 = vrot.slane %v5636, 2
  %v5821 = vrot.slane %v5639, 2
  %v5822 = vsel %vm4355, %v5820, %v5821
  %v5823 = vrot.slane %v5640, 2
  %v5824 = vrot.slane %v5643, 2
  %v5825 = vsel %vm4355, %v5823, %v5824
  %v5826 = vrot.slane %v5641, 2
  %v5827 = vrot.slane %v5644, 2
  %v5828 = vsel %vm4355, %v5826, %v5827
  %v5829 = vrot.slane %v5642, 2
  %v5830 = vrot.slane %v5645, 2
  %v5831 = vsel %vm4355, %v5829, %v5830
  %v5832 = vrot.slane %v5646, 2
  %v5833 = vrot.slane %v5649, 2
  %v5834 = vsel %vm4355, %v5832, %v5833
  %v5835 = vrot.slane %v5647, 2
  %v5836 = vrot.slane %v5650, 2
  %v5837 = vsel %vm4355, %v5835, %v5836
  %v5838 = vrot.slane %v5648, 2
  %v5839 = vrot.slane %v5651, 2
  %v5840 = vsel %vm4355, %v5838, %v5839
  %v5841 = vrot.slane %v5652, 2
  %v5842 = vrot.slane %v5655, 2
  %v5843 = vsel %vm4355, %v5841, %v5842
  %v5844 = vrot.slane %v5653, 2
  %v5845 = vrot.slane %v5656, 2
  %v5846 = vsel %vm4355, %v5844, %v5845
  %v5847 = vrot.slane %v5654, 2
  %v5848 = vrot.slane %v5657, 2
  %v5849 = vsel %vm4355, %v5847, %v5848
  %v5850 = vrot.slane %v5658, 2
  %v5851 = vrot.slane %v5661, 2
  %v5852 = vsel %vm4355, %v5850, %v5851
  %v5853 = vrot.slane %v5659, 2
  %v5854 = vrot.slane %v5662, 2
  %v5855 = vsel %vm4355, %v5853, %v5854
  %v5856 = vrot.slane %v5660, 2
  %v5857 = vrot.slane %v5663, 2
  %v5858 = vsel %vm4355, %v5856, %v5857
  %v5859 = vrot.slane %v5664, 2
  %v5860 = vrot.slane %v5667, 2
  %v5861 = vsel %vm4355, %v5859, %v5860
  %v5862 = vrot.slane %v5665, 2
  %v5863 = vrot.slane %v5668, 2
  %v5864 = vsel %vm4355, %v5862, %v5863
  %v5865 = vrot.slane %v5666, 2
  %v5866 = vrot.slane %v5669, 2
  %v5867 = vsel %vm4355, %v5865, %v5866
  %v5868 = vrot.slane %v5670, 2
  %v5869 = vrot.slane %v5673, 2
  %v5870 = vsel %vm4355, %v5868, %v5869
  %v5871 = vrot.slane %v5671, 2
  %v5872 = vrot.slane %v5674, 2
  %v5873 = vsel %vm4355, %v5871, %v5872
  %v5874 = vrot.slane %v5672, 2
  %v5875 = vrot.slane %v5675, 2
  %v5876 = vsel %vm4355, %v5874, %v5875
  %v5877 = vrot.slane %v5676, 2
  %v5878 = vrot.slane %v5679, 2
  %v5879 = vsel %vm4355, %v5877, %v5878
  %v5880 = vrot.slane %v5677, 2
  %v5881 = vrot.slane %v5680, 2
  %v5882 = vsel %vm4355, %v5880, %v5881
  %v5883 = vrot.slane %v5678, 2
  %v5884 = vrot.slane %v5681, 2
  %v5885 = vsel %vm4355, %v5883, %v5884
  %v5886 = vrot.slane %v5682, 2
  %v5887 = vrot.slane %v5685, 2
  %v5888 = vsel %vm4355, %v5886, %v5887
  %v5889 = vrot.slane %v5683, 2
  %v5890 = vrot.slane %v5686, 2
  %v5891 = vsel %vm4355, %v5889, %v5890
  %v5892 = vrot.slane %v5684, 2
  %v5893 = vrot.slane %v5687, 2
  %v5894 = vsel %vm4355, %v5892, %v5893
  %v5895 = vrot.slane %v5688, 2
  %v5896 = vrot.slane %v5691, 2
  %v5897 = vsel %vm4355, %v5895, %v5896
  %v5898 = vrot.slane %v5689, 2
  %v5899 = vrot.slane %v5692, 2
  %v5900 = vsel %vm4355, %v5898, %v5899
  %v5901 = vrot.slane %v5690, 2
  %v5902 = vrot.slane %v5693, 2
  %v5903 = vsel %vm4355, %v5901, %v5902
  %v5988 = vadd.f32 %v5514, %v5780
  %v5989 = vadd.f32 %v5515, %v5783
  %v5990 = vadd.f32 %v5516, %v5786
  %v5991 = vadd.f32 %v5517, %v5779
  %v5992 = vadd.f32 %v5518, %v5782
  %v5993 = vadd.f32 %v5519, %v5785
  %v5994 = vadd.f32 %v5520, %v5789
  %v5995 = vadd.f32 %v5521, %v5792
  %v5996 = vadd.f32 %v5522, %v5795
  %v5997 = vadd.f32 %v5523, %v5788
  %v5998 = vadd.f32 %v5524, %v5791
  %v5999 = vadd.f32 %v5525, %v5794
  %v6000 = vadd.f32 %v5526, %v5798
  %v6001 = vadd.f32 %v5527, %v5801
  %v6002 = vadd.f32 %v5528, %v5804
  %v6003 = vadd.f32 %v5529, %v5797
  %v6004 = vadd.f32 %v5530, %v5800
  %v6005 = vadd.f32 %v5531, %v5803
  %v6006 = vadd.f32 %v5532, %v5807
  %v6007 = vadd.f32 %v5533, %v5810
  %v6008 = vadd.f32 %v5534, %v5813
  %v6009 = vadd.f32 %v5535, %v5806
  %v6010 = vadd.f32 %v5536, %v5809
  %v6011 = vadd.f32 %v5537, %v5812
  %v6012 = vadd.f32 %v5538, %v5816
  %v6013 = vadd.f32 %v5539, %v5819
  %v6014 = vadd.f32 %v5540, %v5822
  %v6015 = vadd.f32 %v5541, %v5815
  %v6016 = vadd.f32 %v5542, %v5818
  %v6017 = vadd.f32 %v5543, %v5821
  %v6018 = vadd.f32 %v5544, %v5825
  %v6019 = vadd.f32 %v5545, %v5828
  %v6020 = vadd.f32 %v5546, %v5831
  %v6021 = vadd.f32 %v5547, %v5824
  %v6022 = vadd.f32 %v5548, %v5827
  %v6023 = vadd.f32 %v5549, %v5830
  %v6024 = vadd.f32 %v5550, %v5834
  %v6025 = vadd.f32 %v5551, %v5837
  %v6026 = vadd.f32 %v5552, %v5840
  %v6027 = vadd.f32 %v5553, %v5833
  %v6028 = vadd.f32 %v5554, %v5836
  %v6029 = vadd.f32 %v5555, %v5839
  %v6030 = vadd.f32 %v5556, %v5843
  %v6031 = vadd.f32 %v5557, %v5846
  %v6032 = vadd.f32 %v5558, %v5849
  %v6033 = vadd.f32 %v5559, %v5842
  %v6034 = vadd.f32 %v5560, %v5845
  %v6035 = vadd.f32 %v5561, %v5848
  %v6036 = vadd.f32 %v5562, %v5852
  %v6037 = vadd.f32 %v5563, %v5855
  %v6038 = vadd.f32 %v5564, %v5858
  %v6039 = vadd.f32 %v5565, %v5851
  %v6040 = vadd.f32 %v5566, %v5854
  %v6041 = vadd.f32 %v5567, %v5857
  %v6042 = vadd.f32 %v5568, %v5861
  %v6043 = vadd.f32 %v5569, %v5864
  %v6044 = vadd.f32 %v5570, %v5867
  %v6045 = vadd.f32 %v5571, %v5860
  %v6046 = vadd.f32 %v5572, %v5863
  %v6047 = vadd.f32 %v5573, %v5866
  %v6048 = vadd.f32 %v5574, %v5870
  %v6049 = vadd.f32 %v5575, %v5873
  %v6050 = vadd.f32 %v5576, %v5876
  %v6051 = vadd.f32 %v5577, %v5869
  %v6052 = vadd.f32 %v5578, %v5872
  %v6053 = vadd.f32 %v5579, %v5875
  %v6054 = vadd.f32 %v5580, %v5879
  %v6055 = vadd.f32 %v5581, %v5882
  %v6056 = vadd.f32 %v5582, %v5885
  %v6057 = vadd.f32 %v5583, %v5878
  %v6058 = vadd.f32 %v5584, %v5881
  %v6059 = vadd.f32 %v5585, %v5884
  %v6060 = vadd.f32 %v5586, %v5888
  %v6061 = vadd.f32 %v5587, %v5891
  %v6062 = vadd.f32 %v5588, %v5894
  %v6063 = vadd.f32 %v5589, %v5887
  %v6064 = vadd.f32 %v5590, %v5890
  %v6065 = vadd.f32 %v5591, %v5893
  %v6066 = vadd.f32 %v5592, %v5897
  %v6067 = vadd.f32 %v5593, %v5900
  %v6068 = vadd.f32 %v5594, %v5903
  %v6069 = vadd.f32 %v5595, %v5896
  %v6070 = vadd.f32 %v5596, %v5899
  %v6071 = vadd.f32 %v5597, %v5902
  %v6072 = vlaneseq
  %v6073 = vshrl.u32 %v6072, 7
  %v6074 = vsub.s32 6, %v6073
  %v6075 = vrot.slane %v898, %v6074
  %v6076 = vlaneseq
  %v6077 = vshrl.u32 %v6076, 7
  %v6078 = vsub.s32 6, %v6077
  %v6079 = vrot.slane %v899, %v6078
  %v6080 = vlaneseq
  %v6081 = vshrl.u32 %v6080, 7
  %v6082 = vsub.s32 6, %v6081
  %v6083 = vrot.slane %v900, %v6082
  %v6084 = vmul.f32 %v766, %v6075
  %v6085 = vmul.f32 %v767, %v6079
  %v6086 = vmul.f32 %v768, %v6083
  %v6087 = vmul.f32 %v769, %v6075
  %v6088 = vmul.f32 %v770, %v6079
  %v6089 = vmul.f32 %v771, %v6083
  %v6090 = vmul.f32 %v775, %v6075
  %v6091 = vmul.f32 %v776, %v6079
  %v6092 = vmul.f32 %v777, %v6083
  %v6093 = vmul.f32 %v778, %v6075
  %v6094 = vmul.f32 %v779, %v6079
  %v6095 = vmul.f32 %v780, %v6083
  %v6096 = vmul.f32 %v784, %v6075
  %v6097 = vmul.f32 %v785, %v6079
  %v6098 = vmul.f32 %v786, %v6083
  %v6099 = vmul.f32 %v787, %v6075
  %v6100 = vmul.f32 %v788, %v6079
  %v6101 = vmul.f32 %v789, %v6083
  %v6102 = vmul.f32 %v793, %v6075
  %v6103 = vmul.f32 %v794, %v6079
  %v6104 = vmul.f32 %v795, %v6083
  %v6105 = vmul.f32 %v796, %v6075
  %v6106 = vmul.f32 %v797, %v6079
  %v6107 = vmul.f32 %v798, %v6083
  %v6108 = vmul.f32 %v802, %v6075
  %v6109 = vmul.f32 %v803, %v6079
  %v6110 = vmul.f32 %v804, %v6083
  %v6111 = vmul.f32 %v805, %v6075
  %v6112 = vmul.f32 %v806, %v6079
  %v6113 = vmul.f32 %v807, %v6083
  %v6114 = vmul.f32 %v811, %v6075
  %v6115 = vmul.f32 %v812, %v6079
  %v6116 = vmul.f32 %v813, %v6083
  %v6117 = vmul.f32 %v814, %v6075
  %v6118 = vmul.f32 %v815, %v6079
  %v6119 = vmul.f32 %v816, %v6083
  %v6120 = vmul.f32 %v820, %v6075
  %v6121 = vmul.f32 %v821, %v6079
  %v6122 = vmul.f32 %v822, %v6083
  %v6123 = vmul.f32 %v823, %v6075
  %v6124 = vmul.f32 %v824, %v6079
  %v6125 = vmul.f32 %v825, %v6083
  %v6126 = vmul.f32 %v829, %v6075
  %v6127 = vmul.f32 %v830, %v6079
  %v6128 = vmul.f32 %v831, %v6083
  %v6129 = vmul.f32 %v832, %v6075
  %v6130 = vmul.f32 %v833, %v6079
  %v6131 = vmul.f32 %v834, %v6083
  %v6132 = vmul.f32 %v838, %v6075
  %v6133 = vmul.f32 %v839, %v6079
  %v6134 = vmul.f32 %v840, %v6083
  %v6135 = vmul.f32 %v841, %v6075
  %v6136 = vmul.f32 %v842, %v6079
  %v6137 = vmul.f32 %v843, %v6083
  %v6138 = vmul.f32 %v847, %v6075
  %v6139 = vmul.f32 %v848, %v6079
  %v6140 = vmul.f32 %v849, %v6083
  %v6141 = vmul.f32 %v850, %v6075
  %v6142 = vmul.f32 %v851, %v6079
  %v6143 = vmul.f32 %v852, %v6083
  %v6144 = vmul.f32 %v856, %v6075
  %v6145 = vmul.f32 %v857, %v6079
  %v6146 = vmul.f32 %v858, %v6083
  %v6147 = vmul.f32 %v859, %v6075
  %v6148 = vmul.f32 %v860, %v6079
  %v6149 = vmul.f32 %v861, %v6083
  %v6150 = vmul.f32 %v865, %v6075
  %v6151 = vmul.f32 %v866, %v6079
  %v6152 = vmul.f32 %v867, %v6083
  %v6153 = vmul.f32 %v868, %v6075
  %v6154 = vmul.f32 %v869, %v6079
  %v6155 = vmul.f32 %v870, %v6083
  %v6156 = vmul.f32 %v874, %v6075
  %v6157 = vmul.f32 %v875, %v6079
  %v6158 = vmul.f32 %v876, %v6083
  %v6159 = vmul.f32 %v877, %v6075
  %v6160 = vmul.f32 %v878, %v6079
  %v6161 = vmul.f32 %v879, %v6083
  %v6162 = vmul.f32 %v883, %v6075
  %v6163 = vmul.f32 %v884, %v6079
  %v6164 = vmul.f32 %v885, %v6083
  %v6165 = vmul.f32 %v886, %v6075
  %v6166 = vmul.f32 %v887, %v6079
  %v6167 = vmul.f32 %v888, %v6083
  %v6252 = vrot.slane %v6084, 2
  %v6253 = vrot.slane %v6087, 2
  %v6254 = vsel %vm4355, %v6252, %v6253
  %v6255 = vrot.slane %v6085, 2
  %v6256 = vrot.slane %v6088, 2
  %v6257 = vsel %vm4355, %v6255, %v6256
  %v6258 = vrot.slane %v6086, 2
  %v6259 = vrot.slane %v6089, 2
  %v6260 = vsel %vm4355, %v6258, %v6259
  %v6261 = vrot.slane %v6090, 2
  %v6262 = vrot.slane %v6093, 2
  %v6263 = vsel %vm4355, %v6261, %v6262
  %v6264 = vrot.slane %v6091, 2
  %v6265 = vrot.slane %v6094, 2
  %v6266 = vsel %vm4355, %v6264, %v6265
  %v6267 = vrot.slane %v6092, 2
  %v6268 = vrot.slane %v6095, 2
  %v6269 = vsel %vm4355, %v6267, %v6268
  %v6270 = vrot.slane %v6096, 2
  %v6271 = vrot.slane %v6099, 2
  %v6272 = vsel %vm4355, %v6270, %v6271
  %v6273 = vrot.slane %v6097, 2
  %v6274 = vrot.slane %v6100, 2
  %v6275 = vsel %vm4355, %v6273, %v6274
  %v6276 = vrot.slane %v6098, 2
  %v6277 = vrot.slane %v6101, 2
  %v6278 = vsel %vm4355, %v6276, %v6277
  %v6279 = vrot.slane %v6102, 2
  %v6280 = vrot.slane %v6105, 2
  %v6281 = vsel %vm4355, %v6279, %v6280
  %v6282 = vrot.slane %v6103, 2
  %v6283 = vrot.slane %v6106, 2
  %v6284 = vsel %vm4355, %v6282, %v6283
  %v6285 = vrot.slane %v6104, 2
  %v6286 = vrot.slane %v6107, 2
  %v6287 = vsel %vm4355, %v6285, %v6286
  %v6288 = vrot.slane %v6108, 2
  %v6289 = vrot.slane %v6111, 2
  %v6290 = vsel %vm4355, %v6288, %v6289
  %v6291 = vrot.slane %v6109, 2
  %v6292 = vrot.slane %v6112, 2
  %v6293 = vsel %vm4355, %v6291, %v6292
  %v6294 = vrot.slane %v6110, 2
  %v6295 = vrot.slane %v6113, 2
  %v6296 = vsel %vm4355, %v6294, %v6295
  %v6297 = vrot.slane %v6114, 2
  %v6298 = vrot.slane %v6117, 2
  %v6299 = vsel %vm4355, %v6297, %v6298
  %v6300 = vrot.slane %v6115, 2
  %v6301 = vrot.slane %v6118, 2
  %v6302 = vsel %vm4355, %v6300, %v6301
  %v6303 = vrot.slane %v6116, 2
  %v6304 = vrot.slane %v6119, 2
  %v6305 = vsel %vm4355, %v6303, %v6304
  %v6306 = vrot.slane %v6120, 2
  %v6307 = vrot.slane %v6123, 2
  %v6308 = vsel %vm4355, %v6306, %v6307
  %v6309 = vrot.slane %v6121, 2
  %v6310 = vrot.slane %v6124, 2
  %v6311 = vsel %vm4355, %v6309, %v6310
  %v6312 = vrot.slane %v6122, 2
  %v6313 = vrot.slane %v6125, 2
  %v6314 = vsel %vm4355, %v6312, %v6313
  %v6315 = vrot.slane %v6126, 2
  %v6316 = vrot.slane %v6129, 2
  %v6317 = vsel %vm4355, %v6315, %v6316
  %v6318 = vrot.slane %v6127, 2
  %v6319 = vrot.slane %v6130, 2
  %v6320 = vsel %vm4355, %v6318, %v6319
  %v6321 = vrot.slane %v6128, 2
  %v6322 = vrot.slane %v6131, 2
  %v6323 = vsel %vm4355, %v6321, %v6322
  %v6324 = vrot.slane %v6132, 2
  %v6325 = vrot.slane %v6135, 2
  %v6326 = vsel %vm4355, %v6324, %v6325
  %v6327 = vrot.slane %v6133, 2
  %v6328 = vrot.slane %v6136, 2
  %v6329 = vsel %vm4355, %v6327, %v6328
  %v6330 = vrot.slane %v6134, 2
  %v6331 = vrot.slane %v6137, 2
  %v6332 = vsel %vm4355, %v6330, %v6331
  %v6333 = vrot.slane %v6138, 2
  %v6334 = vrot.slane %v6141, 2
  %v6335 = vsel %vm4355, %v6333, %v6334
  %v6336 = vrot.slane %v6139, 2
  %v6337 = vrot.slane %v6142, 2
  %v6338 = vsel %vm4355, %v6336, %v6337
  %v6339 = vrot.slane %v6140, 2
  %v6340 = vrot.slane %v6143, 2
  %v6341 = vsel %vm4355, %v6339, %v6340
  %v6342 = vrot.slane %v6144, 2
  %v6343 = vrot.slane %v6147, 2
  %v6344 = vsel %vm4355, %v6342, %v6343
  %v6345 = vrot.slane %v6145, 2
  %v6346 = vrot.slane %v6148, 2
  %v6347 = vsel %vm4355, %v6345, %v6346
  %v6348 = vrot.slane %v6146, 2
  %v6349 = vrot.slane %v6149, 2
  %v6350 = vsel %vm4355, %v6348, %v6349
  %v6351 = vrot.slane %v6150, 2
  %v6352 = vrot.slane %v6153, 2
  %v6353 = vsel %vm4355, %v6351, %v6352
  %v6354 = vrot.slane %v6151, 2
  %v6355 = vrot.slane %v6154, 2
  %v6356 = vsel %vm4355, %v6354, %v6355
  %v6357 = vrot.slane %v6152, 2
  %v6358 = vrot.slane %v6155, 2
  %v6359 = vsel %vm4355, %v6357, %v6358
  %v6360 = vrot.slane %v6156, 2
  %v6361 = vrot.slane %v6159, 2
  %v6362 = vsel %vm4355, %v6360, %v6361
  %v6363 = vrot.slane %v6157, 2
  %v6364 = vrot.slane %v6160, 2
  %v6365 = vsel %vm4355, %v6363, %v6364
  %v6366 = vrot.slane %v6158, 2
  %v6367 = vrot.slane %v6161, 2
  %v6368 = vsel %vm4355, %v6366, %v6367
  %v6369 = vrot.slane %v6162, 2
  %v6370 = vrot.slane %v6165, 2
  %v6371 = vsel %vm4355, %v6369, %v6370
  %v6372 = vrot.slane %v6163, 2
  %v6373 = vrot.slane %v6166, 2
  %v6374 = vsel %vm4355, %v6372, %v6373
  %v6375 = vrot.slane %v6164, 2
  %v6376 = vrot.slane %v6167, 2
  %v6377 = vsel %vm4355, %v6375, %v6376
  %v6462 = vadd.f32 %v5988, %v6254
  %v6463 = vadd.f32 %v5989, %v6257
  %v6464 = vadd.f32 %v5990, %v6260
  %v6465 = vadd.f32 %v5991, %v6253
  %v6466 = vadd.f32 %v5992, %v6256
  %v6467 = vadd.f32 %v5993, %v6259
  %v6468 = vadd.f32 %v5994, %v6263
  %v6469 = vadd.f32 %v5995, %v6266
  %v6470 = vadd.f32 %v5996, %v6269
  %v6471 = vadd.f32 %v5997, %v6262
  %v6472 = vadd.f32 %v5998, %v6265
  %v6473 = vadd.f32 %v5999, %v6268
  %v6474 = vadd.f32 %v6000, %v6272
  %v6475 = vadd.f32 %v6001, %v6275
  %v6476 = vadd.f32 %v6002, %v6278
  %v6477 = vadd.f32 %v6003, %v6271
  %v6478 = vadd.f32 %v6004, %v6274
  %v6479 = vadd.f32 %v6005, %v6277
  %v6480 = vadd.f32 %v6006, %v6281
  %v6481 = vadd.f32 %v6007, %v6284
  %v6482 = vadd.f32 %v6008, %v6287
  %v6483 = vadd.f32 %v6009, %v6280
  %v6484 = vadd.f32 %v6010, %v6283
  %v6485 = vadd.f32 %v6011, %v6286
  %v6486 = vadd.f32 %v6012, %v6290
  %v6487 = vadd.f32 %v6013, %v6293
  %v6488 = vadd.f32 %v6014, %v6296
  %v6489 = vadd.f32 %v6015, %v6289
  %v6490 = vadd.f32 %v6016, %v6292
  %v6491 = vadd.f32 %v6017, %v6295
  %v6492 = vadd.f32 %v6018, %v6299
  %v6493 = vadd.f32 %v6019, %v6302
  %v6494 = vadd.f32 %v6020, %v6305
  %v6495 = vadd.f32 %v6021, %v6298
  %v6496 = vadd.f32 %v6022, %v6301
  %v6497 = vadd.f32 %v6023, %v6304
  %v6498 = vadd.f32 %v6024, %v6308
  %v6499 = vadd.f32 %v6025, %v6311
  %v6500 = vadd.f32 %v6026, %v6314
  %v6501 = vadd.f32 %v6027, %v6307
  %v6502 = vadd.f32 %v6028, %v6310
  %v6503 = vadd.f32 %v6029, %v6313
  %v6504 = vadd.f32 %v6030, %v6317
  %v6505 = vadd.f32 %v6031, %v6320
  %v6506 = vadd.f32 %v6032, %v6323
  %v6507 = vadd.f32 %v6033, %v6316
  %v6508 = vadd.f32 %v6034, %v6319
  %v6509 = vadd.f32 %v6035, %v6322
  %v6510 = vadd.f32 %v6036, %v6326
  %v6511 = vadd.f32 %v6037, %v6329
  %v6512 = vadd.f32 %v6038, %v6332
  %v6513 = vadd.f32 %v6039, %v6325
  %v6514 = vadd.f32 %v6040, %v6328
  %v6515 = vadd.f32 %v6041, %v6331
  %v6516 = vadd.f32 %v6042, %v6335
  %v6517 = vadd.f32 %v6043, %v6338
  %v6518 = vadd.f32 %v6044, %v6341
  %v6519 = vadd.f32 %v6045, %v6334
  %v6520 = vadd.f32 %v6046, %v6337
  %v6521 = vadd.f32 %v6047, %v6340
  %v6522 = vadd.f32 %v6048, %v6344
  %v6523 = vadd.f32 %v6049, %v6347
  %v6524 = vadd.f32 %v6050, %v6350
  %v6525 = vadd.f32 %v6051, %v6343
  %v6526 = vadd.f32 %v6052, %v6346
  %v6527 = vadd.f32 %v6053, %v6349
  %v6528 = vadd.f32 %v6054, %v6353
  %v6529 = vadd.f32 %v6055, %v6356
  %v6530 = vadd.f32 %v6056, %v6359
  %v6531 = vadd.f32 %v6057, %v6352
  %v6532 = vadd.f32 %v6058, %v6355
  %v6533 = vadd.f32 %v6059, %v6358
  %v6534 = vadd.f32 %v6060, %v6362
  %v6535 = vadd.f32 %v6061, %v6365
  %v6536 = vadd.f32 %v6062, %v6368
  %v6537 = vadd.f32 %v6063, %v6361
  %v6538 = vadd.f32 %v6064, %v6364
  %v6539 = vadd.f32 %v6065, %v6367
  %v6540 = vadd.f32 %v6066, %v6371
  %v6541 = vadd.f32 %v6067, %v6374
  %v6542 = vadd.f32 %v6068, %v6377
  %v6543 = vadd.f32 %v6069, %v6370
  %v6544 = vadd.f32 %v6070, %v6373
  %v6545 = vadd.f32 %v6071, %v6376
  %v6546 = vlaneseq
  %v6547 = vshrl.u32 %v6546, 7
  %v6548 = vsub.s32 3, %v6547
  %v6549 = vrot.slane %v892, %v6548
  %v6550 = vlaneseq
  %v6551 = vshrl.u32 %v6550, 7
  %v6552 = vsub.s32 3, %v6551
  %v6553 = vrot.slane %v893, %v6552
  %v6554 = vlaneseq
  %v6555 = vshrl.u32 %v6554, 7
  %v6556 = vsub.s32 3, %v6555
  %v6557 = vrot.slane %v894, %v6556
  %v6558 = vmul.f32 %v730, %v6549
  %v6559 = vmul.f32 %v731, %v6553
  %v6560 = vmul.f32 %v732, %v6557
  %v6561 = vmul.f32 %v733, %v6549
  %v6562 = vmul.f32 %v734, %v6553
  %v6563 = vmul.f32 %v735, %v6557
  %v6564 = vmul.f32 %v736, %v6549
  %v6565 = vmul.f32 %v737, %v6553
  %v6566 = vmul.f32 %v738, %v6557
  %v6567 = vmul.f32 %v739, %v6549
  %v6568 = vmul.f32 %v740, %v6553
  %v6569 = vmul.f32 %v741, %v6557
  %v6570 = vmul.f32 %v742, %v6549
  %v6571 = vmul.f32 %v743, %v6553
  %v6572 = vmul.f32 %v744, %v6557
  %v6573 = vmul.f32 %v745, %v6549
  %v6574 = vmul.f32 %v746, %v6553
  %v6575 = vmul.f32 %v747, %v6557
  %v6576 = vmul.f32 %v748, %v6549
  %v6577 = vmul.f32 %v749, %v6553
  %v6578 = vmul.f32 %v750, %v6557
  %v6579 = vmul.f32 %v751, %v6549
  %v6580 = vmul.f32 %v752, %v6553
  %v6581 = vmul.f32 %v753, %v6557
  %v6582 = vmul.f32 %v754, %v6549
  %v6583 = vmul.f32 %v755, %v6553
  %v6584 = vmul.f32 %v756, %v6557
  %v6585 = vmul.f32 %v757, %v6549
  %v6586 = vmul.f32 %v758, %v6553
  %v6587 = vmul.f32 %v759, %v6557
  %v6588 = vmul.f32 %v760, %v6549
  %v6589 = vmul.f32 %v761, %v6553
  %v6590 = vmul.f32 %v762, %v6557
  %v6591 = vmul.f32 %v763, %v6549
  %v6592 = vmul.f32 %v764, %v6553
  %v6593 = vmul.f32 %v765, %v6557
  %v6594 = vmul.f32 %v766, %v6549
  %v6595 = vmul.f32 %v767, %v6553
  %v6596 = vmul.f32 %v768, %v6557
  %v6597 = vmul.f32 %v769, %v6549
  %v6598 = vmul.f32 %v770, %v6553
  %v6599 = vmul.f32 %v771, %v6557
  %v6600 = vmul.f32 %v772, %v6549
  %v6601 = vmul.f32 %v773, %v6553
  %v6602 = vmul.f32 %v774, %v6557
  %v6603 = vmul.f32 %v775, %v6549
  %v6604 = vmul.f32 %v776, %v6553
  %v6605 = vmul.f32 %v777, %v6557
  %v6606 = vmul.f32 %v778, %v6549
  %v6607 = vmul.f32 %v779, %v6553
  %v6608 = vmul.f32 %v780, %v6557
  %v6609 = vmul.f32 %v781, %v6549
  %v6610 = vmul.f32 %v782, %v6553
  %v6611 = vmul.f32 %v783, %v6557
  %v6612 = vmul.f32 %v784, %v6549
  %v6613 = vmul.f32 %v785, %v6553
  %v6614 = vmul.f32 %v786, %v6557
  %v6615 = vmul.f32 %v787, %v6549
  %v6616 = vmul.f32 %v788, %v6553
  %v6617 = vmul.f32 %v789, %v6557
  %v6618 = vmul.f32 %v790, %v6549
  %v6619 = vmul.f32 %v791, %v6553
  %v6620 = vmul.f32 %v792, %v6557
  %v6621 = vmul.f32 %v793, %v6549
  %v6622 = vmul.f32 %v794, %v6553
  %v6623 = vmul.f32 %v795, %v6557
  %v6624 = vmul.f32 %v796, %v6549
  %v6625 = vmul.f32 %v797, %v6553
  %v6626 = vmul.f32 %v798, %v6557
  %v6627 = vmul.f32 %v799, %v6549
  %v6628 = vmul.f32 %v800, %v6553
  %v6629 = vmul.f32 %v801, %v6557
  %v6630 = vmul.f32 %v802, %v6549
  %v6631 = vmul.f32 %v803, %v6553
  %v6632 = vmul.f32 %v804, %v6557
  %v6633 = vmul.f32 %v805, %v6549
  %v6634 = vmul.f32 %v806, %v6553
  %v6635 = vmul.f32 %v807, %v6557
  %v6636 = vmul.f32 %v808, %v6549
  %v6637 = vmul.f32 %v809, %v6553
  %v6638 = vmul.f32 %v810, %v6557
  %v6639 = vmul.f32 %v811, %v6549
  %v6640 = vmul.f32 %v812, %v6553
  %v6641 = vmul.f32 %v813, %v6557
  %v6642 = vmul.f32 %v814, %v6549
  %v6643 = vmul.f32 %v815, %v6553
  %v6644 = vmul.f32 %v816, %v6557
  %v6645 = vmul.f32 %v817, %v6549
  %v6646 = vmul.f32 %v818, %v6553
  %v6647 = vmul.f32 %v819, %v6557
  %v6648 = vmul.f32 %v820, %v6549
  %v6649 = vmul.f32 %v821, %v6553
  %v6650 = vmul.f32 %v822, %v6557
  %v6651 = vmul.f32 %v823, %v6549
  %v6652 = vmul.f32 %v824, %v6553
  %v6653 = vmul.f32 %v825, %v6557
  %v6654 = vmul.f32 %v826, %v6549
  %v6655 = vmul.f32 %v827, %v6553
  %v6656 = vmul.f32 %v828, %v6557
  %v6657 = vmul.f32 %v829, %v6549
  %v6658 = vmul.f32 %v830, %v6553
  %v6659 = vmul.f32 %v831, %v6557
  %v6660 = vmul.f32 %v832, %v6549
  %v6661 = vmul.f32 %v833, %v6553
  %v6662 = vmul.f32 %v834, %v6557
  %v6663 = vmul.f32 %v835, %v6549
  %v6664 = vmul.f32 %v836, %v6553
  %v6665 = vmul.f32 %v837, %v6557
  %v6666 = vmul.f32 %v838, %v6549
  %v6667 = vmul.f32 %v839, %v6553
  %v6668 = vmul.f32 %v840, %v6557
  %v6669 = vmul.f32 %v841, %v6549
  %v6670 = vmul.f32 %v842, %v6553
  %v6671 = vmul.f32 %v843, %v6557
  %v6672 = vmul.f32 %v844, %v6549
  %v6673 = vmul.f32 %v845, %v6553
  %v6674 = vmul.f32 %v846, %v6557
  %v6675 = vmul.f32 %v847, %v6549
  %v6676 = vmul.f32 %v848, %v6553
  %v6677 = vmul.f32 %v849, %v6557
  %v6678 = vmul.f32 %v850, %v6549
  %v6679 = vmul.f32 %v851, %v6553
  %v6680 = vmul.f32 %v852, %v6557
  %v6681 = vmul.f32 %v853, %v6549
  %v6682 = vmul.f32 %v854, %v6553
  %v6683 = vmul.f32 %v855, %v6557
  %vm6810 = vcmask 1044480
  %v6811 = vrot.slane %v6558, 3
  %v6812 = vrot.slane %v6561, 3
  %v6813 = vsel %vm6810, %v6811, %v6812
  %v6814 = vrot.slane %v6559, 3
  %v6815 = vrot.slane %v6562, 3
  %v6816 = vsel %vm6810, %v6814, %v6815
  %v6817 = vrot.slane %v6560, 3
  %v6818 = vrot.slane %v6563, 3
  %v6819 = vsel %vm6810, %v6817, %v6818
  %v6820 = vrot.slane %v6564, 3
  %v6821 = vsel %vm6810, %v6812, %v6820
  %v6822 = vrot.slane %v6565, 3
  %v6823 = vsel %vm6810, %v6815, %v6822
  %v6824 = vrot.slane %v6566, 3
  %v6825 = vsel %vm6810, %v6818, %v6824
  %v6826 = vrot.slane %v6567, 3
  %v6827 = vrot.slane %v6570, 3
  %v6828 = vsel %vm6810, %v6826, %v6827
  %v6829 = vrot.slane %v6568, 3
  %v6830 = vrot.slane %v6571, 3
  %v6831 = vsel %vm6810, %v6829, %v6830
  %v6832 = vrot.slane %v6569, 3
  %v6833 = vrot.slane %v6572, 3
  %v6834 = vsel %vm6810, %v6832, %v6833
  %v6835 = vrot.slane %v6573, 3
  %v6836 = vsel %vm6810, %v6827, %v6835
  %v6837 = vrot.slane %v6574, 3
  %v6838 = vsel %vm6810, %v6830, %v6837
  %v6839 = vrot.slane %v6575, 3
  %v6840 = vsel %vm6810, %v6833, %v6839
  %v6841 = vrot.slane %v6576, 3
  %v6842 = vrot.slane %v6579, 3
  %v6843 = vsel %vm6810, %v6841, %v6842
  %v6844 = vrot.slane %v6577, 3
  %v6845 = vrot.slane %v6580, 3
  %v6846 = vsel %vm6810, %v6844, %v6845
  %v6847 = vrot.slane %v6578, 3
  %v6848 = vrot.slane %v6581, 3
  %v6849 = vsel %vm6810, %v6847, %v6848
  %v6850 = vrot.slane %v6582, 3
  %v6851 = vsel %vm6810, %v6842, %v6850
  %v6852 = vrot.slane %v6583, 3
  %v6853 = vsel %vm6810, %v6845, %v6852
  %v6854 = vrot.slane %v6584, 3
  %v6855 = vsel %vm6810, %v6848, %v6854
  %v6856 = vrot.slane %v6585, 3
  %v6857 = vrot.slane %v6588, 3
  %v6858 = vsel %vm6810, %v6856, %v6857
  %v6859 = vrot.slane %v6586, 3
  %v6860 = vrot.slane %v6589, 3
  %v6861 = vsel %vm6810, %v6859, %v6860
  %v6862 = vrot.slane %v6587, 3
  %v6863 = vrot.slane %v6590, 3
  %v6864 = vsel %vm6810, %v6862, %v6863
  %v6865 = vrot.slane %v6591, 3
  %v6866 = vsel %vm6810, %v6857, %v6865
  %v6867 = vrot.slane %v6592, 3
  %v6868 = vsel %vm6810, %v6860, %v6867
  %v6869 = vrot.slane %v6593, 3
  %v6870 = vsel %vm6810, %v6863, %v6869
  %v6871 = vrot.slane %v6594, 3
  %v6872 = vrot.slane %v6597, 3
  %v6873 = vsel %vm6810, %v6871, %v6872
  %v6874 = vrot.slane %v6595, 3
  %v6875 = vrot.slane %v6598, 3
  %v6876 = vsel %vm6810, %v6874, %v6875
  %v6877 = vrot.slane %v6596, 3
  %v6878 = vrot.slane %v6599, 3
  %v6879 = vsel %vm6810, %v6877, %v6878
  %v6880 = vrot.slane %v6600, 3
  %v6881 = vsel %vm6810, %v6872, %v6880
  %v6882 = vrot.slane %v6601, 3
  %v6883 = vsel %vm6810, %v6875, %v6882
  %v6884 = vrot.slane %v6602, 3
  %v6885 = vsel %vm6810, %v6878, %v6884
  %v6886 = vrot.slane %v6603, 3
  %v6887 = vrot.slane %v6606, 3
  %v6888 = vsel %vm6810, %v6886, %v6887
  %v6889 = vrot.slane %v6604, 3
  %v6890 = vrot.slane %v6607, 3
  %v6891 = vsel %vm6810, %v6889, %v6890
  %v6892 = vrot.slane %v6605, 3
  %v6893 = vrot.slane %v6608, 3
  %v6894 = vsel %vm6810, %v6892, %v6893
  %v6895 = vrot.slane %v6609, 3
  %v6896 = vsel %vm6810, %v6887, %v6895
  %v6897 = vrot.slane %v6610, 3
  %v6898 = vsel %vm6810, %v6890, %v6897
  %v6899 = vrot.slane %v6611, 3
  %v6900 = vsel %vm6810, %v6893, %v6899
  %v6901 = vrot.slane %v6612, 3
  %v6902 = vrot.slane %v6615, 3
  %v6903 = vsel %vm6810, %v6901, %v6902
  %v6904 = vrot.slane %v6613, 3
  %v6905 = vrot.slane %v6616, 3
  %v6906 = vsel %vm6810, %v6904, %v6905
  %v6907 = vrot.slane %v6614, 3
  %v6908 = vrot.slane %v6617, 3
  %v6909 = vsel %vm6810, %v6907, %v6908
  %v6910 = vrot.slane %v6618, 3
  %v6911 = vsel %vm6810, %v6902, %v6910
  %v6912 = vrot.slane %v6619, 3
  %v6913 = vsel %vm6810, %v6905, %v6912
  %v6914 = vrot.slane %v6620, 3
  %v6915 = vsel %vm6810, %v6908, %v6914
  %v6916 = vrot.slane %v6621, 3
  %v6917 = vrot.slane %v6624, 3
  %v6918 = vsel %vm6810, %v6916, %v6917
  %v6919 = vrot.slane %v6622, 3
  %v6920 = vrot.slane %v6625, 3
  %v6921 = vsel %vm6810, %v6919, %v6920
  %v6922 = vrot.slane %v6623, 3
  %v6923 = vrot.slane %v6626, 3
  %v6924 = vsel %vm6810, %v6922, %v6923
  %v6925 = vrot.slane %v6627, 3
  %v6926 = vsel %vm6810, %v6917, %v6925
  %v6927 = vrot.slane %v6628, 3
  %v6928 = vsel %vm6810, %v6920, %v6927
  %v6929 = vrot.slane %v6629, 3
  %v6930 = vsel %vm6810, %v6923, %v6929
  %v6931 = vrot.slane %v6630, 3
  %v6932 = vrot.slane %v6633, 3
  %v6933 = vsel %vm6810, %v6931, %v6932
  %v6934 = vrot.slane %v6631, 3
  %v6935 = vrot.slane %v6634, 3
  %v6936 = vsel %vm6810, %v6934, %v6935
  %v6937 = vrot.slane %v6632, 3
  %v6938 = vrot.slane %v6635, 3
  %v6939 = vsel %vm6810, %v6937, %v6938
  %v6940 = vrot.slane %v6636, 3
  %v6941 = vsel %vm6810, %v6932, %v6940
  %v6942 = vrot.slane %v6637, 3
  %v6943 = vsel %vm6810, %v6935, %v6942
  %v6944 = vrot.slane %v6638, 3
  %v6945 = vsel %vm6810, %v6938, %v6944
  %v6946 = vrot.slane %v6639, 3
  %v6947 = vrot.slane %v6642, 3
  %v6948 = vsel %vm6810, %v6946, %v6947
  %v6949 = vrot.slane %v6640, 3
  %v6950 = vrot.slane %v6643, 3
  %v6951 = vsel %vm6810, %v6949, %v6950
  %v6952 = vrot.slane %v6641, 3
  %v6953 = vrot.slane %v6644, 3
  %v6954 = vsel %vm6810, %v6952, %v6953
  %v6955 = vrot.slane %v6645, 3
  %v6956 = vsel %vm6810, %v6947, %v6955
  %v6957 = vrot.slane %v6646, 3
  %v6958 = vsel %vm6810, %v6950, %v6957
  %v6959 = vrot.slane %v6647, 3
  %v6960 = vsel %vm6810, %v6953, %v6959
  %v6961 = vrot.slane %v6648, 3
  %v6962 = vrot.slane %v6651, 3
  %v6963 = vsel %vm6810, %v6961, %v6962
  %v6964 = vrot.slane %v6649, 3
  %v6965 = vrot.slane %v6652, 3
  %v6966 = vsel %vm6810, %v6964, %v6965
  %v6967 = vrot.slane %v6650, 3
  %v6968 = vrot.slane %v6653, 3
  %v6969 = vsel %vm6810, %v6967, %v6968
  %v6970 = vrot.slane %v6654, 3
  %v6971 = vsel %vm6810, %v6962, %v6970
  %v6972 = vrot.slane %v6655, 3
  %v6973 = vsel %vm6810, %v6965, %v6972
  %v6974 = vrot.slane %v6656, 3
  %v6975 = vsel %vm6810, %v6968, %v6974
  %v6976 = vrot.slane %v6657, 3
  %v6977 = vrot.slane %v6660, 3
  %v6978 = vsel %vm6810, %v6976, %v6977
  %v6979 = vrot.slane %v6658, 3
  %v6980 = vrot.slane %v6661, 3
  %v6981 = vsel %vm6810, %v6979, %v6980
  %v6982 = vrot.slane %v6659, 3
  %v6983 = vrot.slane %v6662, 3
  %v6984 = vsel %vm6810, %v6982, %v6983
  %v6985 = vrot.slane %v6663, 3
  %v6986 = vsel %vm6810, %v6977, %v6985
  %v6987 = vrot.slane %v6664, 3
  %v6988 = vsel %vm6810, %v6980, %v6987
  %v6989 = vrot.slane %v6665, 3
  %v6990 = vsel %vm6810, %v6983, %v6989
  %v6991 = vrot.slane %v6666, 3
  %v6992 = vrot.slane %v6669, 3
  %v6993 = vsel %vm6810, %v6991, %v6992
  %v6994 = vrot.slane %v6667, 3
  %v6995 = vrot.slane %v6670, 3
  %v6996 = vsel %vm6810, %v6994, %v6995
  %v6997 = vrot.slane %v6668, 3
  %v6998 = vrot.slane %v6671, 3
  %v6999 = vsel %vm6810, %v6997, %v6998
  %v7000 = vrot.slane %v6672, 3
  %v7001 = vsel %vm6810, %v6992, %v7000
  %v7002 = vrot.slane %v6673, 3
  %v7003 = vsel %vm6810, %v6995, %v7002
  %v7004 = vrot.slane %v6674, 3
  %v7005 = vsel %vm6810, %v6998, %v7004
  %v7006 = vrot.slane %v6675, 3
  %v7007 = vrot.slane %v6678, 3
  %v7008 = vsel %vm6810, %v7006, %v7007
  %v7009 = vrot.slane %v6676, 3
  %v7010 = vrot.slane %v6679, 3
  %v7011 = vsel %vm6810, %v7009, %v7010
  %v7012 = vrot.slane %v6677, 3
  %v7013 = vrot.slane %v6680, 3
  %v7014 = vsel %vm6810, %v7012, %v7013
  %v7015 = vrot.slane %v6681, 3
  %v7016 = vsel %vm6810, %v7007, %v7015
  %v7017 = vrot.slane %v6682, 3
  %v7018 = vsel %vm6810, %v7010, %v7017
  %v7019 = vrot.slane %v6683, 3
  %v7020 = vsel %vm6810, %v7013, %v7019
  %v7105 = vadd.f32 %v6462, %v6813
  %v7106 = vadd.f32 %v6463, %v6816
  %v7107 = vadd.f32 %v6464, %v6819
  %v7108 = vadd.f32 %v6465, %v6821
  %v7109 = vadd.f32 %v6466, %v6823
  %v7110 = vadd.f32 %v6467, %v6825
  %v7111 = vadd.f32 %v6468, %v6828
  %v7112 = vadd.f32 %v6469, %v6831
  %v7113 = vadd.f32 %v6470, %v6834
  %v7114 = vadd.f32 %v6471, %v6836
  %v7115 = vadd.f32 %v6472, %v6838
  %v7116 = vadd.f32 %v6473, %v6840
  %v7117 = vadd.f32 %v6474, %v6843
  %v7118 = vadd.f32 %v6475, %v6846
  %v7119 = vadd.f32 %v6476, %v6849
  %v7120 = vadd.f32 %v6477, %v6851
  %v7121 = vadd.f32 %v6478, %v6853
  %v7122 = vadd.f32 %v6479, %v6855
  %v7123 = vadd.f32 %v6480, %v6858
  %v7124 = vadd.f32 %v6481, %v6861
  %v7125 = vadd.f32 %v6482, %v6864
  %v7126 = vadd.f32 %v6483, %v6866
  %v7127 = vadd.f32 %v6484, %v6868
  %v7128 = vadd.f32 %v6485, %v6870
  %v7129 = vadd.f32 %v6486, %v6873
  %v7130 = vadd.f32 %v6487, %v6876
  %v7131 = vadd.f32 %v6488, %v6879
  %v7132 = vadd.f32 %v6489, %v6881
  %v7133 = vadd.f32 %v6490, %v6883
  %v7134 = vadd.f32 %v6491, %v6885
  %v7135 = vadd.f32 %v6492, %v6888
  %v7136 = vadd.f32 %v6493, %v6891
  %v7137 = vadd.f32 %v6494, %v6894
  %v7138 = vadd.f32 %v6495, %v6896
  %v7139 = vadd.f32 %v6496, %v6898
  %v7140 = vadd.f32 %v6497, %v6900
  %v7141 = vadd.f32 %v6498, %v6903
  %v7142 = vadd.f32 %v6499, %v6906
  %v7143 = vadd.f32 %v6500, %v6909
  %v7144 = vadd.f32 %v6501, %v6911
  %v7145 = vadd.f32 %v6502, %v6913
  %v7146 = vadd.f32 %v6503, %v6915
  %v7147 = vadd.f32 %v6504, %v6918
  %v7148 = vadd.f32 %v6505, %v6921
  %v7149 = vadd.f32 %v6506, %v6924
  %v7150 = vadd.f32 %v6507, %v6926
  %v7151 = vadd.f32 %v6508, %v6928
  %v7152 = vadd.f32 %v6509, %v6930
  %v7153 = vadd.f32 %v6510, %v6933
  %v7154 = vadd.f32 %v6511, %v6936
  %v7155 = vadd.f32 %v6512, %v6939
  %v7156 = vadd.f32 %v6513, %v6941
  %v7157 = vadd.f32 %v6514, %v6943
  %v7158 = vadd.f32 %v6515, %v6945
  %v7159 = vadd.f32 %v6516, %v6948
  %v7160 = vadd.f32 %v6517, %v6951
  %v7161 = vadd.f32 %v6518, %v6954
  %v7162 = vadd.f32 %v6519, %v6956
  %v7163 = vadd.f32 %v6520, %v6958
  %v7164 = vadd.f32 %v6521, %v6960
  %v7165 = vadd.f32 %v6522, %v6963
  %v7166 = vadd.f32 %v6523, %v6966
  %v7167 = vadd.f32 %v6524, %v6969
  %v7168 = vadd.f32 %v6525, %v6971
  %v7169 = vadd.f32 %v6526, %v6973
  %v7170 = vadd.f32 %v6527, %v6975
  %v7171 = vadd.f32 %v6528, %v6978
  %v7172 = vadd.f32 %v6529, %v6981
  %v7173 = vadd.f32 %v6530, %v6984
  %v7174 = vadd.f32 %v6531, %v6986
  %v7175 = vadd.f32 %v6532, %v6988
  %v7176 = vadd.f32 %v6533, %v6990
  %v7177 = vadd.f32 %v6534, %v6993
  %v7178 = vadd.f32 %v6535, %v6996
  %v7179 = vadd.f32 %v6536, %v6999
  %v7180 = vadd.f32 %v6537, %v7001
  %v7181 = vadd.f32 %v6538, %v7003
  %v7182 = vadd.f32 %v6539, %v7005
  %v7183 = vadd.f32 %v6540, %v7008
  %v7184 = vadd.f32 %v6541, %v7011
  %v7185 = vadd.f32 %v6542, %v7014
  %v7186 = vadd.f32 %v6543, %v7016
  %v7187 = vadd.f32 %v6544, %v7018
  %v7188 = vadd.f32 %v6545, %v7020
  %v7189 = vlaneseq
  %v7190 = vshrl.u32 %v7189, 7
  %v7191 = vsub.s32 0, %v7190
  %v7192 = vrot.slane %v895, %v7191
  %v7193 = vlaneseq
  %v7194 = vshrl.u32 %v7193, 7
  %v7195 = vsub.s32 0, %v7194
  %v7196 = vrot.slane %v896, %v7195
  %v7197 = vlaneseq
  %v7198 = vshrl.u32 %v7197, 7
  %v7199 = vsub.s32 0, %v7198
  %v7200 = vrot.slane %v897, %v7199
  %v7201 = vmul.f32 %v739, %v7192
  %v7202 = vmul.f32 %v740, %v7196
  %v7203 = vmul.f32 %v741, %v7200
  %v7204 = vmul.f32 %v742, %v7192
  %v7205 = vmul.f32 %v743, %v7196
  %v7206 = vmul.f32 %v744, %v7200
  %v7207 = vmul.f32 %v745, %v7192
  %v7208 = vmul.f32 %v746, %v7196
  %v7209 = vmul.f32 %v747, %v7200
  %v7210 = vmul.f32 %v748, %v7192
  %v7211 = vmul.f32 %v749, %v7196
  %v7212 = vmul.f32 %v750, %v7200
  %v7213 = vmul.f32 %v751, %v7192
  %v7214 = vmul.f32 %v752, %v7196
  %v7215 = vmul.f32 %v753, %v7200
  %v7216 = vmul.f32 %v754, %v7192
  %v7217 = vmul.f32 %v755, %v7196
  %v7218 = vmul.f32 %v756, %v7200
  %v7219 = vmul.f32 %v757, %v7192
  %v7220 = vmul.f32 %v758, %v7196
  %v7221 = vmul.f32 %v759, %v7200
  %v7222 = vmul.f32 %v760, %v7192
  %v7223 = vmul.f32 %v761, %v7196
  %v7224 = vmul.f32 %v762, %v7200
  %v7225 = vmul.f32 %v763, %v7192
  %v7226 = vmul.f32 %v764, %v7196
  %v7227 = vmul.f32 %v765, %v7200
  %v7228 = vmul.f32 %v766, %v7192
  %v7229 = vmul.f32 %v767, %v7196
  %v7230 = vmul.f32 %v768, %v7200
  %v7231 = vmul.f32 %v769, %v7192
  %v7232 = vmul.f32 %v770, %v7196
  %v7233 = vmul.f32 %v771, %v7200
  %v7234 = vmul.f32 %v772, %v7192
  %v7235 = vmul.f32 %v773, %v7196
  %v7236 = vmul.f32 %v774, %v7200
  %v7237 = vmul.f32 %v775, %v7192
  %v7238 = vmul.f32 %v776, %v7196
  %v7239 = vmul.f32 %v777, %v7200
  %v7240 = vmul.f32 %v778, %v7192
  %v7241 = vmul.f32 %v779, %v7196
  %v7242 = vmul.f32 %v780, %v7200
  %v7243 = vmul.f32 %v781, %v7192
  %v7244 = vmul.f32 %v782, %v7196
  %v7245 = vmul.f32 %v783, %v7200
  %v7246 = vmul.f32 %v784, %v7192
  %v7247 = vmul.f32 %v785, %v7196
  %v7248 = vmul.f32 %v786, %v7200
  %v7249 = vmul.f32 %v787, %v7192
  %v7250 = vmul.f32 %v788, %v7196
  %v7251 = vmul.f32 %v789, %v7200
  %v7252 = vmul.f32 %v790, %v7192
  %v7253 = vmul.f32 %v791, %v7196
  %v7254 = vmul.f32 %v792, %v7200
  %v7255 = vmul.f32 %v793, %v7192
  %v7256 = vmul.f32 %v794, %v7196
  %v7257 = vmul.f32 %v795, %v7200
  %v7258 = vmul.f32 %v796, %v7192
  %v7259 = vmul.f32 %v797, %v7196
  %v7260 = vmul.f32 %v798, %v7200
  %v7261 = vmul.f32 %v799, %v7192
  %v7262 = vmul.f32 %v800, %v7196
  %v7263 = vmul.f32 %v801, %v7200
  %v7264 = vmul.f32 %v802, %v7192
  %v7265 = vmul.f32 %v803, %v7196
  %v7266 = vmul.f32 %v804, %v7200
  %v7267 = vmul.f32 %v805, %v7192
  %v7268 = vmul.f32 %v806, %v7196
  %v7269 = vmul.f32 %v807, %v7200
  %v7270 = vmul.f32 %v808, %v7192
  %v7271 = vmul.f32 %v809, %v7196
  %v7272 = vmul.f32 %v810, %v7200
  %v7273 = vmul.f32 %v811, %v7192
  %v7274 = vmul.f32 %v812, %v7196
  %v7275 = vmul.f32 %v813, %v7200
  %v7276 = vmul.f32 %v814, %v7192
  %v7277 = vmul.f32 %v815, %v7196
  %v7278 = vmul.f32 %v816, %v7200
  %v7279 = vmul.f32 %v817, %v7192
  %v7280 = vmul.f32 %v818, %v7196
  %v7281 = vmul.f32 %v819, %v7200
  %v7282 = vmul.f32 %v820, %v7192
  %v7283 = vmul.f32 %v821, %v7196
  %v7284 = vmul.f32 %v822, %v7200
  %v7285 = vmul.f32 %v823, %v7192
  %v7286 = vmul.f32 %v824, %v7196
  %v7287 = vmul.f32 %v825, %v7200
  %v7288 = vmul.f32 %v826, %v7192
  %v7289 = vmul.f32 %v827, %v7196
  %v7290 = vmul.f32 %v828, %v7200
  %v7291 = vmul.f32 %v829, %v7192
  %v7292 = vmul.f32 %v830, %v7196
  %v7293 = vmul.f32 %v831, %v7200
  %v7294 = vmul.f32 %v832, %v7192
  %v7295 = vmul.f32 %v833, %v7196
  %v7296 = vmul.f32 %v834, %v7200
  %v7297 = vmul.f32 %v835, %v7192
  %v7298 = vmul.f32 %v836, %v7196
  %v7299 = vmul.f32 %v837, %v7200
  %v7300 = vmul.f32 %v838, %v7192
  %v7301 = vmul.f32 %v839, %v7196
  %v7302 = vmul.f32 %v840, %v7200
  %v7303 = vmul.f32 %v841, %v7192
  %v7304 = vmul.f32 %v842, %v7196
  %v7305 = vmul.f32 %v843, %v7200
  %v7306 = vmul.f32 %v844, %v7192
  %v7307 = vmul.f32 %v845, %v7196
  %v7308 = vmul.f32 %v846, %v7200
  %v7309 = vmul.f32 %v847, %v7192
  %v7310 = vmul.f32 %v848, %v7196
  %v7311 = vmul.f32 %v849, %v7200
  %v7312 = vmul.f32 %v850, %v7192
  %v7313 = vmul.f32 %v851, %v7196
  %v7314 = vmul.f32 %v852, %v7200
  %v7315 = vmul.f32 %v853, %v7192
  %v7316 = vmul.f32 %v854, %v7196
  %v7317 = vmul.f32 %v855, %v7200
  %v7318 = vmul.f32 %v856, %v7192
  %v7319 = vmul.f32 %v857, %v7196
  %v7320 = vmul.f32 %v858, %v7200
  %v7321 = vmul.f32 %v859, %v7192
  %v7322 = vmul.f32 %v860, %v7196
  %v7323 = vmul.f32 %v861, %v7200
  %v7324 = vmul.f32 %v862, %v7192
  %v7325 = vmul.f32 %v863, %v7196
  %v7326 = vmul.f32 %v864, %v7200
  %v7453 = vrot.slane %v7201, 3
  %v7454 = vrot.slane %v7204, 3
  %v7455 = vsel %vm6810, %v7453, %v7454
  %v7456 = vrot.slane %v7202, 3
  %v7457 = vrot.slane %v7205, 3
  %v7458 = vsel %vm6810, %v7456, %v7457
  %v7459 = vrot.slane %v7203, 3
  %v7460 = vrot.slane %v7206, 3
  %v7461 = vsel %vm6810, %v7459, %v7460
  %v7462 = vrot.slane %v7207, 3
  %v7463 = vsel %vm6810, %v7454, %v7462
  %v7464 = vrot.slane %v7208, 3
  %v7465 = vsel %vm6810, %v7457, %v7464
  %v7466 = vrot.slane %v7209, 3
  %v7467 = vsel %vm6810, %v7460, %v7466
  %v7468 = vrot.slane %v7210, 3
  %v7469 = vrot.slane %v7213, 3
  %v7470 = vsel %vm6810, %v7468, %v7469
  %v7471 = vrot.slane %v7211, 3
  %v7472 = vrot.slane %v7214, 3
  %v7473 = vsel %vm6810, %v7471, %v7472
  %v7474 = vrot.slane %v7212, 3
  %v7475 = vrot.slane %v7215, 3
  %v7476 = vsel %vm6810, %v7474, %v7475
  %v7477 = vrot.slane %v7216, 3
  %v7478 = vsel %vm6810, %v7469, %v7477
  %v7479 = vrot.slane %v7217, 3
  %v7480 = vsel %vm6810, %v7472, %v7479
  %v7481 = vrot.slane %v7218, 3
  %v7482 = vsel %vm6810, %v7475, %v7481
  %v7483 = vrot.slane %v7219, 3
  %v7484 = vrot.slane %v7222, 3
  %v7485 = vsel %vm6810, %v7483, %v7484
  %v7486 = vrot.slane %v7220, 3
  %v7487 = vrot.slane %v7223, 3
  %v7488 = vsel %vm6810, %v7486, %v7487
  %v7489 = vrot.slane %v7221, 3
  %v7490 = vrot.slane %v7224, 3
  %v7491 = vsel %vm6810, %v7489, %v7490
  %v7492 = vrot.slane %v7225, 3
  %v7493 = vsel %vm6810, %v7484, %v7492
  %v7494 = vrot.slane %v7226, 3
  %v7495 = vsel %vm6810, %v7487, %v7494
  %v7496 = vrot.slane %v7227, 3
  %v7497 = vsel %vm6810, %v7490, %v7496
  %v7498 = vrot.slane %v7228, 3
  %v7499 = vrot.slane %v7231, 3
  %v7500 = vsel %vm6810, %v7498, %v7499
  %v7501 = vrot.slane %v7229, 3
  %v7502 = vrot.slane %v7232, 3
  %v7503 = vsel %vm6810, %v7501, %v7502
  %v7504 = vrot.slane %v7230, 3
  %v7505 = vrot.slane %v7233, 3
  %v7506 = vsel %vm6810, %v7504, %v7505
  %v7507 = vrot.slane %v7234, 3
  %v7508 = vsel %vm6810, %v7499, %v7507
  %v7509 = vrot.slane %v7235, 3
  %v7510 = vsel %vm6810, %v7502, %v7509
  %v7511 = vrot.slane %v7236, 3
  %v7512 = vsel %vm6810, %v7505, %v7511
  %v7513 = vrot.slane %v7237, 3
  %v7514 = vrot.slane %v7240, 3
  %v7515 = vsel %vm6810, %v7513, %v7514
  %v7516 = vrot.slane %v7238, 3
  %v7517 = vrot.slane %v7241, 3
  %v7518 = vsel %vm6810, %v7516, %v7517
  %v7519 = vrot.slane %v7239, 3
  %v7520 = vrot.slane %v7242, 3
  %v7521 = vsel %vm6810, %v7519, %v7520
  %v7522 = vrot.slane %v7243, 3
  %v7523 = vsel %vm6810, %v7514, %v7522
  %v7524 = vrot.slane %v7244, 3
  %v7525 = vsel %vm6810, %v7517, %v7524
  %v7526 = vrot.slane %v7245, 3
  %v7527 = vsel %vm6810, %v7520, %v7526
  %v7528 = vrot.slane %v7246, 3
  %v7529 = vrot.slane %v7249, 3
  %v7530 = vsel %vm6810, %v7528, %v7529
  %v7531 = vrot.slane %v7247, 3
  %v7532 = vrot.slane %v7250, 3
  %v7533 = vsel %vm6810, %v7531, %v7532
  %v7534 = vrot.slane %v7248, 3
  %v7535 = vrot.slane %v7251, 3
  %v7536 = vsel %vm6810, %v7534, %v7535
  %v7537 = vrot.slane %v7252, 3
  %v7538 = vsel %vm6810, %v7529, %v7537
  %v7539 = vrot.slane %v7253, 3
  %v7540 = vsel %vm6810, %v7532, %v7539
  %v7541 = vrot.slane %v7254, 3
  %v7542 = vsel %vm6810, %v7535, %v7541
  %v7543 = vrot.slane %v7255, 3
  %v7544 = vrot.slane %v7258, 3
  %v7545 = vsel %vm6810, %v7543, %v7544
  %v7546 = vrot.slane %v7256, 3
  %v7547 = vrot.slane %v7259, 3
  %v7548 = vsel %vm6810, %v7546, %v7547
  %v7549 = vrot.slane %v7257, 3
  %v7550 = vrot.slane %v7260, 3
  %v7551 = vsel %vm6810, %v7549, %v7550
  %v7552 = vrot.slane %v7261, 3
  %v7553 = vsel %vm6810, %v7544, %v7552
  %v7554 = vrot.slane %v7262, 3
  %v7555 = vsel %vm6810, %v7547, %v7554
  %v7556 = vrot.slane %v7263, 3
  %v7557 = vsel %vm6810, %v7550, %v7556
  %v7558 = vrot.slane %v7264, 3
  %v7559 = vrot.slane %v7267, 3
  %v7560 = vsel %vm6810, %v7558, %v7559
  %v7561 = vrot.slane %v7265, 3
  %v7562 = vrot.slane %v7268, 3
  %v7563 = vsel %vm6810, %v7561, %v7562
  %v7564 = vrot.slane %v7266, 3
  %v7565 = vrot.slane %v7269, 3
  %v7566 = vsel %vm6810, %v7564, %v7565
  %v7567 = vrot.slane %v7270, 3
  %v7568 = vsel %vm6810, %v7559, %v7567
  %v7569 = vrot.slane %v7271, 3
  %v7570 = vsel %vm6810, %v7562, %v7569
  %v7571 = vrot.slane %v7272, 3
  %v7572 = vsel %vm6810, %v7565, %v7571
  %v7573 = vrot.slane %v7273, 3
  %v7574 = vrot.slane %v7276, 3
  %v7575 = vsel %vm6810, %v7573, %v7574
  %v7576 = vrot.slane %v7274, 3
  %v7577 = vrot.slane %v7277, 3
  %v7578 = vsel %vm6810, %v7576, %v7577
  %v7579 = vrot.slane %v7275, 3
  %v7580 = vrot.slane %v7278, 3
  %v7581 = vsel %vm6810, %v7579, %v7580
  %v7582 = vrot.slane %v7279, 3
  %v7583 = vsel %vm6810, %v7574, %v7582
  %v7584 = vrot.slane %v7280, 3
  %v7585 = vsel %vm6810, %v7577, %v7584
  %v7586 = vrot.slane %v7281, 3
  %v7587 = vsel %vm6810, %v7580, %v7586
  %v7588 = vrot.slane %v7282, 3
  %v7589 = vrot.slane %v7285, 3
  %v7590 = vsel %vm6810, %v7588, %v7589
  %v7591 = vrot.slane %v7283, 3
  %v7592 = vrot.slane %v7286, 3
  %v7593 = vsel %vm6810, %v7591, %v7592
  %v7594 = vrot.slane %v7284, 3
  %v7595 = vrot.slane %v7287, 3
  %v7596 = vsel %vm6810, %v7594, %v7595
  %v7597 = vrot.slane %v7288, 3
  %v7598 = vsel %vm6810, %v7589, %v7597
  %v7599 = vrot.slane %v7289, 3
  %v7600 = vsel %vm6810, %v7592, %v7599
  %v7601 = vrot.slane %v7290, 3
  %v7602 = vsel %vm6810, %v7595, %v7601
  %v7603 = vrot.slane %v7291, 3
  %v7604 = vrot.slane %v7294, 3
  %v7605 = vsel %vm6810, %v7603, %v7604
  %v7606 = vrot.slane %v7292, 3
  %v7607 = vrot.slane %v7295, 3
  %v7608 = vsel %vm6810, %v7606, %v7607
  %v7609 = vrot.slane %v7293, 3
  %v7610 = vrot.slane %v7296, 3
  %v7611 = vsel %vm6810, %v7609, %v7610
  %v7612 = vrot.slane %v7297, 3
  %v7613 = vsel %vm6810, %v7604, %v7612
  %v7614 = vrot.slane %v7298, 3
  %v7615 = vsel %vm6810, %v7607, %v7614
  %v7616 = vrot.slane %v7299, 3
  %v7617 = vsel %vm6810, %v7610, %v7616
  %v7618 = vrot.slane %v7300, 3
  %v7619 = vrot.slane %v7303, 3
  %v7620 = vsel %vm6810, %v7618, %v7619
  %v7621 = vrot.slane %v7301, 3
  %v7622 = vrot.slane %v7304, 3
  %v7623 = vsel %vm6810, %v7621, %v7622
  %v7624 = vrot.slane %v7302, 3
  %v7625 = vrot.slane %v7305, 3
  %v7626 = vsel %vm6810, %v7624, %v7625
  %v7627 = vrot.slane %v7306, 3
  %v7628 = vsel %vm6810, %v7619, %v7627
  %v7629 = vrot.slane %v7307, 3
  %v7630 = vsel %vm6810, %v7622, %v7629
  %v7631 = vrot.slane %v7308, 3
  %v7632 = vsel %vm6810, %v7625, %v7631
  %v7633 = vrot.slane %v7309, 3
  %v7634 = vrot.slane %v7312, 3
  %v7635 = vsel %vm6810, %v7633, %v7634
  %v7636 = vrot.slane %v7310, 3
  %v7637 = vrot.slane %v7313, 3
  %v7638 = vsel %vm6810, %v7636, %v7637
  %v7639 = vrot.slane %v7311, 3
  %v7640 = vrot.slane %v7314, 3
  %v7641 = vsel %vm6810, %v7639, %v7640
  %v7642 = vrot.slane %v7315, 3
  %v7643 = vsel %vm6810, %v7634, %v7642
  %v7644 = vrot.slane %v7316, 3
  %v7645 = vsel %vm6810, %v7637, %v7644
  %v7646 = vrot.slane %v7317, 3
  %v7647 = vsel %vm6810, %v7640, %v7646
  %v7648 = vrot.slane %v7318, 3
  %v7649 = vrot.slane %v7321, 3
  %v7650 = vsel %vm6810, %v7648, %v7649
  %v7651 = vrot.slane %v7319, 3
  %v7652 = vrot.slane %v7322, 3
  %v7653 = vsel %vm6810, %v7651, %v7652
  %v7654 = vrot.slane %v7320, 3
  %v7655 = vrot.slane %v7323, 3
  %v7656 = vsel %vm6810, %v7654, %v7655
  %v7657 = vrot.slane %v7324, 3
  %v7658 = vsel %vm6810, %v7649, %v7657
  %v7659 = vrot.slane %v7325, 3
  %v7660 = vsel %vm6810, %v7652, %v7659
  %v7661 = vrot.slane %v7326, 3
  %v7662 = vsel %vm6810, %v7655, %v7661
  %v7747 = vadd.f32 %v7105, %v7455
  %v7748 = vadd.f32 %v7106, %v7458
  %v7749 = vadd.f32 %v7107, %v7461
  %v7750 = vadd.f32 %v7108, %v7463
  %v7751 = vadd.f32 %v7109, %v7465
  %v7752 = vadd.f32 %v7110, %v7467
  %v7753 = vadd.f32 %v7111, %v7470
  %v7754 = vadd.f32 %v7112, %v7473
  %v7755 = vadd.f32 %v7113, %v7476
  %v7756 = vadd.f32 %v7114, %v7478
  %v7757 = vadd.f32 %v7115, %v7480
  %v7758 = vadd.f32 %v7116, %v7482
  %v7759 = vadd.f32 %v7117, %v7485
  %v7760 = vadd.f32 %v7118, %v7488
  %v7761 = vadd.f32 %v7119, %v7491
  %v7762 = vadd.f32 %v7120, %v7493
  %v7763 = vadd.f32 %v7121, %v7495
  %v7764 = vadd.f32 %v7122, %v7497
  %v7765 = vadd.f32 %v7123, %v7500
  %v7766 = vadd.f32 %v7124, %v7503
  %v7767 = vadd.f32 %v7125, %v7506
  %v7768 = vadd.f32 %v7126, %v7508
  %v7769 = vadd.f32 %v7127, %v7510
  %v7770 = vadd.f32 %v7128, %v7512
  %v7771 = vadd.f32 %v7129, %v7515
  %v7772 = vadd.f32 %v7130, %v7518
  %v7773 = vadd.f32 %v7131, %v7521
  %v7774 = vadd.f32 %v7132, %v7523
  %v7775 = vadd.f32 %v7133, %v7525
  %v7776 = vadd.f32 %v7134, %v7527
  %v7777 = vadd.f32 %v7135, %v7530
  %v7778 = vadd.f32 %v7136, %v7533
  %v7779 = vadd.f32 %v7137, %v7536
  %v7780 = vadd.f32 %v7138, %v7538
  %v7781 = vadd.f32 %v7139, %v7540
  %v7782 = vadd.f32 %v7140, %v7542
  %v7783 = vadd.f32 %v7141, %v7545
  %v7784 = vadd.f32 %v7142, %v7548
  %v7785 = vadd.f32 %v7143, %v7551
  %v7786 = vadd.f32 %v7144, %v7553
  %v7787 = vadd.f32 %v7145, %v7555
  %v7788 = vadd.f32 %v7146, %v7557
  %v7789 = vadd.f32 %v7147, %v7560
  %v7790 = vadd.f32 %v7148, %v7563
  %v7791 = vadd.f32 %v7149, %v7566
  %v7792 = vadd.f32 %v7150, %v7568
  %v7793 = vadd.f32 %v7151, %v7570
  %v7794 = vadd.f32 %v7152, %v7572
  %v7795 = vadd.f32 %v7153, %v7575
  %v7796 = vadd.f32 %v7154, %v7578
  %v7797 = vadd.f32 %v7155, %v7581
  %v7798 = vadd.f32 %v7156, %v7583
  %v7799 = vadd.f32 %v7157, %v7585
  %v7800 = vadd.f32 %v7158, %v7587
  %v7801 = vadd.f32 %v7159, %v7590
  %v7802 = vadd.f32 %v7160, %v7593
  %v7803 = vadd.f32 %v7161, %v7596
  %v7804 = vadd.f32 %v7162, %v7598
  %v7805 = vadd.f32 %v7163, %v7600
  %v7806 = vadd.f32 %v7164, %v7602
  %v7807 = vadd.f32 %v7165, %v7605
  %v7808 = vadd.f32 %v7166, %v7608
  %v7809 = vadd.f32 %v7167, %v7611
  %v7810 = vadd.f32 %v7168, %v7613
  %v7811 = vadd.f32 %v7169, %v7615
  %v7812 = vadd.f32 %v7170, %v7617
  %v7813 = vadd.f32 %v7171, %v7620
  %v7814 = vadd.f32 %v7172, %v7623
  %v7815 = vadd.f32 %v7173, %v7626
  %v7816 = vadd.f32 %v7174, %v7628
  %v7817 = vadd.f32 %v7175, %v7630
  %v7818 = vadd.f32 %v7176, %v7632
  %v7819 = vadd.f32 %v7177, %v7635
  %v7820 = vadd.f32 %v7178, %v7638
  %v7821 = vadd.f32 %v7179, %v7641
  %v7822 = vadd.f32 %v7180, %v7643
  %v7823 = vadd.f32 %v7181, %v7645
  %v7824 = vadd.f32 %v7182, %v7647
  %v7825 = vadd.f32 %v7183, %v7650
  %v7826 = vadd.f32 %v7184, %v7653
  %v7827 = vadd.f32 %v7185, %v7656
  %v7828 = vadd.f32 %v7186, %v7658
  %v7829 = vadd.f32 %v7187, %v7660
  %v7830 = vadd.f32 %v7188, %v7662
  %v7831 = vlaneseq
  %v7832 = vshrl.u32 %v7831, 7
  %v7833 = vsub.s32 5, %v7832
  %v7834 = vrot.slane %v895, %v7833
  %v7835 = vlaneseq
  %v7836 = vshrl.u32 %v7835, 7
  %v7837 = vsub.s32 5, %v7836
  %v7838 = vrot.slane %v896, %v7837
  %v7839 = vlaneseq
  %v7840 = vshrl.u32 %v7839, 7
  %v7841 = vsub.s32 5, %v7840
  %v7842 = vrot.slane %v897, %v7841
  %v7843 = vmul.f32 %v748, %v7834
  %v7844 = vmul.f32 %v749, %v7838
  %v7845 = vmul.f32 %v750, %v7842
  %v7846 = vmul.f32 %v751, %v7834
  %v7847 = vmul.f32 %v752, %v7838
  %v7848 = vmul.f32 %v753, %v7842
  %v7849 = vmul.f32 %v754, %v7834
  %v7850 = vmul.f32 %v755, %v7838
  %v7851 = vmul.f32 %v756, %v7842
  %v7852 = vmul.f32 %v757, %v7834
  %v7853 = vmul.f32 %v758, %v7838
  %v7854 = vmul.f32 %v759, %v7842
  %v7855 = vmul.f32 %v760, %v7834
  %v7856 = vmul.f32 %v761, %v7838
  %v7857 = vmul.f32 %v762, %v7842
  %v7858 = vmul.f32 %v763, %v7834
  %v7859 = vmul.f32 %v764, %v7838
  %v7860 = vmul.f32 %v765, %v7842
  %v7861 = vmul.f32 %v766, %v7834
  %v7862 = vmul.f32 %v767, %v7838
  %v7863 = vmul.f32 %v768, %v7842
  %v7864 = vmul.f32 %v769, %v7834
  %v7865 = vmul.f32 %v770, %v7838
  %v7866 = vmul.f32 %v771, %v7842
  %v7867 = vmul.f32 %v772, %v7834
  %v7868 = vmul.f32 %v773, %v7838
  %v7869 = vmul.f32 %v774, %v7842
  %v7870 = vmul.f32 %v775, %v7834
  %v7871 = vmul.f32 %v776, %v7838
  %v7872 = vmul.f32 %v777, %v7842
  %v7873 = vmul.f32 %v778, %v7834
  %v7874 = vmul.f32 %v779, %v7838
  %v7875 = vmul.f32 %v780, %v7842
  %v7876 = vmul.f32 %v781, %v7834
  %v7877 = vmul.f32 %v782, %v7838
  %v7878 = vmul.f32 %v783, %v7842
  %v7879 = vmul.f32 %v784, %v7834
  %v7880 = vmul.f32 %v785, %v7838
  %v7881 = vmul.f32 %v786, %v7842
  %v7882 = vmul.f32 %v787, %v7834
  %v7883 = vmul.f32 %v788, %v7838
  %v7884 = vmul.f32 %v789, %v7842
  %v7885 = vmul.f32 %v790, %v7834
  %v7886 = vmul.f32 %v791, %v7838
  %v7887 = vmul.f32 %v792, %v7842
  %v7888 = vmul.f32 %v793, %v7834
  %v7889 = vmul.f32 %v794, %v7838
  %v7890 = vmul.f32 %v795, %v7842
  %v7891 = vmul.f32 %v796, %v7834
  %v7892 = vmul.f32 %v797, %v7838
  %v7893 = vmul.f32 %v798, %v7842
  %v7894 = vmul.f32 %v799, %v7834
  %v7895 = vmul.f32 %v800, %v7838
  %v7896 = vmul.f32 %v801, %v7842
  %v7897 = vmul.f32 %v802, %v7834
  %v7898 = vmul.f32 %v803, %v7838
  %v7899 = vmul.f32 %v804, %v7842
  %v7900 = vmul.f32 %v805, %v7834
  %v7901 = vmul.f32 %v806, %v7838
  %v7902 = vmul.f32 %v807, %v7842
  %v7903 = vmul.f32 %v808, %v7834
  %v7904 = vmul.f32 %v809, %v7838
  %v7905 = vmul.f32 %v810, %v7842
  %v7906 = vmul.f32 %v811, %v7834
  %v7907 = vmul.f32 %v812, %v7838
  %v7908 = vmul.f32 %v813, %v7842
  %v7909 = vmul.f32 %v814, %v7834
  %v7910 = vmul.f32 %v815, %v7838
  %v7911 = vmul.f32 %v816, %v7842
  %v7912 = vmul.f32 %v817, %v7834
  %v7913 = vmul.f32 %v818, %v7838
  %v7914 = vmul.f32 %v819, %v7842
  %v7915 = vmul.f32 %v820, %v7834
  %v7916 = vmul.f32 %v821, %v7838
  %v7917 = vmul.f32 %v822, %v7842
  %v7918 = vmul.f32 %v823, %v7834
  %v7919 = vmul.f32 %v824, %v7838
  %v7920 = vmul.f32 %v825, %v7842
  %v7921 = vmul.f32 %v826, %v7834
  %v7922 = vmul.f32 %v827, %v7838
  %v7923 = vmul.f32 %v828, %v7842
  %v7924 = vmul.f32 %v829, %v7834
  %v7925 = vmul.f32 %v830, %v7838
  %v7926 = vmul.f32 %v831, %v7842
  %v7927 = vmul.f32 %v832, %v7834
  %v7928 = vmul.f32 %v833, %v7838
  %v7929 = vmul.f32 %v834, %v7842
  %v7930 = vmul.f32 %v835, %v7834
  %v7931 = vmul.f32 %v836, %v7838
  %v7932 = vmul.f32 %v837, %v7842
  %v7933 = vmul.f32 %v838, %v7834
  %v7934 = vmul.f32 %v839, %v7838
  %v7935 = vmul.f32 %v840, %v7842
  %v7936 = vmul.f32 %v841, %v7834
  %v7937 = vmul.f32 %v842, %v7838
  %v7938 = vmul.f32 %v843, %v7842
  %v7939 = vmul.f32 %v844, %v7834
  %v7940 = vmul.f32 %v845, %v7838
  %v7941 = vmul.f32 %v846, %v7842
  %v7942 = vmul.f32 %v847, %v7834
  %v7943 = vmul.f32 %v848, %v7838
  %v7944 = vmul.f32 %v849, %v7842
  %v7945 = vmul.f32 %v850, %v7834
  %v7946 = vmul.f32 %v851, %v7838
  %v7947 = vmul.f32 %v852, %v7842
  %v7948 = vmul.f32 %v853, %v7834
  %v7949 = vmul.f32 %v854, %v7838
  %v7950 = vmul.f32 %v855, %v7842
  %v7951 = vmul.f32 %v856, %v7834
  %v7952 = vmul.f32 %v857, %v7838
  %v7953 = vmul.f32 %v858, %v7842
  %v7954 = vmul.f32 %v859, %v7834
  %v7955 = vmul.f32 %v860, %v7838
  %v7956 = vmul.f32 %v861, %v7842
  %v7957 = vmul.f32 %v862, %v7834
  %v7958 = vmul.f32 %v863, %v7838
  %v7959 = vmul.f32 %v864, %v7842
  %v7960 = vmul.f32 %v865, %v7834
  %v7961 = vmul.f32 %v866, %v7838
  %v7962 = vmul.f32 %v867, %v7842
  %v7963 = vmul.f32 %v868, %v7834
  %v7964 = vmul.f32 %v869, %v7838
  %v7965 = vmul.f32 %v870, %v7842
  %v7966 = vmul.f32 %v871, %v7834
  %v7967 = vmul.f32 %v872, %v7838
  %v7968 = vmul.f32 %v873, %v7842
  %v8095 = vrot.slane %v7843, 3
  %v8096 = vrot.slane %v7846, 3
  %v8097 = vsel %vm6810, %v8095, %v8096
  %v8098 = vrot.slane %v7844, 3
  %v8099 = vrot.slane %v7847, 3
  %v8100 = vsel %vm6810, %v8098, %v8099
  %v8101 = vrot.slane %v7845, 3
  %v8102 = vrot.slane %v7848, 3
  %v8103 = vsel %vm6810, %v8101, %v8102
  %v8104 = vrot.slane %v7849, 3
  %v8105 = vsel %vm6810, %v8096, %v8104
  %v8106 = vrot.slane %v7850, 3
  %v8107 = vsel %vm6810, %v8099, %v8106
  %v8108 = vrot.slane %v7851, 3
  %v8109 = vsel %vm6810, %v8102, %v8108
  %v8110 = vrot.slane %v7852, 3
  %v8111 = vrot.slane %v7855, 3
  %v8112 = vsel %vm6810, %v8110, %v8111
  %v8113 = vrot.slane %v7853, 3
  %v8114 = vrot.slane %v7856, 3
  %v8115 = vsel %vm6810, %v8113, %v8114
  %v8116 = vrot.slane %v7854, 3
  %v8117 = vrot.slane %v7857, 3
  %v8118 = vsel %vm6810, %v8116, %v8117
  %v8119 = vrot.slane %v7858, 3
  %v8120 = vsel %vm6810, %v8111, %v8119
  %v8121 = vrot.slane %v7859, 3
  %v8122 = vsel %vm6810, %v8114, %v8121
  %v8123 = vrot.slane %v7860, 3
  %v8124 = vsel %vm6810, %v8117, %v8123
  %v8125 = vrot.slane %v7861, 3
  %v8126 = vrot.slane %v7864, 3
  %v8127 = vsel %vm6810, %v8125, %v8126
  %v8128 = vrot.slane %v7862, 3
  %v8129 = vrot.slane %v7865, 3
  %v8130 = vsel %vm6810, %v8128, %v8129
  %v8131 = vrot.slane %v7863, 3
  %v8132 = vrot.slane %v7866, 3
  %v8133 = vsel %vm6810, %v8131, %v8132
  %v8134 = vrot.slane %v7867, 3
  %v8135 = vsel %vm6810, %v8126, %v8134
  %v8136 = vrot.slane %v7868, 3
  %v8137 = vsel %vm6810, %v8129, %v8136
  %v8138 = vrot.slane %v7869, 3
  %v8139 = vsel %vm6810, %v8132, %v8138
  %v8140 = vrot.slane %v7870, 3
  %v8141 = vrot.slane %v7873, 3
  %v8142 = vsel %vm6810, %v8140, %v8141
  %v8143 = vrot.slane %v7871, 3
  %v8144 = vrot.slane %v7874, 3
  %v8145 = vsel %vm6810, %v8143, %v8144
  %v8146 = vrot.slane %v7872, 3
  %v8147 = vrot.slane %v7875, 3
  %v8148 = vsel %vm6810, %v8146, %v8147
  %v8149 = vrot.slane %v7876, 3
  %v8150 = vsel %vm6810, %v8141, %v8149
  %v8151 = vrot.slane %v7877, 3
  %v8152 = vsel %vm6810, %v8144, %v8151
  %v8153 = vrot.slane %v7878, 3
  %v8154 = vsel %vm6810, %v8147, %v8153
  %v8155 = vrot.slane %v7879, 3
  %v8156 = vrot.slane %v7882, 3
  %v8157 = vsel %vm6810, %v8155, %v8156
  %v8158 = vrot.slane %v7880, 3
  %v8159 = vrot.slane %v7883, 3
  %v8160 = vsel %vm6810, %v8158, %v8159
  %v8161 = vrot.slane %v7881, 3
  %v8162 = vrot.slane %v7884, 3
  %v8163 = vsel %vm6810, %v8161, %v8162
  %v8164 = vrot.slane %v7885, 3
  %v8165 = vsel %vm6810, %v8156, %v8164
  %v8166 = vrot.slane %v7886, 3
  %v8167 = vsel %vm6810, %v8159, %v8166
  %v8168 = vrot.slane %v7887, 3
  %v8169 = vsel %vm6810, %v8162, %v8168
  %v8170 = vrot.slane %v7888, 3
  %v8171 = vrot.slane %v7891, 3
  %v8172 = vsel %vm6810, %v8170, %v8171
  %v8173 = vrot.slane %v7889, 3
  %v8174 = vrot.slane %v7892, 3
  %v8175 = vsel %vm6810, %v8173, %v8174
  %v8176 = vrot.slane %v7890, 3
  %v8177 = vrot.slane %v7893, 3
  %v8178 = vsel %vm6810, %v8176, %v8177
  %v8179 = vrot.slane %v7894, 3
  %v8180 = vsel %vm6810, %v8171, %v8179
  %v8181 = vrot.slane %v7895, 3
  %v8182 = vsel %vm6810, %v8174, %v8181
  %v8183 = vrot.slane %v7896, 3
  %v8184 = vsel %vm6810, %v8177, %v8183
  %v8185 = vrot.slane %v7897, 3
  %v8186 = vrot.slane %v7900, 3
  %v8187 = vsel %vm6810, %v8185, %v8186
  %v8188 = vrot.slane %v7898, 3
  %v8189 = vrot.slane %v7901, 3
  %v8190 = vsel %vm6810, %v8188, %v8189
  %v8191 = vrot.slane %v7899, 3
  %v8192 = vrot.slane %v7902, 3
  %v8193 = vsel %vm6810, %v8191, %v8192
  %v8194 = vrot.slane %v7903, 3
  %v8195 = vsel %vm6810, %v8186, %v8194
  %v8196 = vrot.slane %v7904, 3
  %v8197 = vsel %vm6810, %v8189, %v8196
  %v8198 = vrot.slane %v7905, 3
  %v8199 = vsel %vm6810, %v8192, %v8198
  %v8200 = vrot.slane %v7906, 3
  %v8201 = vrot.slane %v7909, 3
  %v8202 = vsel %vm6810, %v8200, %v8201
  %v8203 = vrot.slane %v7907, 3
  %v8204 = vrot.slane %v7910, 3
  %v8205 = vsel %vm6810, %v8203, %v8204
  %v8206 = vrot.slane %v7908, 3
  %v8207 = vrot.slane %v7911, 3
  %v8208 = vsel %vm6810, %v8206, %v8207
  %v8209 = vrot.slane %v7912, 3
  %v8210 = vsel %vm6810, %v8201, %v8209
  %v8211 = vrot.slane %v7913, 3
  %v8212 = vsel %vm6810, %v8204, %v8211
  %v8213 = vrot.slane %v7914, 3
  %v8214 = vsel %vm6810, %v8207, %v8213
  %v8215 = vrot.slane %v7915, 3
  %v8216 = vrot.slane %v7918, 3
  %v8217 = vsel %vm6810, %v8215, %v8216
  %v8218 = vrot.slane %v7916, 3
  %v8219 = vrot.slane %v7919, 3
  %v8220 = vsel %vm6810, %v8218, %v8219
  %v8221 = vrot.slane %v7917, 3
  %v8222 = vrot.slane %v7920, 3
  %v8223 = vsel %vm6810, %v8221, %v8222
  %v8224 = vrot.slane %v7921, 3
  %v8225 = vsel %vm6810, %v8216, %v8224
  %v8226 = vrot.slane %v7922, 3
  %v8227 = vsel %vm6810, %v8219, %v8226
  %v8228 = vrot.slane %v7923, 3
  %v8229 = vsel %vm6810, %v8222, %v8228
  %v8230 = vrot.slane %v7924, 3
  %v8231 = vrot.slane %v7927, 3
  %v8232 = vsel %vm6810, %v8230, %v8231
  %v8233 = vrot.slane %v7925, 3
  %v8234 = vrot.slane %v7928, 3
  %v8235 = vsel %vm6810, %v8233, %v8234
  %v8236 = vrot.slane %v7926, 3
  %v8237 = vrot.slane %v7929, 3
  %v8238 = vsel %vm6810, %v8236, %v8237
  %v8239 = vrot.slane %v7930, 3
  %v8240 = vsel %vm6810, %v8231, %v8239
  %v8241 = vrot.slane %v7931, 3
  %v8242 = vsel %vm6810, %v8234, %v8241
  %v8243 = vrot.slane %v7932, 3
  %v8244 = vsel %vm6810, %v8237, %v8243
  %v8245 = vrot.slane %v7933, 3
  %v8246 = vrot.slane %v7936, 3
  %v8247 = vsel %vm6810, %v8245, %v8246
  %v8248 = vrot.slane %v7934, 3
  %v8249 = vrot.slane %v7937, 3
  %v8250 = vsel %vm6810, %v8248, %v8249
  %v8251 = vrot.slane %v7935, 3
  %v8252 = vrot.slane %v7938, 3
  %v8253 = vsel %vm6810, %v8251, %v8252
  %v8254 = vrot.slane %v7939, 3
  %v8255 = vsel %vm6810, %v8246, %v8254
  %v8256 = vrot.slane %v7940, 3
  %v8257 = vsel %vm6810, %v8249, %v8256
  %v8258 = vrot.slane %v7941, 3
  %v8259 = vsel %vm6810, %v8252, %v8258
  %v8260 = vrot.slane %v7942, 3
  %v8261 = vrot.slane %v7945, 3
  %v8262 = vsel %vm6810, %v8260, %v8261
  %v8263 = vrot.slane %v7943, 3
  %v8264 = vrot.slane %v7946, 3
  %v8265 = vsel %vm6810, %v8263, %v8264
  %v8266 = vrot.slane %v7944, 3
  %v8267 = vrot.slane %v7947, 3
  %v8268 = vsel %vm6810, %v8266, %v8267
  %v8269 = vrot.slane %v7948, 3
  %v8270 = vsel %vm6810, %v8261, %v8269
  %v8271 = vrot.slane %v7949, 3
  %v8272 = vsel %vm6810, %v8264, %v8271
  %v8273 = vrot.slane %v7950, 3
  %v8274 = vsel %vm6810, %v8267, %v8273
  %v8275 = vrot.slane %v7951, 3
  %v8276 = vrot.slane %v7954, 3
  %v8277 = vsel %vm6810, %v8275, %v8276
  %v8278 = vrot.slane %v7952, 3
  %v8279 = vrot.slane %v7955, 3
  %v8280 = vsel %vm6810, %v8278, %v8279
  %v8281 = vrot.slane %v7953, 3
  %v8282 = vrot.slane %v7956, 3
  %v8283 = vsel %vm6810, %v8281, %v8282
  %v8284 = vrot.slane %v7957, 3
  %v8285 = vsel %vm6810, %v8276, %v8284
  %v8286 = vrot.slane %v7958, 3
  %v8287 = vsel %vm6810, %v8279, %v8286
  %v8288 = vrot.slane %v7959, 3
  %v8289 = vsel %vm6810, %v8282, %v8288
  %v8290 = vrot.slane %v7960, 3
  %v8291 = vrot.slane %v7963, 3
  %v8292 = vsel %vm6810, %v8290, %v8291
  %v8293 = vrot.slane %v7961, 3
  %v8294 = vrot.slane %v7964, 3
  %v8295 = vsel %vm6810, %v8293, %v8294
  %v8296 = vrot.slane %v7962, 3
  %v8297 = vrot.slane %v7965, 3
  %v8298 = vsel %vm6810, %v8296, %v8297
  %v8299 = vrot.slane %v7966, 3
  %v8300 = vsel %vm6810, %v8291, %v8299
  %v8301 = vrot.slane %v7967, 3
  %v8302 = vsel %vm6810, %v8294, %v8301
  %v8303 = vrot.slane %v7968, 3
  %v8304 = vsel %vm6810, %v8297, %v8303
  %v8389 = vadd.f32 %v7747, %v8097
  %v8390 = vadd.f32 %v7748, %v8100
  %v8391 = vadd.f32 %v7749, %v8103
  %v8392 = vadd.f32 %v7750, %v8105
  %v8393 = vadd.f32 %v7751, %v8107
  %v8394 = vadd.f32 %v7752, %v8109
  %v8395 = vadd.f32 %v7753, %v8112
  %v8396 = vadd.f32 %v7754, %v8115
  %v8397 = vadd.f32 %v7755, %v8118
  %v8398 = vadd.f32 %v7756, %v8120
  %v8399 = vadd.f32 %v7757, %v8122
  %v8400 = vadd.f32 %v7758, %v8124
  %v8401 = vadd.f32 %v7759, %v8127
  %v8402 = vadd.f32 %v7760, %v8130
  %v8403 = vadd.f32 %v7761, %v8133
  %v8404 = vadd.f32 %v7762, %v8135
  %v8405 = vadd.f32 %v7763, %v8137
  %v8406 = vadd.f32 %v7764, %v8139
  %v8407 = vadd.f32 %v7765, %v8142
  %v8408 = vadd.f32 %v7766, %v8145
  %v8409 = vadd.f32 %v7767, %v8148
  %v8410 = vadd.f32 %v7768, %v8150
  %v8411 = vadd.f32 %v7769, %v8152
  %v8412 = vadd.f32 %v7770, %v8154
  %v8413 = vadd.f32 %v7771, %v8157
  %v8414 = vadd.f32 %v7772, %v8160
  %v8415 = vadd.f32 %v7773, %v8163
  %v8416 = vadd.f32 %v7774, %v8165
  %v8417 = vadd.f32 %v7775, %v8167
  %v8418 = vadd.f32 %v7776, %v8169
  %v8419 = vadd.f32 %v7777, %v8172
  %v8420 = vadd.f32 %v7778, %v8175
  %v8421 = vadd.f32 %v7779, %v8178
  %v8422 = vadd.f32 %v7780, %v8180
  %v8423 = vadd.f32 %v7781, %v8182
  %v8424 = vadd.f32 %v7782, %v8184
  %v8425 = vadd.f32 %v7783, %v8187
  %v8426 = vadd.f32 %v7784, %v8190
  %v8427 = vadd.f32 %v7785, %v8193
  %v8428 = vadd.f32 %v7786, %v8195
  %v8429 = vadd.f32 %v7787, %v8197
  %v8430 = vadd.f32 %v7788, %v8199
  %v8431 = vadd.f32 %v7789, %v8202
  %v8432 = vadd.f32 %v7790, %v8205
  %v8433 = vadd.f32 %v7791, %v8208
  %v8434 = vadd.f32 %v7792, %v8210
  %v8435 = vadd.f32 %v7793, %v8212
  %v8436 = vadd.f32 %v7794, %v8214
  %v8437 = vadd.f32 %v7795, %v8217
  %v8438 = vadd.f32 %v7796, %v8220
  %v8439 = vadd.f32 %v7797, %v8223
  %v8440 = vadd.f32 %v7798, %v8225
  %v8441 = vadd.f32 %v7799, %v8227
  %v8442 = vadd.f32 %v7800, %v8229
  %v8443 = vadd.f32 %v7801, %v8232
  %v8444 = vadd.f32 %v7802, %v8235
  %v8445 = vadd.f32 %v7803, %v8238
  %v8446 = vadd.f32 %v7804, %v8240
  %v8447 = vadd.f32 %v7805, %v8242
  %v8448 = vadd.f32 %v7806, %v8244
  %v8449 = vadd.f32 %v7807, %v8247
  %v8450 = vadd.f32 %v7808, %v8250
  %v8451 = vadd.f32 %v7809, %v8253
  %v8452 = vadd.f32 %v7810, %v8255
  %v8453 = vadd.f32 %v7811, %v8257
  %v8454 = vadd.f32 %v7812, %v8259
  %v8455 = vadd.f32 %v7813, %v8262
  %v8456 = vadd.f32 %v7814, %v8265
  %v8457 = vadd.f32 %v7815, %v8268
  %v8458 = vadd.f32 %v7816, %v8270
  %v8459 = vadd.f32 %v7817, %v8272
  %v8460 = vadd.f32 %v7818, %v8274
  %v8461 = vadd.f32 %v7819, %v8277
  %v8462 = vadd.f32 %v7820, %v8280
  %v8463 = vadd.f32 %v7821, %v8283
  %v8464 = vadd.f32 %v7822, %v8285
  %v8465 = vadd.f32 %v7823, %v8287
  %v8466 = vadd.f32 %v7824, %v8289
  %v8467 = vadd.f32 %v7825, %v8292
  %v8468 = vadd.f32 %v7826, %v8295
  %v8469 = vadd.f32 %v7827, %v8298
  %v8470 = vadd.f32 %v7828, %v8300
  %v8471 = vadd.f32 %v7829, %v8302
  %v8472 = vadd.f32 %v7830, %v8304
  %v8473 = vlaneseq
  %v8474 = vshrl.u32 %v8473, 7
  %v8475 = vsub.s32 2, %v8474
  %v8476 = vrot.slane %v898, %v8475
  %v8477 = vlaneseq
  %v8478 = vshrl.u32 %v8477, 7
  %v8479 = vsub.s32 2, %v8478
  %v8480 = vrot.slane %v899, %v8479
  %v8481 = vlaneseq
  %v8482 = vshrl.u32 %v8481, 7
  %v8483 = vsub.s32 2, %v8482
  %v8484 = vrot.slane %v900, %v8483
  %v8485 = vmul.f32 %v757, %v8476
  %v8486 = vmul.f32 %v758, %v8480
  %v8487 = vmul.f32 %v759, %v8484
  %v8488 = vmul.f32 %v760, %v8476
  %v8489 = vmul.f32 %v761, %v8480
  %v8490 = vmul.f32 %v762, %v8484
  %v8491 = vmul.f32 %v763, %v8476
  %v8492 = vmul.f32 %v764, %v8480
  %v8493 = vmul.f32 %v765, %v8484
  %v8494 = vmul.f32 %v766, %v8476
  %v8495 = vmul.f32 %v767, %v8480
  %v8496 = vmul.f32 %v768, %v8484
  %v8497 = vmul.f32 %v769, %v8476
  %v8498 = vmul.f32 %v770, %v8480
  %v8499 = vmul.f32 %v771, %v8484
  %v8500 = vmul.f32 %v772, %v8476
  %v8501 = vmul.f32 %v773, %v8480
  %v8502 = vmul.f32 %v774, %v8484
  %v8503 = vmul.f32 %v775, %v8476
  %v8504 = vmul.f32 %v776, %v8480
  %v8505 = vmul.f32 %v777, %v8484
  %v8506 = vmul.f32 %v778, %v8476
  %v8507 = vmul.f32 %v779, %v8480
  %v8508 = vmul.f32 %v780, %v8484
  %v8509 = vmul.f32 %v781, %v8476
  %v8510 = vmul.f32 %v782, %v8480
  %v8511 = vmul.f32 %v783, %v8484
  %v8512 = vmul.f32 %v784, %v8476
  %v8513 = vmul.f32 %v785, %v8480
  %v8514 = vmul.f32 %v786, %v8484
  %v8515 = vmul.f32 %v787, %v8476
  %v8516 = vmul.f32 %v788, %v8480
  %v8517 = vmul.f32 %v789, %v8484
  %v8518 = vmul.f32 %v790, %v8476
  %v8519 = vmul.f32 %v791, %v8480
  %v8520 = vmul.f32 %v792, %v8484
  %v8521 = vmul.f32 %v793, %v8476
  %v8522 = vmul.f32 %v794, %v8480
  %v8523 = vmul.f32 %v795, %v8484
  %v8524 = vmul.f32 %v796, %v8476
  %v8525 = vmul.f32 %v797, %v8480
  %v8526 = vmul.f32 %v798, %v8484
  %v8527 = vmul.f32 %v799, %v8476
  %v8528 = vmul.f32 %v800, %v8480
  %v8529 = vmul.f32 %v801, %v8484
  %v8530 = vmul.f32 %v802, %v8476
  %v8531 = vmul.f32 %v803, %v8480
  %v8532 = vmul.f32 %v804, %v8484
  %v8533 = vmul.f32 %v805, %v8476
  %v8534 = vmul.f32 %v806, %v8480
  %v8535 = vmul.f32 %v807, %v8484
  %v8536 = vmul.f32 %v808, %v8476
  %v8537 = vmul.f32 %v809, %v8480
  %v8538 = vmul.f32 %v810, %v8484
  %v8539 = vmul.f32 %v811, %v8476
  %v8540 = vmul.f32 %v812, %v8480
  %v8541 = vmul.f32 %v813, %v8484
  %v8542 = vmul.f32 %v814, %v8476
  %v8543 = vmul.f32 %v815, %v8480
  %v8544 = vmul.f32 %v816, %v8484
  %v8545 = vmul.f32 %v817, %v8476
  %v8546 = vmul.f32 %v818, %v8480
  %v8547 = vmul.f32 %v819, %v8484
  %v8548 = vmul.f32 %v820, %v8476
  %v8549 = vmul.f32 %v821, %v8480
  %v8550 = vmul.f32 %v822, %v8484
  %v8551 = vmul.f32 %v823, %v8476
  %v8552 = vmul.f32 %v824, %v8480
  %v8553 = vmul.f32 %v825, %v8484
  %v8554 = vmul.f32 %v826, %v8476
  %v8555 = vmul.f32 %v827, %v8480
  %v8556 = vmul.f32 %v828, %v8484
  %v8557 = vmul.f32 %v829, %v8476
  %v8558 = vmul.f32 %v830, %v8480
  %v8559 = vmul.f32 %v831, %v8484
  %v8560 = vmul.f32 %v832, %v8476
  %v8561 = vmul.f32 %v833, %v8480
  %v8562 = vmul.f32 %v834, %v8484
  %v8563 = vmul.f32 %v835, %v8476
  %v8564 = vmul.f32 %v836, %v8480
  %v8565 = vmul.f32 %v837, %v8484
  %v8566 = vmul.f32 %v838, %v8476
  %v8567 = vmul.f32 %v839, %v8480
  %v8568 = vmul.f32 %v840, %v8484
  %v8569 = vmul.f32 %v841, %v8476
  %v8570 = vmul.f32 %v842, %v8480
  %v8571 = vmul.f32 %v843, %v8484
  %v8572 = vmul.f32 %v844, %v8476
  %v8573 = vmul.f32 %v845, %v8480
  %v8574 = vmul.f32 %v846, %v8484
  %v8575 = vmul.f32 %v847, %v8476
  %v8576 = vmul.f32 %v848, %v8480
  %v8577 = vmul.f32 %v849, %v8484
  %v8578 = vmul.f32 %v850, %v8476
  %v8579 = vmul.f32 %v851, %v8480
  %v8580 = vmul.f32 %v852, %v8484
  %v8581 = vmul.f32 %v853, %v8476
  %v8582 = vmul.f32 %v854, %v8480
  %v8583 = vmul.f32 %v855, %v8484
  %v8584 = vmul.f32 %v856, %v8476
  %v8585 = vmul.f32 %v857, %v8480
  %v8586 = vmul.f32 %v858, %v8484
  %v8587 = vmul.f32 %v859, %v8476
  %v8588 = vmul.f32 %v860, %v8480
  %v8589 = vmul.f32 %v861, %v8484
  %v8590 = vmul.f32 %v862, %v8476
  %v8591 = vmul.f32 %v863, %v8480
  %v8592 = vmul.f32 %v864, %v8484
  %v8593 = vmul.f32 %v865, %v8476
  %v8594 = vmul.f32 %v866, %v8480
  %v8595 = vmul.f32 %v867, %v8484
  %v8596 = vmul.f32 %v868, %v8476
  %v8597 = vmul.f32 %v869, %v8480
  %v8598 = vmul.f32 %v870, %v8484
  %v8599 = vmul.f32 %v871, %v8476
  %v8600 = vmul.f32 %v872, %v8480
  %v8601 = vmul.f32 %v873, %v8484
  %v8602 = vmul.f32 %v874, %v8476
  %v8603 = vmul.f32 %v875, %v8480
  %v8604 = vmul.f32 %v876, %v8484
  %v8605 = vmul.f32 %v877, %v8476
  %v8606 = vmul.f32 %v878, %v8480
  %v8607 = vmul.f32 %v879, %v8484
  %v8608 = vmul.f32 %v880, %v8476
  %v8609 = vmul.f32 %v881, %v8480
  %v8610 = vmul.f32 %v882, %v8484
  %v8737 = vrot.slane %v8485, 3
  %v8738 = vrot.slane %v8488, 3
  %v8739 = vsel %vm6810, %v8737, %v8738
  %v8740 = vrot.slane %v8486, 3
  %v8741 = vrot.slane %v8489, 3
  %v8742 = vsel %vm6810, %v8740, %v8741
  %v8743 = vrot.slane %v8487, 3
  %v8744 = vrot.slane %v8490, 3
  %v8745 = vsel %vm6810, %v8743, %v8744
  %v8746 = vrot.slane %v8491, 3
  %v8747 = vsel %vm6810, %v8738, %v8746
  %v8748 = vrot.slane %v8492, 3
  %v8749 = vsel %vm6810, %v8741, %v8748
  %v8750 = vrot.slane %v8493, 3
  %v8751 = vsel %vm6810, %v8744, %v8750
  %v8752 = vrot.slane %v8494, 3
  %v8753 = vrot.slane %v8497, 3
  %v8754 = vsel %vm6810, %v8752, %v8753
  %v8755 = vrot.slane %v8495, 3
  %v8756 = vrot.slane %v8498, 3
  %v8757 = vsel %vm6810, %v8755, %v8756
  %v8758 = vrot.slane %v8496, 3
  %v8759 = vrot.slane %v8499, 3
  %v8760 = vsel %vm6810, %v8758, %v8759
  %v8761 = vrot.slane %v8500, 3
  %v8762 = vsel %vm6810, %v8753, %v8761
  %v8763 = vrot.slane %v8501, 3
  %v8764 = vsel %vm6810, %v8756, %v8763
  %v8765 = vrot.slane %v8502, 3
  %v8766 = vsel %vm6810, %v8759, %v8765
  %v8767 = vrot.slane %v8503, 3
  %v8768 = vrot.slane %v8506, 3
  %v8769 = vsel %vm6810, %v8767, %v8768
  %v8770 = vrot.slane %v8504, 3
  %v8771 = vrot.slane %v8507, 3
  %v8772 = vsel %vm6810, %v8770, %v8771
  %v8773 = vrot.slane %v8505, 3
  %v8774 = vrot.slane %v8508, 3
  %v8775 = vsel %vm6810, %v8773, %v8774
  %v8776 = vrot.slane %v8509, 3
  %v8777 = vsel %vm6810, %v8768, %v8776
  %v8778 = vrot.slane %v8510, 3
  %v8779 = vsel %vm6810, %v8771, %v8778
  %v8780 = vrot.slane %v8511, 3
  %v8781 = vsel %vm6810, %v8774, %v8780
  %v8782 = vrot.slane %v8512, 3
  %v8783 = vrot.slane %v8515, 3
  %v8784 = vsel %vm6810, %v8782, %v8783
  %v8785 = vrot.slane %v8513, 3
  %v8786 = vrot.slane %v8516, 3
  %v8787 = vsel %vm6810, %v8785, %v8786
  %v8788 = vrot.slane %v8514, 3
  %v8789 = vrot.slane %v8517, 3
  %v8790 = vsel %vm6810, %v8788, %v8789
  %v8791 = vrot.slane %v8518, 3
  %v8792 = vsel %vm6810, %v8783, %v8791
  %v8793 = vrot.slane %v8519, 3
  %v8794 = vsel %vm6810, %v8786, %v8793
  %v8795 = vrot.slane %v8520, 3
  %v8796 = vsel %vm6810, %v8789, %v8795
  %v8797 = vrot.slane %v8521, 3
  %v8798 = vrot.slane %v8524, 3
  %v8799 = vsel %vm6810, %v8797, %v8798
  %v8800 = vrot.slane %v8522, 3
  %v8801 = vrot.slane %v8525, 3
  %v8802 = vsel %vm6810, %v8800, %v8801
  %v8803 = vrot.slane %v8523, 3
  %v8804 = vrot.slane %v8526, 3
  %v8805 = vsel %vm6810, %v8803, %v8804
  %v8806 = vrot.slane %v8527, 3
  %v8807 = vsel %vm6810, %v8798, %v8806
  %v8808 = vrot.slane %v8528, 3
  %v8809 = vsel %vm6810, %v8801, %v8808
  %v8810 = vrot.slane %v8529, 3
  %v8811 = vsel %vm6810, %v8804, %v8810
  %v8812 = vrot.slane %v8530, 3
  %v8813 = vrot.slane %v8533, 3
  %v8814 = vsel %vm6810, %v8812, %v8813
  %v8815 = vrot.slane %v8531, 3
  %v8816 = vrot.slane %v8534, 3
  %v8817 = vsel %vm6810, %v8815, %v8816
  %v8818 = vrot.slane %v8532, 3
  %v8819 = vrot.slane %v8535, 3
  %v8820 = vsel %vm6810, %v8818, %v8819
  %v8821 = vrot.slane %v8536, 3
  %v8822 = vsel %vm6810, %v8813, %v8821
  %v8823 = vrot.slane %v8537, 3
  %v8824 = vsel %vm6810, %v8816, %v8823
  %v8825 = vrot.slane %v8538, 3
  %v8826 = vsel %vm6810, %v8819, %v8825
  %v8827 = vrot.slane %v8539, 3
  %v8828 = vrot.slane %v8542, 3
  %v8829 = vsel %vm6810, %v8827, %v8828
  %v8830 = vrot.slane %v8540, 3
  %v8831 = vrot.slane %v8543, 3
  %v8832 = vsel %vm6810, %v8830, %v8831
  %v8833 = vrot.slane %v8541, 3
  %v8834 = vrot.slane %v8544, 3
  %v8835 = vsel %vm6810, %v8833, %v8834
  %v8836 = vrot.slane %v8545, 3
  %v8837 = vsel %vm6810, %v8828, %v8836
  %v8838 = vrot.slane %v8546, 3
  %v8839 = vsel %vm6810, %v8831, %v8838
  %v8840 = vrot.slane %v8547, 3
  %v8841 = vsel %vm6810, %v8834, %v8840
  %v8842 = vrot.slane %v8548, 3
  %v8843 = vrot.slane %v8551, 3
  %v8844 = vsel %vm6810, %v8842, %v8843
  %v8845 = vrot.slane %v8549, 3
  %v8846 = vrot.slane %v8552, 3
  %v8847 = vsel %vm6810, %v8845, %v8846
  %v8848 = vrot.slane %v8550, 3
  %v8849 = vrot.slane %v8553, 3
  %v8850 = vsel %vm6810, %v8848, %v8849
  %v8851 = vrot.slane %v8554, 3
  %v8852 = vsel %vm6810, %v8843, %v8851
  %v8853 = vrot.slane %v8555, 3
  %v8854 = vsel %vm6810, %v8846, %v8853
  %v8855 = vrot.slane %v8556, 3
  %v8856 = vsel %vm6810, %v8849, %v8855
  %v8857 = vrot.slane %v8557, 3
  %v8858 = vrot.slane %v8560, 3
  %v8859 = vsel %vm6810, %v8857, %v8858
  %v8860 = vrot.slane %v8558, 3
  %v8861 = vrot.slane %v8561, 3
  %v8862 = vsel %vm6810, %v8860, %v8861
  %v8863 = vrot.slane %v8559, 3
  %v8864 = vrot.slane %v8562, 3
  %v8865 = vsel %vm6810, %v8863, %v8864
  %v8866 = vrot.slane %v8563, 3
  %v8867 = vsel %vm6810, %v8858, %v8866
  %v8868 = vrot.slane %v8564, 3
  %v8869 = vsel %vm6810, %v8861, %v8868
  %v8870 = vrot.slane %v8565, 3
  %v8871 = vsel %vm6810, %v8864, %v8870
  %v8872 = vrot.slane %v8566, 3
  %v8873 = vrot.slane %v8569, 3
  %v8874 = vsel %vm6810, %v8872, %v8873
  %v8875 = vrot.slane %v8567, 3
  %v8876 = vrot.slane %v8570, 3
  %v8877 = vsel %vm6810, %v8875, %v8876
  %v8878 = vrot.slane %v8568, 3
  %v8879 = vrot.slane %v8571, 3
  %v8880 = vsel %vm6810, %v8878, %v8879
  %v8881 = vrot.slane %v8572, 3
  %v8882 = vsel %vm6810, %v8873, %v8881
  %v8883 = vrot.slane %v8573, 3
  %v8884 = vsel %vm6810, %v8876, %v8883
  %v8885 = vrot.slane %v8574, 3
  %v8886 = vsel %vm6810, %v8879, %v8885
  %v8887 = vrot.slane %v8575, 3
  %v8888 = vrot.slane %v8578, 3
  %v8889 = vsel %vm6810, %v8887, %v8888
  %v8890 = vrot.slane %v8576, 3
  %v8891 = vrot.slane %v8579, 3
  %v8892 = vsel %vm6810, %v8890, %v8891
  %v8893 = vrot.slane %v8577, 3
  %v8894 = vrot.slane %v8580, 3
  %v8895 = vsel %vm6810, %v8893, %v8894
  %v8896 = vrot.slane %v8581, 3
  %v8897 = vsel %vm6810, %v8888, %v8896
  %v8898 = vrot.slane %v8582, 3
  %v8899 = vsel %vm6810, %v8891, %v8898
  %v8900 = vrot.slane %v8583, 3
  %v8901 = vsel %vm6810, %v8894, %v8900
  %v8902 = vrot.slane %v8584, 3
  %v8903 = vrot.slane %v8587, 3
  %v8904 = vsel %vm6810, %v8902, %v8903
  %v8905 = vrot.slane %v8585, 3
  %v8906 = vrot.slane %v8588, 3
  %v8907 = vsel %vm6810, %v8905, %v8906
  %v8908 = vrot.slane %v8586, 3
  %v8909 = vrot.slane %v8589, 3
  %v8910 = vsel %vm6810, %v8908, %v8909
  %v8911 = vrot.slane %v8590, 3
  %v8912 = vsel %vm6810, %v8903, %v8911
  %v8913 = vrot.slane %v8591, 3
  %v8914 = vsel %vm6810, %v8906, %v8913
  %v8915 = vrot.slane %v8592, 3
  %v8916 = vsel %vm6810, %v8909, %v8915
  %v8917 = vrot.slane %v8593, 3
  %v8918 = vrot.slane %v8596, 3
  %v8919 = vsel %vm6810, %v8917, %v8918
  %v8920 = vrot.slane %v8594, 3
  %v8921 = vrot.slane %v8597, 3
  %v8922 = vsel %vm6810, %v8920, %v8921
  %v8923 = vrot.slane %v8595, 3
  %v8924 = vrot.slane %v8598, 3
  %v8925 = vsel %vm6810, %v8923, %v8924
  %v8926 = vrot.slane %v8599, 3
  %v8927 = vsel %vm6810, %v8918, %v8926
  %v8928 = vrot.slane %v8600, 3
  %v8929 = vsel %vm6810, %v8921, %v8928
  %v8930 = vrot.slane %v8601, 3
  %v8931 = vsel %vm6810, %v8924, %v8930
  %v8932 = vrot.slane %v8602, 3
  %v8933 = vrot.slane %v8605, 3
  %v8934 = vsel %vm6810, %v8932, %v8933
  %v8935 = vrot.slane %v8603, 3
  %v8936 = vrot.slane %v8606, 3
  %v8937 = vsel %vm6810, %v8935, %v8936
  %v8938 = vrot.slane %v8604, 3
  %v8939 = vrot.slane %v8607, 3
  %v8940 = vsel %vm6810, %v8938, %v8939
  %v8941 = vrot.slane %v8608, 3
  %v8942 = vsel %vm6810, %v8933, %v8941
  %v8943 = vrot.slane %v8609, 3
  %v8944 = vsel %vm6810, %v8936, %v8943
  %v8945 = vrot.slane %v8610, 3
  %v8946 = vsel %vm6810, %v8939, %v8945
  %v9031 = vadd.f32 %v8389, %v8739
  %v9032 = vadd.f32 %v8390, %v8742
  %v9033 = vadd.f32 %v8391, %v8745
  %v9034 = vadd.f32 %v8392, %v8747
  %v9035 = vadd.f32 %v8393, %v8749
  %v9036 = vadd.f32 %v8394, %v8751
  %v9037 = vadd.f32 %v8395, %v8754
  %v9038 = vadd.f32 %v8396, %v8757
  %v9039 = vadd.f32 %v8397, %v8760
  %v9040 = vadd.f32 %v8398, %v8762
  %v9041 = vadd.f32 %v8399, %v8764
  %v9042 = vadd.f32 %v8400, %v8766
  %v9043 = vadd.f32 %v8401, %v8769
  %v9044 = vadd.f32 %v8402, %v8772
  %v9045 = vadd.f32 %v8403, %v8775
  %v9046 = vadd.f32 %v8404, %v8777
  %v9047 = vadd.f32 %v8405, %v8779
  %v9048 = vadd.f32 %v8406, %v8781
  %v9049 = vadd.f32 %v8407, %v8784
  %v9050 = vadd.f32 %v8408, %v8787
  %v9051 = vadd.f32 %v8409, %v8790
  %v9052 = vadd.f32 %v8410, %v8792
  %v9053 = vadd.f32 %v8411, %v8794
  %v9054 = vadd.f32 %v8412, %v8796
  %v9055 = vadd.f32 %v8413, %v8799
  %v9056 = vadd.f32 %v8414, %v8802
  %v9057 = vadd.f32 %v8415, %v8805
  %v9058 = vadd.f32 %v8416, %v8807
  %v9059 = vadd.f32 %v8417, %v8809
  %v9060 = vadd.f32 %v8418, %v8811
  %v9061 = vadd.f32 %v8419, %v8814
  %v9062 = vadd.f32 %v8420, %v8817
  %v9063 = vadd.f32 %v8421, %v8820
  %v9064 = vadd.f32 %v8422, %v8822
  %v9065 = vadd.f32 %v8423, %v8824
  %v9066 = vadd.f32 %v8424, %v8826
  %v9067 = vadd.f32 %v8425, %v8829
  %v9068 = vadd.f32 %v8426, %v8832
  %v9069 = vadd.f32 %v8427, %v8835
  %v9070 = vadd.f32 %v8428, %v8837
  %v9071 = vadd.f32 %v8429, %v8839
  %v9072 = vadd.f32 %v8430, %v8841
  %v9073 = vadd.f32 %v8431, %v8844
  %v9074 = vadd.f32 %v8432, %v8847
  %v9075 = vadd.f32 %v8433, %v8850
  %v9076 = vadd.f32 %v8434, %v8852
  %v9077 = vadd.f32 %v8435, %v8854
  %v9078 = vadd.f32 %v8436, %v8856
  %v9079 = vadd.f32 %v8437, %v8859
  %v9080 = vadd.f32 %v8438, %v8862
  %v9081 = vadd.f32 %v8439, %v8865
  %v9082 = vadd.f32 %v8440, %v8867
  %v9083 = vadd.f32 %v8441, %v8869
  %v9084 = vadd.f32 %v8442, %v8871
  %v9085 = vadd.f32 %v8443, %v8874
  %v9086 = vadd.f32 %v8444, %v8877
  %v9087 = vadd.f32 %v8445, %v8880
  %v9088 = vadd.f32 %v8446, %v8882
  %v9089 = vadd.f32 %v8447, %v8884
  %v9090 = vadd.f32 %v8448, %v8886
  %v9091 = vadd.f32 %v8449, %v8889
  %v9092 = vadd.f32 %v8450, %v8892
  %v9093 = vadd.f32 %v8451, %v8895
  %v9094 = vadd.f32 %v8452, %v8897
  %v9095 = vadd.f32 %v8453, %v8899
  %v9096 = vadd.f32 %v8454, %v8901
  %v9097 = vadd.f32 %v8455, %v8904
  %v9098 = vadd.f32 %v8456, %v8907
  %v9099 = vadd.f32 %v8457, %v8910
  %v9100 = vadd.f32 %v8458, %v8912
  %v9101 = vadd.f32 %v8459, %v8914
  %v9102 = vadd.f32 %v8460, %v8916
  %v9103 = vadd.f32 %v8461, %v8919
  %v9104 = vadd.f32 %v8462, %v8922
  %v9105 = vadd.f32 %v8463, %v8925
  %v9106 = vadd.f32 %v8464, %v8927
  %v9107 = vadd.f32 %v8465, %v8929
  %v9108 = vadd.f32 %v8466, %v8931
  %v9109 = vadd.f32 %v8467, %v8934
  %v9110 = vadd.f32 %v8468, %v8937
  %v9111 = vadd.f32 %v8469, %v8940
  %v9112 = vadd.f32 %v8470, %v8942
  %v9113 = vadd.f32 %v8471, %v8944
  %v9114 = vadd.f32 %v8472, %v8946
  %v9115 = vlaneseq
  %v9116 = vshrl.u32 %v9115, 7
  %v9117 = vsub.s32 7, %v9116
  %v9118 = vrot.slane %v898, %v9117
  %v9119 = vlaneseq
  %v9120 = vshrl.u32 %v9119, 7
  %v9121 = vsub.s32 7, %v9120
  %v9122 = vrot.slane %v899, %v9121
  %v9123 = vlaneseq
  %v9124 = vshrl.u32 %v9123, 7
  %v9125 = vsub.s32 7, %v9124
  %v9126 = vrot.slane %v900, %v9125
  %v9127 = vmul.f32 %v766, %v9118
  %v9128 = vmul.f32 %v767, %v9122
  %v9129 = vmul.f32 %v768, %v9126
  %v9130 = vmul.f32 %v769, %v9118
  %v9131 = vmul.f32 %v770, %v9122
  %v9132 = vmul.f32 %v771, %v9126
  %v9133 = vmul.f32 %v772, %v9118
  %v9134 = vmul.f32 %v773, %v9122
  %v9135 = vmul.f32 %v774, %v9126
  %v9136 = vmul.f32 %v775, %v9118
  %v9137 = vmul.f32 %v776, %v9122
  %v9138 = vmul.f32 %v777, %v9126
  %v9139 = vmul.f32 %v778, %v9118
  %v9140 = vmul.f32 %v779, %v9122
  %v9141 = vmul.f32 %v780, %v9126
  %v9142 = vmul.f32 %v781, %v9118
  %v9143 = vmul.f32 %v782, %v9122
  %v9144 = vmul.f32 %v783, %v9126
  %v9145 = vmul.f32 %v784, %v9118
  %v9146 = vmul.f32 %v785, %v9122
  %v9147 = vmul.f32 %v786, %v9126
  %v9148 = vmul.f32 %v787, %v9118
  %v9149 = vmul.f32 %v788, %v9122
  %v9150 = vmul.f32 %v789, %v9126
  %v9151 = vmul.f32 %v790, %v9118
  %v9152 = vmul.f32 %v791, %v9122
  %v9153 = vmul.f32 %v792, %v9126
  %v9154 = vmul.f32 %v793, %v9118
  %v9155 = vmul.f32 %v794, %v9122
  %v9156 = vmul.f32 %v795, %v9126
  %v9157 = vmul.f32 %v796, %v9118
  %v9158 = vmul.f32 %v797, %v9122
  %v9159 = vmul.f32 %v798, %v9126
  %v9160 = vmul.f32 %v799, %v9118
  %v9161 = vmul.f32 %v800, %v9122
  %v9162 = vmul.f32 %v801, %v9126
  %v9163 = vmul.f32 %v802, %v9118
  %v9164 = vmul.f32 %v803, %v9122
  %v9165 = vmul.f32 %v804, %v9126
  %v9166 = vmul.f32 %v805, %v9118
  %v9167 = vmul.f32 %v806, %v9122
  %v9168 = vmul.f32 %v807, %v9126
  %v9169 = vmul.f32 %v808, %v9118
  %v9170 = vmul.f32 %v809, %v9122
  %v9171 = vmul.f32 %v810, %v9126
  %v9172 = vmul.f32 %v811, %v9118
  %v9173 = vmul.f32 %v812, %v9122
  %v9174 = vmul.f32 %v813, %v9126
  %v9175 = vmul.f32 %v814, %v9118
  %v9176 = vmul.f32 %v815, %v9122
  %v9177 = vmul.f32 %v816, %v9126
  %v9178 = vmul.f32 %v817, %v9118
  %v9179 = vmul.f32 %v818, %v9122
  %v9180 = vmul.f32 %v819, %v9126
  %v9181 = vmul.f32 %v820, %v9118
  %v9182 = vmul.f32 %v821, %v9122
  %v9183 = vmul.f32 %v822, %v9126
  %v9184 = vmul.f32 %v823, %v9118
  %v9185 = vmul.f32 %v824, %v9122
  %v9186 = vmul.f32 %v825, %v9126
  %v9187 = vmul.f32 %v826, %v9118
  %v9188 = vmul.f32 %v827, %v9122
  %v9189 = vmul.f32 %v828, %v9126
  %v9190 = vmul.f32 %v829, %v9118
  %v9191 = vmul.f32 %v830, %v9122
  %v9192 = vmul.f32 %v831, %v9126
  %v9193 = vmul.f32 %v832, %v9118
  %v9194 = vmul.f32 %v833, %v9122
  %v9195 = vmul.f32 %v834, %v9126
  %v9196 = vmul.f32 %v835, %v9118
  %v9197 = vmul.f32 %v836, %v9122
  %v9198 = vmul.f32 %v837, %v9126
  %v9199 = vmul.f32 %v838, %v9118
  %v9200 = vmul.f32 %v839, %v9122
  %v9201 = vmul.f32 %v840, %v9126
  %v9202 = vmul.f32 %v841, %v9118
  %v9203 = vmul.f32 %v842, %v9122
  %v9204 = vmul.f32 %v843, %v9126
  %v9205 = vmul.f32 %v844, %v9118
  %v9206 = vmul.f32 %v845, %v9122
  %v9207 = vmul.f32 %v846, %v9126
  %v9208 = vmul.f32 %v847, %v9118
  %v9209 = vmul.f32 %v848, %v9122
  %v9210 = vmul.f32 %v849, %v9126
  %v9211 = vmul.f32 %v850, %v9118
  %v9212 = vmul.f32 %v851, %v9122
  %v9213 = vmul.f32 %v852, %v9126
  %v9214 = vmul.f32 %v853, %v9118
  %v9215 = vmul.f32 %v854, %v9122
  %v9216 = vmul.f32 %v855, %v9126
  %v9217 = vmul.f32 %v856, %v9118
  %v9218 = vmul.f32 %v857, %v9122
  %v9219 = vmul.f32 %v858, %v9126
  %v9220 = vmul.f32 %v859, %v9118
  %v9221 = vmul.f32 %v860, %v9122
  %v9222 = vmul.f32 %v861, %v9126
  %v9223 = vmul.f32 %v862, %v9118
  %v9224 = vmul.f32 %v863, %v9122
  %v9225 = vmul.f32 %v864, %v9126
  %v9226 = vmul.f32 %v865, %v9118
  %v9227 = vmul.f32 %v866, %v9122
  %v9228 = vmul.f32 %v867, %v9126
  %v9229 = vmul.f32 %v868, %v9118
  %v9230 = vmul.f32 %v869, %v9122
  %v9231 = vmul.f32 %v870, %v9126
  %v9232 = vmul.f32 %v871, %v9118
  %v9233 = vmul.f32 %v872, %v9122
  %v9234 = vmul.f32 %v873, %v9126
  %v9235 = vmul.f32 %v874, %v9118
  %v9236 = vmul.f32 %v875, %v9122
  %v9237 = vmul.f32 %v876, %v9126
  %v9238 = vmul.f32 %v877, %v9118
  %v9239 = vmul.f32 %v878, %v9122
  %v9240 = vmul.f32 %v879, %v9126
  %v9241 = vmul.f32 %v880, %v9118
  %v9242 = vmul.f32 %v881, %v9122
  %v9243 = vmul.f32 %v882, %v9126
  %v9244 = vmul.f32 %v883, %v9118
  %v9245 = vmul.f32 %v884, %v9122
  %v9246 = vmul.f32 %v885, %v9126
  %v9247 = vmul.f32 %v886, %v9118
  %v9248 = vmul.f32 %v887, %v9122
  %v9249 = vmul.f32 %v888, %v9126
  %v9250 = vmul.f32 %v889, %v9118
  %v9251 = vmul.f32 %v890, %v9122
  %v9252 = vmul.f32 %v891, %v9126
  %v9379 = vrot.slane %v9127, 3
  %v9380 = vrot.slane %v9130, 3
  %v9381 = vsel %vm6810, %v9379, %v9380
  %v9382 = vrot.slane %v9128, 3
  %v9383 = vrot.slane %v9131, 3
  %v9384 = vsel %vm6810, %v9382, %v9383
  %v9385 = vrot.slane %v9129, 3
  %v9386 = vrot.slane %v9132, 3
  %v9387 = vsel %vm6810, %v9385, %v9386
  %v9388 = vrot.slane %v9133, 3
  %v9389 = vsel %vm6810, %v9380, %v9388
  %v9390 = vrot.slane %v9134, 3
  %v9391 = vsel %vm6810, %v9383, %v9390
  %v9392 = vrot.slane %v9135, 3
  %v9393 = vsel %vm6810, %v9386, %v9392
  %v9394 = vrot.slane %v9136, 3
  %v9395 = vrot.slane %v9139, 3
  %v9396 = vsel %vm6810, %v9394, %v9395
  %v9397 = vrot.slane %v9137, 3
  %v9398 = vrot.slane %v9140, 3
  %v9399 = vsel %vm6810, %v9397, %v9398
  %v9400 = vrot.slane %v9138, 3
  %v9401 = vrot.slane %v9141, 3
  %v9402 = vsel %vm6810, %v9400, %v9401
  %v9403 = vrot.slane %v9142, 3
  %v9404 = vsel %vm6810, %v9395, %v9403
  %v9405 = vrot.slane %v9143, 3
  %v9406 = vsel %vm6810, %v9398, %v9405
  %v9407 = vrot.slane %v9144, 3
  %v9408 = vsel %vm6810, %v9401, %v9407
  %v9409 = vrot.slane %v9145, 3
  %v9410 = vrot.slane %v9148, 3
  %v9411 = vsel %vm6810, %v9409, %v9410
  %v9412 = vrot.slane %v9146, 3
  %v9413 = vrot.slane %v9149, 3
  %v9414 = vsel %vm6810, %v9412, %v9413
  %v9415 = vrot.slane %v9147, 3
  %v9416 = vrot.slane %v9150, 3
  %v9417 = vsel %vm6810, %v9415, %v9416
  %v9418 = vrot.slane %v9151, 3
  %v9419 = vsel %vm6810, %v9410, %v9418
  %v9420 = vrot.slane %v9152, 3
  %v9421 = vsel %vm6810, %v9413, %v9420
  %v9422 = vrot.slane %v9153, 3
  %v9423 = vsel %vm6810, %v9416, %v9422
  %v9424 = vrot.slane %v9154, 3
  %v9425 = vrot.slane %v9157, 3
  %v9426 = vsel %vm6810, %v9424, %v9425
  %v9427 = vrot.slane %v9155, 3
  %v9428 = vrot.slane %v9158, 3
  %v9429 = vsel %vm6810, %v9427, %v9428
  %v9430 = vrot.slane %v9156, 3
  %v9431 = vrot.slane %v9159, 3
  %v9432 = vsel %vm6810, %v9430, %v9431
  %v9433 = vrot.slane %v9160, 3
  %v9434 = vsel %vm6810, %v9425, %v9433
  %v9435 = vrot.slane %v9161, 3
  %v9436 = vsel %vm6810, %v9428, %v9435
  %v9437 = vrot.slane %v9162, 3
  %v9438 = vsel %vm6810, %v9431, %v9437
  %v9439 = vrot.slane %v9163, 3
  %v9440 = vrot.slane %v9166, 3
  %v9441 = vsel %vm6810, %v9439, %v9440
  %v9442 = vrot.slane %v9164, 3
  %v9443 = vrot.slane %v9167, 3
  %v9444 = vsel %vm6810, %v9442, %v9443
  %v9445 = vrot.slane %v9165, 3
  %v9446 = vrot.slane %v9168, 3
  %v9447 = vsel %vm6810, %v9445, %v9446
  %v9448 = vrot.slane %v9169, 3
  %v9449 = vsel %vm6810, %v9440, %v9448
  %v9450 = vrot.slane %v9170, 3
  %v9451 = vsel %vm6810, %v9443, %v9450
  %v9452 = vrot.slane %v9171, 3
  %v9453 = vsel %vm6810, %v9446, %v9452
  %v9454 = vrot.slane %v9172, 3
  %v9455 = vrot.slane %v9175, 3
  %v9456 = vsel %vm6810, %v9454, %v9455
  %v9457 = vrot.slane %v9173, 3
  %v9458 = vrot.slane %v9176, 3
  %v9459 = vsel %vm6810, %v9457, %v9458
  %v9460 = vrot.slane %v9174, 3
  %v9461 = vrot.slane %v9177, 3
  %v9462 = vsel %vm6810, %v9460, %v9461
  %v9463 = vrot.slane %v9178, 3
  %v9464 = vsel %vm6810, %v9455, %v9463
  %v9465 = vrot.slane %v9179, 3
  %v9466 = vsel %vm6810, %v9458, %v9465
  %v9467 = vrot.slane %v9180, 3
  %v9468 = vsel %vm6810, %v9461, %v9467
  %v9469 = vrot.slane %v9181, 3
  %v9470 = vrot.slane %v9184, 3
  %v9471 = vsel %vm6810, %v9469, %v9470
  %v9472 = vrot.slane %v9182, 3
  %v9473 = vrot.slane %v9185, 3
  %v9474 = vsel %vm6810, %v9472, %v9473
  %v9475 = vrot.slane %v9183, 3
  %v9476 = vrot.slane %v9186, 3
  %v9477 = vsel %vm6810, %v9475, %v9476
  %v9478 = vrot.slane %v9187, 3
  %v9479 = vsel %vm6810, %v9470, %v9478
  %v9480 = vrot.slane %v9188, 3
  %v9481 = vsel %vm6810, %v9473, %v9480
  %v9482 = vrot.slane %v9189, 3
  %v9483 = vsel %vm6810, %v9476, %v9482
  %v9484 = vrot.slane %v9190, 3
  %v9485 = vrot.slane %v9193, 3
  %v9486 = vsel %vm6810, %v9484, %v9485
  %v9487 = vrot.slane %v9191, 3
  %v9488 = vrot.slane %v9194, 3
  %v9489 = vsel %vm6810, %v9487, %v9488
  %v9490 = vrot.slane %v9192, 3
  %v9491 = vrot.slane %v9195, 3
  %v9492 = vsel %vm6810, %v9490, %v9491
  %v9493 = vrot.slane %v9196, 3
  %v9494 = vsel %vm6810, %v9485, %v9493
  %v9495 = vrot.slane %v9197, 3
  %v9496 = vsel %vm6810, %v9488, %v9495
  %v9497 = vrot.slane %v9198, 3
  %v9498 = vsel %vm6810, %v9491, %v9497
  %v9499 = vrot.slane %v9199, 3
  %v9500 = vrot.slane %v9202, 3
  %v9501 = vsel %vm6810, %v9499, %v9500
  %v9502 = vrot.slane %v9200, 3
  %v9503 = vrot.slane %v9203, 3
  %v9504 = vsel %vm6810, %v9502, %v9503
  %v9505 = vrot.slane %v9201, 3
  %v9506 = vrot.slane %v9204, 3
  %v9507 = vsel %vm6810, %v9505, %v9506
  %v9508 = vrot.slane %v9205, 3
  %v9509 = vsel %vm6810, %v9500, %v9508
  %v9510 = vrot.slane %v9206, 3
  %v9511 = vsel %vm6810, %v9503, %v9510
  %v9512 = vrot.slane %v9207, 3
  %v9513 = vsel %vm6810, %v9506, %v9512
  %v9514 = vrot.slane %v9208, 3
  %v9515 = vrot.slane %v9211, 3
  %v9516 = vsel %vm6810, %v9514, %v9515
  %v9517 = vrot.slane %v9209, 3
  %v9518 = vrot.slane %v9212, 3
  %v9519 = vsel %vm6810, %v9517, %v9518
  %v9520 = vrot.slane %v9210, 3
  %v9521 = vrot.slane %v9213, 3
  %v9522 = vsel %vm6810, %v9520, %v9521
  %v9523 = vrot.slane %v9214, 3
  %v9524 = vsel %vm6810, %v9515, %v9523
  %v9525 = vrot.slane %v9215, 3
  %v9526 = vsel %vm6810, %v9518, %v9525
  %v9527 = vrot.slane %v9216, 3
  %v9528 = vsel %vm6810, %v9521, %v9527
  %v9529 = vrot.slane %v9217, 3
  %v9530 = vrot.slane %v9220, 3
  %v9531 = vsel %vm6810, %v9529, %v9530
  %v9532 = vrot.slane %v9218, 3
  %v9533 = vrot.slane %v9221, 3
  %v9534 = vsel %vm6810, %v9532, %v9533
  %v9535 = vrot.slane %v9219, 3
  %v9536 = vrot.slane %v9222, 3
  %v9537 = vsel %vm6810, %v9535, %v9536
  %v9538 = vrot.slane %v9223, 3
  %v9539 = vsel %vm6810, %v9530, %v9538
  %v9540 = vrot.slane %v9224, 3
  %v9541 = vsel %vm6810, %v9533, %v9540
  %v9542 = vrot.slane %v9225, 3
  %v9543 = vsel %vm6810, %v9536, %v9542
  %v9544 = vrot.slane %v9226, 3
  %v9545 = vrot.slane %v9229, 3
  %v9546 = vsel %vm6810, %v9544, %v9545
  %v9547 = vrot.slane %v9227, 3
  %v9548 = vrot.slane %v9230, 3
  %v9549 = vsel %vm6810, %v9547, %v9548
  %v9550 = vrot.slane %v9228, 3
  %v9551 = vrot.slane %v9231, 3
  %v9552 = vsel %vm6810, %v9550, %v9551
  %v9553 = vrot.slane %v9232, 3
  %v9554 = vsel %vm6810, %v9545, %v9553
  %v9555 = vrot.slane %v9233, 3
  %v9556 = vsel %vm6810, %v9548, %v9555
  %v9557 = vrot.slane %v9234, 3
  %v9558 = vsel %vm6810, %v9551, %v9557
  %v9559 = vrot.slane %v9235, 3
  %v9560 = vrot.slane %v9238, 3
  %v9561 = vsel %vm6810, %v9559, %v9560
  %v9562 = vrot.slane %v9236, 3
  %v9563 = vrot.slane %v9239, 3
  %v9564 = vsel %vm6810, %v9562, %v9563
  %v9565 = vrot.slane %v9237, 3
  %v9566 = vrot.slane %v9240, 3
  %v9567 = vsel %vm6810, %v9565, %v9566
  %v9568 = vrot.slane %v9241, 3
  %v9569 = vsel %vm6810, %v9560, %v9568
  %v9570 = vrot.slane %v9242, 3
  %v9571 = vsel %vm6810, %v9563, %v9570
  %v9572 = vrot.slane %v9243, 3
  %v9573 = vsel %vm6810, %v9566, %v9572
  %v9574 = vrot.slane %v9244, 3
  %v9575 = vrot.slane %v9247, 3
  %v9576 = vsel %vm6810, %v9574, %v9575
  %v9577 = vrot.slane %v9245, 3
  %v9578 = vrot.slane %v9248, 3
  %v9579 = vsel %vm6810, %v9577, %v9578
  %v9580 = vrot.slane %v9246, 3
  %v9581 = vrot.slane %v9249, 3
  %v9582 = vsel %vm6810, %v9580, %v9581
  %v9583 = vrot.slane %v9250, 3
  %v9584 = vsel %vm6810, %v9575, %v9583
  %v9585 = vrot.slane %v9251, 3
  %v9586 = vsel %vm6810, %v9578, %v9585
  %v9587 = vrot.slane %v9252, 3
  %v9588 = vsel %vm6810, %v9581, %v9587
  %v9673 = vadd.f32 %v9031, %v9381
  %v9674 = vadd.f32 %v9032, %v9384
  %v9675 = vadd.f32 %v9033, %v9387
  %v9676 = vadd.f32 %v9034, %v9389
  %v9677 = vadd.f32 %v9035, %v9391
  %v9678 = vadd.f32 %v9036, %v9393
  %v9679 = vadd.f32 %v9037, %v9396
  %v9680 = vadd.f32 %v9038, %v9399
  %v9681 = vadd.f32 %v9039, %v9402
  %v9682 = vadd.f32 %v9040, %v9404
  %v9683 = vadd.f32 %v9041, %v9406
  %v9684 = vadd.f32 %v9042, %v9408
  %v9685 = vadd.f32 %v9043, %v9411
  %v9686 = vadd.f32 %v9044, %v9414
  %v9687 = vadd.f32 %v9045, %v9417
  %v9688 = vadd.f32 %v9046, %v9419
  %v9689 = vadd.f32 %v9047, %v9421
  %v9690 = vadd.f32 %v9048, %v9423
  %v9691 = vadd.f32 %v9049, %v9426
  %v9692 = vadd.f32 %v9050, %v9429
  %v9693 = vadd.f32 %v9051, %v9432
  %v9694 = vadd.f32 %v9052, %v9434
  %v9695 = vadd.f32 %v9053, %v9436
  %v9696 = vadd.f32 %v9054, %v9438
  %v9697 = vadd.f32 %v9055, %v9441
  %v9698 = vadd.f32 %v9056, %v9444
  %v9699 = vadd.f32 %v9057, %v9447
  %v9700 = vadd.f32 %v9058, %v9449
  %v9701 = vadd.f32 %v9059, %v9451
  %v9702 = vadd.f32 %v9060, %v9453
  %v9703 = vadd.f32 %v9061, %v9456
  %v9704 = vadd.f32 %v9062, %v9459
  %v9705 = vadd.f32 %v9063, %v9462
  %v9706 = vadd.f32 %v9064, %v9464
  %v9707 = vadd.f32 %v9065, %v9466
  %v9708 = vadd.f32 %v9066, %v9468
  %v9709 = vadd.f32 %v9067, %v9471
  %v9710 = vadd.f32 %v9068, %v9474
  %v9711 = vadd.f32 %v9069, %v9477
  %v9712 = vadd.f32 %v9070, %v9479
  %v9713 = vadd.f32 %v9071, %v9481
  %v9714 = vadd.f32 %v9072, %v9483
  %v9715 = vadd.f32 %v9073, %v9486
  %v9716 = vadd.f32 %v9074, %v9489
  %v9717 = vadd.f32 %v9075, %v9492
  %v9718 = vadd.f32 %v9076, %v9494
  %v9719 = vadd.f32 %v9077, %v9496
  %v9720 = vadd.f32 %v9078, %v9498
  %v9721 = vadd.f32 %v9079, %v9501
  %v9722 = vadd.f32 %v9080, %v9504
  %v9723 = vadd.f32 %v9081, %v9507
  %v9724 = vadd.f32 %v9082, %v9509
  %v9725 = vadd.f32 %v9083, %v9511
  %v9726 = vadd.f32 %v9084, %v9513
  %v9727 = vadd.f32 %v9085, %v9516
  %v9728 = vadd.f32 %v9086, %v9519
  %v9729 = vadd.f32 %v9087, %v9522
  %v9730 = vadd.f32 %v9088, %v9524
  %v9731 = vadd.f32 %v9089, %v9526
  %v9732 = vadd.f32 %v9090, %v9528
  %v9733 = vadd.f32 %v9091, %v9531
  %v9734 = vadd.f32 %v9092, %v9534
  %v9735 = vadd.f32 %v9093, %v9537
  %v9736 = vadd.f32 %v9094, %v9539
  %v9737 = vadd.f32 %v9095, %v9541
  %v9738 = vadd.f32 %v9096, %v9543
  %v9739 = vadd.f32 %v9097, %v9546
  %v9740 = vadd.f32 %v9098, %v9549
  %v9741 = vadd.f32 %v9099, %v9552
  %v9742 = vadd.f32 %v9100, %v9554
  %v9743 = vadd.f32 %v9101, %v9556
  %v9744 = vadd.f32 %v9102, %v9558
  %v9745 = vadd.f32 %v9103, %v9561
  %v9746 = vadd.f32 %v9104, %v9564
  %v9747 = vadd.f32 %v9105, %v9567
  %v9748 = vadd.f32 %v9106, %v9569
  %v9749 = vadd.f32 %v9107, %v9571
  %v9750 = vadd.f32 %v9108, %v9573
  %v9751 = vadd.f32 %v9109, %v9576
  %v9752 = vadd.f32 %v9110, %v9579
  %v9753 = vadd.f32 %v9111, %v9582
  %v9754 = vadd.f32 %v9112, %v9584
  %v9755 = vadd.f32 %v9113, %v9586
  %v9756 = vadd.f32 %v9114, %v9588
  %v9757 = vlaneseq
  %v9758 = vshrl.u32 %v9757, 7
  %v9759 = vsub.s32 4, %v9758
  %v9760 = vrot.slane %v892, %v9759
  %v9761 = vlaneseq
  %v9762 = vshrl.u32 %v9761, 7
  %v9763 = vsub.s32 4, %v9762
  %v9764 = vrot.slane %v893, %v9763
  %v9765 = vlaneseq
  %v9766 = vshrl.u32 %v9765, 7
  %v9767 = vsub.s32 4, %v9766
  %v9768 = vrot.slane %v894, %v9767
  %v9769 = vmul.f32 %v730, %v9760
  %v9770 = vmul.f32 %v731, %v9764
  %v9771 = vmul.f32 %v732, %v9768
  %v9772 = vmul.f32 %v733, %v9760
  %v9773 = vmul.f32 %v734, %v9764
  %v9774 = vmul.f32 %v735, %v9768
  %v9775 = vmul.f32 %v736, %v9760
  %v9776 = vmul.f32 %v737, %v9764
  %v9777 = vmul.f32 %v738, %v9768
  %v9778 = vmul.f32 %v739, %v9760
  %v9779 = vmul.f32 %v740, %v9764
  %v9780 = vmul.f32 %v741, %v9768
  %v9781 = vmul.f32 %v742, %v9760
  %v9782 = vmul.f32 %v743, %v9764
  %v9783 = vmul.f32 %v744, %v9768
  %v9784 = vmul.f32 %v745, %v9760
  %v9785 = vmul.f32 %v746, %v9764
  %v9786 = vmul.f32 %v747, %v9768
  %v9787 = vmul.f32 %v748, %v9760
  %v9788 = vmul.f32 %v749, %v9764
  %v9789 = vmul.f32 %v750, %v9768
  %v9790 = vmul.f32 %v751, %v9760
  %v9791 = vmul.f32 %v752, %v9764
  %v9792 = vmul.f32 %v753, %v9768
  %v9793 = vmul.f32 %v754, %v9760
  %v9794 = vmul.f32 %v755, %v9764
  %v9795 = vmul.f32 %v756, %v9768
  %v9796 = vmul.f32 %v757, %v9760
  %v9797 = vmul.f32 %v758, %v9764
  %v9798 = vmul.f32 %v759, %v9768
  %v9799 = vmul.f32 %v760, %v9760
  %v9800 = vmul.f32 %v761, %v9764
  %v9801 = vmul.f32 %v762, %v9768
  %v9802 = vmul.f32 %v763, %v9760
  %v9803 = vmul.f32 %v764, %v9764
  %v9804 = vmul.f32 %v765, %v9768
  %v9805 = vmul.f32 %v766, %v9760
  %v9806 = vmul.f32 %v767, %v9764
  %v9807 = vmul.f32 %v768, %v9768
  %v9808 = vmul.f32 %v769, %v9760
  %v9809 = vmul.f32 %v770, %v9764
  %v9810 = vmul.f32 %v771, %v9768
  %v9811 = vmul.f32 %v772, %v9760
  %v9812 = vmul.f32 %v773, %v9764
  %v9813 = vmul.f32 %v774, %v9768
  %v9814 = vmul.f32 %v775, %v9760
  %v9815 = vmul.f32 %v776, %v9764
  %v9816 = vmul.f32 %v777, %v9768
  %v9817 = vmul.f32 %v778, %v9760
  %v9818 = vmul.f32 %v779, %v9764
  %v9819 = vmul.f32 %v780, %v9768
  %v9820 = vmul.f32 %v781, %v9760
  %v9821 = vmul.f32 %v782, %v9764
  %v9822 = vmul.f32 %v783, %v9768
  %v9823 = vmul.f32 %v784, %v9760
  %v9824 = vmul.f32 %v785, %v9764
  %v9825 = vmul.f32 %v786, %v9768
  %v9826 = vmul.f32 %v787, %v9760
  %v9827 = vmul.f32 %v788, %v9764
  %v9828 = vmul.f32 %v789, %v9768
  %v9829 = vmul.f32 %v790, %v9760
  %v9830 = vmul.f32 %v791, %v9764
  %v9831 = vmul.f32 %v792, %v9768
  %v9832 = vmul.f32 %v793, %v9760
  %v9833 = vmul.f32 %v794, %v9764
  %v9834 = vmul.f32 %v795, %v9768
  %v9835 = vmul.f32 %v796, %v9760
  %v9836 = vmul.f32 %v797, %v9764
  %v9837 = vmul.f32 %v798, %v9768
  %v9838 = vmul.f32 %v799, %v9760
  %v9839 = vmul.f32 %v800, %v9764
  %v9840 = vmul.f32 %v801, %v9768
  %v9841 = vmul.f32 %v802, %v9760
  %v9842 = vmul.f32 %v803, %v9764
  %v9843 = vmul.f32 %v804, %v9768
  %v9844 = vmul.f32 %v805, %v9760
  %v9845 = vmul.f32 %v806, %v9764
  %v9846 = vmul.f32 %v807, %v9768
  %v9847 = vmul.f32 %v808, %v9760
  %v9848 = vmul.f32 %v809, %v9764
  %v9849 = vmul.f32 %v810, %v9768
  %v9850 = vmul.f32 %v811, %v9760
  %v9851 = vmul.f32 %v812, %v9764
  %v9852 = vmul.f32 %v813, %v9768
  %v9853 = vmul.f32 %v814, %v9760
  %v9854 = vmul.f32 %v815, %v9764
  %v9855 = vmul.f32 %v816, %v9768
  %v9856 = vmul.f32 %v817, %v9760
  %v9857 = vmul.f32 %v818, %v9764
  %v9858 = vmul.f32 %v819, %v9768
  %v9859 = vmul.f32 %v820, %v9760
  %v9860 = vmul.f32 %v821, %v9764
  %v9861 = vmul.f32 %v822, %v9768
  %v9862 = vmul.f32 %v823, %v9760
  %v9863 = vmul.f32 %v824, %v9764
  %v9864 = vmul.f32 %v825, %v9768
  %v9865 = vmul.f32 %v826, %v9760
  %v9866 = vmul.f32 %v827, %v9764
  %v9867 = vmul.f32 %v828, %v9768
  %v9868 = vmul.f32 %v829, %v9760
  %v9869 = vmul.f32 %v830, %v9764
  %v9870 = vmul.f32 %v831, %v9768
  %v9871 = vmul.f32 %v832, %v9760
  %v9872 = vmul.f32 %v833, %v9764
  %v9873 = vmul.f32 %v834, %v9768
  %v9874 = vmul.f32 %v835, %v9760
  %v9875 = vmul.f32 %v836, %v9764
  %v9876 = vmul.f32 %v837, %v9768
  %v9877 = vmul.f32 %v838, %v9760
  %v9878 = vmul.f32 %v839, %v9764
  %v9879 = vmul.f32 %v840, %v9768
  %v9880 = vmul.f32 %v841, %v9760
  %v9881 = vmul.f32 %v842, %v9764
  %v9882 = vmul.f32 %v843, %v9768
  %v9883 = vmul.f32 %v844, %v9760
  %v9884 = vmul.f32 %v845, %v9764
  %v9885 = vmul.f32 %v846, %v9768
  %v9886 = vmul.f32 %v847, %v9760
  %v9887 = vmul.f32 %v848, %v9764
  %v9888 = vmul.f32 %v849, %v9768
  %v9889 = vmul.f32 %v850, %v9760
  %v9890 = vmul.f32 %v851, %v9764
  %v9891 = vmul.f32 %v852, %v9768
  %v9892 = vmul.f32 %v853, %v9760
  %v9893 = vmul.f32 %v854, %v9764
  %v9894 = vmul.f32 %v855, %v9768
  %vm10021 = vcmask 1043456
  %v10022 = vrot.slane %v9769, 4
  %v10023 = vrot.slane %v9772, 4
  %v10024 = vsel %vm10021, %v10022, %v10023
  %v10025 = vrot.slane %v9770, 4
  %v10026 = vrot.slane %v9773, 4
  %v10027 = vsel %vm10021, %v10025, %v10026
  %v10028 = vrot.slane %v9771, 4
  %v10029 = vrot.slane %v9774, 4
  %v10030 = vsel %vm10021, %v10028, %v10029
  %v10031 = vrot.slane %v9775, 4
  %v10032 = vsel %vm10021, %v10023, %v10031
  %v10033 = vrot.slane %v9776, 4
  %v10034 = vsel %vm10021, %v10026, %v10033
  %v10035 = vrot.slane %v9777, 4
  %v10036 = vsel %vm10021, %v10029, %v10035
  %v10037 = vrot.slane %v9778, 4
  %v10038 = vrot.slane %v9781, 4
  %v10039 = vsel %vm10021, %v10037, %v10038
  %v10040 = vrot.slane %v9779, 4
  %v10041 = vrot.slane %v9782, 4
  %v10042 = vsel %vm10021, %v10040, %v10041
  %v10043 = vrot.slane %v9780, 4
  %v10044 = vrot.slane %v9783, 4
  %v10045 = vsel %vm10021, %v10043, %v10044
  %v10046 = vrot.slane %v9784, 4
  %v10047 = vsel %vm10021, %v10038, %v10046
  %v10048 = vrot.slane %v9785, 4
  %v10049 = vsel %vm10021, %v10041, %v10048
  %v10050 = vrot.slane %v9786, 4
  %v10051 = vsel %vm10021, %v10044, %v10050
  %v10052 = vrot.slane %v9787, 4
  %v10053 = vrot.slane %v9790, 4
  %v10054 = vsel %vm10021, %v10052, %v10053
  %v10055 = vrot.slane %v9788, 4
  %v10056 = vrot.slane %v9791, 4
  %v10057 = vsel %vm10021, %v10055, %v10056
  %v10058 = vrot.slane %v9789, 4
  %v10059 = vrot.slane %v9792, 4
  %v10060 = vsel %vm10021, %v10058, %v10059
  %v10061 = vrot.slane %v9793, 4
  %v10062 = vsel %vm10021, %v10053, %v10061
  %v10063 = vrot.slane %v9794, 4
  %v10064 = vsel %vm10021, %v10056, %v10063
  %v10065 = vrot.slane %v9795, 4
  %v10066 = vsel %vm10021, %v10059, %v10065
  %v10067 = vrot.slane %v9796, 4
  %v10068 = vrot.slane %v9799, 4
  %v10069 = vsel %vm10021, %v10067, %v10068
  %v10070 = vrot.slane %v9797, 4
  %v10071 = vrot.slane %v9800, 4
  %v10072 = vsel %vm10021, %v10070, %v10071
  %v10073 = vrot.slane %v9798, 4
  %v10074 = vrot.slane %v9801, 4
  %v10075 = vsel %vm10021, %v10073, %v10074
  %v10076 = vrot.slane %v9802, 4
  %v10077 = vsel %vm10021, %v10068, %v10076
  %v10078 = vrot.slane %v9803, 4
  %v10079 = vsel %vm10021, %v10071, %v10078
  %v10080 = vrot.slane %v9804, 4
  %v10081 = vsel %vm10021, %v10074, %v10080
  %v10082 = vrot.slane %v9805, 4
  %v10083 = vrot.slane %v9808, 4
  %v10084 = vsel %vm10021, %v10082, %v10083
  %v10085 = vrot.slane %v9806, 4
  %v10086 = vrot.slane %v9809, 4
  %v10087 = vsel %vm10021, %v10085, %v10086
  %v10088 = vrot.slane %v9807, 4
  %v10089 = vrot.slane %v9810, 4
  %v10090 = vsel %vm10021, %v10088, %v10089
  %v10091 = vrot.slane %v9811, 4
  %v10092 = vsel %vm10021, %v10083, %v10091
  %v10093 = vrot.slane %v9812, 4
  %v10094 = vsel %vm10021, %v10086, %v10093
  %v10095 = vrot.slane %v9813, 4
  %v10096 = vsel %vm10021, %v10089, %v10095
  %v10097 = vrot.slane %v9814, 4
  %v10098 = vrot.slane %v9817, 4
  %v10099 = vsel %vm10021, %v10097, %v10098
  %v10100 = vrot.slane %v9815, 4
  %v10101 = vrot.slane %v9818, 4
  %v10102 = vsel %vm10021, %v10100, %v10101
  %v10103 = vrot.slane %v9816, 4
  %v10104 = vrot.slane %v9819, 4
  %v10105 = vsel %vm10021, %v10103, %v10104
  %v10106 = vrot.slane %v9820, 4
  %v10107 = vsel %vm10021, %v10098, %v10106
  %v10108 = vrot.slane %v9821, 4
  %v10109 = vsel %vm10021, %v10101, %v10108
  %v10110 = vrot.slane %v9822, 4
  %v10111 = vsel %vm10021, %v10104, %v10110
  %v10112 = vrot.slane %v9823, 4
  %v10113 = vrot.slane %v9826, 4
  %v10114 = vsel %vm10021, %v10112, %v10113
  %v10115 = vrot.slane %v9824, 4
  %v10116 = vrot.slane %v9827, 4
  %v10117 = vsel %vm10021, %v10115, %v10116
  %v10118 = vrot.slane %v9825, 4
  %v10119 = vrot.slane %v9828, 4
  %v10120 = vsel %vm10021, %v10118, %v10119
  %v10121 = vrot.slane %v9829, 4
  %v10122 = vsel %vm10021, %v10113, %v10121
  %v10123 = vrot.slane %v9830, 4
  %v10124 = vsel %vm10021, %v10116, %v10123
  %v10125 = vrot.slane %v9831, 4
  %v10126 = vsel %vm10021, %v10119, %v10125
  %v10127 = vrot.slane %v9832, 4
  %v10128 = vrot.slane %v9835, 4
  %v10129 = vsel %vm10021, %v10127, %v10128
  %v10130 = vrot.slane %v9833, 4
  %v10131 = vrot.slane %v9836, 4
  %v10132 = vsel %vm10021, %v10130, %v10131
  %v10133 = vrot.slane %v9834, 4
  %v10134 = vrot.slane %v9837, 4
  %v10135 = vsel %vm10021, %v10133, %v10134
  %v10136 = vrot.slane %v9838, 4
  %v10137 = vsel %vm10021, %v10128, %v10136
  %v10138 = vrot.slane %v9839, 4
  %v10139 = vsel %vm10021, %v10131, %v10138
  %v10140 = vrot.slane %v9840, 4
  %v10141 = vsel %vm10021, %v10134, %v10140
  %v10142 = vrot.slane %v9841, 4
  %v10143 = vrot.slane %v9844, 4
  %v10144 = vsel %vm10021, %v10142, %v10143
  %v10145 = vrot.slane %v9842, 4
  %v10146 = vrot.slane %v9845, 4
  %v10147 = vsel %vm10021, %v10145, %v10146
  %v10148 = vrot.slane %v9843, 4
  %v10149 = vrot.slane %v9846, 4
  %v10150 = vsel %vm10021, %v10148, %v10149
  %v10151 = vrot.slane %v9847, 4
  %v10152 = vsel %vm10021, %v10143, %v10151
  %v10153 = vrot.slane %v9848, 4
  %v10154 = vsel %vm10021, %v10146, %v10153
  %v10155 = vrot.slane %v9849, 4
  %v10156 = vsel %vm10021, %v10149, %v10155
  %v10157 = vrot.slane %v9850, 4
  %v10158 = vrot.slane %v9853, 4
  %v10159 = vsel %vm10021, %v10157, %v10158
  %v10160 = vrot.slane %v9851, 4
  %v10161 = vrot.slane %v9854, 4
  %v10162 = vsel %vm10021, %v10160, %v10161
  %v10163 = vrot.slane %v9852, 4
  %v10164 = vrot.slane %v9855, 4
  %v10165 = vsel %vm10021, %v10163, %v10164
  %v10166 = vrot.slane %v9856, 4
  %v10167 = vsel %vm10021, %v10158, %v10166
  %v10168 = vrot.slane %v9857, 4
  %v10169 = vsel %vm10021, %v10161, %v10168
  %v10170 = vrot.slane %v9858, 4
  %v10171 = vsel %vm10021, %v10164, %v10170
  %v10172 = vrot.slane %v9859, 4
  %v10173 = vrot.slane %v9862, 4
  %v10174 = vsel %vm10021, %v10172, %v10173
  %v10175 = vrot.slane %v9860, 4
  %v10176 = vrot.slane %v9863, 4
  %v10177 = vsel %vm10021, %v10175, %v10176
  %v10178 = vrot.slane %v9861, 4
  %v10179 = vrot.slane %v9864, 4
  %v10180 = vsel %vm10021, %v10178, %v10179
  %v10181 = vrot.slane %v9865, 4
  %v10182 = vsel %vm10021, %v10173, %v10181
  %v10183 = vrot.slane %v9866, 4
  %v10184 = vsel %vm10021, %v10176, %v10183
  %v10185 = vrot.slane %v9867, 4
  %v10186 = vsel %vm10021, %v10179, %v10185
  %v10187 = vrot.slane %v9868, 4
  %v10188 = vrot.slane %v9871, 4
  %v10189 = vsel %vm10021, %v10187, %v10188
  %v10190 = vrot.slane %v9869, 4
  %v10191 = vrot.slane %v9872, 4
  %v10192 = vsel %vm10021, %v10190, %v10191
  %v10193 = vrot.slane %v9870, 4
  %v10194 = vrot.slane %v9873, 4
  %v10195 = vsel %vm10021, %v10193, %v10194
  %v10196 = vrot.slane %v9874, 4
  %v10197 = vsel %vm10021, %v10188, %v10196
  %v10198 = vrot.slane %v9875, 4
  %v10199 = vsel %vm10021, %v10191, %v10198
  %v10200 = vrot.slane %v9876, 4
  %v10201 = vsel %vm10021, %v10194, %v10200
  %v10202 = vrot.slane %v9877, 4
  %v10203 = vrot.slane %v9880, 4
  %v10204 = vsel %vm10021, %v10202, %v10203
  %v10205 = vrot.slane %v9878, 4
  %v10206 = vrot.slane %v9881, 4
  %v10207 = vsel %vm10021, %v10205, %v10206
  %v10208 = vrot.slane %v9879, 4
  %v10209 = vrot.slane %v9882, 4
  %v10210 = vsel %vm10021, %v10208, %v10209
  %v10211 = vrot.slane %v9883, 4
  %v10212 = vsel %vm10021, %v10203, %v10211
  %v10213 = vrot.slane %v9884, 4
  %v10214 = vsel %vm10021, %v10206, %v10213
  %v10215 = vrot.slane %v9885, 4
  %v10216 = vsel %vm10021, %v10209, %v10215
  %v10217 = vrot.slane %v9886, 4
  %v10218 = vrot.slane %v9889, 4
  %v10219 = vsel %vm10021, %v10217, %v10218
  %v10220 = vrot.slane %v9887, 4
  %v10221 = vrot.slane %v9890, 4
  %v10222 = vsel %vm10021, %v10220, %v10221
  %v10223 = vrot.slane %v9888, 4
  %v10224 = vrot.slane %v9891, 4
  %v10225 = vsel %vm10021, %v10223, %v10224
  %v10226 = vrot.slane %v9892, 4
  %v10227 = vsel %vm10021, %v10218, %v10226
  %v10228 = vrot.slane %v9893, 4
  %v10229 = vsel %vm10021, %v10221, %v10228
  %v10230 = vrot.slane %v9894, 4
  %v10231 = vsel %vm10021, %v10224, %v10230
  %v10316 = vadd.f32 %v9673, %v10024
  %v10317 = vadd.f32 %v9674, %v10027
  %v10318 = vadd.f32 %v9675, %v10030
  %v10319 = vadd.f32 %v9676, %v10032
  %v10320 = vadd.f32 %v9677, %v10034
  %v10321 = vadd.f32 %v9678, %v10036
  %v10322 = vadd.f32 %v9679, %v10039
  %v10323 = vadd.f32 %v9680, %v10042
  %v10324 = vadd.f32 %v9681, %v10045
  %v10325 = vadd.f32 %v9682, %v10047
  %v10326 = vadd.f32 %v9683, %v10049
  %v10327 = vadd.f32 %v9684, %v10051
  %v10328 = vadd.f32 %v9685, %v10054
  %v10329 = vadd.f32 %v9686, %v10057
  %v10330 = vadd.f32 %v9687, %v10060
  %v10331 = vadd.f32 %v9688, %v10062
  %v10332 = vadd.f32 %v9689, %v10064
  %v10333 = vadd.f32 %v9690, %v10066
  %v10334 = vadd.f32 %v9691, %v10069
  %v10335 = vadd.f32 %v9692, %v10072
  %v10336 = vadd.f32 %v9693, %v10075
  %v10337 = vadd.f32 %v9694, %v10077
  %v10338 = vadd.f32 %v9695, %v10079
  %v10339 = vadd.f32 %v9696, %v10081
  %v10340 = vadd.f32 %v9697, %v10084
  %v10341 = vadd.f32 %v9698, %v10087
  %v10342 = vadd.f32 %v9699, %v10090
  %v10343 = vadd.f32 %v9700, %v10092
  %v10344 = vadd.f32 %v9701, %v10094
  %v10345 = vadd.f32 %v9702, %v10096
  %v10346 = vadd.f32 %v9703, %v10099
  %v10347 = vadd.f32 %v9704, %v10102
  %v10348 = vadd.f32 %v9705, %v10105
  %v10349 = vadd.f32 %v9706, %v10107
  %v10350 = vadd.f32 %v9707, %v10109
  %v10351 = vadd.f32 %v9708, %v10111
  %v10352 = vadd.f32 %v9709, %v10114
  %v10353 = vadd.f32 %v9710, %v10117
  %v10354 = vadd.f32 %v9711, %v10120
  %v10355 = vadd.f32 %v9712, %v10122
  %v10356 = vadd.f32 %v9713, %v10124
  %v10357 = vadd.f32 %v9714, %v10126
  %v10358 = vadd.f32 %v9715, %v10129
  %v10359 = vadd.f32 %v9716, %v10132
  %v10360 = vadd.f32 %v9717, %v10135
  %v10361 = vadd.f32 %v9718, %v10137
  %v10362 = vadd.f32 %v9719, %v10139
  %v10363 = vadd.f32 %v9720, %v10141
  %v10364 = vadd.f32 %v9721, %v10144
  %v10365 = vadd.f32 %v9722, %v10147
  %v10366 = vadd.f32 %v9723, %v10150
  %v10367 = vadd.f32 %v9724, %v10152
  %v10368 = vadd.f32 %v9725, %v10154
  %v10369 = vadd.f32 %v9726, %v10156
  %v10370 = vadd.f32 %v9727, %v10159
  %v10371 = vadd.f32 %v9728, %v10162
  %v10372 = vadd.f32 %v9729, %v10165
  %v10373 = vadd.f32 %v9730, %v10167
  %v10374 = vadd.f32 %v9731, %v10169
  %v10375 = vadd.f32 %v9732, %v10171
  %v10376 = vadd.f32 %v9733, %v10174
  %v10377 = vadd.f32 %v9734, %v10177
  %v10378 = vadd.f32 %v9735, %v10180
  %v10379 = vadd.f32 %v9736, %v10182
  %v10380 = vadd.f32 %v9737, %v10184
  %v10381 = vadd.f32 %v9738, %v10186
  %v10382 = vadd.f32 %v9739, %v10189
  %v10383 = vadd.f32 %v9740, %v10192
  %v10384 = vadd.f32 %v9741, %v10195
  %v10385 = vadd.f32 %v9742, %v10197
  %v10386 = vadd.f32 %v9743, %v10199
  %v10387 = vadd.f32 %v9744, %v10201
  %v10388 = vadd.f32 %v9745, %v10204
  %v10389 = vadd.f32 %v9746, %v10207
  %v10390 = vadd.f32 %v9747, %v10210
  %v10391 = vadd.f32 %v9748, %v10212
  %v10392 = vadd.f32 %v9749, %v10214
  %v10393 = vadd.f32 %v9750, %v10216
  %v10394 = vadd.f32 %v9751, %v10219
  %v10395 = vadd.f32 %v9752, %v10222
  %v10396 = vadd.f32 %v9753, %v10225
  %v10397 = vadd.f32 %v9754, %v10227
  %v10398 = vadd.f32 %v9755, %v10229
  %v10399 = vadd.f32 %v9756, %v10231
  %v10400 = vlaneseq
  %v10401 = vshrl.u32 %v10400, 7
  %v10402 = vsub.s32 1, %v10401
  %v10403 = vrot.slane %v895, %v10402
  %v10404 = vlaneseq
  %v10405 = vshrl.u32 %v10404, 7
  %v10406 = vsub.s32 1, %v10405
  %v10407 = vrot.slane %v896, %v10406
  %v10408 = vlaneseq
  %v10409 = vshrl.u32 %v10408, 7
  %v10410 = vsub.s32 1, %v10409
  %v10411 = vrot.slane %v897, %v10410
  %v10412 = vmul.f32 %v739, %v10403
  %v10413 = vmul.f32 %v740, %v10407
  %v10414 = vmul.f32 %v741, %v10411
  %v10415 = vmul.f32 %v742, %v10403
  %v10416 = vmul.f32 %v743, %v10407
  %v10417 = vmul.f32 %v744, %v10411
  %v10418 = vmul.f32 %v745, %v10403
  %v10419 = vmul.f32 %v746, %v10407
  %v10420 = vmul.f32 %v747, %v10411
  %v10421 = vmul.f32 %v748, %v10403
  %v10422 = vmul.f32 %v749, %v10407
  %v10423 = vmul.f32 %v750, %v10411
  %v10424 = vmul.f32 %v751, %v10403
  %v10425 = vmul.f32 %v752, %v10407
  %v10426 = vmul.f32 %v753, %v10411
  %v10427 = vmul.f32 %v754, %v10403
  %v10428 = vmul.f32 %v755, %v10407
  %v10429 = vmul.f32 %v756, %v10411
  %v10430 = vmul.f32 %v757, %v10403
  %v10431 = vmul.f32 %v758, %v10407
  %v10432 = vmul.f32 %v759, %v10411
  %v10433 = vmul.f32 %v760, %v10403
  %v10434 = vmul.f32 %v761, %v10407
  %v10435 = vmul.f32 %v762, %v10411
  %v10436 = vmul.f32 %v763, %v10403
  %v10437 = vmul.f32 %v764, %v10407
  %v10438 = vmul.f32 %v765, %v10411
  %v10439 = vmul.f32 %v766, %v10403
  %v10440 = vmul.f32 %v767, %v10407
  %v10441 = vmul.f32 %v768, %v10411
  %v10442 = vmul.f32 %v769, %v10403
  %v10443 = vmul.f32 %v770, %v10407
  %v10444 = vmul.f32 %v771, %v10411
  %v10445 = vmul.f32 %v772, %v10403
  %v10446 = vmul.f32 %v773, %v10407
  %v10447 = vmul.f32 %v774, %v10411
  %v10448 = vmul.f32 %v775, %v10403
  %v10449 = vmul.f32 %v776, %v10407
  %v10450 = vmul.f32 %v777, %v10411
  %v10451 = vmul.f32 %v778, %v10403
  %v10452 = vmul.f32 %v779, %v10407
  %v10453 = vmul.f32 %v780, %v10411
  %v10454 = vmul.f32 %v781, %v10403
  %v10455 = vmul.f32 %v782, %v10407
  %v10456 = vmul.f32 %v783, %v10411
  %v10457 = vmul.f32 %v784, %v10403
  %v10458 = vmul.f32 %v785, %v10407
  %v10459 = vmul.f32 %v786, %v10411
  %v10460 = vmul.f32 %v787, %v10403
  %v10461 = vmul.f32 %v788, %v10407
  %v10462 = vmul.f32 %v789, %v10411
  %v10463 = vmul.f32 %v790, %v10403
  %v10464 = vmul.f32 %v791, %v10407
  %v10465 = vmul.f32 %v792, %v10411
  %v10466 = vmul.f32 %v793, %v10403
  %v10467 = vmul.f32 %v794, %v10407
  %v10468 = vmul.f32 %v795, %v10411
  %v10469 = vmul.f32 %v796, %v10403
  %v10470 = vmul.f32 %v797, %v10407
  %v10471 = vmul.f32 %v798, %v10411
  %v10472 = vmul.f32 %v799, %v10403
  %v10473 = vmul.f32 %v800, %v10407
  %v10474 = vmul.f32 %v801, %v10411
  %v10475 = vmul.f32 %v802, %v10403
  %v10476 = vmul.f32 %v803, %v10407
  %v10477 = vmul.f32 %v804, %v10411
  %v10478 = vmul.f32 %v805, %v10403
  %v10479 = vmul.f32 %v806, %v10407
  %v10480 = vmul.f32 %v807, %v10411
  %v10481 = vmul.f32 %v808, %v10403
  %v10482 = vmul.f32 %v809, %v10407
  %v10483 = vmul.f32 %v810, %v10411
  %v10484 = vmul.f32 %v811, %v10403
  %v10485 = vmul.f32 %v812, %v10407
  %v10486 = vmul.f32 %v813, %v10411
  %v10487 = vmul.f32 %v814, %v10403
  %v10488 = vmul.f32 %v815, %v10407
  %v10489 = vmul.f32 %v816, %v10411
  %v10490 = vmul.f32 %v817, %v10403
  %v10491 = vmul.f32 %v818, %v10407
  %v10492 = vmul.f32 %v819, %v10411
  %v10493 = vmul.f32 %v820, %v10403
  %v10494 = vmul.f32 %v821, %v10407
  %v10495 = vmul.f32 %v822, %v10411
  %v10496 = vmul.f32 %v823, %v10403
  %v10497 = vmul.f32 %v824, %v10407
  %v10498 = vmul.f32 %v825, %v10411
  %v10499 = vmul.f32 %v826, %v10403
  %v10500 = vmul.f32 %v827, %v10407
  %v10501 = vmul.f32 %v828, %v10411
  %v10502 = vmul.f32 %v829, %v10403
  %v10503 = vmul.f32 %v830, %v10407
  %v10504 = vmul.f32 %v831, %v10411
  %v10505 = vmul.f32 %v832, %v10403
  %v10506 = vmul.f32 %v833, %v10407
  %v10507 = vmul.f32 %v834, %v10411
  %v10508 = vmul.f32 %v835, %v10403
  %v10509 = vmul.f32 %v836, %v10407
  %v10510 = vmul.f32 %v837, %v10411
  %v10511 = vmul.f32 %v838, %v10403
  %v10512 = vmul.f32 %v839, %v10407
  %v10513 = vmul.f32 %v840, %v10411
  %v10514 = vmul.f32 %v841, %v10403
  %v10515 = vmul.f32 %v842, %v10407
  %v10516 = vmul.f32 %v843, %v10411
  %v10517 = vmul.f32 %v844, %v10403
  %v10518 = vmul.f32 %v845, %v10407
  %v10519 = vmul.f32 %v846, %v10411
  %v10520 = vmul.f32 %v847, %v10403
  %v10521 = vmul.f32 %v848, %v10407
  %v10522 = vmul.f32 %v849, %v10411
  %v10523 = vmul.f32 %v850, %v10403
  %v10524 = vmul.f32 %v851, %v10407
  %v10525 = vmul.f32 %v852, %v10411
  %v10526 = vmul.f32 %v853, %v10403
  %v10527 = vmul.f32 %v854, %v10407
  %v10528 = vmul.f32 %v855, %v10411
  %v10529 = vmul.f32 %v856, %v10403
  %v10530 = vmul.f32 %v857, %v10407
  %v10531 = vmul.f32 %v858, %v10411
  %v10532 = vmul.f32 %v859, %v10403
  %v10533 = vmul.f32 %v860, %v10407
  %v10534 = vmul.f32 %v861, %v10411
  %v10535 = vmul.f32 %v862, %v10403
  %v10536 = vmul.f32 %v863, %v10407
  %v10537 = vmul.f32 %v864, %v10411
  %v10664 = vrot.slane %v10412, 4
  %v10665 = vrot.slane %v10415, 4
  %v10666 = vsel %vm10021, %v10664, %v10665
  %v10667 = vrot.slane %v10413, 4
  %v10668 = vrot.slane %v10416, 4
  %v10669 = vsel %vm10021, %v10667, %v10668
  %v10670 = vrot.slane %v10414, 4
  %v10671 = vrot.slane %v10417, 4
  %v10672 = vsel %vm10021, %v10670, %v10671
  %v10673 = vrot.slane %v10418, 4
  %v10674 = vsel %vm10021, %v10665, %v10673
  %v10675 = vrot.slane %v10419, 4
  %v10676 = vsel %vm10021, %v10668, %v10675
  %v10677 = vrot.slane %v10420, 4
  %v10678 = vsel %vm10021, %v10671, %v10677
  %v10679 = vrot.slane %v10421, 4
  %v10680 = vrot.slane %v10424, 4
  %v10681 = vsel %vm10021, %v10679, %v10680
  %v10682 = vrot.slane %v10422, 4
  %v10683 = vrot.slane %v10425, 4
  %v10684 = vsel %vm10021, %v10682, %v10683
  %v10685 = vrot.slane %v10423, 4
  %v10686 = vrot.slane %v10426, 4
  %v10687 = vsel %vm10021, %v10685, %v10686
  %v10688 = vrot.slane %v10427, 4
  %v10689 = vsel %vm10021, %v10680, %v10688
  %v10690 = vrot.slane %v10428, 4
  %v10691 = vsel %vm10021, %v10683, %v10690
  %v10692 = vrot.slane %v10429, 4
  %v10693 = vsel %vm10021, %v10686, %v10692
  %v10694 = vrot.slane %v10430, 4
  %v10695 = vrot.slane %v10433, 4
  %v10696 = vsel %vm10021, %v10694, %v10695
  %v10697 = vrot.slane %v10431, 4
  %v10698 = vrot.slane %v10434, 4
  %v10699 = vsel %vm10021, %v10697, %v10698
  %v10700 = vrot.slane %v10432, 4
  %v10701 = vrot.slane %v10435, 4
  %v10702 = vsel %vm10021, %v10700, %v10701
  %v10703 = vrot.slane %v10436, 4
  %v10704 = vsel %vm10021, %v10695, %v10703
  %v10705 = vrot.slane %v10437, 4
  %v10706 = vsel %vm10021, %v10698, %v10705
  %v10707 = vrot.slane %v10438, 4
  %v10708 = vsel %vm10021, %v10701, %v10707
  %v10709 = vrot.slane %v10439, 4
  %v10710 = vrot.slane %v10442, 4
  %v10711 = vsel %vm10021, %v10709, %v10710
  %v10712 = vrot.slane %v10440, 4
  %v10713 = vrot.slane %v10443, 4
  %v10714 = vsel %vm10021, %v10712, %v10713
  %v10715 = vrot.slane %v10441, 4
  %v10716 = vrot.slane %v10444, 4
  %v10717 = vsel %vm10021, %v10715, %v10716
  %v10718 = vrot.slane %v10445, 4
  %v10719 = vsel %vm10021, %v10710, %v10718
  %v10720 = vrot.slane %v10446, 4
  %v10721 = vsel %vm10021, %v10713, %v10720
  %v10722 = vrot.slane %v10447, 4
  %v10723 = vsel %vm10021, %v10716, %v10722
  %v10724 = vrot.slane %v10448, 4
  %v10725 = vrot.slane %v10451, 4
  %v10726 = vsel %vm10021, %v10724, %v10725
  %v10727 = vrot.slane %v10449, 4
  %v10728 = vrot.slane %v10452, 4
  %v10729 = vsel %vm10021, %v10727, %v10728
  %v10730 = vrot.slane %v10450, 4
  %v10731 = vrot.slane %v10453, 4
  %v10732 = vsel %vm10021, %v10730, %v10731
  %v10733 = vrot.slane %v10454, 4
  %v10734 = vsel %vm10021, %v10725, %v10733
  %v10735 = vrot.slane %v10455, 4
  %v10736 = vsel %vm10021, %v10728, %v10735
  %v10737 = vrot.slane %v10456, 4
  %v10738 = vsel %vm10021, %v10731, %v10737
  %v10739 = vrot.slane %v10457, 4
  %v10740 = vrot.slane %v10460, 4
  %v10741 = vsel %vm10021, %v10739, %v10740
  %v10742 = vrot.slane %v10458, 4
  %v10743 = vrot.slane %v10461, 4
  %v10744 = vsel %vm10021, %v10742, %v10743
  %v10745 = vrot.slane %v10459, 4
  %v10746 = vrot.slane %v10462, 4
  %v10747 = vsel %vm10021, %v10745, %v10746
  %v10748 = vrot.slane %v10463, 4
  %v10749 = vsel %vm10021, %v10740, %v10748
  %v10750 = vrot.slane %v10464, 4
  %v10751 = vsel %vm10021, %v10743, %v10750
  %v10752 = vrot.slane %v10465, 4
  %v10753 = vsel %vm10021, %v10746, %v10752
  %v10754 = vrot.slane %v10466, 4
  %v10755 = vrot.slane %v10469, 4
  %v10756 = vsel %vm10021, %v10754, %v10755
  %v10757 = vrot.slane %v10467, 4
  %v10758 = vrot.slane %v10470, 4
  %v10759 = vsel %vm10021, %v10757, %v10758
  %v10760 = vrot.slane %v10468, 4
  %v10761 = vrot.slane %v10471, 4
  %v10762 = vsel %vm10021, %v10760, %v10761
  %v10763 = vrot.slane %v10472, 4
  %v10764 = vsel %vm10021, %v10755, %v10763
  %v10765 = vrot.slane %v10473, 4
  %v10766 = vsel %vm10021, %v10758, %v10765
  %v10767 = vrot.slane %v10474, 4
  %v10768 = vsel %vm10021, %v10761, %v10767
  %v10769 = vrot.slane %v10475, 4
  %v10770 = vrot.slane %v10478, 4
  %v10771 = vsel %vm10021, %v10769, %v10770
  %v10772 = vrot.slane %v10476, 4
  %v10773 = vrot.slane %v10479, 4
  %v10774 = vsel %vm10021, %v10772, %v10773
  %v10775 = vrot.slane %v10477, 4
  %v10776 = vrot.slane %v10480, 4
  %v10777 = vsel %vm10021, %v10775, %v10776
  %v10778 = vrot.slane %v10481, 4
  %v10779 = vsel %vm10021, %v10770, %v10778
  %v10780 = vrot.slane %v10482, 4
  %v10781 = vsel %vm10021, %v10773, %v10780
  %v10782 = vrot.slane %v10483, 4
  %v10783 = vsel %vm10021, %v10776, %v10782
  %v10784 = vrot.slane %v10484, 4
  %v10785 = vrot.slane %v10487, 4
  %v10786 = vsel %vm10021, %v10784, %v10785
  %v10787 = vrot.slane %v10485, 4
  %v10788 = vrot.slane %v10488, 4
  %v10789 = vsel %vm10021, %v10787, %v10788
  %v10790 = vrot.slane %v10486, 4
  %v10791 = vrot.slane %v10489, 4
  %v10792 = vsel %vm10021, %v10790, %v10791
  %v10793 = vrot.slane %v10490, 4
  %v10794 = vsel %vm10021, %v10785, %v10793
  %v10795 = vrot.slane %v10491, 4
  %v10796 = vsel %vm10021, %v10788, %v10795
  %v10797 = vrot.slane %v10492, 4
  %v10798 = vsel %vm10021, %v10791, %v10797
  %v10799 = vrot.slane %v10493, 4
  %v10800 = vrot.slane %v10496, 4
  %v10801 = vsel %vm10021, %v10799, %v10800
  %v10802 = vrot.slane %v10494, 4
  %v10803 = vrot.slane %v10497, 4
  %v10804 = vsel %vm10021, %v10802, %v10803
  %v10805 = vrot.slane %v10495, 4
  %v10806 = vrot.slane %v10498, 4
  %v10807 = vsel %vm10021, %v10805, %v10806
  %v10808 = vrot.slane %v10499, 4
  %v10809 = vsel %vm10021, %v10800, %v10808
  %v10810 = vrot.slane %v10500, 4
  %v10811 = vsel %vm10021, %v10803, %v10810
  %v10812 = vrot.slane %v10501, 4
  %v10813 = vsel %vm10021, %v10806, %v10812
  %v10814 = vrot.slane %v10502, 4
  %v10815 = vrot.slane %v10505, 4
  %v10816 = vsel %vm10021, %v10814, %v10815
  %v10817 = vrot.slane %v10503, 4
  %v10818 = vrot.slane %v10506, 4
  %v10819 = vsel %vm10021, %v10817, %v10818
  %v10820 = vrot.slane %v10504, 4
  %v10821 = vrot.slane %v10507, 4
  %v10822 = vsel %vm10021, %v10820, %v10821
  %v10823 = vrot.slane %v10508, 4
  %v10824 = vsel %vm10021, %v10815, %v10823
  %v10825 = vrot.slane %v10509, 4
  %v10826 = vsel %vm10021, %v10818, %v10825
  %v10827 = vrot.slane %v10510, 4
  %v10828 = vsel %vm10021, %v10821, %v10827
  %v10829 = vrot.slane %v10511, 4
  %v10830 = vrot.slane %v10514, 4
  %v10831 = vsel %vm10021, %v10829, %v10830
  %v10832 = vrot.slane %v10512, 4
  %v10833 = vrot.slane %v10515, 4
  %v10834 = vsel %vm10021, %v10832, %v10833
  %v10835 = vrot.slane %v10513, 4
  %v10836 = vrot.slane %v10516, 4
  %v10837 = vsel %vm10021, %v10835, %v10836
  %v10838 = vrot.slane %v10517, 4
  %v10839 = vsel %vm10021, %v10830, %v10838
  %v10840 = vrot.slane %v10518, 4
  %v10841 = vsel %vm10021, %v10833, %v10840
  %v10842 = vrot.slane %v10519, 4
  %v10843 = vsel %vm10021, %v10836, %v10842
  %v10844 = vrot.slane %v10520, 4
  %v10845 = vrot.slane %v10523, 4
  %v10846 = vsel %vm10021, %v10844, %v10845
  %v10847 = vrot.slane %v10521, 4
  %v10848 = vrot.slane %v10524, 4
  %v10849 = vsel %vm10021, %v10847, %v10848
  %v10850 = vrot.slane %v10522, 4
  %v10851 = vrot.slane %v10525, 4
  %v10852 = vsel %vm10021, %v10850, %v10851
  %v10853 = vrot.slane %v10526, 4
  %v10854 = vsel %vm10021, %v10845, %v10853
  %v10855 = vrot.slane %v10527, 4
  %v10856 = vsel %vm10021, %v10848, %v10855
  %v10857 = vrot.slane %v10528, 4
  %v10858 = vsel %vm10021, %v10851, %v10857
  %v10859 = vrot.slane %v10529, 4
  %v10860 = vrot.slane %v10532, 4
  %v10861 = vsel %vm10021, %v10859, %v10860
  %v10862 = vrot.slane %v10530, 4
  %v10863 = vrot.slane %v10533, 4
  %v10864 = vsel %vm10021, %v10862, %v10863
  %v10865 = vrot.slane %v10531, 4
  %v10866 = vrot.slane %v10534, 4
  %v10867 = vsel %vm10021, %v10865, %v10866
  %v10868 = vrot.slane %v10535, 4
  %v10869 = vsel %vm10021, %v10860, %v10868
  %v10870 = vrot.slane %v10536, 4
  %v10871 = vsel %vm10021, %v10863, %v10870
  %v10872 = vrot.slane %v10537, 4
  %v10873 = vsel %vm10021, %v10866, %v10872
  %v10958 = vadd.f32 %v10316, %v10666
  %v10959 = vadd.f32 %v10317, %v10669
  %v10960 = vadd.f32 %v10318, %v10672
  %v10961 = vadd.f32 %v10319, %v10674
  %v10962 = vadd.f32 %v10320, %v10676
  %v10963 = vadd.f32 %v10321, %v10678
  %v10964 = vadd.f32 %v10322, %v10681
  %v10965 = vadd.f32 %v10323, %v10684
  %v10966 = vadd.f32 %v10324, %v10687
  %v10967 = vadd.f32 %v10325, %v10689
  %v10968 = vadd.f32 %v10326, %v10691
  %v10969 = vadd.f32 %v10327, %v10693
  %v10970 = vadd.f32 %v10328, %v10696
  %v10971 = vadd.f32 %v10329, %v10699
  %v10972 = vadd.f32 %v10330, %v10702
  %v10973 = vadd.f32 %v10331, %v10704
  %v10974 = vadd.f32 %v10332, %v10706
  %v10975 = vadd.f32 %v10333, %v10708
  %v10976 = vadd.f32 %v10334, %v10711
  %v10977 = vadd.f32 %v10335, %v10714
  %v10978 = vadd.f32 %v10336, %v10717
  %v10979 = vadd.f32 %v10337, %v10719
  %v10980 = vadd.f32 %v10338, %v10721
  %v10981 = vadd.f32 %v10339, %v10723
  %v10982 = vadd.f32 %v10340, %v10726
  %v10983 = vadd.f32 %v10341, %v10729
  %v10984 = vadd.f32 %v10342, %v10732
  %v10985 = vadd.f32 %v10343, %v10734
  %v10986 = vadd.f32 %v10344, %v10736
  %v10987 = vadd.f32 %v10345, %v10738
  %v10988 = vadd.f32 %v10346, %v10741
  %v10989 = vadd.f32 %v10347, %v10744
  %v10990 = vadd.f32 %v10348, %v10747
  %v10991 = vadd.f32 %v10349, %v10749
  %v10992 = vadd.f32 %v10350, %v10751
  %v10993 = vadd.f32 %v10351, %v10753
  %v10994 = vadd.f32 %v10352, %v10756
  %v10995 = vadd.f32 %v10353, %v10759
  %v10996 = vadd.f32 %v10354, %v10762
  %v10997 = vadd.f32 %v10355, %v10764
  %v10998 = vadd.f32 %v10356, %v10766
  %v10999 = vadd.f32 %v10357, %v10768
  %v11000 = vadd.f32 %v10358, %v10771
  %v11001 = vadd.f32 %v10359, %v10774
  %v11002 = vadd.f32 %v10360, %v10777
  %v11003 = vadd.f32 %v10361, %v10779
  %v11004 = vadd.f32 %v10362, %v10781
  %v11005 = vadd.f32 %v10363, %v10783
  %v11006 = vadd.f32 %v10364, %v10786
  %v11007 = vadd.f32 %v10365, %v10789
  %v11008 = vadd.f32 %v10366, %v10792
  %v11009 = vadd.f32 %v10367, %v10794
  %v11010 = vadd.f32 %v10368, %v10796
  %v11011 = vadd.f32 %v10369, %v10798
  %v11012 = vadd.f32 %v10370, %v10801
  %v11013 = vadd.f32 %v10371, %v10804
  %v11014 = vadd.f32 %v10372, %v10807
  %v11015 = vadd.f32 %v10373, %v10809
  %v11016 = vadd.f32 %v10374, %v10811
  %v11017 = vadd.f32 %v10375, %v10813
  %v11018 = vadd.f32 %v10376, %v10816
  %v11019 = vadd.f32 %v10377, %v10819
  %v11020 = vadd.f32 %v10378, %v10822
  %v11021 = vadd.f32 %v10379, %v10824
  %v11022 = vadd.f32 %v10380, %v10826
  %v11023 = vadd.f32 %v10381, %v10828
  %v11024 = vadd.f32 %v10382, %v10831
  %v11025 = vadd.f32 %v10383, %v10834
  %v11026 = vadd.f32 %v10384, %v10837
  %v11027 = vadd.f32 %v10385, %v10839
  %v11028 = vadd.f32 %v10386, %v10841
  %v11029 = vadd.f32 %v10387, %v10843
  %v11030 = vadd.f32 %v10388, %v10846
  %v11031 = vadd.f32 %v10389, %v10849
  %v11032 = vadd.f32 %v10390, %v10852
  %v11033 = vadd.f32 %v10391, %v10854
  %v11034 = vadd.f32 %v10392, %v10856
  %v11035 = vadd.f32 %v10393, %v10858
  %v11036 = vadd.f32 %v10394, %v10861
  %v11037 = vadd.f32 %v10395, %v10864
  %v11038 = vadd.f32 %v10396, %v10867
  %v11039 = vadd.f32 %v10397, %v10869
  %v11040 = vadd.f32 %v10398, %v10871
  %v11041 = vadd.f32 %v10399, %v10873
  %v11042 = vlaneseq
  %v11043 = vshrl.u32 %v11042, 7
  %v11044 = vsub.s32 6, %v11043
  %v11045 = vrot.slane %v895, %v11044
  %v11046 = vlaneseq
  %v11047 = vshrl.u32 %v11046, 7
  %v11048 = vsub.s32 6, %v11047
  %v11049 = vrot.slane %v896, %v11048
  %v11050 = vlaneseq
  %v11051 = vshrl.u32 %v11050, 7
  %v11052 = vsub.s32 6, %v11051
  %v11053 = vrot.slane %v897, %v11052
  %v11054 = vmul.f32 %v748, %v11045
  %v11055 = vmul.f32 %v749, %v11049
  %v11056 = vmul.f32 %v750, %v11053
  %v11057 = vmul.f32 %v751, %v11045
  %v11058 = vmul.f32 %v752, %v11049
  %v11059 = vmul.f32 %v753, %v11053
  %v11060 = vmul.f32 %v754, %v11045
  %v11061 = vmul.f32 %v755, %v11049
  %v11062 = vmul.f32 %v756, %v11053
  %v11063 = vmul.f32 %v757, %v11045
  %v11064 = vmul.f32 %v758, %v11049
  %v11065 = vmul.f32 %v759, %v11053
  %v11066 = vmul.f32 %v760, %v11045
  %v11067 = vmul.f32 %v761, %v11049
  %v11068 = vmul.f32 %v762, %v11053
  %v11069 = vmul.f32 %v763, %v11045
  %v11070 = vmul.f32 %v764, %v11049
  %v11071 = vmul.f32 %v765, %v11053
  %v11072 = vmul.f32 %v766, %v11045
  %v11073 = vmul.f32 %v767, %v11049
  %v11074 = vmul.f32 %v768, %v11053
  %v11075 = vmul.f32 %v769, %v11045
  %v11076 = vmul.f32 %v770, %v11049
  %v11077 = vmul.f32 %v771, %v11053
  %v11078 = vmul.f32 %v772, %v11045
  %v11079 = vmul.f32 %v773, %v11049
  %v11080 = vmul.f32 %v774, %v11053
  %v11081 = vmul.f32 %v775, %v11045
  %v11082 = vmul.f32 %v776, %v11049
  %v11083 = vmul.f32 %v777, %v11053
  %v11084 = vmul.f32 %v778, %v11045
  %v11085 = vmul.f32 %v779, %v11049
  %v11086 = vmul.f32 %v780, %v11053
  %v11087 = vmul.f32 %v781, %v11045
  %v11088 = vmul.f32 %v782, %v11049
  %v11089 = vmul.f32 %v783, %v11053
  %v11090 = vmul.f32 %v784, %v11045
  %v11091 = vmul.f32 %v785, %v11049
  %v11092 = vmul.f32 %v786, %v11053
  %v11093 = vmul.f32 %v787, %v11045
  %v11094 = vmul.f32 %v788, %v11049
  %v11095 = vmul.f32 %v789, %v11053
  %v11096 = vmul.f32 %v790, %v11045
  %v11097 = vmul.f32 %v791, %v11049
  %v11098 = vmul.f32 %v792, %v11053
  %v11099 = vmul.f32 %v793, %v11045
  %v11100 = vmul.f32 %v794, %v11049
  %v11101 = vmul.f32 %v795, %v11053
  %v11102 = vmul.f32 %v796, %v11045
  %v11103 = vmul.f32 %v797, %v11049
  %v11104 = vmul.f32 %v798, %v11053
  %v11105 = vmul.f32 %v799, %v11045
  %v11106 = vmul.f32 %v800, %v11049
  %v11107 = vmul.f32 %v801, %v11053
  %v11108 = vmul.f32 %v802, %v11045
  %v11109 = vmul.f32 %v803, %v11049
  %v11110 = vmul.f32 %v804, %v11053
  %v11111 = vmul.f32 %v805, %v11045
  %v11112 = vmul.f32 %v806, %v11049
  %v11113 = vmul.f32 %v807, %v11053
  %v11114 = vmul.f32 %v808, %v11045
  %v11115 = vmul.f32 %v809, %v11049
  %v11116 = vmul.f32 %v810, %v11053
  %v11117 = vmul.f32 %v811, %v11045
  %v11118 = vmul.f32 %v812, %v11049
  %v11119 = vmul.f32 %v813, %v11053
  %v11120 = vmul.f32 %v814, %v11045
  %v11121 = vmul.f32 %v815, %v11049
  %v11122 = vmul.f32 %v816, %v11053
  %v11123 = vmul.f32 %v817, %v11045
  %v11124 = vmul.f32 %v818, %v11049
  %v11125 = vmul.f32 %v819, %v11053
  %v11126 = vmul.f32 %v820, %v11045
  %v11127 = vmul.f32 %v821, %v11049
  %v11128 = vmul.f32 %v822, %v11053
  %v11129 = vmul.f32 %v823, %v11045
  %v11130 = vmul.f32 %v824, %v11049
  %v11131 = vmul.f32 %v825, %v11053
  %v11132 = vmul.f32 %v826, %v11045
  %v11133 = vmul.f32 %v827, %v11049
  %v11134 = vmul.f32 %v828, %v11053
  %v11135 = vmul.f32 %v829, %v11045
  %v11136 = vmul.f32 %v830, %v11049
  %v11137 = vmul.f32 %v831, %v11053
  %v11138 = vmul.f32 %v832, %v11045
  %v11139 = vmul.f32 %v833, %v11049
  %v11140 = vmul.f32 %v834, %v11053
  %v11141 = vmul.f32 %v835, %v11045
  %v11142 = vmul.f32 %v836, %v11049
  %v11143 = vmul.f32 %v837, %v11053
  %v11144 = vmul.f32 %v838, %v11045
  %v11145 = vmul.f32 %v839, %v11049
  %v11146 = vmul.f32 %v840, %v11053
  %v11147 = vmul.f32 %v841, %v11045
  %v11148 = vmul.f32 %v842, %v11049
  %v11149 = vmul.f32 %v843, %v11053
  %v11150 = vmul.f32 %v844, %v11045
  %v11151 = vmul.f32 %v845, %v11049
  %v11152 = vmul.f32 %v846, %v11053
  %v11153 = vmul.f32 %v847, %v11045
  %v11154 = vmul.f32 %v848, %v11049
  %v11155 = vmul.f32 %v849, %v11053
  %v11156 = vmul.f32 %v850, %v11045
  %v11157 = vmul.f32 %v851, %v11049
  %v11158 = vmul.f32 %v852, %v11053
  %v11159 = vmul.f32 %v853, %v11045
  %v11160 = vmul.f32 %v854, %v11049
  %v11161 = vmul.f32 %v855, %v11053
  %v11162 = vmul.f32 %v856, %v11045
  %v11163 = vmul.f32 %v857, %v11049
  %v11164 = vmul.f32 %v858, %v11053
  %v11165 = vmul.f32 %v859, %v11045
  %v11166 = vmul.f32 %v860, %v11049
  %v11167 = vmul.f32 %v861, %v11053
  %v11168 = vmul.f32 %v862, %v11045
  %v11169 = vmul.f32 %v863, %v11049
  %v11170 = vmul.f32 %v864, %v11053
  %v11171 = vmul.f32 %v865, %v11045
  %v11172 = vmul.f32 %v866, %v11049
  %v11173 = vmul.f32 %v867, %v11053
  %v11174 = vmul.f32 %v868, %v11045
  %v11175 = vmul.f32 %v869, %v11049
  %v11176 = vmul.f32 %v870, %v11053
  %v11177 = vmul.f32 %v871, %v11045
  %v11178 = vmul.f32 %v872, %v11049
  %v11179 = vmul.f32 %v873, %v11053
  %v11306 = vrot.slane %v11054, 4
  %v11307 = vrot.slane %v11057, 4
  %v11308 = vsel %vm10021, %v11306, %v11307
  %v11309 = vrot.slane %v11055, 4
  %v11310 = vrot.slane %v11058, 4
  %v11311 = vsel %vm10021, %v11309, %v11310
  %v11312 = vrot.slane %v11056, 4
  %v11313 = vrot.slane %v11059, 4
  %v11314 = vsel %vm10021, %v11312, %v11313
  %v11315 = vrot.slane %v11060, 4
  %v11316 = vsel %vm10021, %v11307, %v11315
  %v11317 = vrot.slane %v11061, 4
  %v11318 = vsel %vm10021, %v11310, %v11317
  %v11319 = vrot.slane %v11062, 4
  %v11320 = vsel %vm10021, %v11313, %v11319
  %v11321 = vrot.slane %v11063, 4
  %v11322 = vrot.slane %v11066, 4
  %v11323 = vsel %vm10021, %v11321, %v11322
  %v11324 = vrot.slane %v11064, 4
  %v11325 = vrot.slane %v11067, 4
  %v11326 = vsel %vm10021, %v11324, %v11325
  %v11327 = vrot.slane %v11065, 4
  %v11328 = vrot.slane %v11068, 4
  %v11329 = vsel %vm10021, %v11327, %v11328
  %v11330 = vrot.slane %v11069, 4
  %v11331 = vsel %vm10021, %v11322, %v11330
  %v11332 = vrot.slane %v11070, 4
  %v11333 = vsel %vm10021, %v11325, %v11332
  %v11334 = vrot.slane %v11071, 4
  %v11335 = vsel %vm10021, %v11328, %v11334
  %v11336 = vrot.slane %v11072, 4
  %v11337 = vrot.slane %v11075, 4
  %v11338 = vsel %vm10021, %v11336, %v11337
  %v11339 = vrot.slane %v11073, 4
  %v11340 = vrot.slane %v11076, 4
  %v11341 = vsel %vm10021, %v11339, %v11340
  %v11342 = vrot.slane %v11074, 4
  %v11343 = vrot.slane %v11077, 4
  %v11344 = vsel %vm10021, %v11342, %v11343
  %v11345 = vrot.slane %v11078, 4
  %v11346 = vsel %vm10021, %v11337, %v11345
  %v11347 = vrot.slane %v11079, 4
  %v11348 = vsel %vm10021, %v11340, %v11347
  %v11349 = vrot.slane %v11080, 4
  %v11350 = vsel %vm10021, %v11343, %v11349
  %v11351 = vrot.slane %v11081, 4
  %v11352 = vrot.slane %v11084, 4
  %v11353 = vsel %vm10021, %v11351, %v11352
  %v11354 = vrot.slane %v11082, 4
  %v11355 = vrot.slane %v11085, 4
  %v11356 = vsel %vm10021, %v11354, %v11355
  %v11357 = vrot.slane %v11083, 4
  %v11358 = vrot.slane %v11086, 4
  %v11359 = vsel %vm10021, %v11357, %v11358
  %v11360 = vrot.slane %v11087, 4
  %v11361 = vsel %vm10021, %v11352, %v11360
  %v11362 = vrot.slane %v11088, 4
  %v11363 = vsel %vm10021, %v11355, %v11362
  %v11364 = vrot.slane %v11089, 4
  %v11365 = vsel %vm10021, %v11358, %v11364
  %v11366 = vrot.slane %v11090, 4
  %v11367 = vrot.slane %v11093, 4
  %v11368 = vsel %vm10021, %v11366, %v11367
  %v11369 = vrot.slane %v11091, 4
  %v11370 = vrot.slane %v11094, 4
  %v11371 = vsel %vm10021, %v11369, %v11370
  %v11372 = vrot.slane %v11092, 4
  %v11373 = vrot.slane %v11095, 4
  %v11374 = vsel %vm10021, %v11372, %v11373
  %v11375 = vrot.slane %v11096, 4
  %v11376 = vsel %vm10021, %v11367, %v11375
  %v11377 = vrot.slane %v11097, 4
  %v11378 = vsel %vm10021, %v11370, %v11377
  %v11379 = vrot.slane %v11098, 4
  %v11380 = vsel %vm10021, %v11373, %v11379
  %v11381 = vrot.slane %v11099, 4
  %v11382 = vrot.slane %v11102, 4
  %v11383 = vsel %vm10021, %v11381, %v11382
  %v11384 = vrot.slane %v11100, 4
  %v11385 = vrot.slane %v11103, 4
  %v11386 = vsel %vm10021, %v11384, %v11385
  %v11387 = vrot.slane %v11101, 4
  %v11388 = vrot.slane %v11104, 4
  %v11389 = vsel %vm10021, %v11387, %v11388
  %v11390 = vrot.slane %v11105, 4
  %v11391 = vsel %vm10021, %v11382, %v11390
  %v11392 = vrot.slane %v11106, 4
  %v11393 = vsel %vm10021, %v11385, %v11392
  %v11394 = vrot.slane %v11107, 4
  %v11395 = vsel %vm10021, %v11388, %v11394
  %v11396 = vrot.slane %v11108, 4
  %v11397 = vrot.slane %v11111, 4
  %v11398 = vsel %vm10021, %v11396, %v11397
  %v11399 = vrot.slane %v11109, 4
  %v11400 = vrot.slane %v11112, 4
  %v11401 = vsel %vm10021, %v11399, %v11400
  %v11402 = vrot.slane %v11110, 4
  %v11403 = vrot.slane %v11113, 4
  %v11404 = vsel %vm10021, %v11402, %v11403
  %v11405 = vrot.slane %v11114, 4
  %v11406 = vsel %vm10021, %v11397, %v11405
  %v11407 = vrot.slane %v11115, 4
  %v11408 = vsel %vm10021, %v11400, %v11407
  %v11409 = vrot.slane %v11116, 4
  %v11410 = vsel %vm10021, %v11403, %v11409
  %v11411 = vrot.slane %v11117, 4
  %v11412 = vrot.slane %v11120, 4
  %v11413 = vsel %vm10021, %v11411, %v11412
  %v11414 = vrot.slane %v11118, 4
  %v11415 = vrot.slane %v11121, 4
  %v11416 = vsel %vm10021, %v11414, %v11415
  %v11417 = vrot.slane %v11119, 4
  %v11418 = vrot.slane %v11122, 4
  %v11419 = vsel %vm10021, %v11417, %v11418
  %v11420 = vrot.slane %v11123, 4
  %v11421 = vsel %vm10021, %v11412, %v11420
  %v11422 = vrot.slane %v11124, 4
  %v11423 = vsel %vm10021, %v11415, %v11422
  %v11424 = vrot.slane %v11125, 4
  %v11425 = vsel %vm10021, %v11418, %v11424
  %v11426 = vrot.slane %v11126, 4
  %v11427 = vrot.slane %v11129, 4
  %v11428 = vsel %vm10021, %v11426, %v11427
  %v11429 = vrot.slane %v11127, 4
  %v11430 = vrot.slane %v11130, 4
  %v11431 = vsel %vm10021, %v11429, %v11430
  %v11432 = vrot.slane %v11128, 4
  %v11433 = vrot.slane %v11131, 4
  %v11434 = vsel %vm10021, %v11432, %v11433
  %v11435 = vrot.slane %v11132, 4
  %v11436 = vsel %vm10021, %v11427, %v11435
  %v11437 = vrot.slane %v11133, 4
  %v11438 = vsel %vm10021, %v11430, %v11437
  %v11439 = vrot.slane %v11134, 4
  %v11440 = vsel %vm10021, %v11433, %v11439
  %v11441 = vrot.slane %v11135, 4
  %v11442 = vrot.slane %v11138, 4
  %v11443 = vsel %vm10021, %v11441, %v11442
  %v11444 = vrot.slane %v11136, 4
  %v11445 = vrot.slane %v11139, 4
  %v11446 = vsel %vm10021, %v11444, %v11445
  %v11447 = vrot.slane %v11137, 4
  %v11448 = vrot.slane %v11140, 4
  %v11449 = vsel %vm10021, %v11447, %v11448
  %v11450 = vrot.slane %v11141, 4
  %v11451 = vsel %vm10021, %v11442, %v11450
  %v11452 = vrot.slane %v11142, 4
  %v11453 = vsel %vm10021, %v11445, %v11452
  %v11454 = vrot.slane %v11143, 4
  %v11455 = vsel %vm10021, %v11448, %v11454
  %v11456 = vrot.slane %v11144, 4
  %v11457 = vrot.slane %v11147, 4
  %v11458 = vsel %vm10021, %v11456, %v11457
  %v11459 = vrot.slane %v11145, 4
  %v11460 = vrot.slane %v11148, 4
  %v11461 = vsel %vm10021, %v11459, %v11460
  %v11462 = vrot.slane %v11146, 4
  %v11463 = vrot.slane %v11149, 4
  %v11464 = vsel %vm10021, %v11462, %v11463
  %v11465 = vrot.slane %v11150, 4
  %v11466 = vsel %vm10021, %v11457, %v11465
  %v11467 = vrot.slane %v11151, 4
  %v11468 = vsel %vm10021, %v11460, %v11467
  %v11469 = vrot.slane %v11152, 4
  %v11470 = vsel %vm10021, %v11463, %v11469
  %v11471 = vrot.slane %v11153, 4
  %v11472 = vrot.slane %v11156, 4
  %v11473 = vsel %vm10021, %v11471, %v11472
  %v11474 = vrot.slane %v11154, 4
  %v11475 = vrot.slane %v11157, 4
  %v11476 = vsel %vm10021, %v11474, %v11475
  %v11477 = vrot.slane %v11155, 4
  %v11478 = vrot.slane %v11158, 4
  %v11479 = vsel %vm10021, %v11477, %v11478
  %v11480 = vrot.slane %v11159, 4
  %v11481 = vsel %vm10021, %v11472, %v11480
  %v11482 = vrot.slane %v11160, 4
  %v11483 = vsel %vm10021, %v11475, %v11482
  %v11484 = vrot.slane %v11161, 4
  %v11485 = vsel %vm10021, %v11478, %v11484
  %v11486 = vrot.slane %v11162, 4
  %v11487 = vrot.slane %v11165, 4
  %v11488 = vsel %vm10021, %v11486, %v11487
  %v11489 = vrot.slane %v11163, 4
  %v11490 = vrot.slane %v11166, 4
  %v11491 = vsel %vm10021, %v11489, %v11490
  %v11492 = vrot.slane %v11164, 4
  %v11493 = vrot.slane %v11167, 4
  %v11494 = vsel %vm10021, %v11492, %v11493
  %v11495 = vrot.slane %v11168, 4
  %v11496 = vsel %vm10021, %v11487, %v11495
  %v11497 = vrot.slane %v11169, 4
  %v11498 = vsel %vm10021, %v11490, %v11497
  %v11499 = vrot.slane %v11170, 4
  %v11500 = vsel %vm10021, %v11493, %v11499
  %v11501 = vrot.slane %v11171, 4
  %v11502 = vrot.slane %v11174, 4
  %v11503 = vsel %vm10021, %v11501, %v11502
  %v11504 = vrot.slane %v11172, 4
  %v11505 = vrot.slane %v11175, 4
  %v11506 = vsel %vm10021, %v11504, %v11505
  %v11507 = vrot.slane %v11173, 4
  %v11508 = vrot.slane %v11176, 4
  %v11509 = vsel %vm10021, %v11507, %v11508
  %v11510 = vrot.slane %v11177, 4
  %v11511 = vsel %vm10021, %v11502, %v11510
  %v11512 = vrot.slane %v11178, 4
  %v11513 = vsel %vm10021, %v11505, %v11512
  %v11514 = vrot.slane %v11179, 4
  %v11515 = vsel %vm10021, %v11508, %v11514
  %v11600 = vadd.f32 %v10958, %v11308
  %v11601 = vadd.f32 %v10959, %v11311
  %v11602 = vadd.f32 %v10960, %v11314
  %v11603 = vadd.f32 %v10961, %v11316
  %v11604 = vadd.f32 %v10962, %v11318
  %v11605 = vadd.f32 %v10963, %v11320
  %v11606 = vadd.f32 %v10964, %v11323
  %v11607 = vadd.f32 %v10965, %v11326
  %v11608 = vadd.f32 %v10966, %v11329
  %v11609 = vadd.f32 %v10967, %v11331
  %v11610 = vadd.f32 %v10968, %v11333
  %v11611 = vadd.f32 %v10969, %v11335
  %v11612 = vadd.f32 %v10970, %v11338
  %v11613 = vadd.f32 %v10971, %v11341
  %v11614 = vadd.f32 %v10972, %v11344
  %v11615 = vadd.f32 %v10973, %v11346
  %v11616 = vadd.f32 %v10974, %v11348
  %v11617 = vadd.f32 %v10975, %v11350
  %v11618 = vadd.f32 %v10976, %v11353
  %v11619 = vadd.f32 %v10977, %v11356
  %v11620 = vadd.f32 %v10978, %v11359
  %v11621 = vadd.f32 %v10979, %v11361
  %v11622 = vadd.f32 %v10980, %v11363
  %v11623 = vadd.f32 %v10981, %v11365
  %v11624 = vadd.f32 %v10982, %v11368
  %v11625 = vadd.f32 %v10983, %v11371
  %v11626 = vadd.f32 %v10984, %v11374
  %v11627 = vadd.f32 %v10985, %v11376
  %v11628 = vadd.f32 %v10986, %v11378
  %v11629 = vadd.f32 %v10987, %v11380
  %v11630 = vadd.f32 %v10988, %v11383
  %v11631 = vadd.f32 %v10989, %v11386
  %v11632 = vadd.f32 %v10990, %v11389
  %v11633 = vadd.f32 %v10991, %v11391
  %v11634 = vadd.f32 %v10992, %v11393
  %v11635 = vadd.f32 %v10993, %v11395
  %v11636 = vadd.f32 %v10994, %v11398
  %v11637 = vadd.f32 %v10995, %v11401
  %v11638 = vadd.f32 %v10996, %v11404
  %v11639 = vadd.f32 %v10997, %v11406
  %v11640 = vadd.f32 %v10998, %v11408
  %v11641 = vadd.f32 %v10999, %v11410
  %v11642 = vadd.f32 %v11000, %v11413
  %v11643 = vadd.f32 %v11001, %v11416
  %v11644 = vadd.f32 %v11002, %v11419
  %v11645 = vadd.f32 %v11003, %v11421
  %v11646 = vadd.f32 %v11004, %v11423
  %v11647 = vadd.f32 %v11005, %v11425
  %v11648 = vadd.f32 %v11006, %v11428
  %v11649 = vadd.f32 %v11007, %v11431
  %v11650 = vadd.f32 %v11008, %v11434
  %v11651 = vadd.f32 %v11009, %v11436
  %v11652 = vadd.f32 %v11010, %v11438
  %v11653 = vadd.f32 %v11011, %v11440
  %v11654 = vadd.f32 %v11012, %v11443
  %v11655 = vadd.f32 %v11013, %v11446
  %v11656 = vadd.f32 %v11014, %v11449
  %v11657 = vadd.f32 %v11015, %v11451
  %v11658 = vadd.f32 %v11016, %v11453
  %v11659 = vadd.f32 %v11017, %v11455
  %v11660 = vadd.f32 %v11018, %v11458
  %v11661 = vadd.f32 %v11019, %v11461
  %v11662 = vadd.f32 %v11020, %v11464
  %v11663 = vadd.f32 %v11021, %v11466
  %v11664 = vadd.f32 %v11022, %v11468
  %v11665 = vadd.f32 %v11023, %v11470
  %v11666 = vadd.f32 %v11024, %v11473
  %v11667 = vadd.f32 %v11025, %v11476
  %v11668 = vadd.f32 %v11026, %v11479
  %v11669 = vadd.f32 %v11027, %v11481
  %v11670 = vadd.f32 %v11028, %v11483
  %v11671 = vadd.f32 %v11029, %v11485
  %v11672 = vadd.f32 %v11030, %v11488
  %v11673 = vadd.f32 %v11031, %v11491
  %v11674 = vadd.f32 %v11032, %v11494
  %v11675 = vadd.f32 %v11033, %v11496
  %v11676 = vadd.f32 %v11034, %v11498
  %v11677 = vadd.f32 %v11035, %v11500
  %v11678 = vadd.f32 %v11036, %v11503
  %v11679 = vadd.f32 %v11037, %v11506
  %v11680 = vadd.f32 %v11038, %v11509
  %v11681 = vadd.f32 %v11039, %v11511
  %v11682 = vadd.f32 %v11040, %v11513
  %v11683 = vadd.f32 %v11041, %v11515
  %v11684 = vlaneseq
  %v11685 = vshrl.u32 %v11684, 7
  %v11686 = vsub.s32 3, %v11685
  %v11687 = vrot.slane %v898, %v11686
  %v11688 = vlaneseq
  %v11689 = vshrl.u32 %v11688, 7
  %v11690 = vsub.s32 3, %v11689
  %v11691 = vrot.slane %v899, %v11690
  %v11692 = vlaneseq
  %v11693 = vshrl.u32 %v11692, 7
  %v11694 = vsub.s32 3, %v11693
  %v11695 = vrot.slane %v900, %v11694
  %v11696 = vmul.f32 %v757, %v11687
  %v11697 = vmul.f32 %v758, %v11691
  %v11698 = vmul.f32 %v759, %v11695
  %v11699 = vmul.f32 %v760, %v11687
  %v11700 = vmul.f32 %v761, %v11691
  %v11701 = vmul.f32 %v762, %v11695
  %v11702 = vmul.f32 %v763, %v11687
  %v11703 = vmul.f32 %v764, %v11691
  %v11704 = vmul.f32 %v765, %v11695
  %v11705 = vmul.f32 %v766, %v11687
  %v11706 = vmul.f32 %v767, %v11691
  %v11707 = vmul.f32 %v768, %v11695
  %v11708 = vmul.f32 %v769, %v11687
  %v11709 = vmul.f32 %v770, %v11691
  %v11710 = vmul.f32 %v771, %v11695
  %v11711 = vmul.f32 %v772, %v11687
  %v11712 = vmul.f32 %v773, %v11691
  %v11713 = vmul.f32 %v774, %v11695
  %v11714 = vmul.f32 %v775, %v11687
  %v11715 = vmul.f32 %v776, %v11691
  %v11716 = vmul.f32 %v777, %v11695
  %v11717 = vmul.f32 %v778, %v11687
  %v11718 = vmul.f32 %v779, %v11691
  %v11719 = vmul.f32 %v780, %v11695
  %v11720 = vmul.f32 %v781, %v11687
  %v11721 = vmul.f32 %v782, %v11691
  %v11722 = vmul.f32 %v783, %v11695
  %v11723 = vmul.f32 %v784, %v11687
  %v11724 = vmul.f32 %v785, %v11691
  %v11725 = vmul.f32 %v786, %v11695
  %v11726 = vmul.f32 %v787, %v11687
  %v11727 = vmul.f32 %v788, %v11691
  %v11728 = vmul.f32 %v789, %v11695
  %v11729 = vmul.f32 %v790, %v11687
  %v11730 = vmul.f32 %v791, %v11691
  %v11731 = vmul.f32 %v792, %v11695
  %v11732 = vmul.f32 %v793, %v11687
  %v11733 = vmul.f32 %v794, %v11691
  %v11734 = vmul.f32 %v795, %v11695
  %v11735 = vmul.f32 %v796, %v11687
  %v11736 = vmul.f32 %v797, %v11691
  %v11737 = vmul.f32 %v798, %v11695
  %v11738 = vmul.f32 %v799, %v11687
  %v11739 = vmul.f32 %v800, %v11691
  %v11740 = vmul.f32 %v801, %v11695
  %v11741 = vmul.f32 %v802, %v11687
  %v11742 = vmul.f32 %v803, %v11691
  %v11743 = vmul.f32 %v804, %v11695
  %v11744 = vmul.f32 %v805, %v11687
  %v11745 = vmul.f32 %v806, %v11691
  %v11746 = vmul.f32 %v807, %v11695
  %v11747 = vmul.f32 %v808, %v11687
  %v11748 = vmul.f32 %v809, %v11691
  %v11749 = vmul.f32 %v810, %v11695
  %v11750 = vmul.f32 %v811, %v11687
  %v11751 = vmul.f32 %v812, %v11691
  %v11752 = vmul.f32 %v813, %v11695
  %v11753 = vmul.f32 %v814, %v11687
  %v11754 = vmul.f32 %v815, %v11691
  %v11755 = vmul.f32 %v816, %v11695
  %v11756 = vmul.f32 %v817, %v11687
  %v11757 = vmul.f32 %v818, %v11691
  %v11758 = vmul.f32 %v819, %v11695
  %v11759 = vmul.f32 %v820, %v11687
  %v11760 = vmul.f32 %v821, %v11691
  %v11761 = vmul.f32 %v822, %v11695
  %v11762 = vmul.f32 %v823, %v11687
  %v11763 = vmul.f32 %v824, %v11691
  %v11764 = vmul.f32 %v825, %v11695
  %v11765 = vmul.f32 %v826, %v11687
  %v11766 = vmul.f32 %v827, %v11691
  %v11767 = vmul.f32 %v828, %v11695
  %v11768 = vmul.f32 %v829, %v11687
  %v11769 = vmul.f32 %v830, %v11691
  %v11770 = vmul.f32 %v831, %v11695
  %v11771 = vmul.f32 %v832, %v11687
  %v11772 = vmul.f32 %v833, %v11691
  %v11773 = vmul.f32 %v834, %v11695
  %v11774 = vmul.f32 %v835, %v11687
  %v11775 = vmul.f32 %v836, %v11691
  %v11776 = vmul.f32 %v837, %v11695
  %v11777 = vmul.f32 %v838, %v11687
  %v11778 = vmul.f32 %v839, %v11691
  %v11779 = vmul.f32 %v840, %v11695
  %v11780 = vmul.f32 %v841, %v11687
  %v11781 = vmul.f32 %v842, %v11691
  %v11782 = vmul.f32 %v843, %v11695
  %v11783 = vmul.f32 %v844, %v11687
  %v11784 = vmul.f32 %v845, %v11691
  %v11785 = vmul.f32 %v846, %v11695
  %v11786 = vmul.f32 %v847, %v11687
  %v11787 = vmul.f32 %v848, %v11691
  %v11788 = vmul.f32 %v849, %v11695
  %v11789 = vmul.f32 %v850, %v11687
  %v11790 = vmul.f32 %v851, %v11691
  %v11791 = vmul.f32 %v852, %v11695
  %v11792 = vmul.f32 %v853, %v11687
  %v11793 = vmul.f32 %v854, %v11691
  %v11794 = vmul.f32 %v855, %v11695
  %v11795 = vmul.f32 %v856, %v11687
  %v11796 = vmul.f32 %v857, %v11691
  %v11797 = vmul.f32 %v858, %v11695
  %v11798 = vmul.f32 %v859, %v11687
  %v11799 = vmul.f32 %v860, %v11691
  %v11800 = vmul.f32 %v861, %v11695
  %v11801 = vmul.f32 %v862, %v11687
  %v11802 = vmul.f32 %v863, %v11691
  %v11803 = vmul.f32 %v864, %v11695
  %v11804 = vmul.f32 %v865, %v11687
  %v11805 = vmul.f32 %v866, %v11691
  %v11806 = vmul.f32 %v867, %v11695
  %v11807 = vmul.f32 %v868, %v11687
  %v11808 = vmul.f32 %v869, %v11691
  %v11809 = vmul.f32 %v870, %v11695
  %v11810 = vmul.f32 %v871, %v11687
  %v11811 = vmul.f32 %v872, %v11691
  %v11812 = vmul.f32 %v873, %v11695
  %v11813 = vmul.f32 %v874, %v11687
  %v11814 = vmul.f32 %v875, %v11691
  %v11815 = vmul.f32 %v876, %v11695
  %v11816 = vmul.f32 %v877, %v11687
  %v11817 = vmul.f32 %v878, %v11691
  %v11818 = vmul.f32 %v879, %v11695
  %v11819 = vmul.f32 %v880, %v11687
  %v11820 = vmul.f32 %v881, %v11691
  %v11821 = vmul.f32 %v882, %v11695
  %v11948 = vrot.slane %v11696, 4
  %v11949 = vrot.slane %v11699, 4
  %v11950 = vsel %vm10021, %v11948, %v11949
  %v11951 = vrot.slane %v11697, 4
  %v11952 = vrot.slane %v11700, 4
  %v11953 = vsel %vm10021, %v11951, %v11952
  %v11954 = vrot.slane %v11698, 4
  %v11955 = vrot.slane %v11701, 4
  %v11956 = vsel %vm10021, %v11954, %v11955
  %v11957 = vrot.slane %v11702, 4
  %v11958 = vsel %vm10021, %v11949, %v11957
  %v11959 = vrot.slane %v11703, 4
  %v11960 = vsel %vm10021, %v11952, %v11959
  %v11961 = vrot.slane %v11704, 4
  %v11962 = vsel %vm10021, %v11955, %v11961
  %v11963 = vrot.slane %v11705, 4
  %v11964 = vrot.slane %v11708, 4
  %v11965 = vsel %vm10021, %v11963, %v11964
  %v11966 = vrot.slane %v11706, 4
  %v11967 = vrot.slane %v11709, 4
  %v11968 = vsel %vm10021, %v11966, %v11967
  %v11969 = vrot.slane %v11707, 4
  %v11970 = vrot.slane %v11710, 4
  %v11971 = vsel %vm10021, %v11969, %v11970
  %v11972 = vrot.slane %v11711, 4
  %v11973 = vsel %vm10021, %v11964, %v11972
  %v11974 = vrot.slane %v11712, 4
  %v11975 = vsel %vm10021, %v11967, %v11974
  %v11976 = vrot.slane %v11713, 4
  %v11977 = vsel %vm10021, %v11970, %v11976
  %v11978 = vrot.slane %v11714, 4
  %v11979 = vrot.slane %v11717, 4
  %v11980 = vsel %vm10021, %v11978, %v11979
  %v11981 = vrot.slane %v11715, 4
  %v11982 = vrot.slane %v11718, 4
  %v11983 = vsel %vm10021, %v11981, %v11982
  %v11984 = vrot.slane %v11716, 4
  %v11985 = vrot.slane %v11719, 4
  %v11986 = vsel %vm10021, %v11984, %v11985
  %v11987 = vrot.slane %v11720, 4
  %v11988 = vsel %vm10021, %v11979, %v11987
  %v11989 = vrot.slane %v11721, 4
  %v11990 = vsel %vm10021, %v11982, %v11989
  %v11991 = vrot.slane %v11722, 4
  %v11992 = vsel %vm10021, %v11985, %v11991
  %v11993 = vrot.slane %v11723, 4
  %v11994 = vrot.slane %v11726, 4
  %v11995 = vsel %vm10021, %v11993, %v11994
  %v11996 = vrot.slane %v11724, 4
  %v11997 = vrot.slane %v11727, 4
  %v11998 = vsel %vm10021, %v11996, %v11997
  %v11999 = vrot.slane %v11725, 4
  %v12000 = vrot.slane %v11728, 4
  %v12001 = vsel %vm10021, %v11999, %v12000
  %v12002 = vrot.slane %v11729, 4
  %v12003 = vsel %vm10021, %v11994, %v12002
  %v12004 = vrot.slane %v11730, 4
  %v12005 = vsel %vm10021, %v11997, %v12004
  %v12006 = vrot.slane %v11731, 4
  %v12007 = vsel %vm10021, %v12000, %v12006
  %v12008 = vrot.slane %v11732, 4
  %v12009 = vrot.slane %v11735, 4
  %v12010 = vsel %vm10021, %v12008, %v12009
  %v12011 = vrot.slane %v11733, 4
  %v12012 = vrot.slane %v11736, 4
  %v12013 = vsel %vm10021, %v12011, %v12012
  %v12014 = vrot.slane %v11734, 4
  %v12015 = vrot.slane %v11737, 4
  %v12016 = vsel %vm10021, %v12014, %v12015
  %v12017 = vrot.slane %v11738, 4
  %v12018 = vsel %vm10021, %v12009, %v12017
  %v12019 = vrot.slane %v11739, 4
  %v12020 = vsel %vm10021, %v12012, %v12019
  %v12021 = vrot.slane %v11740, 4
  %v12022 = vsel %vm10021, %v12015, %v12021
  %v12023 = vrot.slane %v11741, 4
  %v12024 = vrot.slane %v11744, 4
  %v12025 = vsel %vm10021, %v12023, %v12024
  %v12026 = vrot.slane %v11742, 4
  %v12027 = vrot.slane %v11745, 4
  %v12028 = vsel %vm10021, %v12026, %v12027
  %v12029 = vrot.slane %v11743, 4
  %v12030 = vrot.slane %v11746, 4
  %v12031 = vsel %vm10021, %v12029, %v12030
  %v12032 = vrot.slane %v11747, 4
  %v12033 = vsel %vm10021, %v12024, %v12032
  %v12034 = vrot.slane %v11748, 4
  %v12035 = vsel %vm10021, %v12027, %v12034
  %v12036 = vrot.slane %v11749, 4
  %v12037 = vsel %vm10021, %v12030, %v12036
  %v12038 = vrot.slane %v11750, 4
  %v12039 = vrot.slane %v11753, 4
  %v12040 = vsel %vm10021, %v12038, %v12039
  %v12041 = vrot.slane %v11751, 4
  %v12042 = vrot.slane %v11754, 4
  %v12043 = vsel %vm10021, %v12041, %v12042
  %v12044 = vrot.slane %v11752, 4
  %v12045 = vrot.slane %v11755, 4
  %v12046 = vsel %vm10021, %v12044, %v12045
  %v12047 = vrot.slane %v11756, 4
  %v12048 = vsel %vm10021, %v12039, %v12047
  %v12049 = vrot.slane %v11757, 4
  %v12050 = vsel %vm10021, %v12042, %v12049
  %v12051 = vrot.slane %v11758, 4
  %v12052 = vsel %vm10021, %v12045, %v12051
  %v12053 = vrot.slane %v11759, 4
  %v12054 = vrot.slane %v11762, 4
  %v12055 = vsel %vm10021, %v12053, %v12054
  %v12056 = vrot.slane %v11760, 4
  %v12057 = vrot.slane %v11763, 4
  %v12058 = vsel %vm10021, %v12056, %v12057
  %v12059 = vrot.slane %v11761, 4
  %v12060 = vrot.slane %v11764, 4
  %v12061 = vsel %vm10021, %v12059, %v12060
  %v12062 = vrot.slane %v11765, 4
  %v12063 = vsel %vm10021, %v12054, %v12062
  %v12064 = vrot.slane %v11766, 4
  %v12065 = vsel %vm10021, %v12057, %v12064
  %v12066 = vrot.slane %v11767, 4
  %v12067 = vsel %vm10021, %v12060, %v12066
  %v12068 = vrot.slane %v11768, 4
  %v12069 = vrot.slane %v11771, 4
  %v12070 = vsel %vm10021, %v12068, %v12069
  %v12071 = vrot.slane %v11769, 4
  %v12072 = vrot.slane %v11772, 4
  %v12073 = vsel %vm10021, %v12071, %v12072
  %v12074 = vrot.slane %v11770, 4
  %v12075 = vrot.slane %v11773, 4
  %v12076 = vsel %vm10021, %v12074, %v12075
  %v12077 = vrot.slane %v11774, 4
  %v12078 = vsel %vm10021, %v12069, %v12077
  %v12079 = vrot.slane %v11775, 4
  %v12080 = vsel %vm10021, %v12072, %v12079
  %v12081 = vrot.slane %v11776, 4
  %v12082 = vsel %vm10021, %v12075, %v12081
  %v12083 = vrot.slane %v11777, 4
  %v12084 = vrot.slane %v11780, 4
  %v12085 = vsel %vm10021, %v12083, %v12084
  %v12086 = vrot.slane %v11778, 4
  %v12087 = vrot.slane %v11781, 4
  %v12088 = vsel %vm10021, %v12086, %v12087
  %v12089 = vrot.slane %v11779, 4
  %v12090 = vrot.slane %v11782, 4
  %v12091 = vsel %vm10021, %v12089, %v12090
  %v12092 = vrot.slane %v11783, 4
  %v12093 = vsel %vm10021, %v12084, %v12092
  %v12094 = vrot.slane %v11784, 4
  %v12095 = vsel %vm10021, %v12087, %v12094
  %v12096 = vrot.slane %v11785, 4
  %v12097 = vsel %vm10021, %v12090, %v12096
  %v12098 = vrot.slane %v11786, 4
  %v12099 = vrot.slane %v11789, 4
  %v12100 = vsel %vm10021, %v12098, %v12099
  %v12101 = vrot.slane %v11787, 4
  %v12102 = vrot.slane %v11790, 4
  %v12103 = vsel %vm10021, %v12101, %v12102
  %v12104 = vrot.slane %v11788, 4
  %v12105 = vrot.slane %v11791, 4
  %v12106 = vsel %vm10021, %v12104, %v12105
  %v12107 = vrot.slane %v11792, 4
  %v12108 = vsel %vm10021, %v12099, %v12107
  %v12109 = vrot.slane %v11793, 4
  %v12110 = vsel %vm10021, %v12102, %v12109
  %v12111 = vrot.slane %v11794, 4
  %v12112 = vsel %vm10021, %v12105, %v12111
  %v12113 = vrot.slane %v11795, 4
  %v12114 = vrot.slane %v11798, 4
  %v12115 = vsel %vm10021, %v12113, %v12114
  %v12116 = vrot.slane %v11796, 4
  %v12117 = vrot.slane %v11799, 4
  %v12118 = vsel %vm10021, %v12116, %v12117
  %v12119 = vrot.slane %v11797, 4
  %v12120 = vrot.slane %v11800, 4
  %v12121 = vsel %vm10021, %v12119, %v12120
  %v12122 = vrot.slane %v11801, 4
  %v12123 = vsel %vm10021, %v12114, %v12122
  %v12124 = vrot.slane %v11802, 4
  %v12125 = vsel %vm10021, %v12117, %v12124
  %v12126 = vrot.slane %v11803, 4
  %v12127 = vsel %vm10021, %v12120, %v12126
  %v12128 = vrot.slane %v11804, 4
  %v12129 = vrot.slane %v11807, 4
  %v12130 = vsel %vm10021, %v12128, %v12129
  %v12131 = vrot.slane %v11805, 4
  %v12132 = vrot.slane %v11808, 4
  %v12133 = vsel %vm10021, %v12131, %v12132
  %v12134 = vrot.slane %v11806, 4
  %v12135 = vrot.slane %v11809, 4
  %v12136 = vsel %vm10021, %v12134, %v12135
  %v12137 = vrot.slane %v11810, 4
  %v12138 = vsel %vm10021, %v12129, %v12137
  %v12139 = vrot.slane %v11811, 4
  %v12140 = vsel %vm10021, %v12132, %v12139
  %v12141 = vrot.slane %v11812, 4
  %v12142 = vsel %vm10021, %v12135, %v12141
  %v12143 = vrot.slane %v11813, 4
  %v12144 = vrot.slane %v11816, 4
  %v12145 = vsel %vm10021, %v12143, %v12144
  %v12146 = vrot.slane %v11814, 4
  %v12147 = vrot.slane %v11817, 4
  %v12148 = vsel %vm10021, %v12146, %v12147
  %v12149 = vrot.slane %v11815, 4
  %v12150 = vrot.slane %v11818, 4
  %v12151 = vsel %vm10021, %v12149, %v12150
  %v12152 = vrot.slane %v11819, 4
  %v12153 = vsel %vm10021, %v12144, %v12152
  %v12154 = vrot.slane %v11820, 4
  %v12155 = vsel %vm10021, %v12147, %v12154
  %v12156 = vrot.slane %v11821, 4
  %v12157 = vsel %vm10021, %v12150, %v12156
  %v12242 = vadd.f32 %v11600, %v11950
  %v12243 = vadd.f32 %v11601, %v11953
  %v12244 = vadd.f32 %v11602, %v11956
  %v12245 = vadd.f32 %v11603, %v11958
  %v12246 = vadd.f32 %v11604, %v11960
  %v12247 = vadd.f32 %v11605, %v11962
  %v12248 = vadd.f32 %v11606, %v11965
  %v12249 = vadd.f32 %v11607, %v11968
  %v12250 = vadd.f32 %v11608, %v11971
  %v12251 = vadd.f32 %v11609, %v11973
  %v12252 = vadd.f32 %v11610, %v11975
  %v12253 = vadd.f32 %v11611, %v11977
  %v12254 = vadd.f32 %v11612, %v11980
  %v12255 = vadd.f32 %v11613, %v11983
  %v12256 = vadd.f32 %v11614, %v11986
  %v12257 = vadd.f32 %v11615, %v11988
  %v12258 = vadd.f32 %v11616, %v11990
  %v12259 = vadd.f32 %v11617, %v11992
  %v12260 = vadd.f32 %v11618, %v11995
  %v12261 = vadd.f32 %v11619, %v11998
  %v12262 = vadd.f32 %v11620, %v12001
  %v12263 = vadd.f32 %v11621, %v12003
  %v12264 = vadd.f32 %v11622, %v12005
  %v12265 = vadd.f32 %v11623, %v12007
  %v12266 = vadd.f32 %v11624, %v12010
  %v12267 = vadd.f32 %v11625, %v12013
  %v12268 = vadd.f32 %v11626, %v12016
  %v12269 = vadd.f32 %v11627, %v12018
  %v12270 = vadd.f32 %v11628, %v12020
  %v12271 = vadd.f32 %v11629, %v12022
  %v12272 = vadd.f32 %v11630, %v12025
  %v12273 = vadd.f32 %v11631, %v12028
  %v12274 = vadd.f32 %v11632, %v12031
  %v12275 = vadd.f32 %v11633, %v12033
  %v12276 = vadd.f32 %v11634, %v12035
  %v12277 = vadd.f32 %v11635, %v12037
  %v12278 = vadd.f32 %v11636, %v12040
  %v12279 = vadd.f32 %v11637, %v12043
  %v12280 = vadd.f32 %v11638, %v12046
  %v12281 = vadd.f32 %v11639, %v12048
  %v12282 = vadd.f32 %v11640, %v12050
  %v12283 = vadd.f32 %v11641, %v12052
  %v12284 = vadd.f32 %v11642, %v12055
  %v12285 = vadd.f32 %v11643, %v12058
  %v12286 = vadd.f32 %v11644, %v12061
  %v12287 = vadd.f32 %v11645, %v12063
  %v12288 = vadd.f32 %v11646, %v12065
  %v12289 = vadd.f32 %v11647, %v12067
  %v12290 = vadd.f32 %v11648, %v12070
  %v12291 = vadd.f32 %v11649, %v12073
  %v12292 = vadd.f32 %v11650, %v12076
  %v12293 = vadd.f32 %v11651, %v12078
  %v12294 = vadd.f32 %v11652, %v12080
  %v12295 = vadd.f32 %v11653, %v12082
  %v12296 = vadd.f32 %v11654, %v12085
  %v12297 = vadd.f32 %v11655, %v12088
  %v12298 = vadd.f32 %v11656, %v12091
  %v12299 = vadd.f32 %v11657, %v12093
  %v12300 = vadd.f32 %v11658, %v12095
  %v12301 = vadd.f32 %v11659, %v12097
  %v12302 = vadd.f32 %v11660, %v12100
  %v12303 = vadd.f32 %v11661, %v12103
  %v12304 = vadd.f32 %v11662, %v12106
  %v12305 = vadd.f32 %v11663, %v12108
  %v12306 = vadd.f32 %v11664, %v12110
  %v12307 = vadd.f32 %v11665, %v12112
  %v12308 = vadd.f32 %v11666, %v12115
  %v12309 = vadd.f32 %v11667, %v12118
  %v12310 = vadd.f32 %v11668, %v12121
  %v12311 = vadd.f32 %v11669, %v12123
  %v12312 = vadd.f32 %v11670, %v12125
  %v12313 = vadd.f32 %v11671, %v12127
  %v12314 = vadd.f32 %v11672, %v12130
  %v12315 = vadd.f32 %v11673, %v12133
  %v12316 = vadd.f32 %v11674, %v12136
  %v12317 = vadd.f32 %v11675, %v12138
  %v12318 = vadd.f32 %v11676, %v12140
  %v12319 = vadd.f32 %v11677, %v12142
  %v12320 = vadd.f32 %v11678, %v12145
  %v12321 = vadd.f32 %v11679, %v12148
  %v12322 = vadd.f32 %v11680, %v12151
  %v12323 = vadd.f32 %v11681, %v12153
  %v12324 = vadd.f32 %v11682, %v12155
  %v12325 = vadd.f32 %v11683, %v12157
  %v12326 = vlaneseq
  %v12327 = vshrl.u32 %v12326, 7
  %v12328 = vsub.s32 0, %v12327
  %v12329 = vrot.slane %v901, %v12328
  %v12330 = vlaneseq
  %v12331 = vshrl.u32 %v12330, 7
  %v12332 = vsub.s32 0, %v12331
  %v12333 = vrot.slane %v902, %v12332
  %v12334 = vlaneseq
  %v12335 = vshrl.u32 %v12334, 7
  %v12336 = vsub.s32 0, %v12335
  %v12337 = vrot.slane %v903, %v12336
  %v12338 = vmul.f32 %v766, %v12329
  %v12339 = vmul.f32 %v767, %v12333
  %v12340 = vmul.f32 %v768, %v12337
  %v12341 = vmul.f32 %v769, %v12329
  %v12342 = vmul.f32 %v770, %v12333
  %v12343 = vmul.f32 %v771, %v12337
  %v12344 = vmul.f32 %v772, %v12329
  %v12345 = vmul.f32 %v773, %v12333
  %v12346 = vmul.f32 %v774, %v12337
  %v12347 = vmul.f32 %v775, %v12329
  %v12348 = vmul.f32 %v776, %v12333
  %v12349 = vmul.f32 %v777, %v12337
  %v12350 = vmul.f32 %v778, %v12329
  %v12351 = vmul.f32 %v779, %v12333
  %v12352 = vmul.f32 %v780, %v12337
  %v12353 = vmul.f32 %v781, %v12329
  %v12354 = vmul.f32 %v782, %v12333
  %v12355 = vmul.f32 %v783, %v12337
  %v12356 = vmul.f32 %v784, %v12329
  %v12357 = vmul.f32 %v785, %v12333
  %v12358 = vmul.f32 %v786, %v12337
  %v12359 = vmul.f32 %v787, %v12329
  %v12360 = vmul.f32 %v788, %v12333
  %v12361 = vmul.f32 %v789, %v12337
  %v12362 = vmul.f32 %v790, %v12329
  %v12363 = vmul.f32 %v791, %v12333
  %v12364 = vmul.f32 %v792, %v12337
  %v12365 = vmul.f32 %v793, %v12329
  %v12366 = vmul.f32 %v794, %v12333
  %v12367 = vmul.f32 %v795, %v12337
  %v12368 = vmul.f32 %v796, %v12329
  %v12369 = vmul.f32 %v797, %v12333
  %v12370 = vmul.f32 %v798, %v12337
  %v12371 = vmul.f32 %v799, %v12329
  %v12372 = vmul.f32 %v800, %v12333
  %v12373 = vmul.f32 %v801, %v12337
  %v12374 = vmul.f32 %v802, %v12329
  %v12375 = vmul.f32 %v803, %v12333
  %v12376 = vmul.f32 %v804, %v12337
  %v12377 = vmul.f32 %v805, %v12329
  %v12378 = vmul.f32 %v806, %v12333
  %v12379 = vmul.f32 %v807, %v12337
  %v12380 = vmul.f32 %v808, %v12329
  %v12381 = vmul.f32 %v809, %v12333
  %v12382 = vmul.f32 %v810, %v12337
  %v12383 = vmul.f32 %v811, %v12329
  %v12384 = vmul.f32 %v812, %v12333
  %v12385 = vmul.f32 %v813, %v12337
  %v12386 = vmul.f32 %v814, %v12329
  %v12387 = vmul.f32 %v815, %v12333
  %v12388 = vmul.f32 %v816, %v12337
  %v12389 = vmul.f32 %v817, %v12329
  %v12390 = vmul.f32 %v818, %v12333
  %v12391 = vmul.f32 %v819, %v12337
  %v12392 = vmul.f32 %v820, %v12329
  %v12393 = vmul.f32 %v821, %v12333
  %v12394 = vmul.f32 %v822, %v12337
  %v12395 = vmul.f32 %v823, %v12329
  %v12396 = vmul.f32 %v824, %v12333
  %v12397 = vmul.f32 %v825, %v12337
  %v12398 = vmul.f32 %v826, %v12329
  %v12399 = vmul.f32 %v827, %v12333
  %v12400 = vmul.f32 %v828, %v12337
  %v12401 = vmul.f32 %v829, %v12329
  %v12402 = vmul.f32 %v830, %v12333
  %v12403 = vmul.f32 %v831, %v12337
  %v12404 = vmul.f32 %v832, %v12329
  %v12405 = vmul.f32 %v833, %v12333
  %v12406 = vmul.f32 %v834, %v12337
  %v12407 = vmul.f32 %v835, %v12329
  %v12408 = vmul.f32 %v836, %v12333
  %v12409 = vmul.f32 %v837, %v12337
  %v12410 = vmul.f32 %v838, %v12329
  %v12411 = vmul.f32 %v839, %v12333
  %v12412 = vmul.f32 %v840, %v12337
  %v12413 = vmul.f32 %v841, %v12329
  %v12414 = vmul.f32 %v842, %v12333
  %v12415 = vmul.f32 %v843, %v12337
  %v12416 = vmul.f32 %v844, %v12329
  %v12417 = vmul.f32 %v845, %v12333
  %v12418 = vmul.f32 %v846, %v12337
  %v12419 = vmul.f32 %v847, %v12329
  %v12420 = vmul.f32 %v848, %v12333
  %v12421 = vmul.f32 %v849, %v12337
  %v12422 = vmul.f32 %v850, %v12329
  %v12423 = vmul.f32 %v851, %v12333
  %v12424 = vmul.f32 %v852, %v12337
  %v12425 = vmul.f32 %v853, %v12329
  %v12426 = vmul.f32 %v854, %v12333
  %v12427 = vmul.f32 %v855, %v12337
  %v12428 = vmul.f32 %v856, %v12329
  %v12429 = vmul.f32 %v857, %v12333
  %v12430 = vmul.f32 %v858, %v12337
  %v12431 = vmul.f32 %v859, %v12329
  %v12432 = vmul.f32 %v860, %v12333
  %v12433 = vmul.f32 %v861, %v12337
  %v12434 = vmul.f32 %v862, %v12329
  %v12435 = vmul.f32 %v863, %v12333
  %v12436 = vmul.f32 %v864, %v12337
  %v12437 = vmul.f32 %v865, %v12329
  %v12438 = vmul.f32 %v866, %v12333
  %v12439 = vmul.f32 %v867, %v12337
  %v12440 = vmul.f32 %v868, %v12329
  %v12441 = vmul.f32 %v869, %v12333
  %v12442 = vmul.f32 %v870, %v12337
  %v12443 = vmul.f32 %v871, %v12329
  %v12444 = vmul.f32 %v872, %v12333
  %v12445 = vmul.f32 %v873, %v12337
  %v12446 = vmul.f32 %v874, %v12329
  %v12447 = vmul.f32 %v875, %v12333
  %v12448 = vmul.f32 %v876, %v12337
  %v12449 = vmul.f32 %v877, %v12329
  %v12450 = vmul.f32 %v878, %v12333
  %v12451 = vmul.f32 %v879, %v12337
  %v12452 = vmul.f32 %v880, %v12329
  %v12453 = vmul.f32 %v881, %v12333
  %v12454 = vmul.f32 %v882, %v12337
  %v12455 = vmul.f32 %v883, %v12329
  %v12456 = vmul.f32 %v884, %v12333
  %v12457 = vmul.f32 %v885, %v12337
  %v12458 = vmul.f32 %v886, %v12329
  %v12459 = vmul.f32 %v887, %v12333
  %v12460 = vmul.f32 %v888, %v12337
  %v12461 = vmul.f32 %v889, %v12329
  %v12462 = vmul.f32 %v890, %v12333
  %v12463 = vmul.f32 %v891, %v12337
  %v12590 = vrot.slane %v12338, 4
  %v12591 = vrot.slane %v12341, 4
  %v12592 = vsel %vm10021, %v12590, %v12591
  %v12593 = vrot.slane %v12339, 4
  %v12594 = vrot.slane %v12342, 4
  %v12595 = vsel %vm10021, %v12593, %v12594
  %v12596 = vrot.slane %v12340, 4
  %v12597 = vrot.slane %v12343, 4
  %v12598 = vsel %vm10021, %v12596, %v12597
  %v12599 = vrot.slane %v12344, 4
  %v12600 = vsel %vm10021, %v12591, %v12599
  %v12601 = vrot.slane %v12345, 4
  %v12602 = vsel %vm10021, %v12594, %v12601
  %v12603 = vrot.slane %v12346, 4
  %v12604 = vsel %vm10021, %v12597, %v12603
  %v12605 = vrot.slane %v12347, 4
  %v12606 = vrot.slane %v12350, 4
  %v12607 = vsel %vm10021, %v12605, %v12606
  %v12608 = vrot.slane %v12348, 4
  %v12609 = vrot.slane %v12351, 4
  %v12610 = vsel %vm10021, %v12608, %v12609
  %v12611 = vrot.slane %v12349, 4
  %v12612 = vrot.slane %v12352, 4
  %v12613 = vsel %vm10021, %v12611, %v12612
  %v12614 = vrot.slane %v12353, 4
  %v12615 = vsel %vm10021, %v12606, %v12614
  %v12616 = vrot.slane %v12354, 4
  %v12617 = vsel %vm10021, %v12609, %v12616
  %v12618 = vrot.slane %v12355, 4
  %v12619 = vsel %vm10021, %v12612, %v12618
  %v12620 = vrot.slane %v12356, 4
  %v12621 = vrot.slane %v12359, 4
  %v12622 = vsel %vm10021, %v12620, %v12621
  %v12623 = vrot.slane %v12357, 4
  %v12624 = vrot.slane %v12360, 4
  %v12625 = vsel %vm10021, %v12623, %v12624
  %v12626 = vrot.slane %v12358, 4
  %v12627 = vrot.slane %v12361, 4
  %v12628 = vsel %vm10021, %v12626, %v12627
  %v12629 = vrot.slane %v12362, 4
  %v12630 = vsel %vm10021, %v12621, %v12629
  %v12631 = vrot.slane %v12363, 4
  %v12632 = vsel %vm10021, %v12624, %v12631
  %v12633 = vrot.slane %v12364, 4
  %v12634 = vsel %vm10021, %v12627, %v12633
  %v12635 = vrot.slane %v12365, 4
  %v12636 = vrot.slane %v12368, 4
  %v12637 = vsel %vm10021, %v12635, %v12636
  %v12638 = vrot.slane %v12366, 4
  %v12639 = vrot.slane %v12369, 4
  %v12640 = vsel %vm10021, %v12638, %v12639
  %v12641 = vrot.slane %v12367, 4
  %v12642 = vrot.slane %v12370, 4
  %v12643 = vsel %vm10021, %v12641, %v12642
  %v12644 = vrot.slane %v12371, 4
  %v12645 = vsel %vm10021, %v12636, %v12644
  %v12646 = vrot.slane %v12372, 4
  %v12647 = vsel %vm10021, %v12639, %v12646
  %v12648 = vrot.slane %v12373, 4
  %v12649 = vsel %vm10021, %v12642, %v12648
  %v12650 = vrot.slane %v12374, 4
  %v12651 = vrot.slane %v12377, 4
  %v12652 = vsel %vm10021, %v12650, %v12651
  %v12653 = vrot.slane %v12375, 4
  %v12654 = vrot.slane %v12378, 4
  %v12655 = vsel %vm10021, %v12653, %v12654
  %v12656 = vrot.slane %v12376, 4
  %v12657 = vrot.slane %v12379, 4
  %v12658 = vsel %vm10021, %v12656, %v12657
  %v12659 = vrot.slane %v12380, 4
  %v12660 = vsel %vm10021, %v12651, %v12659
  %v12661 = vrot.slane %v12381, 4
  %v12662 = vsel %vm10021, %v12654, %v12661
  %v12663 = vrot.slane %v12382, 4
  %v12664 = vsel %vm10021, %v12657, %v12663
  %v12665 = vrot.slane %v12383, 4
  %v12666 = vrot.slane %v12386, 4
  %v12667 = vsel %vm10021, %v12665, %v12666
  %v12668 = vrot.slane %v12384, 4
  %v12669 = vrot.slane %v12387, 4
  %v12670 = vsel %vm10021, %v12668, %v12669
  %v12671 = vrot.slane %v12385, 4
  %v12672 = vrot.slane %v12388, 4
  %v12673 = vsel %vm10021, %v12671, %v12672
  %v12674 = vrot.slane %v12389, 4
  %v12675 = vsel %vm10021, %v12666, %v12674
  %v12676 = vrot.slane %v12390, 4
  %v12677 = vsel %vm10021, %v12669, %v12676
  %v12678 = vrot.slane %v12391, 4
  %v12679 = vsel %vm10021, %v12672, %v12678
  %v12680 = vrot.slane %v12392, 4
  %v12681 = vrot.slane %v12395, 4
  %v12682 = vsel %vm10021, %v12680, %v12681
  %v12683 = vrot.slane %v12393, 4
  %v12684 = vrot.slane %v12396, 4
  %v12685 = vsel %vm10021, %v12683, %v12684
  %v12686 = vrot.slane %v12394, 4
  %v12687 = vrot.slane %v12397, 4
  %v12688 = vsel %vm10021, %v12686, %v12687
  %v12689 = vrot.slane %v12398, 4
  %v12690 = vsel %vm10021, %v12681, %v12689
  %v12691 = vrot.slane %v12399, 4
  %v12692 = vsel %vm10021, %v12684, %v12691
  %v12693 = vrot.slane %v12400, 4
  %v12694 = vsel %vm10021, %v12687, %v12693
  %v12695 = vrot.slane %v12401, 4
  %v12696 = vrot.slane %v12404, 4
  %v12697 = vsel %vm10021, %v12695, %v12696
  %v12698 = vrot.slane %v12402, 4
  %v12699 = vrot.slane %v12405, 4
  %v12700 = vsel %vm10021, %v12698, %v12699
  %v12701 = vrot.slane %v12403, 4
  %v12702 = vrot.slane %v12406, 4
  %v12703 = vsel %vm10021, %v12701, %v12702
  %v12704 = vrot.slane %v12407, 4
  %v12705 = vsel %vm10021, %v12696, %v12704
  %v12706 = vrot.slane %v12408, 4
  %v12707 = vsel %vm10021, %v12699, %v12706
  %v12708 = vrot.slane %v12409, 4
  %v12709 = vsel %vm10021, %v12702, %v12708
  %v12710 = vrot.slane %v12410, 4
  %v12711 = vrot.slane %v12413, 4
  %v12712 = vsel %vm10021, %v12710, %v12711
  %v12713 = vrot.slane %v12411, 4
  %v12714 = vrot.slane %v12414, 4
  %v12715 = vsel %vm10021, %v12713, %v12714
  %v12716 = vrot.slane %v12412, 4
  %v12717 = vrot.slane %v12415, 4
  %v12718 = vsel %vm10021, %v12716, %v12717
  %v12719 = vrot.slane %v12416, 4
  %v12720 = vsel %vm10021, %v12711, %v12719
  %v12721 = vrot.slane %v12417, 4
  %v12722 = vsel %vm10021, %v12714, %v12721
  %v12723 = vrot.slane %v12418, 4
  %v12724 = vsel %vm10021, %v12717, %v12723
  %v12725 = vrot.slane %v12419, 4
  %v12726 = vrot.slane %v12422, 4
  %v12727 = vsel %vm10021, %v12725, %v12726
  %v12728 = vrot.slane %v12420, 4
  %v12729 = vrot.slane %v12423, 4
  %v12730 = vsel %vm10021, %v12728, %v12729
  %v12731 = vrot.slane %v12421, 4
  %v12732 = vrot.slane %v12424, 4
  %v12733 = vsel %vm10021, %v12731, %v12732
  %v12734 = vrot.slane %v12425, 4
  %v12735 = vsel %vm10021, %v12726, %v12734
  %v12736 = vrot.slane %v12426, 4
  %v12737 = vsel %vm10021, %v12729, %v12736
  %v12738 = vrot.slane %v12427, 4
  %v12739 = vsel %vm10021, %v12732, %v12738
  %v12740 = vrot.slane %v12428, 4
  %v12741 = vrot.slane %v12431, 4
  %v12742 = vsel %vm10021, %v12740, %v12741
  %v12743 = vrot.slane %v12429, 4
  %v12744 = vrot.slane %v12432, 4
  %v12745 = vsel %vm10021, %v12743, %v12744
  %v12746 = vrot.slane %v12430, 4
  %v12747 = vrot.slane %v12433, 4
  %v12748 = vsel %vm10021, %v12746, %v12747
  %v12749 = vrot.slane %v12434, 4
  %v12750 = vsel %vm10021, %v12741, %v12749
  %v12751 = vrot.slane %v12435, 4
  %v12752 = vsel %vm10021, %v12744, %v12751
  %v12753 = vrot.slane %v12436, 4
  %v12754 = vsel %vm10021, %v12747, %v12753
  %v12755 = vrot.slane %v12437, 4
  %v12756 = vrot.slane %v12440, 4
  %v12757 = vsel %vm10021, %v12755, %v12756
  %v12758 = vrot.slane %v12438, 4
  %v12759 = vrot.slane %v12441, 4
  %v12760 = vsel %vm10021, %v12758, %v12759
  %v12761 = vrot.slane %v12439, 4
  %v12762 = vrot.slane %v12442, 4
  %v12763 = vsel %vm10021, %v12761, %v12762
  %v12764 = vrot.slane %v12443, 4
  %v12765 = vsel %vm10021, %v12756, %v12764
  %v12766 = vrot.slane %v12444, 4
  %v12767 = vsel %vm10021, %v12759, %v12766
  %v12768 = vrot.slane %v12445, 4
  %v12769 = vsel %vm10021, %v12762, %v12768
  %v12770 = vrot.slane %v12446, 4
  %v12771 = vrot.slane %v12449, 4
  %v12772 = vsel %vm10021, %v12770, %v12771
  %v12773 = vrot.slane %v12447, 4
  %v12774 = vrot.slane %v12450, 4
  %v12775 = vsel %vm10021, %v12773, %v12774
  %v12776 = vrot.slane %v12448, 4
  %v12777 = vrot.slane %v12451, 4
  %v12778 = vsel %vm10021, %v12776, %v12777
  %v12779 = vrot.slane %v12452, 4
  %v12780 = vsel %vm10021, %v12771, %v12779
  %v12781 = vrot.slane %v12453, 4
  %v12782 = vsel %vm10021, %v12774, %v12781
  %v12783 = vrot.slane %v12454, 4
  %v12784 = vsel %vm10021, %v12777, %v12783
  %v12785 = vrot.slane %v12455, 4
  %v12786 = vrot.slane %v12458, 4
  %v12787 = vsel %vm10021, %v12785, %v12786
  %v12788 = vrot.slane %v12456, 4
  %v12789 = vrot.slane %v12459, 4
  %v12790 = vsel %vm10021, %v12788, %v12789
  %v12791 = vrot.slane %v12457, 4
  %v12792 = vrot.slane %v12460, 4
  %v12793 = vsel %vm10021, %v12791, %v12792
  %v12794 = vrot.slane %v12461, 4
  %v12795 = vsel %vm10021, %v12786, %v12794
  %v12796 = vrot.slane %v12462, 4
  %v12797 = vsel %vm10021, %v12789, %v12796
  %v12798 = vrot.slane %v12463, 4
  %v12799 = vsel %vm10021, %v12792, %v12798
  %v12884 = vadd.f32 %v12242, %v12592
  %v12885 = vadd.f32 %v12243, %v12595
  %v12886 = vadd.f32 %v12244, %v12598
  %v12887 = vadd.f32 %v12245, %v12600
  %v12888 = vadd.f32 %v12246, %v12602
  %v12889 = vadd.f32 %v12247, %v12604
  %v12890 = vadd.f32 %v12248, %v12607
  %v12891 = vadd.f32 %v12249, %v12610
  %v12892 = vadd.f32 %v12250, %v12613
  %v12893 = vadd.f32 %v12251, %v12615
  %v12894 = vadd.f32 %v12252, %v12617
  %v12895 = vadd.f32 %v12253, %v12619
  %v12896 = vadd.f32 %v12254, %v12622
  %v12897 = vadd.f32 %v12255, %v12625
  %v12898 = vadd.f32 %v12256, %v12628
  %v12899 = vadd.f32 %v12257, %v12630
  %v12900 = vadd.f32 %v12258, %v12632
  %v12901 = vadd.f32 %v12259, %v12634
  %v12902 = vadd.f32 %v12260, %v12637
  %v12903 = vadd.f32 %v12261, %v12640
  %v12904 = vadd.f32 %v12262, %v12643
  %v12905 = vadd.f32 %v12263, %v12645
  %v12906 = vadd.f32 %v12264, %v12647
  %v12907 = vadd.f32 %v12265, %v12649
  %v12908 = vadd.f32 %v12266, %v12652
  %v12909 = vadd.f32 %v12267, %v12655
  %v12910 = vadd.f32 %v12268, %v12658
  %v12911 = vadd.f32 %v12269, %v12660
  %v12912 = vadd.f32 %v12270, %v12662
  %v12913 = vadd.f32 %v12271, %v12664
  %v12914 = vadd.f32 %v12272, %v12667
  %v12915 = vadd.f32 %v12273, %v12670
  %v12916 = vadd.f32 %v12274, %v12673
  %v12917 = vadd.f32 %v12275, %v12675
  %v12918 = vadd.f32 %v12276, %v12677
  %v12919 = vadd.f32 %v12277, %v12679
  %v12920 = vadd.f32 %v12278, %v12682
  %v12921 = vadd.f32 %v12279, %v12685
  %v12922 = vadd.f32 %v12280, %v12688
  %v12923 = vadd.f32 %v12281, %v12690
  %v12924 = vadd.f32 %v12282, %v12692
  %v12925 = vadd.f32 %v12283, %v12694
  %v12926 = vadd.f32 %v12284, %v12697
  %v12927 = vadd.f32 %v12285, %v12700
  %v12928 = vadd.f32 %v12286, %v12703
  %v12929 = vadd.f32 %v12287, %v12705
  %v12930 = vadd.f32 %v12288, %v12707
  %v12931 = vadd.f32 %v12289, %v12709
  %v12932 = vadd.f32 %v12290, %v12712
  %v12933 = vadd.f32 %v12291, %v12715
  %v12934 = vadd.f32 %v12292, %v12718
  %v12935 = vadd.f32 %v12293, %v12720
  %v12936 = vadd.f32 %v12294, %v12722
  %v12937 = vadd.f32 %v12295, %v12724
  %v12938 = vadd.f32 %v12296, %v12727
  %v12939 = vadd.f32 %v12297, %v12730
  %v12940 = vadd.f32 %v12298, %v12733
  %v12941 = vadd.f32 %v12299, %v12735
  %v12942 = vadd.f32 %v12300, %v12737
  %v12943 = vadd.f32 %v12301, %v12739
  %v12944 = vadd.f32 %v12302, %v12742
  %v12945 = vadd.f32 %v12303, %v12745
  %v12946 = vadd.f32 %v12304, %v12748
  %v12947 = vadd.f32 %v12305, %v12750
  %v12948 = vadd.f32 %v12306, %v12752
  %v12949 = vadd.f32 %v12307, %v12754
  %v12950 = vadd.f32 %v12308, %v12757
  %v12951 = vadd.f32 %v12309, %v12760
  %v12952 = vadd.f32 %v12310, %v12763
  %v12953 = vadd.f32 %v12311, %v12765
  %v12954 = vadd.f32 %v12312, %v12767
  %v12955 = vadd.f32 %v12313, %v12769
  %v12956 = vadd.f32 %v12314, %v12772
  %v12957 = vadd.f32 %v12315, %v12775
  %v12958 = vadd.f32 %v12316, %v12778
  %v12959 = vadd.f32 %v12317, %v12780
  %v12960 = vadd.f32 %v12318, %v12782
  %v12961 = vadd.f32 %v12319, %v12784
  %v12962 = vadd.f32 %v12320, %v12787
  %v12963 = vadd.f32 %v12321, %v12790
  %v12964 = vadd.f32 %v12322, %v12793
  %v12965 = vadd.f32 %v12323, %v12795
  %v12966 = vadd.f32 %v12324, %v12797
  %v12967 = vadd.f32 %v12325, %v12799
  %v12968 = vsel %vm4355, %v12887, 0.0
  %v12969 = vadd.f32 %v12884, %v12968
  %v12970 = vadd.f32 %v12969, %v12890
  %v12971 = vsel %vm4355, %v12893, 0.0
  %v12972 = vadd.f32 %v12970, %v12971
  %v12973 = vadd.f32 %v12972, %v12896
  %v12974 = vsel %vm4355, %v12899, 0.0
  %v12975 = vadd.f32 %v12973, %v12974
  %v12976 = vadd.f32 %v12975, %v12902
  %v12977 = vsel %vm4355, %v12905, 0.0
  %v12978 = vadd.f32 %v12976, %v12977
  %v12979 = vadd.f32 %v12978, %v12908
  %v12980 = vsel %vm4355, %v12911, 0.0
  %v12981 = vadd.f32 %v12979, %v12980
  %v12982 = vadd.f32 %v12981, %v12914
  %v12983 = vsel %vm4355, %v12917, 0.0
  %v12984 = vadd.f32 %v12982, %v12983
  %v12985 = vadd.f32 %v12984, %v12920
  %v12986 = vsel %vm4355, %v12923, 0.0
  %v12987 = vadd.f32 %v12985, %v12986
  %v12988 = vadd.f32 %v12987, %v12926
  %v12989 = vsel %vm4355, %v12929, 0.0
  %v12990 = vadd.f32 %v12988, %v12989
  %v12991 = vadd.f32 %v12990, %v12932
  %v12992 = vsel %vm4355, %v12935, 0.0
  %v12993 = vadd.f32 %v12991, %v12992
  %v12994 = vadd.f32 %v12993, %v12938
  %v12995 = vsel %vm4355, %v12941, 0.0
  %v12996 = vadd.f32 %v12994, %v12995
  %v12997 = vadd.f32 %v12996, %v12944
  %v12998 = vsel %vm4355, %v12947, 0.0
  %v12999 = vadd.f32 %v12997, %v12998
  %v13000 = vadd.f32 %v12999, %v12950
  %v13001 = vsel %vm4355, %v12953, 0.0
  %v13002 = vadd.f32 %v13000, %v13001
  %v13003 = vadd.f32 %v13002, %v12956
  %v13004 = vsel %vm4355, %v12959, 0.0
  %v13005 = vadd.f32 %v13003, %v13004
  %v13006 = vadd.f32 %v13005, %v12962
  %v13007 = vsel %vm4355, %v12965, 0.0
  %v13008 = vadd.f32 %v13006, %v13007
  %v13009 = vrot.slane %v13008, 4
  %v13010 = vadd.f32 %v13008, %v13009
  %v13011 = vrot.slane %v13010, 2
  %v13012 = vadd.f32 %v13010, %v13011
  %v13013 = vrot.slane %v13012, 1
  %v13014 = vadd.f32 %v13012, %v13013
  %v13015 = vsel %vm4355, %v12888, 0.0
  %v13016 = vadd.f32 %v12885, %v13015
  %v13017 = vadd.f32 %v13016, %v12891
  %v13018 = vsel %vm4355, %v12894, 0.0
  %v13019 = vadd.f32 %v13017, %v13018
  %v13020 = vadd.f32 %v13019, %v12897
  %v13021 = vsel %vm4355, %v12900, 0.0
  %v13022 = vadd.f32 %v13020, %v13021
  %v13023 = vadd.f32 %v13022, %v12903
  %v13024 = vsel %vm4355, %v12906, 0.0
  %v13025 = vadd.f32 %v13023, %v13024
  %v13026 = vadd.f32 %v13025, %v12909
  %v13027 = vsel %vm4355, %v12912, 0.0
  %v13028 = vadd.f32 %v13026, %v13027
  %v13029 = vadd.f32 %v13028, %v12915
  %v13030 = vsel %vm4355, %v12918, 0.0
  %v13031 = vadd.f32 %v13029, %v13030
  %v13032 = vadd.f32 %v13031, %v12921
  %v13033 = vsel %vm4355, %v12924, 0.0
  %v13034 = vadd.f32 %v13032, %v13033
  %v13035 = vadd.f32 %v13034, %v12927
  %v13036 = vsel %vm4355, %v12930, 0.0
  %v13037 = vadd.f32 %v13035, %v13036
  %v13038 = vadd.f32 %v13037, %v12933
  %v13039 = vsel %vm4355, %v12936, 0.0
  %v13040 = vadd.f32 %v13038, %v13039
  %v13041 = vadd.f32 %v13040, %v12939
  %v13042 = vsel %vm4355, %v12942, 0.0
  %v13043 = vadd.f32 %v13041, %v13042
  %v13044 = vadd.f32 %v13043, %v12945
  %v13045 = vsel %vm4355, %v12948, 0.0
  %v13046 = vadd.f32 %v13044, %v13045
  %v13047 = vadd.f32 %v13046, %v12951
  %v13048 = vsel %vm4355, %v12954, 0.0
  %v13049 = vadd.f32 %v13047, %v13048
  %v13050 = vadd.f32 %v13049, %v12957
  %v13051 = vsel %vm4355, %v12960, 0.0
  %v13052 = vadd.f32 %v13050, %v13051
  %v13053 = vadd.f32 %v13052, %v12963
  %v13054 = vsel %vm4355, %v12966, 0.0
  %v13055 = vadd.f32 %v13053, %v13054
  %v13056 = vrot.slane %v13055, 4
  %v13057 = vadd.f32 %v13055, %v13056
  %v13058 = vrot.slane %v13057, 2
  %v13059 = vadd.f32 %v13057, %v13058
  %v13060 = vrot.slane %v13059, 1
  %v13061 = vadd.f32 %v13059, %v13060
  %v13062 = vsel %vm19, %v12886, 0.0
  %vm13063 = vcmask 259072
  %v13064 = vsel %vm13063, %v12889, 0.0
  %v13065 = vadd.f32 %v13062, %v13064
  %v13066 = vsel %vm19, %v12892, 0.0
  %v13067 = vadd.f32 %v13065, %v13066
  %v13068 = vsel %vm13063, %v12895, 0.0
  %v13069 = vadd.f32 %v13067, %v13068
  %v13070 = vsel %vm19, %v12898, 0.0
  %v13071 = vadd.f32 %v13069, %v13070
  %v13072 = vsel %vm13063, %v12901, 0.0
  %v13073 = vadd.f32 %v13071, %v13072
  %v13074 = vsel %vm19, %v12904, 0.0
  %v13075 = vadd.f32 %v13073, %v13074
  %v13076 = vsel %vm13063, %v12907, 0.0
  %v13077 = vadd.f32 %v13075, %v13076
  %v13078 = vsel %vm19, %v12910, 0.0
  %v13079 = vadd.f32 %v13077, %v13078
  %v13080 = vsel %vm13063, %v12913, 0.0
  %v13081 = vadd.f32 %v13079, %v13080
  %v13082 = vsel %vm19, %v12916, 0.0
  %v13083 = vadd.f32 %v13081, %v13082
  %v13084 = vsel %vm13063, %v12919, 0.0
  %v13085 = vadd.f32 %v13083, %v13084
  %v13086 = vsel %vm19, %v12922, 0.0
  %v13087 = vadd.f32 %v13085, %v13086
  %v13088 = vsel %vm13063, %v12925, 0.0
  %v13089 = vadd.f32 %v13087, %v13088
  %v13090 = vsel %vm19, %v12928, 0.0
  %v13091 = vadd.f32 %v13089, %v13090
  %v13092 = vsel %vm13063, %v12931, 0.0
  %v13093 = vadd.f32 %v13091, %v13092
  %v13094 = vsel %vm19, %v12934, 0.0
  %v13095 = vadd.f32 %v13093, %v13094
  %v13096 = vsel %vm13063, %v12937, 0.0
  %v13097 = vadd.f32 %v13095, %v13096
  %v13098 = vsel %vm19, %v12940, 0.0
  %v13099 = vadd.f32 %v13097, %v13098
  %v13100 = vsel %vm13063, %v12943, 0.0
  %v13101 = vadd.f32 %v13099, %v13100
  %v13102 = vsel %vm19, %v12946, 0.0
  %v13103 = vadd.f32 %v13101, %v13102
  %v13104 = vsel %vm13063, %v12949, 0.0
  %v13105 = vadd.f32 %v13103, %v13104
  %v13106 = vsel %vm19, %v12952, 0.0
  %v13107 = vadd.f32 %v13105, %v13106
  %v13108 = vsel %vm13063, %v12955, 0.0
  %v13109 = vadd.f32 %v13107, %v13108
  %v13110 = vsel %vm19, %v12958, 0.0
  %v13111 = vadd.f32 %v13109, %v13110
  %v13112 = vsel %vm13063, %v12961, 0.0
  %v13113 = vadd.f32 %v13111, %v13112
  %v13114 = vsel %vm19, %v12964, 0.0
  %v13115 = vadd.f32 %v13113, %v13114
  %v13116 = vsel %vm13063, %v12967, 0.0
  %v13117 = vadd.f32 %v13115, %v13116
  %v13118 = vrot.slane %v13117, 4
  %v13119 = vadd.f32 %v13117, %v13118
  %v13120 = vrot.slane %v13119, 2
  %v13121 = vadd.f32 %v13119, %v13120
  %v13122 = vrot.slane %v13121, 1
  %v13123 = vadd.f32 %v13121, %v13122
  %v13124 = vmul.f32 %v12884, %v12884
  %v13125 = vmul.f32 %v12885, %v12885
  %v13126 = vmul.f32 %v12886, %v12886
  %v13127 = vmul.f32 %v12887, %v12887
  %v13128 = vmul.f32 %v12888, %v12888
  %v13129 = vmul.f32 %v12889, %v12889
  %v13130 = vmul.f32 %v12890, %v12890
  %v13131 = vmul.f32 %v12891, %v12891
  %v13132 = vmul.f32 %v12892, %v12892
  %v13133 = vmul.f32 %v12893, %v12893
  %v13134 = vmul.f32 %v12894, %v12894
  %v13135 = vmul.f32 %v12895, %v12895
  %v13136 = vmul.f32 %v12896, %v12896
  %v13137 = vmul.f32 %v12897, %v12897
  %v13138 = vmul.f32 %v12898, %v12898
  %v13139 = vmul.f32 %v12899, %v12899
  %v13140 = vmul.f32 %v12900, %v12900
  %v13141 = vmul.f32 %v12901, %v12901
  %v13142 = vmul.f32 %v12902, %v12902
  %v13143 = vmul.f32 %v12903, %v12903
  %v13144 = vmul.f32 %v12904, %v12904
  %v13145 = vmul.f32 %v12905, %v12905
  %v13146 = vmul.f32 %v12906, %v12906
  %v13147 = vmul.f32 %v12907, %v12907
  %v13148 = vmul.f32 %v12908, %v12908
  %v13149 = vmul.f32 %v12909, %v12909
  %v13150 = vmul.f32 %v12910, %v12910
  %v13151 = vmul.f32 %v12911, %v12911
  %v13152 = vmul.f32 %v12912, %v12912
  %v13153 = vmul.f32 %v12913, %v12913
  %v13154 = vmul.f32 %v12914, %v12914
  %v13155 = vmul.f32 %v12915, %v12915
  %v13156 = vmul.f32 %v12916, %v12916
  %v13157 = vmul.f32 %v12917, %v12917
  %v13158 = vmul.f32 %v12918, %v12918
  %v13159 = vmul.f32 %v12919, %v12919
  %v13160 = vmul.f32 %v12920, %v12920
  %v13161 = vmul.f32 %v12921, %v12921
  %v13162 = vmul.f32 %v12922, %v12922
  %v13163 = vmul.f32 %v12923, %v12923
  %v13164 = vmul.f32 %v12924, %v12924
  %v13165 = vmul.f32 %v12925, %v12925
  %v13166 = vmul.f32 %v12926, %v12926
  %v13167 = vmul.f32 %v12927, %v12927
  %v13168 = vmul.f32 %v12928, %v12928
  %v13169 = vmul.f32 %v12929, %v12929
  %v13170 = vmul.f32 %v12930, %v12930
  %v13171 = vmul.f32 %v12931, %v12931
  %v13172 = vmul.f32 %v12932, %v12932
  %v13173 = vmul.f32 %v12933, %v12933
  %v13174 = vmul.f32 %v12934, %v12934
  %v13175 = vmul.f32 %v12935, %v12935
  %v13176 = vmul.f32 %v12936, %v12936
  %v13177 = vmul.f32 %v12937, %v12937
  %v13178 = vmul.f32 %v12938, %v12938
  %v13179 = vmul.f32 %v12939, %v12939
  %v13180 = vmul.f32 %v12940, %v12940
  %v13181 = vmul.f32 %v12941, %v12941
  %v13182 = vmul.f32 %v12942, %v12942
  %v13183 = vmul.f32 %v12943, %v12943
  %v13184 = vmul.f32 %v12944, %v12944
  %v13185 = vmul.f32 %v12945, %v12945
  %v13186 = vmul.f32 %v12946, %v12946
  %v13187 = vmul.f32 %v12947, %v12947
  %v13188 = vmul.f32 %v12948, %v12948
  %v13189 = vmul.f32 %v12949, %v12949
  %v13190 = vmul.f32 %v12950, %v12950
  %v13191 = vmul.f32 %v12951, %v12951
  %v13192 = vmul.f32 %v12952, %v12952
  %v13193 = vmul.f32 %v12953, %v12953
  %v13194 = vmul.f32 %v12954, %v12954
  %v13195 = vmul.f32 %v12955, %v12955
  %v13196 = vmul.f32 %v12956, %v12956
  %v13197 = vmul.f32 %v12957, %v12957
  %v13198 = vmul.f32 %v12958, %v12958
  %v13199 = vmul.f32 %v12959, %v12959
  %v13200 = vmul.f32 %v12960, %v12960
  %v13201 = vmul.f32 %v12961, %v12961
  %v13202 = vmul.f32 %v12962, %v12962
  %v13203 = vmul.f32 %v12963, %v12963
  %v13204 = vmul.f32 %v12964, %v12964
  %v13205 = vmul.f32 %v12965, %v12965
  %v13206 = vmul.f32 %v12966, %v12966
  %v13207 = vmul.f32 %v12967, %v12967
  %v13208 = vsel %vm4355, %v13127, 0.0
  %v13209 = vadd.f32 %v13124, %v13208
  %v13210 = vadd.f32 %v13209, %v13130
  %v13211 = vsel %vm4355, %v13133, 0.0
  %v13212 = vadd.f32 %v13210, %v13211
  %v13213 = vadd.f32 %v13212, %v13136
  %v13214 = vsel %vm4355, %v13139, 0.0
  %v13215 = vadd.f32 %v13213, %v13214
  %v13216 = vadd.f32 %v13215, %v13142
  %v13217 = vsel %vm4355, %v13145, 0.0
  %v13218 = vadd.f32 %v13216, %v13217
  %v13219 = vadd.f32 %v13218, %v13148
  %v13220 = vsel %vm4355, %v13151, 0.0
  %v13221 = vadd.f32 %v13219, %v13220
  %v13222 = vadd.f32 %v13221, %v13154
  %v13223 = vsel %vm4355, %v13157, 0.0
  %v13224 = vadd.f32 %v13222, %v13223
  %v13225 = vadd.f32 %v13224, %v13160
  %v13226 = vsel %vm4355, %v13163, 0.0
  %v13227 = vadd.f32 %v13225, %v13226
  %v13228 = vadd.f32 %v13227, %v13166
  %v13229 = vsel %vm4355, %v13169, 0.0
  %v13230 = vadd.f32 %v13228, %v13229
  %v13231 = vadd.f32 %v13230, %v13172
  %v13232 = vsel %vm4355, %v13175, 0.0
  %v13233 = vadd.f32 %v13231, %v13232
  %v13234 = vadd.f32 %v13233, %v13178
  %v13235 = vsel %vm4355, %v13181, 0.0
  %v13236 = vadd.f32 %v13234, %v13235
  %v13237 = vadd.f32 %v13236, %v13184
  %v13238 = vsel %vm4355, %v13187, 0.0
  %v13239 = vadd.f32 %v13237, %v13238
  %v13240 = vadd.f32 %v13239, %v13190
  %v13241 = vsel %vm4355, %v13193, 0.0
  %v13242 = vadd.f32 %v13240, %v13241
  %v13243 = vadd.f32 %v13242, %v13196
  %v13244 = vsel %vm4355, %v13199, 0.0
  %v13245 = vadd.f32 %v13243, %v13244
  %v13246 = vadd.f32 %v13245, %v13202
  %v13247 = vsel %vm4355, %v13205, 0.0
  %v13248 = vadd.f32 %v13246, %v13247
  %v13249 = vrot.slane %v13248, 4
  %v13250 = vadd.f32 %v13248, %v13249
  %v13251 = vrot.slane %v13250, 2
  %v13252 = vadd.f32 %v13250, %v13251
  %v13253 = vrot.slane %v13252, 1
  %v13254 = vadd.f32 %v13252, %v13253
  %v13255 = vsel %vm4355, %v13128, 0.0
  %v13256 = vadd.f32 %v13125, %v13255
  %v13257 = vadd.f32 %v13256, %v13131
  %v13258 = vsel %vm4355, %v13134, 0.0
  %v13259 = vadd.f32 %v13257, %v13258
  %v13260 = vadd.f32 %v13259, %v13137
  %v13261 = vsel %vm4355, %v13140, 0.0
  %v13262 = vadd.f32 %v13260, %v13261
  %v13263 = vadd.f32 %v13262, %v13143
  %v13264 = vsel %vm4355, %v13146, 0.0
  %v13265 = vadd.f32 %v13263, %v13264
  %v13266 = vadd.f32 %v13265, %v13149
  %v13267 = vsel %vm4355, %v13152, 0.0
  %v13268 = vadd.f32 %v13266, %v13267
  %v13269 = vadd.f32 %v13268, %v13155
  %v13270 = vsel %vm4355, %v13158, 0.0
  %v13271 = vadd.f32 %v13269, %v13270
  %v13272 = vadd.f32 %v13271, %v13161
  %v13273 = vsel %vm4355, %v13164, 0.0
  %v13274 = vadd.f32 %v13272, %v13273
  %v13275 = vadd.f32 %v13274, %v13167
  %v13276 = vsel %vm4355, %v13170, 0.0
  %v13277 = vadd.f32 %v13275, %v13276
  %v13278 = vadd.f32 %v13277, %v13173
  %v13279 = vsel %vm4355, %v13176, 0.0
  %v13280 = vadd.f32 %v13278, %v13279
  %v13281 = vadd.f32 %v13280, %v13179
  %v13282 = vsel %vm4355, %v13182, 0.0
  %v13283 = vadd.f32 %v13281, %v13282
  %v13284 = vadd.f32 %v13283, %v13185
  %v13285 = vsel %vm4355, %v13188, 0.0
  %v13286 = vadd.f32 %v13284, %v13285
  %v13287 = vadd.f32 %v13286, %v13191
  %v13288 = vsel %vm4355, %v13194, 0.0
  %v13289 = vadd.f32 %v13287, %v13288
  %v13290 = vadd.f32 %v13289, %v13197
  %v13291 = vsel %vm4355, %v13200, 0.0
  %v13292 = vadd.f32 %v13290, %v13291
  %v13293 = vadd.f32 %v13292, %v13203
  %v13294 = vsel %vm4355, %v13206, 0.0
  %v13295 = vadd.f32 %v13293, %v13294
  %v13296 = vrot.slane %v13295, 4
  %v13297 = vadd.f32 %v13295, %v13296
  %v13298 = vrot.slane %v13297, 2
  %v13299 = vadd.f32 %v13297, %v13298
  %v13300 = vrot.slane %v13299, 1
  %v13301 = vadd.f32 %v13299, %v13300
  %v13302 = vsel %vm19, %v13126, 0.0
  %v13303 = vsel %vm13063, %v13129, 0.0
  %v13304 = vadd.f32 %v13302, %v13303
  %v13305 = vsel %vm19, %v13132, 0.0
  %v13306 = vadd.f32 %v13304, %v13305
  %v13307 = vsel %vm13063, %v13135, 0.0
  %v13308 = vadd.f32 %v13306, %v13307
  %v13309 = vsel %vm19, %v13138, 0.0
  %v13310 = vadd.f32 %v13308, %v13309
  %v13311 = vsel %vm13063, %v13141, 0.0
  %v13312 = vadd.f32 %v13310, %v13311
  %v13313 = vsel %vm19, %v13144, 0.0
  %v13314 = vadd.f32 %v13312, %v13313
  %v13315 = vsel %vm13063, %v13147, 0.0
  %v13316 = vadd.f32 %v13314, %v13315
  %v13317 = vsel %vm19, %v13150, 0.0
  %v13318 = vadd.f32 %v13316, %v13317
  %v13319 = vsel %vm13063, %v13153, 0.0
  %v13320 = vadd.f32 %v13318, %v13319
  %v13321 = vsel %vm19, %v13156, 0.0
  %v13322 = vadd.f32 %v13320, %v13321
  %v13323 = vsel %vm13063, %v13159, 0.0
  %v13324 = vadd.f32 %v13322, %v13323
  %v13325 = vsel %vm19, %v13162, 0.0
  %v13326 = vadd.f32 %v13324, %v13325
  %v13327 = vsel %vm13063, %v13165, 0.0
  %v13328 = vadd.f32 %v13326, %v13327
  %v13329 = vsel %vm19, %v13168, 0.0
  %v13330 = vadd.f32 %v13328, %v13329
  %v13331 = vsel %vm13063, %v13171, 0.0
  %v13332 = vadd.f32 %v13330, %v13331
  %v13333 = vsel %vm19, %v13174, 0.0
  %v13334 = vadd.f32 %v13332, %v13333
  %v13335 = vsel %vm13063, %v13177, 0.0
  %v13336 = vadd.f32 %v13334, %v13335
  %v13337 = vsel %vm19, %v13180, 0.0
  %v13338 = vadd.f32 %v13336, %v13337
  %v13339 = vsel %vm13063, %v13183, 0.0
  %v13340 = vadd.f32 %v13338, %v13339
  %v13341 = vsel %vm19, %v13186, 0.0
  %v13342 = vadd.f32 %v13340, %v13341
  %v13343 = vsel %vm13063, %v13189, 0.0
  %v13344 = vadd.f32 %v13342, %v13343
  %v13345 = vsel %vm19, %v13192, 0.0
  %v13346 = vadd.f32 %v13344, %v13345
  %v13347 = vsel %vm13063, %v13195, 0.0
  %v13348 = vadd.f32 %v13346, %v13347
  %v13349 = vsel %vm19, %v13198, 0.0
  %v13350 = vadd.f32 %v13348, %v13349
  %v13351 = vsel %vm13063, %v13201, 0.0
  %v13352 = vadd.f32 %v13350, %v13351
  %v13353 = vsel %vm19, %v13204, 0.0
  %v13354 = vadd.f32 %v13352, %v13353
  %v13355 = vsel %vm13063, %v13207, 0.0
  %v13356 = vadd.f32 %v13354, %v13355
  %v13357 = vrot.slane %v13356, 4
  %v13358 = vadd.f32 %v13356, %v13357
  %v13359 = vrot.slane %v13358, 2
  %v13360 = vadd.f32 %v13358, %v13359
  %v13361 = vrot.slane %v13360, 1
  %v13362 = vadd.f32 %v13360, %v13361
  %v13363 = vmul.f32 %v13014, 0.0051020407
  %v13364 = vmul.f32 %v13061, 0.0051020407
  %v13365 = vmul.f32 %v13123, 0.0051020407
  %v13366 = vmul.f32 %v13254, 0.0051020407
  %v13367 = vmul.f32 %v13301, 0.0051020407
  %v13368 = vmul.f32 %v13362, 0.0051020407
  %v13369 = vmul.f32 %v13363, %v13363
  %v13370 = vmul.f32 %v13364, %v13364
  %v13371 = vmul.f32 %v13365, %v13365
  %v13372 = vsub.f32 %v13366, %v13369
  %v13373 = vsub.f32 %v13367, %v13370
  %v13374 = vsub.f32 %v13368, %v13371
  %v13375 = vmax.f32 %v13372, 0.0
  %v13376 = vmax.f32 %v13373, 0.0
  %v13377 = vmax.f32 %v13374, 0.0
  %v13378 = vadd.f32 %v13375, 1e-05
  %v13379 = vadd.f32 %v13376, 1e-05
  %v13380 = vadd.f32 %v13377, 1e-05
  %v13381 = vrsqrt.pop %v13378
  %v13382 = vrsqrt.pop %v13379
  %v13383 = vrsqrt.pop %v13380
  %v13384 = vld [vmem:[%s2] sm:$0x7]
  %v13385 = vld [vmem:[%s3] sm:$0x7]
  %v13386 = vsub.f32 %v12884, %v13363
  %v13387 = vsub.f32 %v12885, %v13364
  %v13388 = vsub.f32 %v12886, %v13365
  %v13389 = vsub.f32 %v12887, %v13363
  %v13390 = vsub.f32 %v12888, %v13364
  %v13391 = vsub.f32 %v12889, %v13365
  %v13392 = vsub.f32 %v12890, %v13363
  %v13393 = vsub.f32 %v12891, %v13364
  %v13394 = vsub.f32 %v12892, %v13365
  %v13395 = vsub.f32 %v12893, %v13363
  %v13396 = vsub.f32 %v12894, %v13364
  %v13397 = vsub.f32 %v12895, %v13365
  %v13398 = vsub.f32 %v12896, %v13363
  %v13399 = vsub.f32 %v12897, %v13364
  %v13400 = vsub.f32 %v12898, %v13365
  %v13401 = vsub.f32 %v12899, %v13363
  %v13402 = vsub.f32 %v12900, %v13364
  %v13403 = vsub.f32 %v12901, %v13365
  %v13404 = vsub.f32 %v12902, %v13363
  %v13405 = vsub.f32 %v12903, %v13364
  %v13406 = vsub.f32 %v12904, %v13365
  %v13407 = vsub.f32 %v12905, %v13363
  %v13408 = vsub.f32 %v12906, %v13364
  %v13409 = vsub.f32 %v12907, %v13365
  %v13410 = vsub.f32 %v12908, %v13363
  %v13411 = vsub.f32 %v12909, %v13364
  %v13412 = vsub.f32 %v12910, %v13365
  %v13413 = vsub.f32 %v12911, %v13363
  %v13414 = vsub.f32 %v12912, %v13364
  %v13415 = vsub.f32 %v12913, %v13365
  %v13416 = vsub.f32 %v12914, %v13363
  %v13417 = vsub.f32 %v12915, %v13364
  %v13418 = vsub.f32 %v12916, %v13365
  %v13419 = vsub.f32 %v12917, %v13363
  %v13420 = vsub.f32 %v12918, %v13364
  %v13421 = vsub.f32 %v12919, %v13365
  %v13422 = vsub.f32 %v12920, %v13363
  %v13423 = vsub.f32 %v12921, %v13364
  %v13424 = vsub.f32 %v12922, %v13365
  %v13425 = vsub.f32 %v12923, %v13363
  %v13426 = vsub.f32 %v12924, %v13364
  %v13427 = vsub.f32 %v12925, %v13365
  %v13428 = vsub.f32 %v12926, %v13363
  %v13429 = vsub.f32 %v12927, %v13364
  %v13430 = vsub.f32 %v12928, %v13365
  %v13431 = vsub.f32 %v12929, %v13363
  %v13432 = vsub.f32 %v12930, %v13364
  %v13433 = vsub.f32 %v12931, %v13365
  %v13434 = vsub.f32 %v12932, %v13363
  %v13435 = vsub.f32 %v12933, %v13364
  %v13436 = vsub.f32 %v12934, %v13365
  %v13437 = vsub.f32 %v12935, %v13363
  %v13438 = vsub.f32 %v12936, %v13364
  %v13439 = vsub.f32 %v12937, %v13365
  %v13440 = vsub.f32 %v12938, %v13363
  %v13441 = vsub.f32 %v12939, %v13364
  %v13442 = vsub.f32 %v12940, %v13365
  %v13443 = vsub.f32 %v12941, %v13363
  %v13444 = vsub.f32 %v12942, %v13364
  %v13445 = vsub.f32 %v12943, %v13365
  %v13446 = vsub.f32 %v12944, %v13363
  %v13447 = vsub.f32 %v12945, %v13364
  %v13448 = vsub.f32 %v12946, %v13365
  %v13449 = vsub.f32 %v12947, %v13363
  %v13450 = vsub.f32 %v12948, %v13364
  %v13451 = vsub.f32 %v12949, %v13365
  %v13452 = vsub.f32 %v12950, %v13363
  %v13453 = vsub.f32 %v12951, %v13364
  %v13454 = vsub.f32 %v12952, %v13365
  %v13455 = vsub.f32 %v12953, %v13363
  %v13456 = vsub.f32 %v12954, %v13364
  %v13457 = vsub.f32 %v12955, %v13365
  %v13458 = vsub.f32 %v12956, %v13363
  %v13459 = vsub.f32 %v12957, %v13364
  %v13460 = vsub.f32 %v12958, %v13365
  %v13461 = vsub.f32 %v12959, %v13363
  %v13462 = vsub.f32 %v12960, %v13364
  %v13463 = vsub.f32 %v12961, %v13365
  %v13464 = vsub.f32 %v12962, %v13363
  %v13465 = vsub.f32 %v12963, %v13364
  %v13466 = vsub.f32 %v12964, %v13365
  %v13467 = vsub.f32 %v12965, %v13363
  %v13468 = vsub.f32 %v12966, %v13364
  %v13469 = vsub.f32 %v12967, %v13365
  %v13471 = vlaneseq
  %v13472 = vshrl.u32 %v13471, 7
  %v13473 = vsub.s32 0, %v13472
  %v13474 = vrot.slane %v13384, %v13473
  %v13475 = vlaneseq
  %v13476 = vshrl.u32 %v13475, 7
  %v13477 = vsub.s32 1, %v13476
  %v13478 = vrot.slane %v13384, %v13477
  %v13479 = vlaneseq
  %v13480 = vshrl.u32 %v13479, 7
  %v13481 = vsub.s32 2, %v13480
  %v13482 = vrot.slane %v13384, %v13481
  %v13486 = vmul.f32 %v13381, %v13474
  %v13487 = vmul.f32 %v13382, %v13478
  %v13488 = vmul.f32 %v13383, %v13482
  %v13489 = vlaneseq
  %v13490 = vshrl.u32 %v13489, 7
  %v13491 = vsub.s32 0, %v13490
  %v13492 = vrot.slane %v13486, %v13491
  %v13493 = vlaneseq
  %v13494 = vshrl.u32 %v13493, 7
  %v13495 = vsub.s32 0, %v13494
  %v13496 = vrot.slane %v13487, %v13495
  %v13497 = vlaneseq
  %v13498 = vshrl.u32 %v13497, 7
  %v13499 = vsub.s32 0, %v13498
  %v13500 = vrot.slane %v13488, %v13499
  %v13501 = vmul.f32 %v13386, %v13492
  %v13502 = vmul.f32 %v13387, %v13496
  %v13503 = vmul.f32 %v13388, %v13500
  %v13504 = vmul.f32 %v13389, %v13492
  %v13505 = vmul.f32 %v13390, %v13496
  %v13506 = vmul.f32 %v13391, %v13500
  %v13507 = vmul.f32 %v13392, %v13492
  %v13508 = vmul.f32 %v13393, %v13496
  %v13509 = vmul.f32 %v13394, %v13500
  %v13510 = vmul.f32 %v13395, %v13492
  %v13511 = vmul.f32 %v13396, %v13496
  %v13512 = vmul.f32 %v13397, %v13500
  %v13513 = vmul.f32 %v13398, %v13492
  %v13514 = vmul.f32 %v13399, %v13496
  %v13515 = vmul.f32 %v13400, %v13500
  %v13516 = vmul.f32 %v13401, %v13492
  %v13517 = vmul.f32 %v13402, %v13496
  %v13518 = vmul.f32 %v13403, %v13500
  %v13519 = vmul.f32 %v13404, %v13492
  %v13520 = vmul.f32 %v13405, %v13496
  %v13521 = vmul.f32 %v13406, %v13500
  %v13522 = vmul.f32 %v13407, %v13492
  %v13523 = vmul.f32 %v13408, %v13496
  %v13524 = vmul.f32 %v13409, %v13500
  %v13525 = vmul.f32 %v13410, %v13492
  %v13526 = vmul.f32 %v13411, %v13496
  %v13527 = vmul.f32 %v13412, %v13500
  %v13528 = vmul.f32 %v13413, %v13492
  %v13529 = vmul.f32 %v13414, %v13496
  %v13530 = vmul.f32 %v13415, %v13500
  %v13531 = vmul.f32 %v13416, %v13492
  %v13532 = vmul.f32 %v13417, %v13496
  %v13533 = vmul.f32 %v13418, %v13500
  %v13534 = vmul.f32 %v13419, %v13492
  %v13535 = vmul.f32 %v13420, %v13496
  %v13536 = vmul.f32 %v13421, %v13500
  %v13537 = vmul.f32 %v13422, %v13492
  %v13538 = vmul.f32 %v13423, %v13496
  %v13539 = vmul.f32 %v13424, %v13500
  %v13540 = vmul.f32 %v13425, %v13492
  %v13541 = vmul.f32 %v13426, %v13496
  %v13542 = vmul.f32 %v13427, %v13500
  %v13543 = vmul.f32 %v13428, %v13492
  %v13544 = vmul.f32 %v13429, %v13496
  %v13545 = vmul.f32 %v13430, %v13500
  %v13546 = vmul.f32 %v13431, %v13492
  %v13547 = vmul.f32 %v13432, %v13496
  %v13548 = vmul.f32 %v13433, %v13500
  %v13549 = vmul.f32 %v13434, %v13492
  %v13550 = vmul.f32 %v13435, %v13496
  %v13551 = vmul.f32 %v13436, %v13500
  %v13552 = vmul.f32 %v13437, %v13492
  %v13553 = vmul.f32 %v13438, %v13496
  %v13554 = vmul.f32 %v13439, %v13500
  %v13555 = vmul.f32 %v13440, %v13492
  %v13556 = vmul.f32 %v13441, %v13496
  %v13557 = vmul.f32 %v13442, %v13500
  %v13558 = vmul.f32 %v13443, %v13492
  %v13559 = vmul.f32 %v13444, %v13496
  %v13560 = vmul.f32 %v13445, %v13500
  %v13561 = vmul.f32 %v13446, %v13492
  %v13562 = vmul.f32 %v13447, %v13496
  %v13563 = vmul.f32 %v13448, %v13500
  %v13564 = vmul.f32 %v13449, %v13492
  %v13565 = vmul.f32 %v13450, %v13496
  %v13566 = vmul.f32 %v13451, %v13500
  %v13567 = vmul.f32 %v13452, %v13492
  %v13568 = vmul.f32 %v13453, %v13496
  %v13569 = vmul.f32 %v13454, %v13500
  %v13570 = vmul.f32 %v13455, %v13492
  %v13571 = vmul.f32 %v13456, %v13496
  %v13572 = vmul.f32 %v13457, %v13500
  %v13573 = vmul.f32 %v13458, %v13492
  %v13574 = vmul.f32 %v13459, %v13496
  %v13575 = vmul.f32 %v13460, %v13500
  %v13576 = vmul.f32 %v13461, %v13492
  %v13577 = vmul.f32 %v13462, %v13496
  %v13578 = vmul.f32 %v13463, %v13500
  %v13579 = vmul.f32 %v13464, %v13492
  %v13580 = vmul.f32 %v13465, %v13496
  %v13581 = vmul.f32 %v13466, %v13500
  %v13582 = vmul.f32 %v13467, %v13492
  %v13583 = vmul.f32 %v13468, %v13496
  %v13584 = vmul.f32 %v13469, %v13500
  %v13586 = vlaneseq
  %v13587 = vshrl.u32 %v13586, 7
  %v13588 = vsub.s32 0, %v13587
  %v13589 = vrot.slane %v13385, %v13588
  %v13590 = vlaneseq
  %v13591 = vshrl.u32 %v13590, 7
  %v13592 = vsub.s32 1, %v13591
  %v13593 = vrot.slane %v13385, %v13592
  %v13594 = vlaneseq
  %v13595 = vshrl.u32 %v13594, 7
  %v13596 = vsub.s32 2, %v13595
  %v13597 = vrot.slane %v13385, %v13596
  %v13601 = vadd.f32 %v13501, %v13589
  %v13602 = vadd.f32 %v13502, %v13593
  %v13603 = vadd.f32 %v13503, %v13597
  %v13604 = vadd.f32 %v13504, %v13589
  %v13605 = vadd.f32 %v13505, %v13593
  %v13606 = vadd.f32 %v13506, %v13597
  %v13607 = vadd.f32 %v13507, %v13589
  %v13608 = vadd.f32 %v13508, %v13593
  %v13609 = vadd.f32 %v13509, %v13597
  %v13610 = vadd.f32 %v13510, %v13589
  %v13611 = vadd.f32 %v13511, %v13593
  %v13612 = vadd.f32 %v13512, %v13597
  %v13613 = vadd.f32 %v13513, %v13589
  %v13614 = vadd.f32 %v13514, %v13593
  %v13615 = vadd.f32 %v13515, %v13597
  %v13616 = vadd.f32 %v13516, %v13589
  %v13617 = vadd.f32 %v13517, %v13593
  %v13618 = vadd.f32 %v13518, %v13597
  %v13619 = vadd.f32 %v13519, %v13589
  %v13620 = vadd.f32 %v13520, %v13593
  %v13621 = vadd.f32 %v13521, %v13597
  %v13622 = vadd.f32 %v13522, %v13589
  %v13623 = vadd.f32 %v13523, %v13593
  %v13624 = vadd.f32 %v13524, %v13597
  %v13625 = vadd.f32 %v13525, %v13589
  %v13626 = vadd.f32 %v13526, %v13593
  %v13627 = vadd.f32 %v13527, %v13597
  %v13628 = vadd.f32 %v13528, %v13589
  %v13629 = vadd.f32 %v13529, %v13593
  %v13630 = vadd.f32 %v13530, %v13597
  %v13631 = vadd.f32 %v13531, %v13589
  %v13632 = vadd.f32 %v13532, %v13593
  %v13633 = vadd.f32 %v13533, %v13597
  %v13634 = vadd.f32 %v13534, %v13589
  %v13635 = vadd.f32 %v13535, %v13593
  %v13636 = vadd.f32 %v13536, %v13597
  %v13637 = vadd.f32 %v13537, %v13589
  %v13638 = vadd.f32 %v13538, %v13593
  %v13639 = vadd.f32 %v13539, %v13597
  %v13640 = vadd.f32 %v13540, %v13589
  %v13641 = vadd.f32 %v13541, %v13593
  %v13642 = vadd.f32 %v13542, %v13597
  %v13643 = vadd.f32 %v13543, %v13589
  %v13644 = vadd.f32 %v13544, %v13593
  %v13645 = vadd.f32 %v13545, %v13597
  %v13646 = vadd.f32 %v13546, %v13589
  %v13647 = vadd.f32 %v13547, %v13593
  %v13648 = vadd.f32 %v13548, %v13597
  %v13649 = vadd.f32 %v13549, %v13589
  %v13650 = vadd.f32 %v13550, %v13593
  %v13651 = vadd.f32 %v13551, %v13597
  %v13652 = vadd.f32 %v13552, %v13589
  %v13653 = vadd.f32 %v13553, %v13593
  %v13654 = vadd.f32 %v13554, %v13597
  %v13655 = vadd.f32 %v13555, %v13589
  %v13656 = vadd.f32 %v13556, %v13593
  %v13657 = vadd.f32 %v13557, %v13597
  %v13658 = vadd.f32 %v13558, %v13589
  %v13659 = vadd.f32 %v13559, %v13593
  %v13660 = vadd.f32 %v13560, %v13597
  %v13661 = vadd.f32 %v13561, %v13589
  %v13662 = vadd.f32 %v13562, %v13593
  %v13663 = vadd.f32 %v13563, %v13597
  %v13664 = vadd.f32 %v13564, %v13589
  %v13665 = vadd.f32 %v13565, %v13593
  %v13666 = vadd.f32 %v13566, %v13597
  %v13667 = vadd.f32 %v13567, %v13589
  %v13668 = vadd.f32 %v13568, %v13593
  %v13669 = vadd.f32 %v13569, %v13597
  %v13670 = vadd.f32 %v13570, %v13589
  %v13671 = vadd.f32 %v13571, %v13593
  %v13672 = vadd.f32 %v13572, %v13597
  %v13673 = vadd.f32 %v13573, %v13589
  %v13674 = vadd.f32 %v13574, %v13593
  %v13675 = vadd.f32 %v13575, %v13597
  %v13676 = vadd.f32 %v13576, %v13589
  %v13677 = vadd.f32 %v13577, %v13593
  %v13678 = vadd.f32 %v13578, %v13597
  %v13679 = vadd.f32 %v13579, %v13589
  %v13680 = vadd.f32 %v13580, %v13593
  %v13681 = vadd.f32 %v13581, %v13597
  %v13682 = vadd.f32 %v13582, %v13589
  %v13683 = vadd.f32 %v13583, %v13593
  %v13684 = vadd.f32 %v13584, %v13597
  %v13685 = vmax.f32 %v13601, 0.0
  %v13686 = vmax.f32 %v13602, 0.0
  %v13687 = vmax.f32 %v13603, 0.0
  %v13688 = vmax.f32 %v13604, 0.0
  %v13689 = vmax.f32 %v13605, 0.0
  %v13690 = vmax.f32 %v13606, 0.0
  %v13691 = vmax.f32 %v13607, 0.0
  %v13692 = vmax.f32 %v13608, 0.0
  %v13693 = vmax.f32 %v13609, 0.0
  %v13694 = vmax.f32 %v13610, 0.0
  %v13695 = vmax.f32 %v13611, 0.0
  %v13696 = vmax.f32 %v13612, 0.0
  %v13697 = vmax.f32 %v13613, 0.0
  %v13698 = vmax.f32 %v13614, 0.0
  %v13699 = vmax.f32 %v13615, 0.0
  %v13700 = vmax.f32 %v13616, 0.0
  %v13701 = vmax.f32 %v13617, 0.0
  %v13702 = vmax.f32 %v13618, 0.0
  %v13703 = vmax.f32 %v13619, 0.0
  %v13704 = vmax.f32 %v13620, 0.0
  %v13705 = vmax.f32 %v13621, 0.0
  %v13706 = vmax.f32 %v13622, 0.0
  %v13707 = vmax.f32 %v13623, 0.0
  %v13708 = vmax.f32 %v13624, 0.0
  %v13709 = vmax.f32 %v13625, 0.0
  %v13710 = vmax.f32 %v13626, 0.0
  %v13711 = vmax.f32 %v13627, 0.0
  %v13712 = vmax.f32 %v13628, 0.0
  %v13713 = vmax.f32 %v13629, 0.0
  %v13714 = vmax.f32 %v13630, 0.0
  %v13715 = vmax.f32 %v13631, 0.0
  %v13716 = vmax.f32 %v13632, 0.0
  %v13717 = vmax.f32 %v13633, 0.0
  %v13718 = vmax.f32 %v13634, 0.0
  %v13719 = vmax.f32 %v13635, 0.0
  %v13720 = vmax.f32 %v13636, 0.0
  %v13721 = vmax.f32 %v13637, 0.0
  %v13722 = vmax.f32 %v13638, 0.0
  %v13723 = vmax.f32 %v13639, 0.0
  %v13724 = vmax.f32 %v13640, 0.0
  %v13725 = vmax.f32 %v13641, 0.0
  %v13726 = vmax.f32 %v13642, 0.0
  %v13727 = vmax.f32 %v13643, 0.0
  %v13728 = vmax.f32 %v13644, 0.0
  %v13729 = vmax.f32 %v13645, 0.0
  %v13730 = vmax.f32 %v13646, 0.0
  %v13731 = vmax.f32 %v13647, 0.0
  %v13732 = vmax.f32 %v13648, 0.0
  %v13733 = vmax.f32 %v13649, 0.0
  %v13734 = vmax.f32 %v13650, 0.0
  %v13735 = vmax.f32 %v13651, 0.0
  %v13736 = vmax.f32 %v13652, 0.0
  %v13737 = vmax.f32 %v13653, 0.0
  %v13738 = vmax.f32 %v13654, 0.0
  %v13739 = vmax.f32 %v13655, 0.0
  %v13740 = vmax.f32 %v13656, 0.0
  %v13741 = vmax.f32 %v13657, 0.0
  %v13742 = vmax.f32 %v13658, 0.0
  %v13743 = vmax.f32 %v13659, 0.0
  %v13744 = vmax.f32 %v13660, 0.0
  %v13745 = vmax.f32 %v13661, 0.0
  %v13746 = vmax.f32 %v13662, 0.0
  %v13747 = vmax.f32 %v13663, 0.0
  %v13748 = vmax.f32 %v13664, 0.0
  %v13749 = vmax.f32 %v13665, 0.0
  %v13750 = vmax.f32 %v13666, 0.0
  %v13751 = vmax.f32 %v13667, 0.0
  %v13752 = vmax.f32 %v13668, 0.0
  %v13753 = vmax.f32 %v13669, 0.0
  %v13754 = vmax.f32 %v13670, 0.0
  %v13755 = vmax.f32 %v13671, 0.0
  %v13756 = vmax.f32 %v13672, 0.0
  %v13757 = vmax.f32 %v13673, 0.0
  %v13758 = vmax.f32 %v13674, 0.0
  %v13759 = vmax.f32 %v13675, 0.0
  %v13760 = vmax.f32 %v13676, 0.0
  %v13761 = vmax.f32 %v13677, 0.0
  %v13762 = vmax.f32 %v13678, 0.0
  %v13763 = vmax.f32 %v13679, 0.0
  %v13764 = vmax.f32 %v13680, 0.0
  %v13765 = vmax.f32 %v13681, 0.0
  %v13766 = vmax.f32 %v13682, 0.0
  %v13767 = vmax.f32 %v13683, 0.0
  %v13768 = vmax.f32 %v13684, 0.0
  %13769 = vst [vmem:[%s4] sm:$0xff] %v13685
  %13770 = vst [vmem:[%s4 + $0x8] sm:$0xff] %v13686
  %13771 = vst.msk [vmem:[%s4 + $0x10] sm:$0xff] %vm19, %v13687
  %13772 = vst [vmem:[%s4 + $0x18] sm:$0x3f] %v13688
  %13773 = vst [vmem:[%s4 + $0x20] sm:$0x3f] %v13689
  %13774 = vst.msk [vmem:[%s4 + $0x28] sm:$0x3f] %vm13063, %v13690
  %13775 = vst [vmem:[%s4 + $0x30] sm:$0xff] %v13691
  %13776 = vst [vmem:[%s4 + $0x38] sm:$0xff] %v13692
  %13777 = vst.msk [vmem:[%s4 + $0x40] sm:$0xff] %vm19, %v13693
  %13778 = vst [vmem:[%s4 + $0x48] sm:$0x3f] %v13694
  %13779 = vst [vmem:[%s4 + $0x50] sm:$0x3f] %v13695
  %13780 = vst.msk [vmem:[%s4 + $0x58] sm:$0x3f] %vm13063, %v13696
  %13781 = vst [vmem:[%s4 + $0x60] sm:$0xff] %v13697
  %13782 = vst [vmem:[%s4 + $0x68] sm:$0xff] %v13698
  %13783 = vst.msk [vmem:[%s4 + $0x70] sm:$0xff] %vm19, %v13699
  %13784 = vst [vmem:[%s4 + $0x78] sm:$0x3f] %v13700
  %13785 = vst [vmem:[%s4 + $0x80] sm:$0x3f] %v13701
  %13786 = vst.msk [vmem:[%s4 + $0x88] sm:$0x3f] %vm13063, %v13702
  %13787 = vst [vmem:[%s4 + $0x90] sm:$0xff] %v13703
  %13788 = vst [vmem:[%s4 + $0x98] sm:$0xff] %v13704
  %13789 = vst.msk [vmem:[%s4 + $0xa0] sm:$0xff] %vm19, %v13705
  %13790 = vst [vmem:[%s4 + $0xa8] sm:$0x3f] %v13706
  %13791 = vst [vmem:[%s4 + $0xb0] sm:$0x3f] %v13707
  %13792 = vst.msk [vmem:[%s4 + $0xb8] sm:$0x3f] %vm13063, %v13708
  %13793 = vst [vmem:[%s4 + $0xc0] sm:$0xff] %v13709
  %13794 = vst [vmem:[%s4 + $0xc8] sm:$0xff] %v13710
  %13795 = vst.msk [vmem:[%s4 + $0xd0] sm:$0xff] %vm19, %v13711
  %13796 = vst [vmem:[%s4 + $0xd8] sm:$0x3f] %v13712
  %13797 = vst [vmem:[%s4 + $0xe0] sm:$0x3f] %v13713
  %13798 = vst.msk [vmem:[%s4 + $0xe8] sm:$0x3f] %vm13063, %v13714
  %13799 = vst [vmem:[%s4 + $0xf0] sm:$0xff] %v13715
  %13800 = vst [vmem:[%s4 + $0xf8] sm:$0xff] %v13716
  %13801 = vst.msk [vmem:[%s4 + $0x100] sm:$0xff] %vm19, %v13717
  %13802 = vst [vmem:[%s4 + $0x108] sm:$0x3f] %v13718
  %13803 = vst [vmem:[%s4 + $0x110] sm:$0x3f] %v13719
  %13804 = vst.msk [vmem:[%s4 + $0x118] sm:$0x3f] %vm13063, %v13720
  %13805 = vst [vmem:[%s4 + $0x120] sm:$0xff] %v13721
  %13806 = vst [vmem:[%s4 + $0x128] sm:$0xff] %v13722
  %13807 = vst.msk [vmem:[%s4 + $0x130] sm:$0xff] %vm19, %v13723
  %13808 = vst [vmem:[%s4 + $0x138] sm:$0x3f] %v13724
  %13809 = vst [vmem:[%s4 + $0x140] sm:$0x3f] %v13725
  %13810 = vst.msk [vmem:[%s4 + $0x148] sm:$0x3f] %vm13063, %v13726
  %13811 = vst [vmem:[%s4 + $0x150] sm:$0xff] %v13727
  %13812 = vst [vmem:[%s4 + $0x158] sm:$0xff] %v13728
  %13813 = vst.msk [vmem:[%s4 + $0x160] sm:$0xff] %vm19, %v13729
  %13814 = vst [vmem:[%s4 + $0x168] sm:$0x3f] %v13730
  %13815 = vst [vmem:[%s4 + $0x170] sm:$0x3f] %v13731
  %13816 = vst.msk [vmem:[%s4 + $0x178] sm:$0x3f] %vm13063, %v13732
  %13817 = vst [vmem:[%s4 + $0x180] sm:$0xff] %v13733
  %13818 = vst [vmem:[%s4 + $0x188] sm:$0xff] %v13734
  %13819 = vst.msk [vmem:[%s4 + $0x190] sm:$0xff] %vm19, %v13735
  %13820 = vst [vmem:[%s4 + $0x198] sm:$0x3f] %v13736
  %13821 = vst [vmem:[%s4 + $0x1a0] sm:$0x3f] %v13737
  %13822 = vst.msk [vmem:[%s4 + $0x1a8] sm:$0x3f] %vm13063, %v13738
  %13823 = vst [vmem:[%s4 + $0x1b0] sm:$0xff] %v13739
  %13824 = vst [vmem:[%s4 + $0x1b8] sm:$0xff] %v13740
  %13825 = vst.msk [vmem:[%s4 + $0x1c0] sm:$0xff] %vm19, %v13741
  %13826 = vst [vmem:[%s4 + $0x1c8] sm:$0x3f] %v13742
  %13827 = vst [vmem:[%s4 + $0x1d0] sm:$0x3f] %v13743
  %13828 = vst.msk [vmem:[%s4 + $0x1d8] sm:$0x3f] %vm13063, %v13744
  %13829 = vst [vmem:[%s4 + $0x1e0] sm:$0xff] %v13745
  %13830 = vst [vmem:[%s4 + $0x1e8] sm:$0xff] %v13746
  %13831 = vst.msk [vmem:[%s4 + $0x1f0] sm:$0xff] %vm19, %v13747
  %13832 = vst [vmem:[%s4 + $0x1f8] sm:$0x3f] %v13748
  %13833 = vst [vmem:[%s4 + $0x200] sm:$0x3f] %v13749
  %13834 = vst.msk [vmem:[%s4 + $0x208] sm:$0x3f] %vm13063, %v13750
  %13835 = vst [vmem:[%s4 + $0x210] sm:$0xff] %v13751
  %13836 = vst [vmem:[%s4 + $0x218] sm:$0xff] %v13752
  %13837 = vst.msk [vmem:[%s4 + $0x220] sm:$0xff] %vm19, %v13753
  %13838 = vst [vmem:[%s4 + $0x228] sm:$0x3f] %v13754
  %13839 = vst [vmem:[%s4 + $0x230] sm:$0x3f] %v13755
  %13840 = vst.msk [vmem:[%s4 + $0x238] sm:$0x3f] %vm13063, %v13756
  %13841 = vst [vmem:[%s4 + $0x240] sm:$0xff] %v13757
  %13842 = vst [vmem:[%s4 + $0x248] sm:$0xff] %v13758
  %13843 = vst.msk [vmem:[%s4 + $0x250] sm:$0xff] %vm19, %v13759
  %13844 = vst [vmem:[%s4 + $0x258] sm:$0x3f] %v13760
  %13845 = vst [vmem:[%s4 + $0x260] sm:$0x3f] %v13761
  %13846 = vst.msk [vmem:[%s4 + $0x268] sm:$0x3f] %vm13063, %v13762
  %13847 = vst [vmem:[%s4 + $0x270] sm:$0xff] %v13763
  %13848 = vst [vmem:[%s4 + $0x278] sm:$0xff] %v13764
  %13849 = vst.msk [vmem:[%s4 + $0x280] sm:$0xff] %vm19, %v13765
  %13850 = vst [vmem:[%s4 + $0x288] sm:$0x3f] %v13766
  %13851 = vst [vmem:[%s4 + $0x290] sm:$0x3f] %v13767
  %13852 = vst.msk [vmem:[%s4 + $0x298] sm:$0x3f] %vm13063, %v13768
  // Predicated region
  $region18: #{fused_relu_dwconv_bn_relu.1} parent=0 // pred_check
    _
  $region19: #{fused_relu_dwconv_bn_relu.1} parent=0 // pred_check_branch
    %13854 = sbr.rel (0) target = $region21
  $region20: #{fused_relu_dwconv_bn_relu.1} parent=0 // pred_region
    _
  $region21: #{fused_relu_dwconv_bn_relu.1} parent=0 // pred_fallthru
    _
  // Predicated region
  $region22: #{fused_relu_dwconv_bn_relu.1} parent=0 // pred_check
    _
  $region23: #{fused_relu_dwconv_bn_relu.1} parent=0 // pred_check_branch
    %13856 = sbr.rel (0) target = $region25
  $region24: #{fused_relu_dwconv_bn_relu.1} parent=0 // pred_region
    _
  $region25: #{fused_relu_dwconv_bn_relu.1} parent=0 // pred_fallthru
    _

</llo_original>
